<compile_context>
chip_gen: v7x
topology: tpu7x:2x2x1
jax: 0.10.0
libtpu: 0.0.40
codegen_flags: <defaults>
</compile_context>

<pallas_src>
import jax
import jax.numpy as jnp
from jax.experimental import pallas as pl
from jax.experimental.pallas import tpu as pltpu

LANE = 128           # channel axes are padded to a multiple of this
_XOFF = 16           # left halo offset: sublane-aligned for bf16 (16,128) tiles
_VMEM_LIMIT = 32 * 1024 * 1024
_EPS = 1e-5


def _round_up(x, m):
    return (x + m - 1) // m * m


# ---------------------------------------------------------------------------
# Fused Conv3x3(no bias) + BatchNorm2d(train stats) + ReLU [+ MaxPool2x2]
# [+ fused head: Conv1x1(bias) + global MaxPool]  -- one pallas_call per block
# ---------------------------------------------------------------------------
def _make_block_kernel(N, H, W, cin_p, cout_p, do_pool, fuse_head, big_k):
    M = N * H * W
    Ho, Wo = (H // 2, W // 2) if do_pool else (H, W)

    def kernel(*refs):
        if fuse_head:
            x_ref, w_ref, gamma_ref, beta_ref, hw_ref, hb_ref, out_ref = refs[:7]
            scratch = refs[7:]
        else:
            x_ref, w_ref, gamma_ref, beta_ref, out_ref = refs[:5]
            scratch = refs[5:]
        pad_ref = scratch[0]

        # --- Stage input into a bf16 VMEM scratch with a 1-pixel halo. ------
        # Only the border is zeroed (the interior is overwritten right after),
        # saving a full pass through the vector-store slot.  Interior starts
        # at sublane offset 16 so the big store stays aligned for bf16.
        Wp = W + 2 * _XOFF
        zrow = jnp.zeros((N, 1, Wp, cin_p), jnp.bfloat16)
        pad_ref[:, 0:1, :, :] = zrow
        pad_ref[:, H + 1:H + 2, :, :] = zrow
        zcol = jnp.zeros((N, H, _XOFF, cin_p), jnp.bfloat16)
        pad_ref[:, 1:H + 1, 0:_XOFF, :] = zcol
        pad_ref[:, 1:H + 1, _XOFF + W:, :] = zcol
        pad_ref[:, 1:H + 1, _XOFF:_XOFF + W, :] = x_ref[...]     # already bf16
        xp = pad_ref[...]                           # (N, H+2, W+2*_XOFF, cin_p)

        wmat = w_ref[...]                           # (9*cin_p, cout_p) bf16

        # --- Conv3x3 as MXU matmul(s): bf16 operands, f32 accumulation. ------
        if big_k:
            # Toy / small-channel case: 9 shifted windows concatenated along
            # the lane axis -> one big-K dot (K = 9*cin_p).
            blocks = []
            for a in range(3):                       # dy
                for b in range(3):                   # dx
                    c0 = _XOFF - 1 + b
                    blocks.append(xp[:, a:a + H, c0:c0 + W, :])
            patches = jnp.concatenate(blocks, axis=-1).reshape(M, 9 * cin_p)
            acc = jnp.dot(patches, wmat, preferred_element_type=jnp.float32)
        else:
            # Real channel counts: per-tap dots (K = cin_p each) accumulated
            # in f32 -> the 9x im2col activation copy is never materialized.
            acc = jnp.zeros((M, cout_p), jnp.float32)
            for a in range(3):
                for b in range(3):
                    c0 = _XOFF - 1 + b
                    t = a * 3 + b
                    win = xp[:, a:a + H, c0:c0 + W, :].reshape(M, cin_p)
                    acc = acc + jnp.dot(win, wmat[t * cin_p:(t + 1) * cin_p, :],
                                        preferred_element_type=jnp.float32)

        # --- BatchNorm2d (training-mode batch statistics, biased variance,
        # eps=1e-5) folded into a per-channel affine + ReLU.  One stats pass
        # over acc (sum / sum-of-squares), two VALU ops/element to normalize.
        mean = jnp.sum(acc, axis=0, keepdims=True) * (1.0 / M)     # (1, cout_p)
        ex2 = jnp.sum(acc * acc, axis=0, keepdims=True) * (1.0 / M)
        var = jnp.maximum(ex2 - mean * mean, 0.0)
        scale = gamma_ref[...] * jax.lax.rsqrt(var + _EPS)         # (1, cout_p)
        shift = beta_ref[...] - mean * scale                       # (1, cout_p)
        y = jnp.maximum(acc * scale + shift, 0.0)                  # (M, cout_p)

        # --- Optional fused MaxPool2d(2,2) epilogue:
        #   H direction via a free major-axis reshape + max,
        #   W (sublane) direction via strided VMEM reads from a scratch ref.
        if do_pool:
            pool_ref = scratch[1]
            y5 = y.reshape(N, H // 2, 2, W, cout_p)
            pool_ref[...] = jnp.maximum(y5[:, :, 0], y5[:, :, 1])
            left = pool_ref[:, :, pl.ds(0, W // 2, 2), :]
            right = pool_ref[:, :, pl.ds(1, W // 2, 2), :]
            act = jnp.maximum(left, right)            # (N, Ho, Wo, cout_p) f32
        else:
            act = y.reshape(N, H, W, cout_p)

        if not fuse_head:
            out_ref[...] = act.astype(out_ref.dtype)
            return

        # --- Fused head: Conv1x1 + global MaxPool + squeeze; bias is added
        # after the max (max commutes with a per-channel constant).
        ncls_p = hw_ref.shape[-1]
        a2 = act.reshape(N * Ho * Wo, cout_p).astype(jnp.bfloat16)
        logits = jnp.dot(a2, hw_ref[...], preferred_element_type=jnp.float32)
        logits = jnp.max(logits.reshape(N, Ho * Wo, ncls_p), axis=1) + hb_ref[...]
        out_ref[...] = logits

    return kernel


def conv_block(x, w_p, g_p, b_p, do_pool, head=None):
    """One fused VGG block.  head=(hw_p, hb_p) fuses the classifier head."""
    N, H, W, cin_p = x.shape
    cout_p = w_p.shape[-1]
    if do_pool:
        # TODO(synk): odd H/W (PyTorch MaxPool2d floors) not handled.
        assert H % 2 == 0 and W % 2 == 0
    Ho, Wo = (H // 2, W // 2) if do_pool else (H, W)
    big_k = cin_p <= LANE          # K = 9*cin_p <= 1152 -> single fused dot

    scratch = [pltpu.VMEM((N, H + 2, W + 2 * _XOFF, cin_p), jnp.bfloat16)]
    if do_pool:
        scratch.append(pltpu.VMEM((N, H // 2, W, cout_p), jnp.float32))

    in_specs = [
        pl.BlockSpec((N, H, W, cin_p), lambda i: (0, 0, 0, 0)),
        pl.BlockSpec(w_p.shape, lambda i: (0, 0)),
        pl.BlockSpec(g_p.shape, lambda i: (0, 0)),
        pl.BlockSpec(b_p.shape, lambda i: (0, 0)),
    ]
    operands = [x, w_p, g_p, b_p]

    if head is not None:
        hw_p, hb_p = head
        ncls_p = hw_p.shape[-1]
        in_specs += [pl.BlockSpec(hw_p.shape, lambda i: (0, 0)),
                     pl.BlockSpec(hb_p.shape, lambda i: (0, 0))]
        operands += [hw_p, hb_p]
        out_spec = pl.BlockSpec((N, ncls_p), lambda i: (0, 0))
        out_shape = jax.ShapeDtypeStruct((N, ncls_p), jnp.float32)
    else:
        out_spec = pl.BlockSpec((N, Ho, Wo, cout_p), lambda i: (0, 0, 0, 0))
        out_shape = jax.ShapeDtypeStruct((N, Ho, Wo, cout_p), jnp.bfloat16)

    return pl.pallas_call(
        _make_block_kernel(N, H, W, cin_p, cout_p, do_pool, head is not None,
                           big_k),
        grid=(1,),
        in_specs=in_specs,
        out_specs=out_spec,
        out_shape=out_shape,
        scratch_shapes=scratch,
        compiler_params=pltpu.CompilerParams(
            dimension_semantics=("arbitrary",),
            vmem_limit_bytes=_VMEM_LIMIT),
    )(*operands)


# ---------------------------------------------------------------------------
# Parameters (logical shapes) + packing into lane-padded kernel layouts
# ---------------------------------------------------------------------------
def init_params(key, in_channels, num_classes, model_structure):
    convs = []
    cin = in_channels
    for item in model_structure:
        if isinstance(item, str):
            continue
        cout = item
        key, k1, k2, k3 = jax.random.split(key, 4)
        w = jax.random.normal(k1, (3, 3, cin, cout), jnp.float32) * 0.1   # HWIO
        gamma = jax.random.uniform(k2, (cout,), jnp.float32, 0.5, 1.5)
        beta = jax.random.normal(k3, (cout,), jnp.float32) * 0.1
        convs.append((w, gamma, beta))
        cin = cout
    key, k1, k2 = jax.random.split(key, 3)
    head_w = jax.random.normal(k1, (cin, num_classes), jnp.float32) * 0.1
    head_b = jax.random.normal(k2, (num_classes,), jnp.float32) * 0.1
    return {"convs": convs, "head_w": head_w, "head_b": head_b}


def pack_params(params, in_channels):
    """Pad channels to lane multiples; reshape conv weights for im2col."""
    packed = []
    cin = in_channels
    for (w, gamma, beta) in params["convs"]:
        cout = w.shape[-1]
        cin_p, cout_p = _round_up(cin, LANE), _round_up(cout, LANE)
        w_p = jnp.zeros((3, 3, cin_p, cout_p), jnp.float32)
        w_p = w_p.at[:, :, :cin, :cout].set(w)
        w_p = w_p.reshape(9 * cin_p, cout_p).astype(jnp.bfloat16)
        g_p = jnp.zeros((1, cout_p), jnp.float32).at[0, :cout].set(gamma)
        b_p = jnp.zeros((1, cout_p), jnp.float32).at[0, :cout].set(beta)
        packed.append((w_p, g_p, b_p))
        cin = cout
    nclass = params["head_w"].shape[-1]
    cin_p, ncls_p = _round_up(cin, LANE), _round_up(nclass, LANE)
    hw_p = (jnp.zeros((cin_p, ncls_p), jnp.float32)
            .at[:cin, :nclass].set(params["head_w"])).astype(jnp.bfloat16)
    hb_p = jnp.zeros((1, ncls_p), jnp.float32).at[0, :nclass].set(params["head_b"])
    return packed, hw_p, hb_p


# ---------------------------------------------------------------------------
# Forward
# ---------------------------------------------------------------------------
def vgg_forward(x_nchw, packed_convs, head_w_p, head_b_p, model_structure,
                num_classes):
    # Layout glue (once, outside the kernels): NCHW -> NHWC, cast to bf16,
    # lane-pad channels so every kernel sees a dense 128-lane last dim.
    x = jnp.transpose(x_nchw, (0, 2, 3, 1)).astype(jnp.bfloat16)
    cin = x.shape[-1]
    cin_p = _round_up(cin, LANE)
    if cin_p != cin:
        x = jnp.pad(x, ((0, 0), (0, 0), (0, 0), (0, cin_p - cin)))

    n_convs = len(packed_convs)
    conv_idx = 0
    i = 0
    logits_p = None
    while i < len(model_structure):
        item = model_structure[i]
        assert not isinstance(item, str), "'M' must follow a conv layer"
        do_pool = (i + 1 < len(model_structure)
                   and isinstance(model_structure[i + 1], str))
        w_p, g_p, b_p = packed_convs[conv_idx]
        is_last = conv_idx == n_convs - 1
        conv_idx += 1
        if is_last:
            # Head fused into the last conv block's kernel (no extra launch
            # and no HBM round trip of the final activation).
            logits_p = conv_block(x, w_p, g_p, b_p, do_pool,
                                  head=(head_w_p, head_b_p))
        else:
            x = conv_block(x, w_p, g_p, b_p, do_pool)
        i += 2 if do_pool else 1

    return logits_p[:, :num_classes]          # strip lane padding


# ---------------------------------------------------------------------------
# Pure-JAX reference (independent formulation) for a correctness check
# ---------------------------------------------------------------------------
def reference_forward(x_nchw, params, model_structure):
    x = jnp.transpose(x_nchw, (0, 2, 3, 1)).astype(jnp.float32)
    ci = 0
    for item in model_structure:
        if isinstance(item, str):
            x = jnp.maximum(
                jnp.maximum(x[:, 0::2, 0::2, :], x[:, 0::2, 1::2, :]),
                jnp.maximum(x[:, 1::2, 0::2, :], x[:, 1::2, 1::2, :]))
        else:
            w, gamma, beta = params["convs"][ci]
            ci += 1
            y = jax.lax.conv_general_dilated(
                x, w, window_strides=(1, 1), padding=((1, 1), (1, 1)),
                dimension_numbers=("NHWC", "HWIO", "NHWC"),
                precision=jax.lax.Precision.HIGHEST)
            mean = jnp.mean(y, axis=(0, 1, 2), keepdims=True)
            var = jnp.mean(jnp.square(y - mean), axis=(0, 1, 2), keepdims=True)
            y = (y - mean) * jax.lax.rsqrt(var + 1e-5) * gamma + beta
            x = jnp.maximum(y, 0.0)
    y = jnp.einsum("nhwc,ck->nhwk", x, params["head_w"]) + params["head_b"]
    return jnp.max(y, axis=(1, 2))


if __name__ == "__main__":
    in_channels = 4
    num_classes = 10
    model_structure = [8, "M", 16, "M"]
    image_size = 16
    batch = 2

    key = jax.random.PRNGKey(0)
    kx, kp = jax.random.split(key)
    x = jax.random.normal(kx, (batch, in_channels, image_size, image_size),
                          jnp.float32)
    params = init_params(kp, in_channels, num_classes, model_structure)
    packed_convs, head_w_p, head_b_p = pack_params(params, in_channels)

    fwd = jax.jit(lambda xi, cv, hw, hb: vgg_forward(
        xi, cv, hw, hb, model_structure, num_classes))
    out = jax.block_until_ready(fwd(x, packed_convs, head_w_p, head_b_p))

    assert out.shape == (batch, num_classes), out.shape
    assert jnp.all(jnp.isfinite(out))

    ref = reference_forward(x, params, model_structure)
    assert jnp.all(jnp.abs(out - ref) <= 0.1 + 0.1 * jnp.abs(ref)), (out, ref)

    print("KERNEL_OK")
</pallas_src>

<mosaic_0001>
module attributes {stable_mosaic.version = 11 : i64} {
  func.func @kernel(%arg0: i32, %arg1: memref<2x16x16x128xbf16, #tpu.memory_space<vmem>>, %arg2: memref<1152x128xbf16, #tpu.memory_space<vmem>>, %arg3: memref<1x128xf32, #tpu.memory_space<vmem>>, %arg4: memref<1x128xf32, #tpu.memory_space<vmem>>, %arg5: memref<2x8x8x128xbf16, #tpu.memory_space<vmem>>, %arg6: memref<2x18x48x128xbf16, #tpu.memory_space<vmem>>, %arg7: memref<2x8x16x128xf32, #tpu.memory_space<vmem>>) attributes {dimension_semantics = [#tpu.dimension_semantics<arbitrary>], iteration_bounds = array<i64: 1>, scalar_prefetch = 0 : i64, scratch_operands = 2 : i64, tpu.core_type = #tpu.core_type<tc>, window_params = [{pipeline_mode = #tpu.pipeline_mode<synchronous>, transform_indices = @transform_0, window_bounds = array<i64: 2, 16, 16, 128>}, {pipeline_mode = #tpu.pipeline_mode<synchronous>, transform_indices = @transform_1, window_bounds = array<i64: 1152, 128>}, {pipeline_mode = #tpu.pipeline_mode<synchronous>, transform_indices = @transform_2, window_bounds = array<i64: 1, 128>}, {pipeline_mode = #tpu.pipeline_mode<synchronous>, transform_indices = @transform_3, window_bounds = array<i64: 1, 128>}, {pipeline_mode = #tpu.pipeline_mode<synchronous>, transform_indices = @transform_4, window_bounds = array<i64: 2, 8, 8, 128>}]} {
    %cst = arith.constant 0.000000e+00 : bf16
    %0 = vector.broadcast %cst : bf16 to vector<2x1x48x128xbf16>
    %c0 = arith.constant 0 : index
    %c0_0 = arith.constant 0 : index
    %c0_1 = arith.constant 0 : index
    %c0_2 = arith.constant 0 : index
    %1 = vector.load %arg6[%c0, %c0_0, %c0_1, %c0_2] : memref<2x18x48x128xbf16, #tpu.memory_space<vmem>>, vector<2x1x48x128xbf16>
    tpu.vector_store %arg6[%c0, %c0_0, %c0_1, %c0_2], %0 {strides = array<i32>} : memref<2x18x48x128xbf16, #tpu.memory_space<vmem>>, vector<2x1x48x128xbf16>,
    %c0_3 = arith.constant 0 : index
    %c17 = arith.constant 17 : index
    %c0_4 = arith.constant 0 : index
    %c0_5 = arith.constant 0 : index
    %2 = vector.load %arg6[%c0_3, %c17, %c0_4, %c0_5] : memref<2x18x48x128xbf16, #tpu.memory_space<vmem>>, vector<2x1x48x128xbf16>
    tpu.vector_store %arg6[%c0_3, %c17, %c0_4, %c0_5], %0 {strides = array<i32>} : memref<2x18x48x128xbf16, #tpu.memory_space<vmem>>, vector<2x1x48x128xbf16>,
    %cst_6 = arith.constant 0.000000e+00 : bf16
    %3 = vector.broadcast %cst_6 : bf16 to vector<2x16x16x128xbf16>
    %c0_7 = arith.constant 0 : index
    %c1 = arith.constant 1 : index
    %c0_8 = arith.constant 0 : index
    %c0_9 = arith.constant 0 : index
    %4 = vector.load %arg6[%c0_7, %c1, %c0_8, %c0_9] : memref<2x18x48x128xbf16, #tpu.memory_space<vmem>>, vector<2x16x16x128xbf16>
    tpu.vector_store %arg6[%c0_7, %c1, %c0_8, %c0_9], %3 {strides = array<i32>} : memref<2x18x48x128xbf16, #tpu.memory_space<vmem>>, vector<2x16x16x128xbf16>,
    %c0_10 = arith.constant 0 : index
    %c1_11 = arith.constant 1 : index
    %c32 = arith.constant 32 : index
    %c0_12 = arith.constant 0 : index
    %5 = vector.load %arg6[%c0_10, %c1_11, %c32, %c0_12] : memref<2x18x48x128xbf16, #tpu.memory_space<vmem>>, vector<2x16x16x128xbf16>
    tpu.vector_store %arg6[%c0_10, %c1_11, %c32, %c0_12], %3 {strides = array<i32>} : memref<2x18x48x128xbf16, #tpu.memory_space<vmem>>, vector<2x16x16x128xbf16>,
    %c0_13 = arith.constant 0 : index
    %c0_14 = arith.constant 0 : index
    %c0_15 = arith.constant 0 : index
    %c0_16 = arith.constant 0 : index
    %6 = vector.load %arg1[%c0_13, %c0_14, %c0_15, %c0_16] : memref<2x16x16x128xbf16, #tpu.memory_space<vmem>>, vector<2x16x16x128xbf16>
    %c0_17 = arith.constant 0 : index
    %c1_18 = arith.constant 1 : index
    %c16 = arith.constant 16 : index
    %c0_19 = arith.constant 0 : index
    %7 = vector.load %arg6[%c0_17, %c1_18, %c16, %c0_19] : memref<2x18x48x128xbf16, #tpu.memory_space<vmem>>, vector<2x16x16x128xbf16>
    tpu.vector_store %arg6[%c0_17, %c1_18, %c16, %c0_19], %6 {strides = array<i32>} : memref<2x18x48x128xbf16, #tpu.memory_space<vmem>>, vector<2x16x16x128xbf16>,
    %c0_20 = arith.constant 0 : index
    %c0_21 = arith.constant 0 : index
    %c0_22 = arith.constant 0 : index
    %c0_23 = arith.constant 0 : index
    %8 = vector.load %arg6[%c0_20, %c0_21, %c0_22, %c0_23] : memref<2x18x48x128xbf16, #tpu.memory_space<vmem>>, vector<2x18x48x128xbf16>
    %c0_24 = arith.constant 0 : index
    %c0_25 = arith.constant 0 : index
    %9 = vector.load %arg2[%c0_24, %c0_25] : memref<1152x128xbf16, #tpu.memory_space<vmem>>, vector<1152x128xbf16>
    %10 = vector.extract_strided_slice %8 {offsets = [0, 0, 15, 0], sizes = [2, 16, 16, 128], strides = [1, 1, 1, 1]} : vector<2x18x48x128xbf16> to vector<2x16x16x128xbf16>
    %11 = vector.extract_strided_slice %8 {offsets = [0, 0, 16, 0], sizes = [2, 16, 16, 128], strides = [1, 1, 1, 1]} : vector<2x18x48x128xbf16> to vector<2x16x16x128xbf16>
    %12 = vector.extract_strided_slice %8 {offsets = [0, 0, 17, 0], sizes = [2, 16, 16, 128], strides = [1, 1, 1, 1]} : vector<2x18x48x128xbf16> to vector<2x16x16x128xbf16>
    %13 = vector.extract_strided_slice %8 {offsets = [0, 1, 15, 0], sizes = [2, 16, 16, 128], strides = [1, 1, 1, 1]} : vector<2x18x48x128xbf16> to vector<2x16x16x128xbf16>
    %14 = vector.extract_strided_slice %8 {offsets = [0, 1, 16, 0], sizes = [2, 16, 16, 128], strides = [1, 1, 1, 1]} : vector<2x18x48x128xbf16> to vector<2x16x16x128xbf16>
    %15 = vector.extract_strided_slice %8 {offsets = [0, 1, 17, 0], sizes = [2, 16, 16, 128], strides = [1, 1, 1, 1]} : vector<2x18x48x128xbf16> to vector<2x16x16x128xbf16>
    %16 = vector.extract_strided_slice %8 {offsets = [0, 2, 15, 0], sizes = [2, 16, 16, 128], strides = [1, 1, 1, 1]} : vector<2x18x48x128xbf16> to vector<2x16x16x128xbf16>
    %17 = vector.extract_strided_slice %8 {offsets = [0, 2, 16, 0], sizes = [2, 16, 16, 128], strides = [1, 1, 1, 1]} : vector<2x18x48x128xbf16> to vector<2x16x16x128xbf16>
    %18 = vector.extract_strided_slice %8 {offsets = [0, 2, 17, 0], sizes = [2, 16, 16, 128], strides = [1, 1, 1, 1]} : vector<2x18x48x128xbf16> to vector<2x16x16x128xbf16>
    %19 = tpu.concatenate %10, %11, %12, %13, %14, %15, %16, %17, %18 in 3 : vector<2x16x16x128xbf16>, vector<2x16x16x128xbf16>, vector<2x16x16x128xbf16>, vector<2x16x16x128xbf16>, vector<2x16x16x128xbf16>, vector<2x16x16x128xbf16>, vector<2x16x16x128xbf16>, vector<2x16x16x128xbf16>, vector<2x16x16x128xbf16> -> vector<2x16x16x1152xbf16>
    %20 = vector.shape_cast %19 : vector<2x16x16x1152xbf16> to vector<512x1152xbf16>
    %cst_26 = arith.constant dense<0.000000e+00> : vector<512x128xf32>
    %21 = tpu.matmul %20, %9, %cst_26 {dimension_numbers = #tpu.dot_dimension_numbers<[1], [0], [0], [1], [0, 0, 1, 1], [], []>} : vector<512x1152xbf16>, vector<1152x128xbf16>, vector<512x128xf32> -> vector<512x128xf32>
    %cst_27 = arith.constant dense<0.000000e+00> : vector<128xf32>
    %22 = vector.multi_reduction <add>, %21, %cst_27 [0] : vector<512x128xf32> to vector<128xf32>
    %23 = vector.shape_cast %22 : vector<128xf32> to vector<1x128xf32>
    %cst_28 = arith.constant 0.001953125 : f32
    %24 = vector.broadcast %cst_28 : f32 to vector<1x128xf32>
    %25 = arith.mulf %23, %24 : vector<1x128xf32>
    %26 = arith.mulf %21, %21 : vector<512x128xf32>
    %cst_29 = arith.constant dense<0.000000e+00> : vector<128xf32>
    %27 = vector.multi_reduction <add>, %26, %cst_29 [0] : vector<512x128xf32> to vector<128xf32>
    %28 = vector.shape_cast %27 : vector<128xf32> to vector<1x128xf32>
    %cst_30 = arith.constant 0.001953125 : f32
    %29 = vector.broadcast %cst_30 : f32 to vector<1x128xf32>
    %30 = arith.mulf %28, %29 : vector<1x128xf32>
    %31 = arith.mulf %25, %25 : vector<1x128xf32>
    %32 = arith.subf %30, %31 : vector<1x128xf32>
    %cst_31 = arith.constant 0.000000e+00 : f32
    %33 = vector.broadcast %cst_31 : f32 to vector<1x128xf32>
    %34 = arith.maximumf %32, %33 : vector<1x128xf32>
    %c0_32 = arith.constant 0 : index
    %c0_33 = arith.constant 0 : index
    %35 = vector.load %arg3[%c0_32, %c0_33] : memref<1x128xf32, #tpu.memory_space<vmem>>, vector<1x128xf32>
    %cst_34 = arith.constant 9.99999974E-6 : f32
    %36 = vector.broadcast %cst_34 : f32 to vector<1x128xf32>
    %37 = arith.addf %34, %36 : vector<1x128xf32>
    %38 = math.rsqrt %37 : vector<1x128xf32>
    %39 = arith.mulf %35, %38 : vector<1x128xf32>
    %c0_35 = arith.constant 0 : index
    %c0_36 = arith.constant 0 : index
    %40 = vector.load %arg4[%c0_35, %c0_36] : memref<1x128xf32, #tpu.memory_space<vmem>>, vector<1x128xf32>
    %41 = arith.mulf %25, %39 : vector<1x128xf32>
    %42 = arith.subf %40, %41 : vector<1x128xf32>
    %43 = vector.broadcast %39 : vector<1x128xf32> to vector<512x128xf32>
    %44 = arith.mulf %21, %43 : vector<512x128xf32>
    %45 = vector.broadcast %42 : vector<1x128xf32> to vector<512x128xf32>
    %46 = arith.addf %44, %45 : vector<512x128xf32>
    %cst_37 = arith.constant 0.000000e+00 : f32
    %47 = vector.broadcast %cst_37 : f32 to vector<512x128xf32>
    %48 = arith.maximumf %46, %47 : vector<512x128xf32>
    %49 = vector.shape_cast %48 : vector<512x128xf32> to vector<2x8x2x16x128xf32>
    %50 = vector.extract_strided_slice %49 {offsets = [0, 0, 0, 0, 0], sizes = [2, 8, 1, 16, 128], strides = [1, 1, 1, 1, 1]} : vector<2x8x2x16x128xf32> to vector<2x8x1x16x128xf32>
    %51 = vector.shape_cast %50 : vector<2x8x1x16x128xf32> to vector<2x8x16x128xf32>
    %52 = vector.extract_strided_slice %49 {offsets = [0, 0, 1, 0, 0], sizes = [2, 8, 1, 16, 128], strides = [1, 1, 1, 1, 1]} : vector<2x8x2x16x128xf32> to vector<2x8x1x16x128xf32>
    %53 = vector.shape_cast %52 : vector<2x8x1x16x128xf32> to vector<2x8x16x128xf32>
    %54 = arith.maximumf %51, %53 : vector<2x8x16x128xf32>
    %c0_38 = arith.constant 0 : index
    %c0_39 = arith.constant 0 : index
    %c0_40 = arith.constant 0 : index
    %c0_41 = arith.constant 0 : index
    %55 = vector.load %arg7[%c0_38, %c0_39, %c0_40, %c0_41] : memref<2x8x16x128xf32, #tpu.memory_space<vmem>>, vector<2x8x16x128xf32>
    tpu.vector_store %arg7[%c0_38, %c0_39, %c0_40, %c0_41], %54 {strides = array<i32>} : memref<2x8x16x128xf32, #tpu.memory_space<vmem>>, vector<2x8x16x128xf32>,
    %c0_42 = arith.constant 0 : index
    %c0_43 = arith.constant 0 : index
    %c0_44 = arith.constant 0 : index
    %c0_45 = arith.constant 0 : index
    %56 = tpu.strided_load %arg7[%c0_42, %c0_43, %c0_44, %c0_45] {strides = array<i32: 1, 1, 2, 1>} : memref<2x8x16x128xf32, #tpu.memory_space<vmem>>, vector<2x8x8x128xf32>
    %c0_46 = arith.constant 0 : index
    %c0_47 = arith.constant 0 : index
    %c1_48 = arith.constant 1 : index
    %c0_49 = arith.constant 0 : index
    %57 = tpu.strided_load %arg7[%c0_46, %c0_47, %c1_48, %c0_49] {strides = array<i32: 1, 1, 2, 1>} : memref<2x8x16x128xf32, #tpu.memory_space<vmem>>, vector<2x8x8x128xf32>
    %58 = arith.maximumf %56, %57 : vector<2x8x8x128xf32>
    %59 = arith.truncf %58 : vector<2x8x8x128xf32> to vector<2x8x8x128xbf16>
    %c0_50 = arith.constant 0 : index
    %c0_51 = arith.constant 0 : index
    %c0_52 = arith.constant 0 : index
    %c0_53 = arith.constant 0 : index
    %60 = vector.load %arg5[%c0_50, %c0_51, %c0_52, %c0_53] : memref<2x8x8x128xbf16, #tpu.memory_space<vmem>>, vector<2x8x8x128xbf16>
    tpu.vector_store %arg5[%c0_50, %c0_51, %c0_52, %c0_53], %59 {strides = array<i32>} : memref<2x8x8x128xbf16, #tpu.memory_space<vmem>>, vector<2x8x8x128xbf16>,
    return
  }
  func.func @transform_0(%arg0: i32) -> (i32, i32, i32, i32) {
    %c0_i32 = arith.constant 0 : i32
    %c0_i32_0 = arith.constant 0 : i32
    %c0_i32_1 = arith.constant 0 : i32
    %c0_i32_2 = arith.constant 0 : i32
    %c0_i32_3 = arith.constant 0 : i32
    return %c0_i32, %c0_i32_0, %c0_i32_1, %c0_i32_2 : i32, i32, i32, i32
  }
  func.func @transform_1(%arg0: i32) -> (i32, i32) {
    %c0_i32 = arith.constant 0 : i32
    %c0_i32_0 = arith.constant 0 : i32
    %c0_i32_1 = arith.constant 0 : i32
    return %c0_i32, %c0_i32_0 : i32, i32
  }
  func.func @transform_2(%arg0: i32) -> (i32, i32) {
    %c0_i32 = arith.constant 0 : i32
    %c0_i32_0 = arith.constant 0 : i32
    %c0_i32_1 = arith.constant 0 : i32
    return %c0_i32, %c0_i32_0 : i32, i32
  }
  func.func @transform_3(%arg0: i32) -> (i32, i32) {
    %c0_i32 = arith.constant 0 : i32
    %c0_i32_0 = arith.constant 0 : i32
    %c0_i32_1 = arith.constant 0 : i32
    return %c0_i32, %c0_i32_0 : i32, i32
  }
  func.func @transform_4(%arg0: i32) -> (i32, i32, i32, i32) {
    %c0_i32 = arith.constant 0 : i32
    %c0_i32_0 = arith.constant 0 : i32
    %c0_i32_1 = arith.constant 0 : i32
    %c0_i32_2 = arith.constant 0 : i32
    %c0_i32_3 = arith.constant 0 : i32
    return %c0_i32, %c0_i32_0, %c0_i32_1, %c0_i32_2 : i32, i32, i32, i32
  }
}

module attributes {stable_mosaic.version = 11 : i64} {
  func.func @kernel(%arg0: i32, %arg1: memref<2x8x8x128xbf16, #tpu.memory_space<vmem>>, %arg2: memref<1152x128xbf16, #tpu.memory_space<vmem>>, %arg3: memref<1x128xf32, #tpu.memory_space<vmem>>, %arg4: memref<1x128xf32, #tpu.memory_space<vmem>>, %arg5: memref<128x128xbf16, #tpu.memory_space<vmem>>, %arg6: memref<1x128xf32, #tpu.memory_space<vmem>>, %arg7: memref<2x128xf32, #tpu.memory_space<vmem>>, %arg8: memref<2x10x40x128xbf16, #tpu.memory_space<vmem>>, %arg9: memref<2x4x8x128xf32, #tpu.memory_space<vmem>>) attributes {dimension_semantics = [#tpu.dimension_semantics<arbitrary>], iteration_bounds = array<i64: 1>, scalar_prefetch = 0 : i64, scratch_operands = 2 : i64, tpu.core_type = #tpu.core_type<tc>, window_params = [{pipeline_mode = #tpu.pipeline_mode<synchronous>, transform_indices = @transform_0, window_bounds = array<i64: 2, 8, 8, 128>}, {pipeline_mode = #tpu.pipeline_mode<synchronous>, transform_indices = @transform_1, window_bounds = array<i64: 1152, 128>}, {pipeline_mode = #tpu.pipeline_mode<synchronous>, transform_indices = @transform_2, window_bounds = array<i64: 1, 128>}, {pipeline_mode = #tpu.pipeline_mode<synchronous>, transform_indices = @transform_3, window_bounds = array<i64: 1, 128>}, {pipeline_mode = #tpu.pipeline_mode<synchronous>, transform_indices = @transform_4, window_bounds = array<i64: 128, 128>}, {pipeline_mode = #tpu.pipeline_mode<synchronous>, transform_indices = @transform_5, window_bounds = array<i64: 1, 128>}, {pipeline_mode = #tpu.pipeline_mode<synchronous>, transform_indices = @transform_6, window_bounds = array<i64: 2, 128>}]} {
    %cst = arith.constant 0.000000e+00 : bf16
    %0 = vector.broadcast %cst : bf16 to vector<2x1x40x128xbf16>
    %c0 = arith.constant 0 : index
    %c0_0 = arith.constant 0 : index
    %c0_1 = arith.constant 0 : index
    %c0_2 = arith.constant 0 : index
    %1 = vector.load %arg8[%c0, %c0_0, %c0_1, %c0_2] : memref<2x10x40x128xbf16, #tpu.memory_space<vmem>>, vector<2x1x40x128xbf16>
    tpu.vector_store %arg8[%c0, %c0_0, %c0_1, %c0_2], %0 {strides = array<i32>} : memref<2x10x40x128xbf16, #tpu.memory_space<vmem>>, vector<2x1x40x128xbf16>,
    %c0_3 = arith.constant 0 : index
    %c9 = arith.constant 9 : index
    %c0_4 = arith.constant 0 : index
    %c0_5 = arith.constant 0 : index
    %2 = vector.load %arg8[%c0_3, %c9, %c0_4, %c0_5] : memref<2x10x40x128xbf16, #tpu.memory_space<vmem>>, vector<2x1x40x128xbf16>
    tpu.vector_store %arg8[%c0_3, %c9, %c0_4, %c0_5], %0 {strides = array<i32>} : memref<2x10x40x128xbf16, #tpu.memory_space<vmem>>, vector<2x1x40x128xbf16>,
    %cst_6 = arith.constant 0.000000e+00 : bf16
    %3 = vector.broadcast %cst_6 : bf16 to vector<2x8x16x128xbf16>
    %c0_7 = arith.constant 0 : index
    %c1 = arith.constant 1 : index
    %c0_8 = arith.constant 0 : index
    %c0_9 = arith.constant 0 : index
    %4 = vector.load %arg8[%c0_7, %c1, %c0_8, %c0_9] : memref<2x10x40x128xbf16, #tpu.memory_space<vmem>>, vector<2x8x16x128xbf16>
    tpu.vector_store %arg8[%c0_7, %c1, %c0_8, %c0_9], %3 {strides = array<i32>} : memref<2x10x40x128xbf16, #tpu.memory_space<vmem>>, vector<2x8x16x128xbf16>,
    %c0_10 = arith.constant 0 : index
    %c1_11 = arith.constant 1 : index
    %c24 = arith.constant 24 : index
    %c0_12 = arith.constant 0 : index
    %5 = vector.load %arg8[%c0_10, %c1_11, %c24, %c0_12] : memref<2x10x40x128xbf16, #tpu.memory_space<vmem>>, vector<2x8x16x128xbf16>
    tpu.vector_store %arg8[%c0_10, %c1_11, %c24, %c0_12], %3 {strides = array<i32>} : memref<2x10x40x128xbf16, #tpu.memory_space<vmem>>, vector<2x8x16x128xbf16>,
    %c0_13 = arith.constant 0 : index
    %c0_14 = arith.constant 0 : index
    %c0_15 = arith.constant 0 : index
    %c0_16 = arith.constant 0 : index
    %6 = vector.load %arg1[%c0_13, %c0_14, %c0_15, %c0_16] : memref<2x8x8x128xbf16, #tpu.memory_space<vmem>>, vector<2x8x8x128xbf16>
    %c0_17 = arith.constant 0 : index
    %c1_18 = arith.constant 1 : index
    %c16 = arith.constant 16 : index
    %c0_19 = arith.constant 0 : index
    %7 = vector.load %arg8[%c0_17, %c1_18, %c16, %c0_19] : memref<2x10x40x128xbf16, #tpu.memory_space<vmem>>, vector<2x8x8x128xbf16>
    tpu.vector_store %arg8[%c0_17, %c1_18, %c16, %c0_19], %6 {strides = array<i32>} : memref<2x10x40x128xbf16, #tpu.memory_space<vmem>>, vector<2x8x8x128xbf16>,
    %c0_20 = arith.constant 0 : index
    %c0_21 = arith.constant 0 : index
    %c0_22 = arith.constant 0 : index
    %c0_23 = arith.constant 0 : index
    %8 = vector.load %arg8[%c0_20, %c0_21, %c0_22, %c0_23] : memref<2x10x40x128xbf16, #tpu.memory_space<vmem>>, vector<2x10x40x128xbf16>
    %c0_24 = arith.constant 0 : index
    %c0_25 = arith.constant 0 : index
    %9 = vector.load %arg2[%c0_24, %c0_25] : memref<1152x128xbf16, #tpu.memory_space<vmem>>, vector<1152x128xbf16>
    %10 = vector.extract_strided_slice %8 {offsets = [0, 0, 15, 0], sizes = [2, 8, 8, 128], strides = [1, 1, 1, 1]} : vector<2x10x40x128xbf16> to vector<2x8x8x128xbf16>
    %11 = vector.extract_strided_slice %8 {offsets = [0, 0, 16, 0], sizes = [2, 8, 8, 128], strides = [1, 1, 1, 1]} : vector<2x10x40x128xbf16> to vector<2x8x8x128xbf16>
    %12 = vector.extract_strided_slice %8 {offsets = [0, 0, 17, 0], sizes = [2, 8, 8, 128], strides = [1, 1, 1, 1]} : vector<2x10x40x128xbf16> to vector<2x8x8x128xbf16>
    %13 = vector.extract_strided_slice %8 {offsets = [0, 1, 15, 0], sizes = [2, 8, 8, 128], strides = [1, 1, 1, 1]} : vector<2x10x40x128xbf16> to vector<2x8x8x128xbf16>
    %14 = vector.extract_strided_slice %8 {offsets = [0, 1, 16, 0], sizes = [2, 8, 8, 128], strides = [1, 1, 1, 1]} : vector<2x10x40x128xbf16> to vector<2x8x8x128xbf16>
    %15 = vector.extract_strided_slice %8 {offsets = [0, 1, 17, 0], sizes = [2, 8, 8, 128], strides = [1, 1, 1, 1]} : vector<2x10x40x128xbf16> to vector<2x8x8x128xbf16>
    %16 = vector.extract_strided_slice %8 {offsets = [0, 2, 15, 0], sizes = [2, 8, 8, 128], strides = [1, 1, 1, 1]} : vector<2x10x40x128xbf16> to vector<2x8x8x128xbf16>
    %17 = vector.extract_strided_slice %8 {offsets = [0, 2, 16, 0], sizes = [2, 8, 8, 128], strides = [1, 1, 1, 1]} : vector<2x10x40x128xbf16> to vector<2x8x8x128xbf16>
    %18 = vector.extract_strided_slice %8 {offsets = [0, 2, 17, 0], sizes = [2, 8, 8, 128], strides = [1, 1, 1, 1]} : vector<2x10x40x128xbf16> to vector<2x8x8x128xbf16>
    %19 = tpu.concatenate %10, %11, %12, %13, %14, %15, %16, %17, %18 in 3 : vector<2x8x8x128xbf16>, vector<2x8x8x128xbf16>, vector<2x8x8x128xbf16>, vector<2x8x8x128xbf16>, vector<2x8x8x128xbf16>, vector<2x8x8x128xbf16>, vector<2x8x8x128xbf16>, vector<2x8x8x128xbf16>, vector<2x8x8x128xbf16> -> vector<2x8x8x1152xbf16>
    %20 = vector.shape_cast %19 : vector<2x8x8x1152xbf16> to vector<128x1152xbf16>
    %cst_26 = arith.constant dense<0.000000e+00> : vector<128x128xf32>
    %21 = tpu.matmul %20, %9, %cst_26 {dimension_numbers = #tpu.dot_dimension_numbers<[1], [0], [0], [1], [0, 0, 1, 1], [], []>} : vector<128x1152xbf16>, vector<1152x128xbf16>, vector<128x128xf32> -> vector<128x128xf32>
    %cst_27 = arith.constant dense<0.000000e+00> : vector<128xf32>
    %22 = vector.multi_reduction <add>, %21, %cst_27 [0] : vector<128x128xf32> to vector<128xf32>
    %23 = vector.shape_cast %22 : vector<128xf32> to vector<1x128xf32>
    %cst_28 = arith.constant 7.812500e-03 : f32
    %24 = vector.broadcast %cst_28 : f32 to vector<1x128xf32>
    %25 = arith.mulf %23, %24 : vector<1x128xf32>
    %26 = arith.mulf %21, %21 : vector<128x128xf32>
    %cst_29 = arith.constant dense<0.000000e+00> : vector<128xf32>
    %27 = vector.multi_reduction <add>, %26, %cst_29 [0] : vector<128x128xf32> to vector<128xf32>
    %28 = vector.shape_cast %27 : vector<128xf32> to vector<1x128xf32>
    %cst_30 = arith.constant 7.812500e-03 : f32
    %29 = vector.broadcast %cst_30 : f32 to vector<1x128xf32>
    %30 = arith.mulf %28, %29 : vector<1x128xf32>
    %31 = arith.mulf %25, %25 : vector<1x128xf32>
    %32 = arith.subf %30, %31 : vector<1x128xf32>
    %cst_31 = arith.constant 0.000000e+00 : f32
    %33 = vector.broadcast %cst_31 : f32 to vector<1x128xf32>
    %34 = arith.maximumf %32, %33 : vector<1x128xf32>
    %c0_32 = arith.constant 0 : index
    %c0_33 = arith.constant 0 : index
    %35 = vector.load %arg3[%c0_32, %c0_33] : memref<1x128xf32, #tpu.memory_space<vmem>>, vector<1x128xf32>
    %cst_34 = arith.constant 9.99999974E-6 : f32
    %36 = vector.broadcast %cst_34 : f32 to vector<1x128xf32>
    %37 = arith.addf %34, %36 : vector<1x128xf32>
    %38 = math.rsqrt %37 : vector<1x128xf32>
    %39 = arith.mulf %35, %38 : vector<1x128xf32>
    %c0_35 = arith.constant 0 : index
    %c0_36 = arith.constant 0 : index
    %40 = vector.load %arg4[%c0_35, %c0_36] : memref<1x128xf32, #tpu.memory_space<vmem>>, vector<1x128xf32>
    %41 = arith.mulf %25, %39 : vector<1x128xf32>
    %42 = arith.subf %40, %41 : vector<1x128xf32>
    %43 = vector.broadcast %39 : vector<1x128xf32> to vector<128x128xf32>
    %44 = arith.mulf %21, %43 : vector<128x128xf32>
    %45 = vector.broadcast %42 : vector<1x128xf32> to vector<128x128xf32>
    %46 = arith.addf %44, %45 : vector<128x128xf32>
    %cst_37 = arith.constant 0.000000e+00 : f32
    %47 = vector.broadcast %cst_37 : f32 to vector<128x128xf32>
    %48 = arith.maximumf %46, %47 : vector<128x128xf32>
    %49 = vector.shape_cast %48 : vector<128x128xf32> to vector<2x4x2x8x128xf32>
    %50 = vector.extract_strided_slice %49 {offsets = [0, 0, 0, 0, 0], sizes = [2, 4, 1, 8, 128], strides = [1, 1, 1, 1, 1]} : vector<2x4x2x8x128xf32> to vector<2x4x1x8x128xf32>
    %51 = vector.shape_cast %50 : vector<2x4x1x8x128xf32> to vector<2x4x8x128xf32>
    %52 = vector.extract_strided_slice %49 {offsets = [0, 0, 1, 0, 0], sizes = [2, 4, 1, 8, 128], strides = [1, 1, 1, 1, 1]} : vector<2x4x2x8x128xf32> to vector<2x4x1x8x128xf32>
    %53 = vector.shape_cast %52 : vector<2x4x1x8x128xf32> to vector<2x4x8x128xf32>
    %54 = arith.maximumf %51, %53 : vector<2x4x8x128xf32>
    %c0_38 = arith.constant 0 : index
    %c0_39 = arith.constant 0 : index
    %c0_40 = arith.constant 0 : index
    %c0_41 = arith.constant 0 : index
    %55 = vector.load %arg9[%c0_38, %c0_39, %c0_40, %c0_41] : memref<2x4x8x128xf32, #tpu.memory_space<vmem>>, vector<2x4x8x128xf32>
    tpu.vector_store %arg9[%c0_38, %c0_39, %c0_40, %c0_41], %54 {strides = array<i32>} : memref<2x4x8x128xf32, #tpu.memory_space<vmem>>, vector<2x4x8x128xf32>,
    %c0_42 = arith.constant 0 : index
    %c0_43 = arith.constant 0 : index
    %c0_44 = arith.constant 0 : index
    %c0_45 = arith.constant 0 : index
    %56 = tpu.strided_load %arg9[%c0_42, %c0_43, %c0_44, %c0_45] {strides = array<i32: 1, 1, 2, 1>} : memref<2x4x8x128xf32, #tpu.memory_space<vmem>>, vector<2x4x4x128xf32>
    %c0_46 = arith.constant 0 : index
    %c0_47 = arith.constant 0 : index
    %c1_48 = arith.constant 1 : index
    %c0_49 = arith.constant 0 : index
    %57 = tpu.strided_load %arg9[%c0_46, %c0_47, %c1_48, %c0_49] {strides = array<i32: 1, 1, 2, 1>} : memref<2x4x8x128xf32, #tpu.memory_space<vmem>>, vector<2x4x4x128xf32>
    %58 = arith.maximumf %56, %57 : vector<2x4x4x128xf32>
    %59 = vector.shape_cast %58 : vector<2x4x4x128xf32> to vector<32x128xf32>
    %60 = arith.truncf %59 : vector<32x128xf32> to vector<32x128xbf16>
    %c0_50 = arith.constant 0 : index
    %c0_51 = arith.constant 0 : index
    %61 = vector.load %arg5[%c0_50, %c0_51] : memref<128x128xbf16, #tpu.memory_space<vmem>>, vector<128x128xbf16>
    %cst_52 = arith.constant dense<0.000000e+00> : vector<32x128xf32>
    %62 = tpu.matmul %60, %61, %cst_52 {dimension_numbers = #tpu.dot_dimension_numbers<[1], [0], [0], [1], [0, 0, 1, 1], [], []>} : vector<32x128xbf16>, vector<128x128xbf16>, vector<32x128xf32> -> vector<32x128xf32>
    %63 = vector.shape_cast %62 : vector<32x128xf32> to vector<2x16x128xf32>
    %cst_53 = arith.constant dense<0xFF800000> : vector<2x128xf32>
    %64 = vector.multi_reduction <maximumf>, %63, %cst_53 [1] : vector<2x16x128xf32> to vector<2x128xf32>
    %c0_54 = arith.constant 0 : index
    %c0_55 = arith.constant 0 : index
    %65 = vector.load %arg6[%c0_54, %c0_55] : memref<1x128xf32, #tpu.memory_space<vmem>>, vector<1x128xf32>
    %66 = vector.broadcast %65 : vector<1x128xf32> to vector<2x128xf32>
    %67 = arith.addf %64, %66 : vector<2x128xf32>
    %c0_56 = arith.constant 0 : index
    %c0_57 = arith.constant 0 : index
    %68 = vector.load %arg7[%c0_56, %c0_57] : memref<2x128xf32, #tpu.memory_space<vmem>>, vector<2x128xf32>
    tpu.vector_store %arg7[%c0_56, %c0_57], %67 {strides = array<i32>} : memref<2x128xf32, #tpu.memory_space<vmem>>, vector<2x128xf32>,
    return
  }
  func.func @transform_0(%arg0: i32) -> (i32, i32, i32, i32) {
    %c0_i32 = arith.constant 0 : i32
    %c0_i32_0 = arith.constant 0 : i32
    %c0_i32_1 = arith.constant 0 : i32
    %c0_i32_2 = arith.constant 0 : i32
    %c0_i32_3 = arith.constant 0 : i32
    return %c0_i32, %c0_i32_0, %c0_i32_1, %c0_i32_2 : i32, i32, i32, i32
  }
  func.func @transform_1(%arg0: i32) -> (i32, i32) {
    %c0_i32 = arith.constant 0 : i32
    %c0_i32_0 = arith.constant 0 : i32
    %c0_i32_1 = arith.constant 0 : i32
    return %c0_i32, %c0_i32_0 : i32, i32
  }
  func.func @transform_2(%arg0: i32) -> (i32, i32) {
    %c0_i32 = arith.constant 0 : i32
    %c0_i32_0 = arith.constant 0 : i32
    %c0_i32_1 = arith.constant 0 : i32
    return %c0_i32, %c0_i32_0 : i32, i32
  }
  func.func @transform_3(%arg0: i32) -> (i32, i32) {
    %c0_i32 = arith.constant 0 : i32
    %c0_i32_0 = arith.constant 0 : i32
    %c0_i32_1 = arith.constant 0 : i32
    return %c0_i32, %c0_i32_0 : i32, i32
  }
  func.func @transform_4(%arg0: i32) -> (i32, i32) {
    %c0_i32 = arith.constant 0 : i32
    %c0_i32_0 = arith.constant 0 : i32
    %c0_i32_1 = arith.constant 0 : i32
    return %c0_i32, %c0_i32_0 : i32, i32
  }
  func.func @transform_5(%arg0: i32) -> (i32, i32) {
    %c0_i32 = arith.constant 0 : i32
    %c0_i32_0 = arith.constant 0 : i32
    %c0_i32_1 = arith.constant 0 : i32
    return %c0_i32, %c0_i32_0 : i32, i32
  }
  func.func @transform_6(%arg0: i32) -> (i32, i32) {
    %c0_i32 = arith.constant 0 : i32
    %c0_i32_0 = arith.constant 0 : i32
    %c0_i32_1 = arith.constant 0 : i32
    return %c0_i32, %c0_i32_0 : i32, i32
  }
}

</mosaic_0001>

<llo_original>
// kernel: _lambda_.3
$region0: #{_lambda_.3}
  #allocation0 [shape = 'u32[]', space=smem, size = 0x4, offset = 0x4, fixed_abs, tag = 'smem constant byte address 0x4 - core index']
  #allocation1 [shape = 'u32[144,128]{1,0:T(1,128)}', space=vmem, size = 0x12000, scoped, tag = 'internal scratch']
  #allocation2 [shape = 'bf16[2,10,40,128]{3,2,1,0:T(8,128)(2,1)}', space=vmem, size = 0x32000, scoped, tag = 'scratch operand']
  #allocation3 [shape = 'f32[2,4,8,128]{3,2,1,0:T(8,128)}', space=vmem, size = 0x8000, scoped, tag = 'scratch operand']
  %s0 = inlined_call_operand.vmem [shape: bf16[2,8,8,128], index: 0, kind: input, shape index: {}]
  %s1 = inlined_call_operand.vmem [shape: bf16[1152,128], index: 1, kind: input, shape index: {}]
  %s2 = inlined_call_operand.vmem [shape: f32[1,128], index: 2, kind: input, shape index: {}]
  %s3 = inlined_call_operand.vmem [shape: f32[1,128], index: 3, kind: input, shape index: {}]
  %s4 = inlined_call_operand.vmem [shape: bf16[128,128], index: 4, kind: input, shape index: {}]
  %s5 = inlined_call_operand.vmem [shape: f32[1,128], index: 5, kind: input, shape index: {}]
  %s6 = inlined_call_operand.hbm [shape: f32[2,128], index: 6, kind: output, shape index: {}]
  %s7 = sld [smem:[#allocation0]]
  $region34: #{_lambda_.3} parent=0
    _
  %s9 = ssub.s32 1, %s7
  %s10 = scalar_select 0, %s9, %s7
  $region1: #{_lambda_.3} parent=0
    #allocation4 [shape = 'u8[1024]{0}', space=vmem, size = 0x400, scoped, tag = 'output window, operand 0, single buffered']
    #allocation5 [shape = 's32[1]{0}', space=sflag, size = 0x4, scoped, tag = 'scoped memory for _lambda_.3']
    %11 = vsyncpa [#allocation5], 0
    // Predicated region
    $region2: #{_lambda_.3} parent=1 // pred_check
      _
    $region3: #{_lambda_.3} parent=1 // pred_check_branch
      %13 = sbr.rel (0) target = $region5
    $region4: #{_lambda_.3} parent=1 // pred_region
      _
    $region5: #{_lambda_.3} parent=1 // pred_fallthru
      _
    // Predicated region
    $region6: #{_lambda_.3} parent=1 // pred_check
      _
    $region7: #{_lambda_.3} parent=1 // pred_check_branch
      %15 = sbr.rel (0) target = $region9
    $region8: #{_lambda_.3} parent=1 // pred_region
      _
    $region9: #{_lambda_.3} parent=1 // pred_fallthru
      _
    // Predicated region
    $region10: #{_lambda_.3} parent=1 // pred_check
      _
    $region11: #{_lambda_.3} parent=1 // pred_check_branch
      %17 = sbr.rel (0) target = $region13
    $region12: #{_lambda_.3} parent=1 // pred_region
      _
    $region13: #{_lambda_.3} parent=1 // pred_fallthru
      _
    // Predicated region
    $region14: #{_lambda_.3} parent=1 // pred_check
      _
    $region15: #{_lambda_.3} parent=1 // pred_check_branch
      %19 = sbr.rel (0) target = $region17
    $region16: #{_lambda_.3} parent=1 // pred_region
      _
    $region17: #{_lambda_.3} parent=1 // pred_fallthru
      _
    // Predicated region
    $region18: #{_lambda_.3} parent=1 // pred_check
      _
    $region19: #{_lambda_.3} parent=1 // pred_check_branch
      %21 = sbr.rel (0) target = $region21
    $region20: #{_lambda_.3} parent=1 // pred_region
      _
    $region21: #{_lambda_.3} parent=1 // pred_fallthru
      _
    // Predicated region
    $region22: #{_lambda_.3} parent=1 // pred_check
      _
    $region23: #{_lambda_.3} parent=1 // pred_check_branch
      %23 = sbr.rel (0) target = $region25
    $region24: #{_lambda_.3} parent=1 // pred_region
      _
    $region25: #{_lambda_.3} parent=1 // pred_fallthru
      _
    %25 = vst [vmem:[#allocation2] sm:$0xf] 0
    %26 = vst [vmem:[#allocation2 + $0x4] sm:$0xf] 0
    %27 = vst [vmem:[#allocation2 + $0x8] sm:$0xf] 0
    %28 = vst [vmem:[#allocation2 + $0xc] sm:$0xf] 0
    %29 = vst [vmem:[#allocation2 + $0x10] sm:$0xf] 0
    %30 = vst [vmem:[#allocation2 + $0xc8] sm:$0xf] 0
    %31 = vst [vmem:[#allocation2 + $0xcc] sm:$0xf] 0
    %32 = vst [vmem:[#allocation2 + $0xd0] sm:$0xf] 0
    %33 = vst [vmem:[#allocation2 + $0xd4] sm:$0xf] 0
    %34 = vst [vmem:[#allocation2 + $0xd8] sm:$0xf] 0
    %s35 = scalar_lea.vmem [#allocation2], 180
    %36 = vst [vmem:[%s35] sm:$0xf] 0
    %37 = vst [vmem:[%s35 + $0x4] sm:$0xf] 0
    %38 = vst [vmem:[%s35 + $0x8] sm:$0xf] 0
    %39 = vst [vmem:[%s35 + $0xc] sm:$0xf] 0
    %40 = vst [vmem:[%s35 + $0x10] sm:$0xf] 0
    %41 = vst [vmem:[%s35 + $0xc8] sm:$0xf] 0
    %42 = vst [vmem:[%s35 + $0xcc] sm:$0xf] 0
    %43 = vst [vmem:[%s35 + $0xd0] sm:$0xf] 0
    %44 = vst [vmem:[%s35 + $0xd4] sm:$0xf] 0
    %45 = vst [vmem:[%s35 + $0xd8] sm:$0xf] 0
    %s46 = scalar_lea.vmem [#allocation2], 20
    %47 = vst [vmem:[%s46] sm:$0xf] 0
    %48 = vst [vmem:[%s46 + $0x4] sm:$0xf] 0
    %49 = vst [vmem:[%s46 + $0x14] sm:$0xf] 0
    %50 = vst [vmem:[%s46 + $0x18] sm:$0xf] 0
    %51 = vst [vmem:[%s46 + $0x28] sm:$0xf] 0
    %52 = vst [vmem:[%s46 + $0x2c] sm:$0xf] 0
    %53 = vst [vmem:[%s46 + $0x3c] sm:$0xf] 0
    %54 = vst [vmem:[%s46 + $0x40] sm:$0xf] 0
    %55 = vst [vmem:[%s46 + $0x50] sm:$0xf] 0
    %56 = vst [vmem:[%s46 + $0x54] sm:$0xf] 0
    %57 = vst [vmem:[%s46 + $0x64] sm:$0xf] 0
    %58 = vst [vmem:[%s46 + $0x68] sm:$0xf] 0
    %59 = vst [vmem:[%s46 + $0x78] sm:$0xf] 0
    %60 = vst [vmem:[%s46 + $0x7c] sm:$0xf] 0
    %61 = vst [vmem:[%s46 + $0x8c] sm:$0xf] 0
    %62 = vst [vmem:[%s46 + $0x90] sm:$0xf] 0
    %63 = vst [vmem:[%s46 + $0xc8] sm:$0xf] 0
    %64 = vst [vmem:[%s46 + $0xcc] sm:$0xf] 0
    %65 = vst [vmem:[%s46 + $0xdc] sm:$0xf] 0
    %66 = vst [vmem:[%s46 + $0xe0] sm:$0xf] 0
    %67 = vst [vmem:[%s46 + $0xf0] sm:$0xf] 0
    %68 = vst [vmem:[%s46 + $0xf4] sm:$0xf] 0
    %69 = vst [vmem:[%s46 + $0x104] sm:$0xf] 0
    %70 = vst [vmem:[%s46 + $0x108] sm:$0xf] 0
    %71 = vst [vmem:[%s46 + $0x118] sm:$0xf] 0
    %72 = vst [vmem:[%s46 + $0x11c] sm:$0xf] 0
    %73 = vst [vmem:[%s46 + $0x12c] sm:$0xf] 0
    %74 = vst [vmem:[%s46 + $0x130] sm:$0xf] 0
    %75 = vst [vmem:[%s46 + $0x140] sm:$0xf] 0
    %76 = vst [vmem:[%s46 + $0x144] sm:$0xf] 0
    %77 = vst [vmem:[%s46 + $0x154] sm:$0xf] 0
    %78 = vst [vmem:[%s46 + $0x158] sm:$0xf] 0
    %79 = vst [vmem:[%s46 + $0xc] sm:$0xf] 0
    %80 = vst [vmem:[%s46 + $0x10] sm:$0xf] 0
    %81 = vst [vmem:[%s46 + $0x20] sm:$0xf] 0
    %82 = vst [vmem:[%s46 + $0x24] sm:$0xf] 0
    %83 = vst [vmem:[%s46 + $0x34] sm:$0xf] 0
    %84 = vst [vmem:[%s46 + $0x38] sm:$0xf] 0
    %85 = vst [vmem:[%s46 + $0x48] sm:$0xf] 0
    %86 = vst [vmem:[%s46 + $0x4c] sm:$0xf] 0
    %87 = vst [vmem:[%s46 + $0x5c] sm:$0xf] 0
    %88 = vst [vmem:[%s46 + $0x60] sm:$0xf] 0
    %89 = vst [vmem:[%s46 + $0x70] sm:$0xf] 0
    %90 = vst [vmem:[%s46 + $0x74] sm:$0xf] 0
    %91 = vst [vmem:[%s46 + $0x84] sm:$0xf] 0
    %92 = vst [vmem:[%s46 + $0x88] sm:$0xf] 0
    %93 = vst [vmem:[%s46 + $0x98] sm:$0xf] 0
    %94 = vst [vmem:[%s46 + $0x9c] sm:$0xf] 0
    %95 = vst [vmem:[%s46 + $0xd4] sm:$0xf] 0
    %96 = vst [vmem:[%s46 + $0xd8] sm:$0xf] 0
    %97 = vst [vmem:[%s46 + $0xe8] sm:$0xf] 0
    %98 = vst [vmem:[%s46 + $0xec] sm:$0xf] 0
    %99 = vst [vmem:[%s46 + $0xfc] sm:$0xf] 0
    %100 = vst [vmem:[%s46 + $0x100] sm:$0xf] 0
    %101 = vst [vmem:[%s46 + $0x110] sm:$0xf] 0
    %102 = vst [vmem:[%s46 + $0x114] sm:$0xf] 0
    %103 = vst [vmem:[%s46 + $0x124] sm:$0xf] 0
    %104 = vst [vmem:[%s46 + $0x128] sm:$0xf] 0
    %105 = vst [vmem:[%s46 + $0x138] sm:$0xf] 0
    %106 = vst [vmem:[%s46 + $0x13c] sm:$0xf] 0
    %107 = vst [vmem:[%s46 + $0x14c] sm:$0xf] 0
    %108 = vst [vmem:[%s46 + $0x150] sm:$0xf] 0
    %109 = vst [vmem:[%s46 + $0x160] sm:$0xf] 0
    %110 = vst [vmem:[%s46 + $0x164] sm:$0xf] 0
    %v111 = vld [vmem:[%s0] sm:$0xf]
    %v112 = vld [vmem:[%s0 + $0x4] sm:$0xf]
    %v113 = vld [vmem:[%s0 + $0x8] sm:$0xf]
    %v114 = vld [vmem:[%s0 + $0xc] sm:$0xf]
    %v115 = vld [vmem:[%s0 + $0x10] sm:$0xf]
    %v116 = vld [vmem:[%s0 + $0x14] sm:$0xf]
    %v117 = vld [vmem:[%s0 + $0x18] sm:$0xf]
    %v118 = vld [vmem:[%s0 + $0x1c] sm:$0xf]
    %v119 = vld [vmem:[%s0 + $0x20] sm:$0xf]
    %v120 = vld [vmem:[%s0 + $0x24] sm:$0xf]
    %v121 = vld [vmem:[%s0 + $0x28] sm:$0xf]
    %v122 = vld [vmem:[%s0 + $0x2c] sm:$0xf]
    %v123 = vld [vmem:[%s0 + $0x30] sm:$0xf]
    %v124 = vld [vmem:[%s0 + $0x34] sm:$0xf]
    %v125 = vld [vmem:[%s0 + $0x38] sm:$0xf]
    %v126 = vld [vmem:[%s0 + $0x3c] sm:$0xf]
    %127 = vst [vmem:[%s46 + $0x8] sm:$0xf] %v111
    %128 = vst [vmem:[%s46 + $0x1c] sm:$0xf] %v112
    %129 = vst [vmem:[%s46 + $0x30] sm:$0xf] %v113
    %130 = vst [vmem:[%s46 + $0x44] sm:$0xf] %v114
    %131 = vst [vmem:[%s46 + $0x58] sm:$0xf] %v115
    %132 = vst [vmem:[%s46 + $0x6c] sm:$0xf] %v116
    %133 = vst [vmem:[%s46 + $0x80] sm:$0xf] %v117
    %134 = vst [vmem:[%s46 + $0x94] sm:$0xf] %v118
    %135 = vst [vmem:[%s46 + $0xd0] sm:$0xf] %v119
    %136 = vst [vmem:[%s46 + $0xe4] sm:$0xf] %v120
    %137 = vst [vmem:[%s46 + $0xf8] sm:$0xf] %v121
    %138 = vst [vmem:[%s46 + $0x10c] sm:$0xf] %v122
    %139 = vst [vmem:[%s46 + $0x120] sm:$0xf] %v123
    %140 = vst [vmem:[%s46 + $0x134] sm:$0xf] %v124
    %141 = vst [vmem:[%s46 + $0x148] sm:$0xf] %v125
    %142 = vst [vmem:[%s46 + $0x15c] sm:$0xf] %v126
    %v143 = vld [vmem:[#allocation2 + $0x4] sm:$0xf]
    %v144 = vld [vmem:[#allocation2 + $0x8] sm:$0xf]
    %v145 = vld [vmem:[#allocation2 + $0xc] sm:$0xf]
    %v146 = vld [vmem:[#allocation2 + $0x18] sm:$0xf]
    %v147 = vld [vmem:[#allocation2 + $0x1c] sm:$0xf]
    %v148 = vld [vmem:[#allocation2 + $0x20] sm:$0xf]
    %v149 = vld [vmem:[#allocation2 + $0x2c] sm:$0xf]
    %v150 = vld [vmem:[#allocation2 + $0x30] sm:$0xf]
    %v151 = vld [vmem:[#allocation2 + $0x34] sm:$0xf]
    %v152 = vld [vmem:[#allocation2 + $0x40] sm:$0xf]
    %v153 = vld [vmem:[#allocation2 + $0x44] sm:$0xf]
    %v154 = vld [vmem:[#allocation2 + $0x48] sm:$0xf]
    %v155 = vld [vmem:[#allocation2 + $0x54] sm:$0xf]
    %v156 = vld [vmem:[#allocation2 + $0x58] sm:$0xf]
    %v157 = vld [vmem:[#allocation2 + $0x5c] sm:$0xf]
    %v158 = vld [vmem:[#allocation2 + $0x68] sm:$0xf]
    %v159 = vld [vmem:[#allocation2 + $0x6c] sm:$0xf]
    %v160 = vld [vmem:[#allocation2 + $0x70] sm:$0xf]
    %v161 = vld [vmem:[#allocation2 + $0x7c] sm:$0xf]
    %v162 = vld [vmem:[#allocation2 + $0x80] sm:$0xf]
    %v163 = vld [vmem:[#allocation2 + $0x84] sm:$0xf]
    %v164 = vld [vmem:[#allocation2 + $0x90] sm:$0xf]
    %v165 = vld [vmem:[#allocation2 + $0x94] sm:$0xf]
    %v166 = vld [vmem:[#allocation2 + $0x98] sm:$0xf]
    %v167 = vld [vmem:[#allocation2 + $0xa4] sm:$0xf]
    %v168 = vld [vmem:[#allocation2 + $0xa8] sm:$0xf]
    %v169 = vld [vmem:[#allocation2 + $0xac] sm:$0xf]
    %v170 = vld [vmem:[#allocation2 + $0xb8] sm:$0xf]
    %v171 = vld [vmem:[#allocation2 + $0xbc] sm:$0xf]
    %v172 = vld [vmem:[#allocation2 + $0xc0] sm:$0xf]
    %v173 = vld [vmem:[#allocation2 + $0xcc] sm:$0xf]
    %v174 = vld [vmem:[#allocation2 + $0xd0] sm:$0xf]
    %v175 = vld [vmem:[#allocation2 + $0xd4] sm:$0xf]
    %v176 = vld [vmem:[#allocation2 + $0xe0] sm:$0xf]
    %v177 = vld [vmem:[#allocation2 + $0xe4] sm:$0xf]
    %v178 = vld [vmem:[#allocation2 + $0xe8] sm:$0xf]
    %v179 = vld [vmem:[#allocation2 + $0xf4] sm:$0xf]
    %v180 = vld [vmem:[#allocation2 + $0xf8] sm:$0xf]
    %v181 = vld [vmem:[#allocation2 + $0xfc] sm:$0xf]
    %v182 = vld [vmem:[#allocation2 + $0x108] sm:$0xf]
    %v183 = vld [vmem:[#allocation2 + $0x10c] sm:$0xf]
    %v184 = vld [vmem:[#allocation2 + $0x110] sm:$0xf]
    %v185 = vld [vmem:[#allocation2 + $0x11c] sm:$0xf]
    %v186 = vld [vmem:[#allocation2 + $0x120] sm:$0xf]
    %v187 = vld [vmem:[#allocation2 + $0x124] sm:$0xf]
    %v188 = vld [vmem:[#allocation2 + $0x130] sm:$0xf]
    %v189 = vld [vmem:[#allocation2 + $0x134] sm:$0xf]
    %v190 = vld [vmem:[#allocation2 + $0x138] sm:$0xf]
    %v191 = vld [vmem:[#allocation2 + $0x144] sm:$0xf]
    %v192 = vld [vmem:[#allocation2 + $0x148] sm:$0xf]
    %v193 = vld [vmem:[#allocation2 + $0x14c] sm:$0xf]
    %v194 = vld [vmem:[#allocation2 + $0x158] sm:$0xf]
    %v195 = vld [vmem:[#allocation2 + $0x15c] sm:$0xf]
    %v196 = vld [vmem:[#allocation2 + $0x160] sm:$0xf]
    %v197 = vld [vmem:[#allocation2 + $0x16c] sm:$0xf]
    %v198 = vld [vmem:[#allocation2 + $0x170] sm:$0xf]
    %v199 = vld [vmem:[#allocation2 + $0x174] sm:$0xf]
    %v200 = vld [vmem:[#allocation2 + $0x180] sm:$0xf]
    %v201 = vld [vmem:[#allocation2 + $0x184] sm:$0xf]
    %v202 = vld [vmem:[#allocation2 + $0x188] sm:$0xf]
    %v203 = vld [vmem:[%s1] sm:$0xf]
    %v204 = vld [vmem:[%s1 + $0x4] sm:$0xf]
    %v205 = vld [vmem:[%s1 + $0x8] sm:$0xf]
    %v206 = vld [vmem:[%s1 + $0xc] sm:$0xf]
    %v207 = vld [vmem:[%s1 + $0x10] sm:$0xf]
    %v208 = vld [vmem:[%s1 + $0x14] sm:$0xf]
    %v209 = vld [vmem:[%s1 + $0x18] sm:$0xf]
    %v210 = vld [vmem:[%s1 + $0x1c] sm:$0xf]
    %v211 = vld [vmem:[%s1 + $0x20] sm:$0xf]
    %v212 = vld [vmem:[%s1 + $0x24] sm:$0xf]
    %v213 = vld [vmem:[%s1 + $0x28] sm:$0xf]
    %v214 = vld [vmem:[%s1 + $0x2c] sm:$0xf]
    %v215 = vld [vmem:[%s1 + $0x30] sm:$0xf]
    %v216 = vld [vmem:[%s1 + $0x34] sm:$0xf]
    %v217 = vld [vmem:[%s1 + $0x38] sm:$0xf]
    %v218 = vld [vmem:[%s1 + $0x3c] sm:$0xf]
    %v219 = vld [vmem:[%s1 + $0x40] sm:$0xf]
    %v220 = vld [vmem:[%s1 + $0x44] sm:$0xf]
    %v221 = vld [vmem:[%s1 + $0x48] sm:$0xf]
    %v222 = vld [vmem:[%s1 + $0x4c] sm:$0xf]
    %v223 = vld [vmem:[%s1 + $0x50] sm:$0xf]
    %v224 = vld [vmem:[%s1 + $0x54] sm:$0xf]
    %v225 = vld [vmem:[%s1 + $0x58] sm:$0xf]
    %v226 = vld [vmem:[%s1 + $0x5c] sm:$0xf]
    %v227 = vld [vmem:[%s1 + $0x60] sm:$0xf]
    %v228 = vld [vmem:[%s1 + $0x64] sm:$0xf]
    %v229 = vld [vmem:[%s1 + $0x68] sm:$0xf]
    %v230 = vld [vmem:[%s1 + $0x6c] sm:$0xf]
    %v231 = vld [vmem:[%s1 + $0x70] sm:$0xf]
    %v232 = vld [vmem:[%s1 + $0x74] sm:$0xf]
    %v233 = vld [vmem:[%s1 + $0x78] sm:$0xf]
    %v234 = vld [vmem:[%s1 + $0x7c] sm:$0xf]
    %v235 = vld [vmem:[%s1 + $0x80] sm:$0xf]
    %v236 = vld [vmem:[%s1 + $0x84] sm:$0xf]
    %v237 = vld [vmem:[%s1 + $0x88] sm:$0xf]
    %v238 = vld [vmem:[%s1 + $0x8c] sm:$0xf]
    %v239 = vld [vmem:[%s1 + $0x90] sm:$0xf]
    %v240 = vld [vmem:[%s1 + $0x94] sm:$0xf]
    %v241 = vld [vmem:[%s1 + $0x98] sm:$0xf]
    %v242 = vld [vmem:[%s1 + $0x9c] sm:$0xf]
    %v243 = vld [vmem:[%s1 + $0xa0] sm:$0xf]
    %v244 = vld [vmem:[%s1 + $0xa4] sm:$0xf]
    %v245 = vld [vmem:[%s1 + $0xa8] sm:$0xf]
    %v246 = vld [vmem:[%s1 + $0xac] sm:$0xf]
    %v247 = vld [vmem:[%s1 + $0xb0] sm:$0xf]
    %v248 = vld [vmem:[%s1 + $0xb4] sm:$0xf]
    %v249 = vld [vmem:[%s1 + $0xb8] sm:$0xf]
    %v250 = vld [vmem:[%s1 + $0xbc] sm:$0xf]
    %v251 = vld [vmem:[%s1 + $0xc0] sm:$0xf]
    %v252 = vld [vmem:[%s1 + $0xc4] sm:$0xf]
    %v253 = vld [vmem:[%s1 + $0xc8] sm:$0xf]
    %v254 = vld [vmem:[%s1 + $0xcc] sm:$0xf]
    %v255 = vld [vmem:[%s1 + $0xd0] sm:$0xf]
    %v256 = vld [vmem:[%s1 + $0xd4] sm:$0xf]
    %v257 = vld [vmem:[%s1 + $0xd8] sm:$0xf]
    %v258 = vld [vmem:[%s1 + $0xdc] sm:$0xf]
    %v259 = vld [vmem:[%s1 + $0xe0] sm:$0xf]
    %v260 = vld [vmem:[%s1 + $0xe4] sm:$0xf]
    %v261 = vld [vmem:[%s1 + $0xe8] sm:$0xf]
    %v262 = vld [vmem:[%s1 + $0xec] sm:$0xf]
    %v263 = vld [vmem:[%s1 + $0xf0] sm:$0xf]
    %v264 = vld [vmem:[%s1 + $0xf4] sm:$0xf]
    %v265 = vld [vmem:[%s1 + $0xf8] sm:$0xf]
    %v266 = vld [vmem:[%s1 + $0xfc] sm:$0xf]
    %v267 = vld [vmem:[%s1 + $0x100] sm:$0xf]
    %v268 = vld [vmem:[%s1 + $0x104] sm:$0xf]
    %v269 = vld [vmem:[%s1 + $0x108] sm:$0xf]
    %v270 = vld [vmem:[%s1 + $0x10c] sm:$0xf]
    %v271 = vld [vmem:[%s1 + $0x110] sm:$0xf]
    %v272 = vld [vmem:[%s1 + $0x114] sm:$0xf]
    %v273 = vld [vmem:[%s1 + $0x118] sm:$0xf]
    %v274 = vld [vmem:[%s1 + $0x11c] sm:$0xf]
    %v275 = vld [vmem:[%s1 + $0x120] sm:$0xf]
    %v276 = vld [vmem:[%s1 + $0x124] sm:$0xf]
    %v277 = vld [vmem:[%s1 + $0x128] sm:$0xf]
    %v278 = vld [vmem:[%s1 + $0x12c] sm:$0xf]
    %v279 = vld [vmem:[%s1 + $0x130] sm:$0xf]
    %v280 = vld [vmem:[%s1 + $0x134] sm:$0xf]
    %v281 = vld [vmem:[%s1 + $0x138] sm:$0xf]
    %v282 = vld [vmem:[%s1 + $0x13c] sm:$0xf]
    %v283 = vld [vmem:[%s1 + $0x140] sm:$0xf]
    %v284 = vld [vmem:[%s1 + $0x144] sm:$0xf]
    %v285 = vld [vmem:[%s1 + $0x148] sm:$0xf]
    %v286 = vld [vmem:[%s1 + $0x14c] sm:$0xf]
    %v287 = vld [vmem:[%s1 + $0x150] sm:$0xf]
    %v288 = vld [vmem:[%s1 + $0x154] sm:$0xf]
    %v289 = vld [vmem:[%s1 + $0x158] sm:$0xf]
    %v290 = vld [vmem:[%s1 + $0x15c] sm:$0xf]
    %v291 = vld [vmem:[%s1 + $0x160] sm:$0xf]
    %v292 = vld [vmem:[%s1 + $0x164] sm:$0xf]
    %v293 = vld [vmem:[%s1 + $0x168] sm:$0xf]
    %v294 = vld [vmem:[%s1 + $0x16c] sm:$0xf]
    %v295 = vld [vmem:[%s1 + $0x170] sm:$0xf]
    %v296 = vld [vmem:[%s1 + $0x174] sm:$0xf]
    %v297 = vld [vmem:[%s1 + $0x178] sm:$0xf]
    %v298 = vld [vmem:[%s1 + $0x17c] sm:$0xf]
    %v299 = vld [vmem:[%s1 + $0x180] sm:$0xf]
    %v300 = vld [vmem:[%s1 + $0x184] sm:$0xf]
    %v301 = vld [vmem:[%s1 + $0x188] sm:$0xf]
    %v302 = vld [vmem:[%s1 + $0x18c] sm:$0xf]
    %v303 = vld [vmem:[%s1 + $0x190] sm:$0xf]
    %v304 = vld [vmem:[%s1 + $0x194] sm:$0xf]
    %v305 = vld [vmem:[%s1 + $0x198] sm:$0xf]
    %v306 = vld [vmem:[%s1 + $0x19c] sm:$0xf]
    %v307 = vld [vmem:[%s1 + $0x1a0] sm:$0xf]
    %v308 = vld [vmem:[%s1 + $0x1a4] sm:$0xf]
    %v309 = vld [vmem:[%s1 + $0x1a8] sm:$0xf]
    %v310 = vld [vmem:[%s1 + $0x1ac] sm:$0xf]
    %v311 = vld [vmem:[%s1 + $0x1b0] sm:$0xf]
    %v312 = vld [vmem:[%s1 + $0x1b4] sm:$0xf]
    %v313 = vld [vmem:[%s1 + $0x1b8] sm:$0xf]
    %v314 = vld [vmem:[%s1 + $0x1bc] sm:$0xf]
    %v315 = vld [vmem:[%s1 + $0x1c0] sm:$0xf]
    %v316 = vld [vmem:[%s1 + $0x1c4] sm:$0xf]
    %v317 = vld [vmem:[%s1 + $0x1c8] sm:$0xf]
    %v318 = vld [vmem:[%s1 + $0x1cc] sm:$0xf]
    %v319 = vld [vmem:[%s1 + $0x1d0] sm:$0xf]
    %v320 = vld [vmem:[%s1 + $0x1d4] sm:$0xf]
    %v321 = vld [vmem:[%s1 + $0x1d8] sm:$0xf]
    %v322 = vld [vmem:[%s1 + $0x1dc] sm:$0xf]
    %v323 = vld [vmem:[%s1 + $0x1e0] sm:$0xf]
    %v324 = vld [vmem:[%s1 + $0x1e4] sm:$0xf]
    %v325 = vld [vmem:[%s1 + $0x1e8] sm:$0xf]
    %v326 = vld [vmem:[%s1 + $0x1ec] sm:$0xf]
    %v327 = vld [vmem:[%s1 + $0x1f0] sm:$0xf]
    %v328 = vld [vmem:[%s1 + $0x1f4] sm:$0xf]
    %v329 = vld [vmem:[%s1 + $0x1f8] sm:$0xf]
    %v330 = vld [vmem:[%s1 + $0x1fc] sm:$0xf]
    %v331 = vld [vmem:[%s1 + $0x200] sm:$0xf]
    %v332 = vld [vmem:[%s1 + $0x204] sm:$0xf]
    %v333 = vld [vmem:[%s1 + $0x208] sm:$0xf]
    %v334 = vld [vmem:[%s1 + $0x20c] sm:$0xf]
    %v335 = vld [vmem:[%s1 + $0x210] sm:$0xf]
    %v336 = vld [vmem:[%s1 + $0x214] sm:$0xf]
    %v337 = vld [vmem:[%s1 + $0x218] sm:$0xf]
    %v338 = vld [vmem:[%s1 + $0x21c] sm:$0xf]
    %v339 = vld [vmem:[%s1 + $0x220] sm:$0xf]
    %v340 = vld [vmem:[%s1 + $0x224] sm:$0xf]
    %v341 = vld [vmem:[%s1 + $0x228] sm:$0xf]
    %v342 = vld [vmem:[%s1 + $0x22c] sm:$0xf]
    %v343 = vld [vmem:[%s1 + $0x230] sm:$0xf]
    %v344 = vld [vmem:[%s1 + $0x234] sm:$0xf]
    %v345 = vld [vmem:[%s1 + $0x238] sm:$0xf]
    %v346 = vld [vmem:[%s1 + $0x23c] sm:$0xf]
    %v379 = vunpack.c.l.b16 %v143
    %v380 = vunpack.c.l.b16 %v144
    %v381 = vunpack.c.l.b16 %v146
    %v382 = vunpack.c.l.b16 %v147
    %v383 = vunpack.c.l.b16 %v149
    %v384 = vunpack.c.l.b16 %v150
    %v385 = vunpack.c.l.b16 %v152
    %v386 = vunpack.c.l.b16 %v153
    %v387 = vunpack.c.l.b16 %v155
    %v388 = vunpack.c.l.b16 %v156
    %v389 = vunpack.c.l.b16 %v158
    %v390 = vunpack.c.l.b16 %v159
    %v391 = vunpack.c.l.b16 %v161
    %v392 = vunpack.c.l.b16 %v162
    %v393 = vunpack.c.l.b16 %v164
    %v394 = vunpack.c.l.b16 %v165
    %v395 = vunpack.c.l.b16 %v173
    %v396 = vunpack.c.l.b16 %v174
    %v397 = vunpack.c.l.b16 %v176
    %v398 = vunpack.c.l.b16 %v177
    %v399 = vunpack.c.l.b16 %v179
    %v400 = vunpack.c.l.b16 %v180
    %v401 = vunpack.c.l.b16 %v182
    %v402 = vunpack.c.l.b16 %v183
    %v403 = vunpack.c.l.b16 %v185
    %v404 = vunpack.c.l.b16 %v186
    %v405 = vunpack.c.l.b16 %v188
    %v406 = vunpack.c.l.b16 %v189
    %v407 = vunpack.c.l.b16 %v191
    %v408 = vunpack.c.l.b16 %v192
    %v409 = vunpack.c.l.b16 %v194
    %v410 = vunpack.c.l.b16 %v195
    %v411 = vpack.c.b16 %v380, %v380
    %v412 = vpack.c.b16 %v382, %v382
    %v413 = vpack.c.b16 %v384, %v384
    %v414 = vpack.c.b16 %v386, %v386
    %v415 = vpack.c.b16 %v388, %v388
    %v416 = vpack.c.b16 %v390, %v390
    %v417 = vpack.c.b16 %v392, %v392
    %v418 = vpack.c.b16 %v394, %v394
    %v419 = vpack.c.b16 %v396, %v396
    %v420 = vpack.c.b16 %v398, %v398
    %v421 = vpack.c.b16 %v400, %v400
    %v422 = vpack.c.b16 %v402, %v402
    %v423 = vpack.c.b16 %v404, %v404
    %v424 = vpack.c.b16 %v406, %v406
    %v425 = vpack.c.b16 %v408, %v408
    %v426 = vpack.c.b16 %v410, %v410
    %v428 = vshrl.u32 %v411, 16
    %v430 = vrot.slane %v428, 4
    %v431 = vshll.u32 %v411, 16
    %v433 = vrot.slane %v431, 5
    %v434 = vor.u32 %v430, %v433
    %v436 = vshrl.u32 %v412, 16
    %v438 = vrot.slane %v436, 4
    %v439 = vshll.u32 %v412, 16
    %v441 = vrot.slane %v439, 5
    %v442 = vor.u32 %v438, %v441
    %v444 = vshrl.u32 %v413, 16
    %v446 = vrot.slane %v444, 4
    %v447 = vshll.u32 %v413, 16
    %v449 = vrot.slane %v447, 5
    %v450 = vor.u32 %v446, %v449
    %v452 = vshrl.u32 %v414, 16
    %v454 = vrot.slane %v452, 4
    %v455 = vshll.u32 %v414, 16
    %v457 = vrot.slane %v455, 5
    %v458 = vor.u32 %v454, %v457
    %v460 = vshrl.u32 %v415, 16
    %v462 = vrot.slane %v460, 4
    %v463 = vshll.u32 %v415, 16
    %v465 = vrot.slane %v463, 5
    %v466 = vor.u32 %v462, %v465
    %v468 = vshrl.u32 %v416, 16
    %v470 = vrot.slane %v468, 4
    %v471 = vshll.u32 %v416, 16
    %v473 = vrot.slane %v471, 5
    %v474 = vor.u32 %v470, %v473
    %v476 = vshrl.u32 %v417, 16
    %v478 = vrot.slane %v476, 4
    %v479 = vshll.u32 %v417, 16
    %v481 = vrot.slane %v479, 5
    %v482 = vor.u32 %v478, %v481
    %v484 = vshrl.u32 %v418, 16
    %v486 = vrot.slane %v484, 4
    %v487 = vshll.u32 %v418, 16
    %v489 = vrot.slane %v487, 5
    %v490 = vor.u32 %v486, %v489
    %v492 = vshrl.u32 %v419, 16
    %v494 = vrot.slane %v492, 4
    %v495 = vshll.u32 %v419, 16
    %v497 = vrot.slane %v495, 5
    %v498 = vor.u32 %v494, %v497
    %v500 = vshrl.u32 %v420, 16
    %v502 = vrot.slane %v500, 4
    %v503 = vshll.u32 %v420, 16
    %v505 = vrot.slane %v503, 5
    %v506 = vor.u32 %v502, %v505
    %v508 = vshrl.u32 %v421, 16
    %v510 = vrot.slane %v508, 4
    %v511 = vshll.u32 %v421, 16
    %v513 = vrot.slane %v511, 5
    %v514 = vor.u32 %v510, %v513
    %v516 = vshrl.u32 %v422, 16
    %v518 = vrot.slane %v516, 4
    %v519 = vshll.u32 %v422, 16
    %v521 = vrot.slane %v519, 5
    %v522 = vor.u32 %v518, %v521
    %v524 = vshrl.u32 %v423, 16
    %v526 = vrot.slane %v524, 4
    %v527 = vshll.u32 %v423, 16
    %v529 = vrot.slane %v527, 5
    %v530 = vor.u32 %v526, %v529
    %v532 = vshrl.u32 %v424, 16
    %v534 = vrot.slane %v532, 4
    %v535 = vshll.u32 %v424, 16
    %v537 = vrot.slane %v535, 5
    %v538 = vor.u32 %v534, %v537
    %v540 = vshrl.u32 %v425, 16
    %v542 = vrot.slane %v540, 4
    %v543 = vshll.u32 %v425, 16
    %v545 = vrot.slane %v543, 5
    %v546 = vor.u32 %v542, %v545
    %v548 = vshrl.u32 %v426, 16
    %v550 = vrot.slane %v548, 4
    %v551 = vshll.u32 %v426, 16
    %v553 = vrot.slane %v551, 5
    %v554 = vor.u32 %v550, %v553
    %v571 = vunpack.c.l.b16 %v145
    %v572 = vunpack.c.l.b16 %v148
    %v573 = vunpack.c.l.b16 %v151
    %v574 = vunpack.c.l.b16 %v154
    %v575 = vunpack.c.l.b16 %v157
    %v576 = vunpack.c.l.b16 %v160
    %v577 = vunpack.c.l.b16 %v163
    %v578 = vunpack.c.l.b16 %v166
    %v579 = vunpack.c.l.b16 %v175
    %v580 = vunpack.c.l.b16 %v178
    %v581 = vunpack.c.l.b16 %v181
    %v582 = vunpack.c.l.b16 %v184
    %v583 = vunpack.c.l.b16 %v187
    %v584 = vunpack.c.l.b16 %v190
    %v585 = vunpack.c.l.b16 %v193
    %v586 = vunpack.c.l.b16 %v196
    %v587 = vpack.c.b16 %v571, %v380
    %v588 = vpack.c.b16 %v572, %v382
    %v589 = vpack.c.b16 %v573, %v384
    %v590 = vpack.c.b16 %v574, %v386
    %v591 = vpack.c.b16 %v575, %v388
    %v592 = vpack.c.b16 %v576, %v390
    %v593 = vpack.c.b16 %v577, %v392
    %v594 = vpack.c.b16 %v578, %v394
    %v595 = vpack.c.b16 %v579, %v396
    %v596 = vpack.c.b16 %v580, %v398
    %v597 = vpack.c.b16 %v581, %v400
    %v598 = vpack.c.b16 %v582, %v402
    %v599 = vpack.c.b16 %v583, %v404
    %v600 = vpack.c.b16 %v584, %v406
    %v601 = vpack.c.b16 %v585, %v408
    %v602 = vpack.c.b16 %v586, %v410
    %v603 = vrot.slane %v587, 5
    %v604 = vrot.slane %v588, 5
    %v605 = vrot.slane %v589, 5
    %v606 = vrot.slane %v590, 5
    %v607 = vrot.slane %v591, 5
    %v608 = vrot.slane %v592, 5
    %v609 = vrot.slane %v593, 5
    %v610 = vrot.slane %v594, 5
    %v611 = vrot.slane %v595, 5
    %v612 = vrot.slane %v596, 5
    %v613 = vrot.slane %v597, 5
    %v614 = vrot.slane %v598, 5
    %v615 = vrot.slane %v599, 5
    %v616 = vrot.slane %v600, 5
    %v617 = vrot.slane %v601, 5
    %v618 = vrot.slane %v602, 5
    %v623 = vunpack.c.l.b16 %v167
    %v624 = vunpack.c.l.b16 %v168
    %v625 = vunpack.c.l.b16 %v197
    %v626 = vunpack.c.l.b16 %v198
    %v627 = vpack.c.b16 %v624, %v624
    %v628 = vpack.c.b16 %v626, %v626
    %v630 = vshrl.u32 %v627, 16
    %v632 = vrot.slane %v630, 4
    %v633 = vshll.u32 %v627, 16
    %v635 = vrot.slane %v633, 5
    %v636 = vor.u32 %v632, %v635
    %v638 = vshrl.u32 %v628, 16
    %v640 = vrot.slane %v638, 4
    %v641 = vshll.u32 %v628, 16
    %v643 = vrot.slane %v641, 5
    %v644 = vor.u32 %v640, %v643
    %v647 = vunpack.c.l.b16 %v169
    %v648 = vunpack.c.l.b16 %v199
    %v649 = vpack.c.b16 %v647, %v624
    %v650 = vpack.c.b16 %v648, %v626
    %v651 = vrot.slane %v649, 5
    %v652 = vrot.slane %v650, 5
    %v657 = vunpack.c.l.b16 %v170
    %v658 = vunpack.c.l.b16 %v171
    %v659 = vunpack.c.l.b16 %v200
    %v660 = vunpack.c.l.b16 %v201
    %v661 = vpack.c.b16 %v658, %v658
    %v662 = vpack.c.b16 %v660, %v660
    %v664 = vshrl.u32 %v661, 16
    %v666 = vrot.slane %v664, 4
    %v667 = vshll.u32 %v661, 16
    %v669 = vrot.slane %v667, 5
    %v670 = vor.u32 %v666, %v669
    %v672 = vshrl.u32 %v662, 16
    %v674 = vrot.slane %v672, 4
    %v675 = vshll.u32 %v662, 16
    %v677 = vrot.slane %v675, 5
    %v678 = vor.u32 %v674, %v677
    %v681 = vunpack.c.l.b16 %v172
    %v682 = vunpack.c.l.b16 %v202
    %v683 = vpack.c.b16 %v681, %v658
    %v684 = vpack.c.b16 %v682, %v660
    %v685 = vrot.slane %v683, 5
    %v686 = vrot.slane %v684, 5
    %v687 = vunpack.c.l.b16 %v434
    %v688 = vunpack.c.l.b16 %v603
    %v689 = vunpack.c.l.b16 %v442
    %v690 = vunpack.c.l.b16 %v604
    %v691 = vunpack.c.l.b16 %v450
    %v692 = vunpack.c.l.b16 %v605
    %v693 = vunpack.c.h.b16 %v434
    %v694 = vunpack.c.h.b16 %v603
    %v695 = vunpack.c.h.b16 %v442
    %v696 = vunpack.c.h.b16 %v604
    %v697 = vunpack.c.h.b16 %v450
    %v698 = vunpack.c.h.b16 %v605
    %v699 = vunpack.c.l.b16 %v458
    %v700 = vunpack.c.l.b16 %v606
    %v701 = vunpack.c.h.b16 %v458
    %v702 = vunpack.c.h.b16 %v606
    %v703 = vunpack.c.l.b16 %v466
    %v704 = vunpack.c.l.b16 %v607
    %v705 = vunpack.c.h.b16 %v466
    %v706 = vunpack.c.h.b16 %v607
    %v707 = vunpack.c.l.b16 %v474
    %v708 = vunpack.c.l.b16 %v608
    %v709 = vunpack.c.h.b16 %v474
    %v710 = vunpack.c.h.b16 %v608
    %v711 = vunpack.c.l.b16 %v482
    %v712 = vunpack.c.l.b16 %v609
    %v713 = vunpack.c.h.b16 %v482
    %v714 = vunpack.c.h.b16 %v609
    %v715 = vunpack.c.l.b16 %v490
    %v716 = vunpack.c.l.b16 %v610
    %v717 = vunpack.c.h.b16 %v490
    %v718 = vunpack.c.h.b16 %v610
    %v719 = vunpack.c.l.b16 %v636
    %v720 = vunpack.c.l.b16 %v651
    %v721 = vunpack.c.h.b16 %v636
    %v722 = vunpack.c.h.b16 %v651
    %v723 = vunpack.c.l.b16 %v670
    %v724 = vunpack.c.l.b16 %v685
    %v725 = vunpack.c.h.b16 %v670
    %v726 = vunpack.c.h.b16 %v685
    %v727 = vunpack.c.l.b16 %v498
    %v728 = vunpack.c.l.b16 %v611
    %v729 = vunpack.c.l.b16 %v506
    %v730 = vunpack.c.l.b16 %v612
    %v731 = vunpack.c.l.b16 %v514
    %v732 = vunpack.c.l.b16 %v613
    %v733 = vunpack.c.h.b16 %v498
    %v734 = vunpack.c.h.b16 %v611
    %v735 = vunpack.c.h.b16 %v506
    %v736 = vunpack.c.h.b16 %v612
    %v737 = vunpack.c.h.b16 %v514
    %v738 = vunpack.c.h.b16 %v613
    %v739 = vunpack.c.l.b16 %v522
    %v740 = vunpack.c.l.b16 %v614
    %v741 = vunpack.c.h.b16 %v522
    %v742 = vunpack.c.h.b16 %v614
    %v743 = vunpack.c.l.b16 %v530
    %v744 = vunpack.c.l.b16 %v615
    %v745 = vunpack.c.h.b16 %v530
    %v746 = vunpack.c.h.b16 %v615
    %v747 = vunpack.c.l.b16 %v538
    %v748 = vunpack.c.l.b16 %v616
    %v749 = vunpack.c.h.b16 %v538
    %v750 = vunpack.c.h.b16 %v616
    %v751 = vunpack.c.l.b16 %v546
    %v752 = vunpack.c.l.b16 %v617
    %v753 = vunpack.c.h.b16 %v546
    %v754 = vunpack.c.h.b16 %v617
    %v755 = vunpack.c.l.b16 %v554
    %v756 = vunpack.c.l.b16 %v618
    %v757 = vunpack.c.h.b16 %v554
    %v758 = vunpack.c.h.b16 %v618
    %v759 = vunpack.c.l.b16 %v644
    %v760 = vunpack.c.l.b16 %v652
    %v761 = vunpack.c.h.b16 %v644
    %v762 = vunpack.c.h.b16 %v652
    %v763 = vunpack.c.l.b16 %v678
    %v764 = vunpack.c.l.b16 %v686
    %v765 = vunpack.c.h.b16 %v678
    %v766 = vunpack.c.h.b16 %v686
    %v767 = vpack.c.b16 %v687, %v379
    %v768 = vpack.c.b16 %v381, %v688
    %v769 = vpack.c.b16 %v690, %v689
    %v770 = vpack.c.b16 %v691, %v383
    %v771 = vpack.c.b16 %v692, %v692
    %v772 = vpack.c.b16 %v693, %v380
    %v773 = vpack.c.b16 %v382, %v694
    %v774 = vpack.c.b16 %v696, %v695
    %v775 = vpack.c.b16 %v697, %v384
    %v776 = vpack.c.b16 %v698, %v698
    %v777 = vpack.c.b16 %v689, %v381
    %v778 = vpack.c.b16 %v383, %v690
    %v779 = vpack.c.b16 %v692, %v691
    %v780 = vpack.c.b16 %v699, %v385
    %v781 = vpack.c.b16 %v700, %v700
    %v782 = vpack.c.b16 %v695, %v382
    %v783 = vpack.c.b16 %v384, %v696
    %v784 = vpack.c.b16 %v698, %v697
    %v785 = vpack.c.b16 %v701, %v386
    %v786 = vpack.c.b16 %v702, %v702
    %v787 = vpack.c.b16 %v385, %v692
    %v788 = vpack.c.b16 %v700, %v699
    %v789 = vpack.c.b16 %v703, %v387
    %v790 = vpack.c.b16 %v704, %v704
    %v791 = vpack.c.b16 %v386, %v698
    %v792 = vpack.c.b16 %v702, %v701
    %v793 = vpack.c.b16 %v705, %v388
    %v794 = vpack.c.b16 %v706, %v706
    %v795 = vpack.c.b16 %v387, %v700
    %v796 = vpack.c.b16 %v704, %v703
    %v797 = vpack.c.b16 %v707, %v389
    %v798 = vpack.c.b16 %v708, %v708
    %v799 = vpack.c.b16 %v388, %v702
    %v800 = vpack.c.b16 %v706, %v705
    %v801 = vpack.c.b16 %v709, %v390
    %v802 = vpack.c.b16 %v710, %v710
    %v803 = vpack.c.b16 %v389, %v704
    %v804 = vpack.c.b16 %v708, %v707
    %v805 = vpack.c.b16 %v711, %v391
    %v806 = vpack.c.b16 %v712, %v712
    %v807 = vpack.c.b16 %v390, %v706
    %v808 = vpack.c.b16 %v710, %v709
    %v809 = vpack.c.b16 %v713, %v392
    %v810 = vpack.c.b16 %v714, %v714
    %v811 = vpack.c.b16 %v391, %v708
    %v812 = vpack.c.b16 %v712, %v711
    %v813 = vpack.c.b16 %v715, %v393
    %v814 = vpack.c.b16 %v716, %v716
    %v815 = vpack.c.b16 %v392, %v710
    %v816 = vpack.c.b16 %v714, %v713
    %v817 = vpack.c.b16 %v717, %v394
    %v818 = vpack.c.b16 %v718, %v718
    %v819 = vpack.c.b16 %v393, %v712
    %v820 = vpack.c.b16 %v716, %v715
    %v821 = vpack.c.b16 %v719, %v623
    %v822 = vpack.c.b16 %v720, %v720
    %v823 = vpack.c.b16 %v394, %v714
    %v824 = vpack.c.b16 %v718, %v717
    %v825 = vpack.c.b16 %v721, %v624
    %v826 = vpack.c.b16 %v722, %v722
    %v827 = vpack.c.b16 %v623, %v716
    %v828 = vpack.c.b16 %v720, %v719
    %v829 = vpack.c.b16 %v723, %v657
    %v830 = vpack.c.b16 %v724, %v724
    %v831 = vpack.c.b16 %v624, %v718
    %v832 = vpack.c.b16 %v722, %v721
    %v833 = vpack.c.b16 %v725, %v658
    %v834 = vpack.c.b16 %v726, %v726
    %v835 = vpack.c.b16 %v727, %v395
    %v836 = vpack.c.b16 %v397, %v728
    %v837 = vpack.c.b16 %v730, %v729
    %v838 = vpack.c.b16 %v731, %v399
    %v839 = vpack.c.b16 %v732, %v732
    %v840 = vpack.c.b16 %v733, %v396
    %v841 = vpack.c.b16 %v398, %v734
    %v842 = vpack.c.b16 %v736, %v735
    %v843 = vpack.c.b16 %v737, %v400
    %v844 = vpack.c.b16 %v738, %v738
    %v845 = vpack.c.b16 %v729, %v397
    %v846 = vpack.c.b16 %v399, %v730
    %v847 = vpack.c.b16 %v732, %v731
    %v848 = vpack.c.b16 %v739, %v401
    %v849 = vpack.c.b16 %v740, %v740
    %v850 = vpack.c.b16 %v735, %v398
    %v851 = vpack.c.b16 %v400, %v736
    %v852 = vpack.c.b16 %v738, %v737
    %v853 = vpack.c.b16 %v741, %v402
    %v854 = vpack.c.b16 %v742, %v742
    %v855 = vpack.c.b16 %v401, %v732
    %v856 = vpack.c.b16 %v740, %v739
    %v857 = vpack.c.b16 %v743, %v403
    %v858 = vpack.c.b16 %v744, %v744
    %v859 = vpack.c.b16 %v402, %v738
    %v860 = vpack.c.b16 %v742, %v741
    %v861 = vpack.c.b16 %v745, %v404
    %v862 = vpack.c.b16 %v746, %v746
    %v863 = vpack.c.b16 %v403, %v740
    %v864 = vpack.c.b16 %v744, %v743
    %v865 = vpack.c.b16 %v747, %v405
    %v866 = vpack.c.b16 %v748, %v748
    %v867 = vpack.c.b16 %v404, %v742
    %v868 = vpack.c.b16 %v746, %v745
    %v869 = vpack.c.b16 %v749, %v406
    %v870 = vpack.c.b16 %v750, %v750
    %v871 = vpack.c.b16 %v405, %v744
    %v872 = vpack.c.b16 %v748, %v747
    %v873 = vpack.c.b16 %v751, %v407
    %v874 = vpack.c.b16 %v752, %v752
    %v875 = vpack.c.b16 %v406, %v746
    %v876 = vpack.c.b16 %v750, %v749
    %v877 = vpack.c.b16 %v753, %v408
    %v878 = vpack.c.b16 %v754, %v754
    %v879 = vpack.c.b16 %v407, %v748
    %v880 = vpack.c.b16 %v752, %v751
    %v881 = vpack.c.b16 %v755, %v409
    %v882 = vpack.c.b16 %v756, %v756
    %v883 = vpack.c.b16 %v408, %v750
    %v884 = vpack.c.b16 %v754, %v753
    %v885 = vpack.c.b16 %v757, %v410
    %v886 = vpack.c.b16 %v758, %v758
    %v887 = vpack.c.b16 %v409, %v752
    %v888 = vpack.c.b16 %v756, %v755
    %v889 = vpack.c.b16 %v759, %v625
    %v890 = vpack.c.b16 %v760, %v760
    %v891 = vpack.c.b16 %v410, %v754
    %v892 = vpack.c.b16 %v758, %v757
    %v893 = vpack.c.b16 %v761, %v626
    %v894 = vpack.c.b16 %v762, %v762
    %v895 = vpack.c.b16 %v625, %v756
    %v896 = vpack.c.b16 %v760, %v759
    %v897 = vpack.c.b16 %v763, %v659
    %v898 = vpack.c.b16 %v764, %v764
    %v899 = vpack.c.b16 %v626, %v758
    %v900 = vpack.c.b16 %v762, %v761
    %v901 = vpack.c.b16 %v765, %v660
    %v902 = vpack.c.b16 %v766, %v766
    %vm903 = vsmask.f32 256
    %vm904 = vsmask.f32 4368
    %vm905 = vmor %vm903, %vm904
    %v907 = vshrl.u32 %v767, 16
    %v909 = vrot.slane %v907, 7
    %v910 = vrot.slane %v909, 4
    %v912 = vshrl.u32 %v772, 16
    %v914 = vrot.slane %v912, 7
    %v915 = vshll.u32 %v772, 16
    %v917 = vor.u32 %v914, %v915
    %v918 = vsel %vm905, %v910, %v917
    %v920 = vshrl.u32 %v768, 16
    %v922 = vrot.slane %v920, 7
    %v923 = vrot.slane %v922, 4
    %v925 = vshrl.u32 %v773, 16
    %v927 = vrot.slane %v925, 7
    %v928 = vshll.u32 %v773, 16
    %v930 = vor.u32 %v927, %v928
    %v931 = vsel %vm905, %v923, %v930
    %v933 = vshrl.u32 %v769, 16
    %v935 = vrot.slane %v933, 7
    %v936 = vrot.slane %v935, 4
    %v938 = vshrl.u32 %v774, 16
    %v940 = vrot.slane %v938, 7
    %v941 = vshll.u32 %v774, 16
    %v943 = vor.u32 %v940, %v941
    %v944 = vsel %vm905, %v936, %v943
    %v946 = vshrl.u32 %v770, 16
    %v948 = vrot.slane %v946, 7
    %v949 = vrot.slane %v948, 4
    %v951 = vshrl.u32 %v775, 16
    %v953 = vrot.slane %v951, 7
    %v954 = vshll.u32 %v775, 16
    %v956 = vor.u32 %v953, %v954
    %v957 = vsel %vm905, %v949, %v956
    %v959 = vshrl.u32 %v771, 16
    %v961 = vrot.slane %v959, 7
    %v962 = vrot.slane %v961, 4
    %v964 = vshrl.u32 %v776, 16
    %v966 = vrot.slane %v964, 7
    %v967 = vshll.u32 %v776, 16
    %v969 = vor.u32 %v966, %v967
    %v970 = vsel %vm905, %v962, %v969
    %v972 = vshrl.u32 %v777, 16
    %v974 = vrot.slane %v972, 7
    %v975 = vrot.slane %v974, 4
    %v977 = vshrl.u32 %v782, 16
    %v979 = vrot.slane %v977, 7
    %v980 = vshll.u32 %v782, 16
    %v982 = vor.u32 %v979, %v980
    %v983 = vsel %vm905, %v975, %v982
    %v985 = vshrl.u32 %v778, 16
    %v987 = vrot.slane %v985, 7
    %v988 = vrot.slane %v987, 4
    %v990 = vshrl.u32 %v783, 16
    %v992 = vrot.slane %v990, 7
    %v993 = vshll.u32 %v783, 16
    %v995 = vor.u32 %v992, %v993
    %v996 = vsel %vm905, %v988, %v995
    %v998 = vshrl.u32 %v779, 16
    %v1000 = vrot.slane %v998, 7
    %v1001 = vrot.slane %v1000, 4
    %v1003 = vshrl.u32 %v784, 16
    %v1005 = vrot.slane %v1003, 7
    %v1006 = vshll.u32 %v784, 16
    %v1008 = vor.u32 %v1005, %v1006
    %v1009 = vsel %vm905, %v1001, %v1008
    %v1011 = vshrl.u32 %v780, 16
    %v1013 = vrot.slane %v1011, 7
    %v1014 = vrot.slane %v1013, 4
    %v1016 = vshrl.u32 %v785, 16
    %v1018 = vrot.slane %v1016, 7
    %v1019 = vshll.u32 %v785, 16
    %v1021 = vor.u32 %v1018, %v1019
    %v1022 = vsel %vm905, %v1014, %v1021
    %v1024 = vshrl.u32 %v781, 16
    %v1026 = vrot.slane %v1024, 7
    %v1027 = vrot.slane %v1026, 4
    %v1029 = vshrl.u32 %v786, 16
    %v1031 = vrot.slane %v1029, 7
    %v1032 = vshll.u32 %v786, 16
    %v1034 = vor.u32 %v1031, %v1032
    %v1035 = vsel %vm905, %v1027, %v1034
    %v1037 = vshrl.u32 %v787, 16
    %v1039 = vrot.slane %v1037, 7
    %v1040 = vrot.slane %v1039, 4
    %v1042 = vshrl.u32 %v791, 16
    %v1044 = vrot.slane %v1042, 7
    %v1045 = vshll.u32 %v791, 16
    %v1047 = vor.u32 %v1044, %v1045
    %v1048 = vsel %vm905, %v1040, %v1047
    %v1050 = vshrl.u32 %v788, 16
    %v1052 = vrot.slane %v1050, 7
    %v1053 = vrot.slane %v1052, 4
    %v1055 = vshrl.u32 %v792, 16
    %v1057 = vrot.slane %v1055, 7
    %v1058 = vshll.u32 %v792, 16
    %v1060 = vor.u32 %v1057, %v1058
    %v1061 = vsel %vm905, %v1053, %v1060
    %v1063 = vshrl.u32 %v789, 16
    %v1065 = vrot.slane %v1063, 7
    %v1066 = vrot.slane %v1065, 4
    %v1068 = vshrl.u32 %v793, 16
    %v1070 = vrot.slane %v1068, 7
    %v1071 = vshll.u32 %v793, 16
    %v1073 = vor.u32 %v1070, %v1071
    %v1074 = vsel %vm905, %v1066, %v1073
    %v1076 = vshrl.u32 %v790, 16
    %v1078 = vrot.slane %v1076, 7
    %v1079 = vrot.slane %v1078, 4
    %v1081 = vshrl.u32 %v794, 16
    %v1083 = vrot.slane %v1081, 7
    %v1084 = vshll.u32 %v794, 16
    %v1086 = vor.u32 %v1083, %v1084
    %v1087 = vsel %vm905, %v1079, %v1086
    %v1089 = vshrl.u32 %v795, 16
    %v1091 = vrot.slane %v1089, 7
    %v1092 = vrot.slane %v1091, 4
    %v1094 = vshrl.u32 %v799, 16
    %v1096 = vrot.slane %v1094, 7
    %v1097 = vshll.u32 %v799, 16
    %v1099 = vor.u32 %v1096, %v1097
    %v1100 = vsel %vm905, %v1092, %v1099
    %v1102 = vshrl.u32 %v796, 16
    %v1104 = vrot.slane %v1102, 7
    %v1105 = vrot.slane %v1104, 4
    %v1107 = vshrl.u32 %v800, 16
    %v1109 = vrot.slane %v1107, 7
    %v1110 = vshll.u32 %v800, 16
    %v1112 = vor.u32 %v1109, %v1110
    %v1113 = vsel %vm905, %v1105, %v1112
    %v1115 = vshrl.u32 %v797, 16
    %v1117 = vrot.slane %v1115, 7
    %v1118 = vrot.slane %v1117, 4
    %v1120 = vshrl.u32 %v801, 16
    %v1122 = vrot.slane %v1120, 7
    %v1123 = vshll.u32 %v801, 16
    %v1125 = vor.u32 %v1122, %v1123
    %v1126 = vsel %vm905, %v1118, %v1125
    %v1128 = vshrl.u32 %v798, 16
    %v1130 = vrot.slane %v1128, 7
    %v1131 = vrot.slane %v1130, 4
    %v1133 = vshrl.u32 %v802, 16
    %v1135 = vrot.slane %v1133, 7
    %v1136 = vshll.u32 %v802, 16
    %v1138 = vor.u32 %v1135, %v1136
    %v1139 = vsel %vm905, %v1131, %v1138
    %v1141 = vshrl.u32 %v803, 16
    %v1143 = vrot.slane %v1141, 7
    %v1144 = vrot.slane %v1143, 4
    %v1146 = vshrl.u32 %v807, 16
    %v1148 = vrot.slane %v1146, 7
    %v1149 = vshll.u32 %v807, 16
    %v1151 = vor.u32 %v1148, %v1149
    %v1152 = vsel %vm905, %v1144, %v1151
    %v1154 = vshrl.u32 %v804, 16
    %v1156 = vrot.slane %v1154, 7
    %v1157 = vrot.slane %v1156, 4
    %v1159 = vshrl.u32 %v808, 16
    %v1161 = vrot.slane %v1159, 7
    %v1162 = vshll.u32 %v808, 16
    %v1164 = vor.u32 %v1161, %v1162
    %v1165 = vsel %vm905, %v1157, %v1164
    %v1167 = vshrl.u32 %v805, 16
    %v1169 = vrot.slane %v1167, 7
    %v1170 = vrot.slane %v1169, 4
    %v1172 = vshrl.u32 %v809, 16
    %v1174 = vrot.slane %v1172, 7
    %v1175 = vshll.u32 %v809, 16
    %v1177 = vor.u32 %v1174, %v1175
    %v1178 = vsel %vm905, %v1170, %v1177
    %v1180 = vshrl.u32 %v806, 16
    %v1182 = vrot.slane %v1180, 7
    %v1183 = vrot.slane %v1182, 4
    %v1185 = vshrl.u32 %v810, 16
    %v1187 = vrot.slane %v1185, 7
    %v1188 = vshll.u32 %v810, 16
    %v1190 = vor.u32 %v1187, %v1188
    %v1191 = vsel %vm905, %v1183, %v1190
    %v1193 = vshrl.u32 %v811, 16
    %v1195 = vrot.slane %v1193, 7
    %v1196 = vrot.slane %v1195, 4
    %v1198 = vshrl.u32 %v815, 16
    %v1200 = vrot.slane %v1198, 7
    %v1201 = vshll.u32 %v815, 16
    %v1203 = vor.u32 %v1200, %v1201
    %v1204 = vsel %vm905, %v1196, %v1203
    %v1206 = vshrl.u32 %v812, 16
    %v1208 = vrot.slane %v1206, 7
    %v1209 = vrot.slane %v1208, 4
    %v1211 = vshrl.u32 %v816, 16
    %v1213 = vrot.slane %v1211, 7
    %v1214 = vshll.u32 %v816, 16
    %v1216 = vor.u32 %v1213, %v1214
    %v1217 = vsel %vm905, %v1209, %v1216
    %v1219 = vshrl.u32 %v813, 16
    %v1221 = vrot.slane %v1219, 7
    %v1222 = vrot.slane %v1221, 4
    %v1224 = vshrl.u32 %v817, 16
    %v1226 = vrot.slane %v1224, 7
    %v1227 = vshll.u32 %v817, 16
    %v1229 = vor.u32 %v1226, %v1227
    %v1230 = vsel %vm905, %v1222, %v1229
    %v1232 = vshrl.u32 %v814, 16
    %v1234 = vrot.slane %v1232, 7
    %v1235 = vrot.slane %v1234, 4
    %v1237 = vshrl.u32 %v818, 16
    %v1239 = vrot.slane %v1237, 7
    %v1240 = vshll.u32 %v818, 16
    %v1242 = vor.u32 %v1239, %v1240
    %v1243 = vsel %vm905, %v1235, %v1242
    %v1245 = vshrl.u32 %v819, 16
    %v1247 = vrot.slane %v1245, 7
    %v1248 = vrot.slane %v1247, 4
    %v1250 = vshrl.u32 %v823, 16
    %v1252 = vrot.slane %v1250, 7
    %v1253 = vshll.u32 %v823, 16
    %v1255 = vor.u32 %v1252, %v1253
    %v1256 = vsel %vm905, %v1248, %v1255
    %v1258 = vshrl.u32 %v820, 16
    %v1260 = vrot.slane %v1258, 7
    %v1261 = vrot.slane %v1260, 4
    %v1263 = vshrl.u32 %v824, 16
    %v1265 = vrot.slane %v1263, 7
    %v1266 = vshll.u32 %v824, 16
    %v1268 = vor.u32 %v1265, %v1266
    %v1269 = vsel %vm905, %v1261, %v1268
    %v1271 = vshrl.u32 %v821, 16
    %v1273 = vrot.slane %v1271, 7
    %v1274 = vrot.slane %v1273, 4
    %v1276 = vshrl.u32 %v825, 16
    %v1278 = vrot.slane %v1276, 7
    %v1279 = vshll.u32 %v825, 16
    %v1281 = vor.u32 %v1278, %v1279
    %v1282 = vsel %vm905, %v1274, %v1281
    %v1284 = vshrl.u32 %v822, 16
    %v1286 = vrot.slane %v1284, 7
    %v1287 = vrot.slane %v1286, 4
    %v1289 = vshrl.u32 %v826, 16
    %v1291 = vrot.slane %v1289, 7
    %v1292 = vshll.u32 %v826, 16
    %v1294 = vor.u32 %v1291, %v1292
    %v1295 = vsel %vm905, %v1287, %v1294
    %v1297 = vshrl.u32 %v827, 16
    %v1299 = vrot.slane %v1297, 7
    %v1300 = vrot.slane %v1299, 4
    %v1302 = vshrl.u32 %v831, 16
    %v1304 = vrot.slane %v1302, 7
    %v1305 = vshll.u32 %v831, 16
    %v1307 = vor.u32 %v1304, %v1305
    %v1308 = vsel %vm905, %v1300, %v1307
    %v1310 = vshrl.u32 %v828, 16
    %v1312 = vrot.slane %v1310, 7
    %v1313 = vrot.slane %v1312, 4
    %v1315 = vshrl.u32 %v832, 16
    %v1317 = vrot.slane %v1315, 7
    %v1318 = vshll.u32 %v832, 16
    %v1320 = vor.u32 %v1317, %v1318
    %v1321 = vsel %vm905, %v1313, %v1320
    %v1323 = vshrl.u32 %v829, 16
    %v1325 = vrot.slane %v1323, 7
    %v1326 = vrot.slane %v1325, 4
    %v1328 = vshrl.u32 %v833, 16
    %v1330 = vrot.slane %v1328, 7
    %v1331 = vshll.u32 %v833, 16
    %v1333 = vor.u32 %v1330, %v1331
    %v1334 = vsel %vm905, %v1326, %v1333
    %v1336 = vshrl.u32 %v830, 16
    %v1338 = vrot.slane %v1336, 7
    %v1339 = vrot.slane %v1338, 4
    %v1341 = vshrl.u32 %v834, 16
    %v1343 = vrot.slane %v1341, 7
    %v1344 = vshll.u32 %v834, 16
    %v1346 = vor.u32 %v1343, %v1344
    %v1347 = vsel %vm905, %v1339, %v1346
    %v1349 = vshrl.u32 %v835, 16
    %v1351 = vrot.slane %v1349, 7
    %v1352 = vrot.slane %v1351, 4
    %v1354 = vshrl.u32 %v840, 16
    %v1356 = vrot.slane %v1354, 7
    %v1357 = vshll.u32 %v840, 16
    %v1359 = vor.u32 %v1356, %v1357
    %v1360 = vsel %vm905, %v1352, %v1359
    %v1362 = vshrl.u32 %v836, 16
    %v1364 = vrot.slane %v1362, 7
    %v1365 = vrot.slane %v1364, 4
    %v1367 = vshrl.u32 %v841, 16
    %v1369 = vrot.slane %v1367, 7
    %v1370 = vshll.u32 %v841, 16
    %v1372 = vor.u32 %v1369, %v1370
    %v1373 = vsel %vm905, %v1365, %v1372
    %v1375 = vshrl.u32 %v837, 16
    %v1377 = vrot.slane %v1375, 7
    %v1378 = vrot.slane %v1377, 4
    %v1380 = vshrl.u32 %v842, 16
    %v1382 = vrot.slane %v1380, 7
    %v1383 = vshll.u32 %v842, 16
    %v1385 = vor.u32 %v1382, %v1383
    %v1386 = vsel %vm905, %v1378, %v1385
    %v1388 = vshrl.u32 %v838, 16
    %v1390 = vrot.slane %v1388, 7
    %v1391 = vrot.slane %v1390, 4
    %v1393 = vshrl.u32 %v843, 16
    %v1395 = vrot.slane %v1393, 7
    %v1396 = vshll.u32 %v843, 16
    %v1398 = vor.u32 %v1395, %v1396
    %v1399 = vsel %vm905, %v1391, %v1398
    %v1401 = vshrl.u32 %v839, 16
    %v1403 = vrot.slane %v1401, 7
    %v1404 = vrot.slane %v1403, 4
    %v1406 = vshrl.u32 %v844, 16
    %v1408 = vrot.slane %v1406, 7
    %v1409 = vshll.u32 %v844, 16
    %v1411 = vor.u32 %v1408, %v1409
    %v1412 = vsel %vm905, %v1404, %v1411
    %v1414 = vshrl.u32 %v845, 16
    %v1416 = vrot.slane %v1414, 7
    %v1417 = vrot.slane %v1416, 4
    %v1419 = vshrl.u32 %v850, 16
    %v1421 = vrot.slane %v1419, 7
    %v1422 = vshll.u32 %v850, 16
    %v1424 = vor.u32 %v1421, %v1422
    %v1425 = vsel %vm905, %v1417, %v1424
    %v1427 = vshrl.u32 %v846, 16
    %v1429 = vrot.slane %v1427, 7
    %v1430 = vrot.slane %v1429, 4
    %v1432 = vshrl.u32 %v851, 16
    %v1434 = vrot.slane %v1432, 7
    %v1435 = vshll.u32 %v851, 16
    %v1437 = vor.u32 %v1434, %v1435
    %v1438 = vsel %vm905, %v1430, %v1437
    %v1440 = vshrl.u32 %v847, 16
    %v1442 = vrot.slane %v1440, 7
    %v1443 = vrot.slane %v1442, 4
    %v1445 = vshrl.u32 %v852, 16
    %v1447 = vrot.slane %v1445, 7
    %v1448 = vshll.u32 %v852, 16
    %v1450 = vor.u32 %v1447, %v1448
    %v1451 = vsel %vm905, %v1443, %v1450
    %v1453 = vshrl.u32 %v848, 16
    %v1455 = vrot.slane %v1453, 7
    %v1456 = vrot.slane %v1455, 4
    %v1458 = vshrl.u32 %v853, 16
    %v1460 = vrot.slane %v1458, 7
    %v1461 = vshll.u32 %v853, 16
    %v1463 = vor.u32 %v1460, %v1461
    %v1464 = vsel %vm905, %v1456, %v1463
    %v1466 = vshrl.u32 %v849, 16
    %v1468 = vrot.slane %v1466, 7
    %v1469 = vrot.slane %v1468, 4
    %v1471 = vshrl.u32 %v854, 16
    %v1473 = vrot.slane %v1471, 7
    %v1474 = vshll.u32 %v854, 16
    %v1476 = vor.u32 %v1473, %v1474
    %v1477 = vsel %vm905, %v1469, %v1476
    %v1479 = vshrl.u32 %v855, 16
    %v1481 = vrot.slane %v1479, 7
    %v1482 = vrot.slane %v1481, 4
    %v1484 = vshrl.u32 %v859, 16
    %v1486 = vrot.slane %v1484, 7
    %v1487 = vshll.u32 %v859, 16
    %v1489 = vor.u32 %v1486, %v1487
    %v1490 = vsel %vm905, %v1482, %v1489
    %v1492 = vshrl.u32 %v856, 16
    %v1494 = vrot.slane %v1492, 7
    %v1495 = vrot.slane %v1494, 4
    %v1497 = vshrl.u32 %v860, 16
    %v1499 = vrot.slane %v1497, 7
    %v1500 = vshll.u32 %v860, 16
    %v1502 = vor.u32 %v1499, %v1500
    %v1503 = vsel %vm905, %v1495, %v1502
    %v1505 = vshrl.u32 %v857, 16
    %v1507 = vrot.slane %v1505, 7
    %v1508 = vrot.slane %v1507, 4
    %v1510 = vshrl.u32 %v861, 16
    %v1512 = vrot.slane %v1510, 7
    %v1513 = vshll.u32 %v861, 16
    %v1515 = vor.u32 %v1512, %v1513
    %v1516 = vsel %vm905, %v1508, %v1515
    %v1518 = vshrl.u32 %v858, 16
    %v1520 = vrot.slane %v1518, 7
    %v1521 = vrot.slane %v1520, 4
    %v1523 = vshrl.u32 %v862, 16
    %v1525 = vrot.slane %v1523, 7
    %v1526 = vshll.u32 %v862, 16
    %v1528 = vor.u32 %v1525, %v1526
    %v1529 = vsel %vm905, %v1521, %v1528
    %v1531 = vshrl.u32 %v863, 16
    %v1533 = vrot.slane %v1531, 7
    %v1534 = vrot.slane %v1533, 4
    %v1536 = vshrl.u32 %v867, 16
    %v1538 = vrot.slane %v1536, 7
    %v1539 = vshll.u32 %v867, 16
    %v1541 = vor.u32 %v1538, %v1539
    %v1542 = vsel %vm905, %v1534, %v1541
    %v1544 = vshrl.u32 %v864, 16
    %v1546 = vrot.slane %v1544, 7
    %v1547 = vrot.slane %v1546, 4
    %v1549 = vshrl.u32 %v868, 16
    %v1551 = vrot.slane %v1549, 7
    %v1552 = vshll.u32 %v868, 16
    %v1554 = vor.u32 %v1551, %v1552
    %v1555 = vsel %vm905, %v1547, %v1554
    %v1557 = vshrl.u32 %v865, 16
    %v1559 = vrot.slane %v1557, 7
    %v1560 = vrot.slane %v1559, 4
    %v1562 = vshrl.u32 %v869, 16
    %v1564 = vrot.slane %v1562, 7
    %v1565 = vshll.u32 %v869, 16
    %v1567 = vor.u32 %v1564, %v1565
    %v1568 = vsel %vm905, %v1560, %v1567
    %v1570 = vshrl.u32 %v866, 16
    %v1572 = vrot.slane %v1570, 7
    %v1573 = vrot.slane %v1572, 4
    %v1575 = vshrl.u32 %v870, 16
    %v1577 = vrot.slane %v1575, 7
    %v1578 = vshll.u32 %v870, 16
    %v1580 = vor.u32 %v1577, %v1578
    %v1581 = vsel %vm905, %v1573, %v1580
    %v1583 = vshrl.u32 %v871, 16
    %v1585 = vrot.slane %v1583, 7
    %v1586 = vrot.slane %v1585, 4
    %v1588 = vshrl.u32 %v875, 16
    %v1590 = vrot.slane %v1588, 7
    %v1591 = vshll.u32 %v875, 16
    %v1593 = vor.u32 %v1590, %v1591
    %v1594 = vsel %vm905, %v1586, %v1593
    %v1596 = vshrl.u32 %v872, 16
    %v1598 = vrot.slane %v1596, 7
    %v1599 = vrot.slane %v1598, 4
    %v1601 = vshrl.u32 %v876, 16
    %v1603 = vrot.slane %v1601, 7
    %v1604 = vshll.u32 %v876, 16
    %v1606 = vor.u32 %v1603, %v1604
    %v1607 = vsel %vm905, %v1599, %v1606
    %v1609 = vshrl.u32 %v873, 16
    %v1611 = vrot.slane %v1609, 7
    %v1612 = vrot.slane %v1611, 4
    %v1614 = vshrl.u32 %v877, 16
    %v1616 = vrot.slane %v1614, 7
    %v1617 = vshll.u32 %v877, 16
    %v1619 = vor.u32 %v1616, %v1617
    %v1620 = vsel %vm905, %v1612, %v1619
    %v1622 = vshrl.u32 %v874, 16
    %v1624 = vrot.slane %v1622, 7
    %v1625 = vrot.slane %v1624, 4
    %v1627 = vshrl.u32 %v878, 16
    %v1629 = vrot.slane %v1627, 7
    %v1630 = vshll.u32 %v878, 16
    %v1632 = vor.u32 %v1629, %v1630
    %v1633 = vsel %vm905, %v1625, %v1632
    %v1635 = vshrl.u32 %v879, 16
    %v1637 = vrot.slane %v1635, 7
    %v1638 = vrot.slane %v1637, 4
    %v1640 = vshrl.u32 %v883, 16
    %v1642 = vrot.slane %v1640, 7
    %v1643 = vshll.u32 %v883, 16
    %v1645 = vor.u32 %v1642, %v1643
    %v1646 = vsel %vm905, %v1638, %v1645
    %v1648 = vshrl.u32 %v880, 16
    %v1650 = vrot.slane %v1648, 7
    %v1651 = vrot.slane %v1650, 4
    %v1653 = vshrl.u32 %v884, 16
    %v1655 = vrot.slane %v1653, 7
    %v1656 = vshll.u32 %v884, 16
    %v1658 = vor.u32 %v1655, %v1656
    %v1659 = vsel %vm905, %v1651, %v1658
    %v1661 = vshrl.u32 %v881, 16
    %v1663 = vrot.slane %v1661, 7
    %v1664 = vrot.slane %v1663, 4
    %v1666 = vshrl.u32 %v885, 16
    %v1668 = vrot.slane %v1666, 7
    %v1669 = vshll.u32 %v885, 16
    %v1671 = vor.u32 %v1668, %v1669
    %v1672 = vsel %vm905, %v1664, %v1671
    %v1674 = vshrl.u32 %v882, 16
    %v1676 = vrot.slane %v1674, 7
    %v1677 = vrot.slane %v1676, 4
    %v1679 = vshrl.u32 %v886, 16
    %v1681 = vrot.slane %v1679, 7
    %v1682 = vshll.u32 %v886, 16
    %v1684 = vor.u32 %v1681, %v1682
    %v1685 = vsel %vm905, %v1677, %v1684
    %v1687 = vshrl.u32 %v887, 16
    %v1689 = vrot.slane %v1687, 7
    %v1690 = vrot.slane %v1689, 4
    %v1692 = vshrl.u32 %v891, 16
    %v1694 = vrot.slane %v1692, 7
    %v1695 = vshll.u32 %v891, 16
    %v1697 = vor.u32 %v1694, %v1695
    %v1698 = vsel %vm905, %v1690, %v1697
    %v1700 = vshrl.u32 %v888, 16
    %v1702 = vrot.slane %v1700, 7
    %v1703 = vrot.slane %v1702, 4
    %v1705 = vshrl.u32 %v892, 16
    %v1707 = vrot.slane %v1705, 7
    %v1708 = vshll.u32 %v892, 16
    %v1710 = vor.u32 %v1707, %v1708
    %v1711 = vsel %vm905, %v1703, %v1710
    %v1713 = vshrl.u32 %v889, 16
    %v1715 = vrot.slane %v1713, 7
    %v1716 = vrot.slane %v1715, 4
    %v1718 = vshrl.u32 %v893, 16
    %v1720 = vrot.slane %v1718, 7
    %v1721 = vshll.u32 %v893, 16
    %v1723 = vor.u32 %v1720, %v1721
    %v1724 = vsel %vm905, %v1716, %v1723
    %v1726 = vshrl.u32 %v890, 16
    %v1728 = vrot.slane %v1726, 7
    %v1729 = vrot.slane %v1728, 4
    %v1731 = vshrl.u32 %v894, 16
    %v1733 = vrot.slane %v1731, 7
    %v1734 = vshll.u32 %v894, 16
    %v1736 = vor.u32 %v1733, %v1734
    %v1737 = vsel %vm905, %v1729, %v1736
    %v1739 = vshrl.u32 %v895, 16
    %v1741 = vrot.slane %v1739, 7
    %v1742 = vrot.slane %v1741, 4
    %v1744 = vshrl.u32 %v899, 16
    %v1746 = vrot.slane %v1744, 7
    %v1747 = vshll.u32 %v899, 16
    %v1749 = vor.u32 %v1746, %v1747
    %v1750 = vsel %vm905, %v1742, %v1749
    %v1752 = vshrl.u32 %v896, 16
    %v1754 = vrot.slane %v1752, 7
    %v1755 = vrot.slane %v1754, 4
    %v1757 = vshrl.u32 %v900, 16
    %v1759 = vrot.slane %v1757, 7
    %v1760 = vshll.u32 %v900, 16
    %v1762 = vor.u32 %v1759, %v1760
    %v1763 = vsel %vm905, %v1755, %v1762
    %v1765 = vshrl.u32 %v897, 16
    %v1767 = vrot.slane %v1765, 7
    %v1768 = vrot.slane %v1767, 4
    %v1770 = vshrl.u32 %v901, 16
    %v1772 = vrot.slane %v1770, 7
    %v1773 = vshll.u32 %v901, 16
    %v1775 = vor.u32 %v1772, %v1773
    %v1776 = vsel %vm905, %v1768, %v1775
    %v1778 = vshrl.u32 %v898, 16
    %v1780 = vrot.slane %v1778, 7
    %v1781 = vrot.slane %v1780, 4
    %v1783 = vshrl.u32 %v902, 16
    %v1785 = vrot.slane %v1783, 7
    %v1786 = vshll.u32 %v902, 16
    %v1788 = vor.u32 %v1785, %v1786
    %v1789 = vsel %vm905, %v1781, %v1788
    %v1790 = vunpack.c.l.b16 %v918
    %v1791 = vunpack.c.h.b16 %v918
    %v1792 = vunpack.c.l.b16 %v931
    %v1793 = vunpack.c.h.b16 %v931
    %v1794 = vunpack.c.l.b16 %v944
    %v1795 = vunpack.c.h.b16 %v944
    %v1796 = vunpack.c.l.b16 %v957
    %v1797 = vunpack.c.h.b16 %v957
    %v1798 = vunpack.c.l.b16 %v970
    %v1799 = vunpack.c.l.b16 %v983
    %v1800 = vunpack.c.h.b16 %v983
    %v1801 = vunpack.c.l.b16 %v996
    %v1802 = vunpack.c.h.b16 %v996
    %v1803 = vunpack.c.l.b16 %v1009
    %v1804 = vunpack.c.h.b16 %v1009
    %v1805 = vunpack.c.l.b16 %v1022
    %v1806 = vunpack.c.h.b16 %v1022
    %v1807 = vunpack.c.l.b16 %v1035
    %v1808 = vunpack.c.l.b16 %v1048
    %v1809 = vunpack.c.h.b16 %v1048
    %v1810 = vunpack.c.l.b16 %v1061
    %v1811 = vunpack.c.h.b16 %v1061
    %v1812 = vunpack.c.l.b16 %v1074
    %v1813 = vunpack.c.h.b16 %v1074
    %v1814 = vunpack.c.l.b16 %v1087
    %v1815 = vunpack.c.l.b16 %v1100
    %v1816 = vunpack.c.h.b16 %v1100
    %v1817 = vunpack.c.l.b16 %v1113
    %v1818 = vunpack.c.h.b16 %v1113
    %v1819 = vunpack.c.l.b16 %v1126
    %v1820 = vunpack.c.h.b16 %v1126
    %v1821 = vunpack.c.l.b16 %v1139
    %v1822 = vunpack.c.l.b16 %v1152
    %v1823 = vunpack.c.h.b16 %v1152
    %v1824 = vunpack.c.l.b16 %v1165
    %v1825 = vunpack.c.h.b16 %v1165
    %v1826 = vunpack.c.l.b16 %v1178
    %v1827 = vunpack.c.h.b16 %v1178
    %v1828 = vunpack.c.l.b16 %v1191
    %v1829 = vunpack.c.l.b16 %v1204
    %v1830 = vunpack.c.h.b16 %v1204
    %v1831 = vunpack.c.l.b16 %v1217
    %v1832 = vunpack.c.h.b16 %v1217
    %v1833 = vunpack.c.l.b16 %v1230
    %v1834 = vunpack.c.h.b16 %v1230
    %v1835 = vunpack.c.l.b16 %v1243
    %v1836 = vunpack.c.l.b16 %v1256
    %v1837 = vunpack.c.h.b16 %v1256
    %v1838 = vunpack.c.l.b16 %v1269
    %v1839 = vunpack.c.h.b16 %v1269
    %v1840 = vunpack.c.l.b16 %v1282
    %v1841 = vunpack.c.h.b16 %v1282
    %v1842 = vunpack.c.l.b16 %v1295
    %v1843 = vunpack.c.l.b16 %v1308
    %v1844 = vunpack.c.h.b16 %v1308
    %v1845 = vunpack.c.l.b16 %v1321
    %v1846 = vunpack.c.h.b16 %v1321
    %v1847 = vunpack.c.l.b16 %v1334
    %v1848 = vunpack.c.h.b16 %v1334
    %v1849 = vunpack.c.l.b16 %v1347
    %v1850 = vunpack.c.l.b16 %v1360
    %v1851 = vunpack.c.h.b16 %v1360
    %v1852 = vunpack.c.l.b16 %v1373
    %v1853 = vunpack.c.h.b16 %v1373
    %v1854 = vunpack.c.l.b16 %v1386
    %v1855 = vunpack.c.h.b16 %v1386
    %v1856 = vunpack.c.l.b16 %v1399
    %v1857 = vunpack.c.h.b16 %v1399
    %v1858 = vunpack.c.l.b16 %v1412
    %v1859 = vunpack.c.l.b16 %v1425
    %v1860 = vunpack.c.h.b16 %v1425
    %v1861 = vunpack.c.l.b16 %v1438
    %v1862 = vunpack.c.h.b16 %v1438
    %v1863 = vunpack.c.l.b16 %v1451
    %v1864 = vunpack.c.h.b16 %v1451
    %v1865 = vunpack.c.l.b16 %v1464
    %v1866 = vunpack.c.h.b16 %v1464
    %v1867 = vunpack.c.l.b16 %v1477
    %v1868 = vunpack.c.l.b16 %v1490
    %v1869 = vunpack.c.h.b16 %v1490
    %v1870 = vunpack.c.l.b16 %v1503
    %v1871 = vunpack.c.h.b16 %v1503
    %v1872 = vunpack.c.l.b16 %v1516
    %v1873 = vunpack.c.h.b16 %v1516
    %v1874 = vunpack.c.l.b16 %v1529
    %v1875 = vunpack.c.l.b16 %v1542
    %v1876 = vunpack.c.h.b16 %v1542
    %v1877 = vunpack.c.l.b16 %v1555
    %v1878 = vunpack.c.h.b16 %v1555
    %v1879 = vunpack.c.l.b16 %v1568
    %v1880 = vunpack.c.h.b16 %v1568
    %v1881 = vunpack.c.l.b16 %v1581
    %v1882 = vunpack.c.l.b16 %v1594
    %v1883 = vunpack.c.h.b16 %v1594
    %v1884 = vunpack.c.l.b16 %v1607
    %v1885 = vunpack.c.h.b16 %v1607
    %v1886 = vunpack.c.l.b16 %v1620
    %v1887 = vunpack.c.h.b16 %v1620
    %v1888 = vunpack.c.l.b16 %v1633
    %v1889 = vunpack.c.l.b16 %v1646
    %v1890 = vunpack.c.h.b16 %v1646
    %v1891 = vunpack.c.l.b16 %v1659
    %v1892 = vunpack.c.h.b16 %v1659
    %v1893 = vunpack.c.l.b16 %v1672
    %v1894 = vunpack.c.h.b16 %v1672
    %v1895 = vunpack.c.l.b16 %v1685
    %v1896 = vunpack.c.l.b16 %v1698
    %v1897 = vunpack.c.h.b16 %v1698
    %v1898 = vunpack.c.l.b16 %v1711
    %v1899 = vunpack.c.h.b16 %v1711
    %v1900 = vunpack.c.l.b16 %v1724
    %v1901 = vunpack.c.h.b16 %v1724
    %v1902 = vunpack.c.l.b16 %v1737
    %v1903 = vunpack.c.l.b16 %v1750
    %v1904 = vunpack.c.h.b16 %v1750
    %v1905 = vunpack.c.l.b16 %v1763
    %v1906 = vunpack.c.h.b16 %v1763
    %v1907 = vunpack.c.l.b16 %v1776
    %v1908 = vunpack.c.h.b16 %v1776
    %v1909 = vunpack.c.l.b16 %v1789
    %v1910 = vpack.c.b16 %v1799, %v1790
    %v1911 = vpack.c.b16 %v1800, %v1791
    %v1912 = vpack.c.b16 %v1801, %v1792
    %v1913 = vpack.c.b16 %v1802, %v1793
    %v1914 = vpack.c.b16 %v1803, %v1794
    %v1915 = vpack.c.b16 %v1804, %v1795
    %v1916 = vpack.c.b16 %v1805, %v1796
    %v1917 = vpack.c.b16 %v1806, %v1797
    %v1918 = vpack.c.b16 %v1807, %v1798
    %v1919 = vpack.c.b16 %v1815, %v1808
    %v1920 = vpack.c.b16 %v1816, %v1809
    %v1921 = vpack.c.b16 %v1817, %v1810
    %v1922 = vpack.c.b16 %v1818, %v1811
    %v1923 = vpack.c.b16 %v1819, %v1812
    %v1924 = vpack.c.b16 %v1820, %v1813
    %v1925 = vpack.c.b16 %v1821, %v1814
    %v1926 = vpack.c.b16 %v1829, %v1822
    %v1927 = vpack.c.b16 %v1830, %v1823
    %v1928 = vpack.c.b16 %v1831, %v1824
    %v1929 = vpack.c.b16 %v1832, %v1825
    %v1930 = vpack.c.b16 %v1833, %v1826
    %v1931 = vpack.c.b16 %v1834, %v1827
    %v1932 = vpack.c.b16 %v1835, %v1828
    %v1933 = vpack.c.b16 %v1843, %v1836
    %v1934 = vpack.c.b16 %v1844, %v1837
    %v1935 = vpack.c.b16 %v1845, %v1838
    %v1936 = vpack.c.b16 %v1846, %v1839
    %v1937 = vpack.c.b16 %v1847, %v1840
    %v1938 = vpack.c.b16 %v1848, %v1841
    %v1939 = vpack.c.b16 %v1849, %v1842
    %v1940 = vpack.c.b16 %v1859, %v1850
    %v1941 = vpack.c.b16 %v1860, %v1851
    %v1942 = vpack.c.b16 %v1861, %v1852
    %v1943 = vpack.c.b16 %v1862, %v1853
    %v1944 = vpack.c.b16 %v1863, %v1854
    %v1945 = vpack.c.b16 %v1864, %v1855
    %v1946 = vpack.c.b16 %v1865, %v1856
    %v1947 = vpack.c.b16 %v1866, %v1857
    %v1948 = vpack.c.b16 %v1867, %v1858
    %v1949 = vpack.c.b16 %v1875, %v1868
    %v1950 = vpack.c.b16 %v1876, %v1869
    %v1951 = vpack.c.b16 %v1877, %v1870
    %v1952 = vpack.c.b16 %v1878, %v1871
    %v1953 = vpack.c.b16 %v1879, %v1872
    %v1954 = vpack.c.b16 %v1880, %v1873
    %v1955 = vpack.c.b16 %v1881, %v1874
    %v1956 = vpack.c.b16 %v1889, %v1882
    %v1957 = vpack.c.b16 %v1890, %v1883
    %v1958 = vpack.c.b16 %v1891, %v1884
    %v1959 = vpack.c.b16 %v1892, %v1885
    %v1960 = vpack.c.b16 %v1893, %v1886
    %v1961 = vpack.c.b16 %v1894, %v1887
    %v1962 = vpack.c.b16 %v1895, %v1888
    %v1963 = vpack.c.b16 %v1903, %v1896
    %v1964 = vpack.c.b16 %v1904, %v1897
    %v1965 = vpack.c.b16 %v1905, %v1898
    %v1966 = vpack.c.b16 %v1906, %v1899
    %v1967 = vpack.c.b16 %v1907, %v1900
    %v1968 = vpack.c.b16 %v1908, %v1901
    %v1969 = vpack.c.b16 %v1909, %v1902
    %v2174 = vunpack.c.l.b16 %v203
    %v2175 = vunpack.c.l.b16 %v204
    %v2176 = vunpack.c.l.b16 %v205
    %v2177 = vunpack.c.l.b16 %v206
    %v2178 = vunpack.c.l.b16 %v207
    %v2179 = vunpack.c.l.b16 %v208
    %v2180 = vunpack.c.l.b16 %v209
    %v2181 = vunpack.c.l.b16 %v210
    %v2182 = vunpack.c.l.b16 %v211
    %v2183 = vunpack.c.l.b16 %v212
    %v2184 = vunpack.c.l.b16 %v213
    %v2185 = vunpack.c.l.b16 %v214
    %v2186 = vunpack.c.l.b16 %v215
    %v2187 = vunpack.c.l.b16 %v216
    %v2188 = vunpack.c.l.b16 %v217
    %v2189 = vunpack.c.l.b16 %v218
    %v2190 = vunpack.c.l.b16 %v219
    %v2191 = vunpack.c.l.b16 %v220
    %v2192 = vunpack.c.l.b16 %v221
    %v2193 = vunpack.c.l.b16 %v222
    %v2194 = vunpack.c.l.b16 %v223
    %v2195 = vunpack.c.l.b16 %v224
    %v2196 = vunpack.c.l.b16 %v225
    %v2197 = vunpack.c.l.b16 %v226
    %v2198 = vunpack.c.l.b16 %v227
    %v2199 = vunpack.c.l.b16 %v228
    %v2200 = vunpack.c.l.b16 %v229
    %v2201 = vunpack.c.l.b16 %v230
    %v2202 = vunpack.c.l.b16 %v231
    %v2203 = vunpack.c.l.b16 %v232
    %v2204 = vunpack.c.l.b16 %v233
    %v2205 = vunpack.c.l.b16 %v234
    %v2206 = vunpack.c.l.b16 %v235
    %v2207 = vunpack.c.l.b16 %v236
    %v2208 = vunpack.c.l.b16 %v237
    %v2209 = vunpack.c.l.b16 %v238
    %v2210 = vunpack.c.l.b16 %v239
    %v2211 = vunpack.c.l.b16 %v240
    %v2212 = vunpack.c.l.b16 %v241
    %v2213 = vunpack.c.l.b16 %v242
    %v2214 = vunpack.c.l.b16 %v243
    %v2215 = vunpack.c.l.b16 %v244
    %v2216 = vunpack.c.l.b16 %v245
    %v2217 = vunpack.c.l.b16 %v246
    %v2218 = vunpack.c.l.b16 %v247
    %v2219 = vunpack.c.l.b16 %v248
    %v2220 = vunpack.c.l.b16 %v249
    %v2221 = vunpack.c.l.b16 %v250
    %v2222 = vunpack.c.l.b16 %v251
    %v2223 = vunpack.c.l.b16 %v252
    %v2224 = vunpack.c.l.b16 %v253
    %v2225 = vunpack.c.l.b16 %v254
    %v2226 = vunpack.c.l.b16 %v255
    %v2227 = vunpack.c.l.b16 %v256
    %v2228 = vunpack.c.l.b16 %v257
    %v2229 = vunpack.c.l.b16 %v258
    %v2230 = vunpack.c.l.b16 %v259
    %v2231 = vunpack.c.l.b16 %v260
    %v2232 = vunpack.c.l.b16 %v261
    %v2233 = vunpack.c.l.b16 %v262
    %v2234 = vunpack.c.l.b16 %v263
    %v2235 = vunpack.c.l.b16 %v264
    %v2236 = vunpack.c.l.b16 %v265
    %v2237 = vunpack.c.l.b16 %v266
    %v2238 = vunpack.c.l.b16 %v267
    %v2239 = vunpack.c.l.b16 %v268
    %v2240 = vunpack.c.l.b16 %v269
    %v2241 = vunpack.c.l.b16 %v270
    %v2242 = vunpack.c.l.b16 %v271
    %v2243 = vunpack.c.l.b16 %v272
    %v2244 = vunpack.c.l.b16 %v273
    %v2245 = vunpack.c.l.b16 %v274
    %v2246 = vunpack.c.l.b16 %v275
    %v2247 = vunpack.c.l.b16 %v276
    %v2248 = vunpack.c.l.b16 %v277
    %v2249 = vunpack.c.l.b16 %v278
    %v2250 = vunpack.c.l.b16 %v279
    %v2251 = vunpack.c.l.b16 %v280
    %v2252 = vunpack.c.l.b16 %v281
    %v2253 = vunpack.c.l.b16 %v282
    %v2254 = vunpack.c.l.b16 %v283
    %v2255 = vunpack.c.l.b16 %v284
    %v2256 = vunpack.c.l.b16 %v285
    %v2257 = vunpack.c.l.b16 %v286
    %v2258 = vunpack.c.l.b16 %v287
    %v2259 = vunpack.c.l.b16 %v288
    %v2260 = vunpack.c.l.b16 %v289
    %v2261 = vunpack.c.l.b16 %v290
    %v2262 = vunpack.c.l.b16 %v291
    %v2263 = vunpack.c.l.b16 %v292
    %v2264 = vunpack.c.l.b16 %v293
    %v2265 = vunpack.c.l.b16 %v294
    %v2266 = vunpack.c.l.b16 %v295
    %v2267 = vunpack.c.l.b16 %v296
    %v2268 = vunpack.c.l.b16 %v297
    %v2269 = vunpack.c.l.b16 %v298
    %v2270 = vunpack.c.l.b16 %v299
    %v2271 = vunpack.c.l.b16 %v300
    %v2272 = vunpack.c.l.b16 %v301
    %v2273 = vunpack.c.l.b16 %v302
    %v2274 = vunpack.c.l.b16 %v303
    %v2275 = vunpack.c.l.b16 %v304
    %v2276 = vunpack.c.l.b16 %v305
    %v2277 = vunpack.c.l.b16 %v306
    %v2278 = vunpack.c.l.b16 %v307
    %v2279 = vunpack.c.l.b16 %v308
    %v2280 = vunpack.c.l.b16 %v309
    %v2281 = vunpack.c.l.b16 %v310
    %v2282 = vunpack.c.l.b16 %v311
    %v2283 = vunpack.c.l.b16 %v312
    %v2284 = vunpack.c.l.b16 %v313
    %v2285 = vunpack.c.l.b16 %v314
    %v2286 = vunpack.c.l.b16 %v315
    %v2287 = vunpack.c.l.b16 %v316
    %v2288 = vunpack.c.l.b16 %v317
    %v2289 = vunpack.c.l.b16 %v318
    %v2290 = vunpack.c.l.b16 %v319
    %v2291 = vunpack.c.l.b16 %v320
    %v2292 = vunpack.c.l.b16 %v321
    %v2293 = vunpack.c.l.b16 %v322
    %v2294 = vunpack.c.l.b16 %v323
    %v2295 = vunpack.c.l.b16 %v324
    %v2296 = vunpack.c.l.b16 %v325
    %v2297 = vunpack.c.l.b16 %v326
    %v2298 = vunpack.c.l.b16 %v327
    %v2299 = vunpack.c.l.b16 %v328
    %v2300 = vunpack.c.l.b16 %v329
    %v2301 = vunpack.c.l.b16 %v330
    %v2302 = vunpack.c.l.b16 %v331
    %v2303 = vunpack.c.l.b16 %v332
    %v2304 = vunpack.c.l.b16 %v333
    %v2305 = vunpack.c.l.b16 %v334
    %v2306 = vunpack.c.l.b16 %v335
    %v2307 = vunpack.c.l.b16 %v336
    %v2308 = vunpack.c.l.b16 %v337
    %v2309 = vunpack.c.l.b16 %v338
    %v2310 = vunpack.c.l.b16 %v339
    %v2311 = vunpack.c.l.b16 %v340
    %v2312 = vunpack.c.l.b16 %v341
    %v2313 = vunpack.c.l.b16 %v342
    %v2314 = vunpack.c.l.b16 %v343
    %v2315 = vunpack.c.l.b16 %v344
    %v2316 = vunpack.c.l.b16 %v345
    %v2317 = vunpack.c.l.b16 %v346
    %v2318 = vpack.c.b16 %v2175, %v2174
    %v2319 = vpack.c.b16 %v2177, %v2176
    %v2320 = vpack.c.b16 %v2179, %v2178
    %v2321 = vpack.c.b16 %v2181, %v2180
    %v2322 = vpack.c.b16 %v2183, %v2182
    %v2323 = vpack.c.b16 %v2185, %v2184
    %v2324 = vpack.c.b16 %v2187, %v2186
    %v2325 = vpack.c.b16 %v2189, %v2188
    %v2326 = vpack.c.b16 %v2191, %v2190
    %v2327 = vpack.c.b16 %v2193, %v2192
    %v2328 = vpack.c.b16 %v2195, %v2194
    %v2329 = vpack.c.b16 %v2197, %v2196
    %v2330 = vpack.c.b16 %v2199, %v2198
    %v2331 = vpack.c.b16 %v2201, %v2200
    %v2332 = vpack.c.b16 %v2203, %v2202
    %v2333 = vpack.c.b16 %v2205, %v2204
    %v2334 = vpack.c.b16 %v2207, %v2206
    %v2335 = vpack.c.b16 %v2209, %v2208
    %v2336 = vpack.c.b16 %v2211, %v2210
    %v2337 = vpack.c.b16 %v2213, %v2212
    %v2338 = vpack.c.b16 %v2215, %v2214
    %v2339 = vpack.c.b16 %v2217, %v2216
    %v2340 = vpack.c.b16 %v2219, %v2218
    %v2341 = vpack.c.b16 %v2221, %v2220
    %v2342 = vpack.c.b16 %v2223, %v2222
    %v2343 = vpack.c.b16 %v2225, %v2224
    %v2344 = vpack.c.b16 %v2227, %v2226
    %v2345 = vpack.c.b16 %v2229, %v2228
    %v2346 = vpack.c.b16 %v2231, %v2230
    %v2347 = vpack.c.b16 %v2233, %v2232
    %v2348 = vpack.c.b16 %v2235, %v2234
    %v2349 = vpack.c.b16 %v2237, %v2236
    %v2350 = vpack.c.b16 %v2239, %v2238
    %v2351 = vpack.c.b16 %v2241, %v2240
    %v2352 = vpack.c.b16 %v2243, %v2242
    %v2353 = vpack.c.b16 %v2245, %v2244
    %v2354 = vpack.c.b16 %v2247, %v2246
    %v2355 = vpack.c.b16 %v2249, %v2248
    %v2356 = vpack.c.b16 %v2251, %v2250
    %v2357 = vpack.c.b16 %v2253, %v2252
    %v2358 = vpack.c.b16 %v2255, %v2254
    %v2359 = vpack.c.b16 %v2257, %v2256
    %v2360 = vpack.c.b16 %v2259, %v2258
    %v2361 = vpack.c.b16 %v2261, %v2260
    %v2362 = vpack.c.b16 %v2263, %v2262
    %v2363 = vpack.c.b16 %v2265, %v2264
    %v2364 = vpack.c.b16 %v2267, %v2266
    %v2365 = vpack.c.b16 %v2269, %v2268
    %v2366 = vpack.c.b16 %v2271, %v2270
    %v2367 = vpack.c.b16 %v2273, %v2272
    %v2368 = vpack.c.b16 %v2275, %v2274
    %v2369 = vpack.c.b16 %v2277, %v2276
    %v2370 = vpack.c.b16 %v2279, %v2278
    %v2371 = vpack.c.b16 %v2281, %v2280
    %v2372 = vpack.c.b16 %v2283, %v2282
    %v2373 = vpack.c.b16 %v2285, %v2284
    %v2374 = vpack.c.b16 %v2287, %v2286
    %v2375 = vpack.c.b16 %v2289, %v2288
    %v2376 = vpack.c.b16 %v2291, %v2290
    %v2377 = vpack.c.b16 %v2293, %v2292
    %v2378 = vpack.c.b16 %v2295, %v2294
    %v2379 = vpack.c.b16 %v2297, %v2296
    %v2380 = vpack.c.b16 %v2299, %v2298
    %v2381 = vpack.c.b16 %v2301, %v2300
    %v2382 = vpack.c.b16 %v2303, %v2302
    %v2383 = vpack.c.b16 %v2305, %v2304
    %v2384 = vpack.c.b16 %v2307, %v2306
    %v2385 = vpack.c.b16 %v2309, %v2308
    %v2386 = vpack.c.b16 %v2311, %v2310
    %v2387 = vpack.c.b16 %v2313, %v2312
    %v2388 = vpack.c.b16 %v2315, %v2314
    %v2389 = vpack.c.b16 %v2317, %v2316
    %2462 = vmatprep.subr.bf16.mxu0 0
    %2463 = vmatpush1.bf16.msra.mxu0 %v2318
    %2464 = vmatprep.subr.bf16.mxu0 0
    %2465 = vmatpush1.bf16.msra.mxu0 %v2319
    %2466 = vmatprep.subr.bf16.mxu0 0
    %2467 = vmatpush1.bf16.msra.mxu0 %v2320
    %2468 = vmatprep.subr.bf16.mxu0 0
    %2469 = vmatpush1.bf16.msra.mxu0 %v2321
    %2470 = vmatprep.subr.bf16.mxu0 0
    %2471 = vmatpush1.bf16.msra.mxu0 %v2322
    %2472 = vmatprep.subr.bf16.mxu0 0
    %2473 = vmatpush1.bf16.msra.mxu0 %v2323
    %2474 = vmatprep.subr.bf16.mxu0 0
    %2475 = vmatpush1.bf16.msra.mxu0 %v2324
    %2476 = vmatprep.subr.bf16.mxu0 0
    %2477 = vmatpush1.bf16.msra.mxu0 %v2325
    %2478 = vmatprep.subr.bf16.mxu0 0
    %2479 = vmatpush1.bf16.msra.mxu0 %v2326
    %2480 = vmatprep.subr.bf16.mxu0 0
    %2481 = vmatpush1.bf16.msra.mxu0 %v2327
    %2482 = vmatprep.subr.bf16.mxu0 0
    %2483 = vmatpush1.bf16.msra.mxu0 %v2328
    %2484 = vmatprep.subr.bf16.mxu0 0
    %2485 = vmatpush1.bf16.msra.mxu0 %v2329
    %2486 = vmatprep.subr.bf16.mxu0 0
    %2487 = vmatpush1.bf16.msra.mxu0 %v2330
    %2488 = vmatprep.subr.bf16.mxu0 0
    %2489 = vmatpush1.bf16.msra.mxu0 %v2331
    %2490 = vmatprep.subr.bf16.mxu0 0
    %2491 = vmatpush1.bf16.msra.mxu0 %v2332
    %2492 = vmatprep.subr.bf16.mxu0 0
    %2493 = vmatpush1.bf16.msra.mxu0 %v2333
    %2494 = vmatprep.mubr.bf16.mxu0 %v1911
    %2495 = vmatmul.mubr.bf16.gmra.mrb[0].mxu0 %v1910
    %v2496 = vpop.f32.mrb[0].mxu0
    %v2497 = vadd.f32 0.0, %v2496
    %v2498 = vpop.f32.mrb[0].mxu0
    %v2499 = vpop.f32.mrb[0].mxu0
    %v2500 = vadd.f32 0.0, %v2499
    %v2501 = vpop.f32.mrb[0].mxu0
    %2502 = vmatprep.mubr.bf16.mxu0 %v1917
    %2503 = vmatmul.mubr.bf16.gmra.mrb[0].mxu0 %v1916
    %v2504 = vpop.f32.mrb[0].mxu0
    %v2505 = vadd.f32 0.0, %v2504
    %v2506 = vpop.f32.mrb[0].mxu0
    %v2507 = vpop.f32.mrb[0].mxu0
    %v2508 = vadd.f32 0.0, %v2507
    %v2509 = vpop.f32.mrb[0].mxu0
    %2510 = vmatprep.mubr.bf16.mxu0 %v1924
    %2511 = vmatmul.mubr.bf16.gmra.mrb[0].mxu0 %v1923
    %v2512 = vpop.f32.mrb[0].mxu0
    %v2513 = vadd.f32 0.0, %v2512
    %v2514 = vpop.f32.mrb[0].mxu0
    %v2515 = vpop.f32.mrb[0].mxu0
    %v2516 = vadd.f32 0.0, %v2515
    %v2517 = vpop.f32.mrb[0].mxu0
    %2518 = vmatprep.mubr.bf16.mxu0 %v1931
    %2519 = vmatmul.mubr.bf16.gmra.mrb[0].mxu0 %v1930
    %v2520 = vpop.f32.mrb[0].mxu0
    %v2521 = vadd.f32 0.0, %v2520
    %v2522 = vpop.f32.mrb[0].mxu0
    %v2523 = vpop.f32.mrb[0].mxu0
    %v2524 = vadd.f32 0.0, %v2523
    %v2525 = vpop.f32.mrb[0].mxu0
    %2526 = vmatprep.mubr.bf16.mxu0 %v1941
    %2527 = vmatmul.mubr.bf16.gmra.mrb[0].mxu0 %v1940
    %v2528 = vpop.f32.mrb[0].mxu0
    %v2529 = vadd.f32 0.0, %v2528
    %v2530 = vpop.f32.mrb[0].mxu0
    %v2531 = vpop.f32.mrb[0].mxu0
    %v2532 = vadd.f32 0.0, %v2531
    %v2533 = vpop.f32.mrb[0].mxu0
    %2534 = vmatprep.mubr.bf16.mxu0 %v1947
    %2535 = vmatmul.mubr.bf16.gmra.mrb[0].mxu0 %v1946
    %v2536 = vpop.f32.mrb[0].mxu0
    %v2537 = vadd.f32 0.0, %v2536
    %v2538 = vpop.f32.mrb[0].mxu0
    %v2539 = vpop.f32.mrb[0].mxu0
    %v2540 = vadd.f32 0.0, %v2539
    %v2541 = vpop.f32.mrb[0].mxu0
    %2542 = vmatprep.mubr.bf16.mxu0 %v1954
    %2543 = vmatmul.mubr.bf16.gmra.mrb[0].mxu0 %v1953
    %v2544 = vpop.f32.mrb[0].mxu0
    %v2545 = vadd.f32 0.0, %v2544
    %v2546 = vpop.f32.mrb[0].mxu0
    %v2547 = vpop.f32.mrb[0].mxu0
    %v2548 = vadd.f32 0.0, %v2547
    %v2549 = vpop.f32.mrb[0].mxu0
    %2550 = vmatprep.mubr.bf16.mxu0 %v1961
    %2551 = vmatmul.mubr.bf16.gmra.mrb[0].mxu0 %v1960
    %v2552 = vpop.f32.mrb[0].mxu0
    %v2553 = vadd.f32 0.0, %v2552
    %v2554 = vpop.f32.mrb[0].mxu0
    %v2555 = vpop.f32.mrb[0].mxu0
    %v2556 = vadd.f32 0.0, %v2555
    %v2557 = vpop.f32.mrb[0].mxu0
    %2558 = vdwg.mxu0
    %2559 = vmatprep.subr.bf16.mxu0 0
    %2560 = vmatpush1.bf16.msra.mxu0 %v2334
    %2561 = vmatprep.subr.bf16.mxu0 0
    %2562 = vmatpush1.bf16.msra.mxu0 %v2335
    %2563 = vmatprep.subr.bf16.mxu0 0
    %2564 = vmatpush1.bf16.msra.mxu0 %v2336
    %2565 = vmatprep.subr.bf16.mxu0 0
    %2566 = vmatpush1.bf16.msra.mxu0 %v2337
    %2567 = vmatprep.subr.bf16.mxu0 0
    %2568 = vmatpush1.bf16.msra.mxu0 %v2338
    %2569 = vmatprep.subr.bf16.mxu0 0
    %2570 = vmatpush1.bf16.msra.mxu0 %v2339
    %2571 = vmatprep.subr.bf16.mxu0 0
    %2572 = vmatpush1.bf16.msra.mxu0 %v2340
    %2573 = vmatprep.subr.bf16.mxu0 0
    %2574 = vmatpush1.bf16.msra.mxu0 %v2341
    %2575 = vmatprep.subr.bf16.mxu0 0
    %2576 = vmatpush1.bf16.msra.mxu0 %v2342
    %2577 = vmatprep.subr.bf16.mxu0 0
    %2578 = vmatpush1.bf16.msra.mxu0 %v2343
    %2579 = vmatprep.subr.bf16.mxu0 0
    %2580 = vmatpush1.bf16.msra.mxu0 %v2344
    %2581 = vmatprep.subr.bf16.mxu0 0
    %2582 = vmatpush1.bf16.msra.mxu0 %v2345
    %2583 = vmatprep.subr.bf16.mxu0 0
    %2584 = vmatpush1.bf16.msra.mxu0 %v2346
    %2585 = vmatprep.subr.bf16.mxu0 0
    %2586 = vmatpush1.bf16.msra.mxu0 %v2347
    %2587 = vmatprep.subr.bf16.mxu0 0
    %2588 = vmatpush1.bf16.msra.mxu0 %v2348
    %2589 = vmatprep.subr.bf16.mxu0 0
    %2590 = vmatpush1.bf16.msra.mxu0 %v2349
    %2591 = vmatprep.mubr.bf16.mxu0 %v1913
    %2592 = vmatmul.mubr.bf16.gmra.mrb[0].mxu0 %v1912
    %v2593 = vpop.f32.mrb[0].mxu0
    %v2594 = vadd.f32 %v2497, %v2593
    %v2595 = vpop.f32.mrb[0].mxu0
    %v2596 = vpop.f32.mrb[0].mxu0
    %v2597 = vadd.f32 %v2500, %v2596
    %v2598 = vpop.f32.mrb[0].mxu0
    %2599 = vmatprep.mubr.bf16.mxu0 %v1920
    %2600 = vmatmul.mubr.bf16.gmra.mrb[0].mxu0 %v1919
    %v2601 = vpop.f32.mrb[0].mxu0
    %v2602 = vadd.f32 %v2505, %v2601
    %v2603 = vpop.f32.mrb[0].mxu0
    %v2604 = vpop.f32.mrb[0].mxu0
    %v2605 = vadd.f32 %v2508, %v2604
    %v2606 = vpop.f32.mrb[0].mxu0
    %2607 = vmatprep.mubr.bf16.mxu0 %v1927
    %2608 = vmatmul.mubr.bf16.gmra.mrb[0].mxu0 %v1926
    %v2609 = vpop.f32.mrb[0].mxu0
    %v2610 = vadd.f32 %v2513, %v2609
    %v2611 = vpop.f32.mrb[0].mxu0
    %v2612 = vpop.f32.mrb[0].mxu0
    %v2613 = vadd.f32 %v2516, %v2612
    %v2614 = vpop.f32.mrb[0].mxu0
    %2615 = vmatprep.mubr.bf16.mxu0 %v1934
    %2616 = vmatmul.mubr.bf16.gmra.mrb[0].mxu0 %v1933
    %v2617 = vpop.f32.mrb[0].mxu0
    %v2618 = vadd.f32 %v2521, %v2617
    %v2619 = vpop.f32.mrb[0].mxu0
    %v2620 = vpop.f32.mrb[0].mxu0
    %v2621 = vadd.f32 %v2524, %v2620
    %v2622 = vpop.f32.mrb[0].mxu0
    %2623 = vmatprep.mubr.bf16.mxu0 %v1943
    %2624 = vmatmul.mubr.bf16.gmra.mrb[0].mxu0 %v1942
    %v2625 = vpop.f32.mrb[0].mxu0
    %v2626 = vadd.f32 %v2529, %v2625
    %v2627 = vpop.f32.mrb[0].mxu0
    %v2628 = vpop.f32.mrb[0].mxu0
    %v2629 = vadd.f32 %v2532, %v2628
    %v2630 = vpop.f32.mrb[0].mxu0
    %2631 = vmatprep.mubr.bf16.mxu0 %v1950
    %2632 = vmatmul.mubr.bf16.gmra.mrb[0].mxu0 %v1949
    %v2633 = vpop.f32.mrb[0].mxu0
    %v2634 = vadd.f32 %v2537, %v2633
    %v2635 = vpop.f32.mrb[0].mxu0
    %v2636 = vpop.f32.mrb[0].mxu0
    %v2637 = vadd.f32 %v2540, %v2636
    %v2638 = vpop.f32.mrb[0].mxu0
    %2639 = vmatprep.mubr.bf16.mxu0 %v1957
    %2640 = vmatmul.mubr.bf16.gmra.mrb[0].mxu0 %v1956
    %v2641 = vpop.f32.mrb[0].mxu0
    %v2642 = vadd.f32 %v2545, %v2641
    %v2643 = vpop.f32.mrb[0].mxu0
    %v2644 = vpop.f32.mrb[0].mxu0
    %v2645 = vadd.f32 %v2548, %v2644
    %v2646 = vpop.f32.mrb[0].mxu0
    %2647 = vmatprep.mubr.bf16.mxu0 %v1964
    %2648 = vmatmul.mubr.bf16.gmra.mrb[0].mxu0 %v1963
    %v2649 = vpop.f32.mrb[0].mxu0
    %v2650 = vadd.f32 %v2553, %v2649
    %v2651 = vpop.f32.mrb[0].mxu0
    %v2652 = vpop.f32.mrb[0].mxu0
    %v2653 = vadd.f32 %v2556, %v2652
    %v2654 = vpop.f32.mrb[0].mxu0
    %2655 = vdwg.mxu0
    %2656 = vmatprep.subr.bf16.mxu0 0
    %2657 = vmatpush1.bf16.msra.mxu0 %v2350
    %2658 = vmatprep.subr.bf16.mxu0 0
    %2659 = vmatpush1.bf16.msra.mxu0 %v2351
    %2660 = vmatprep.subr.bf16.mxu0 0
    %2661 = vmatpush1.bf16.msra.mxu0 %v2352
    %2662 = vmatprep.subr.bf16.mxu0 0
    %2663 = vmatpush1.bf16.msra.mxu0 %v2353
    %2664 = vmatprep.subr.bf16.mxu0 0
    %2665 = vmatpush1.bf16.msra.mxu0 %v2354
    %2666 = vmatprep.subr.bf16.mxu0 0
    %2667 = vmatpush1.bf16.msra.mxu0 %v2355
    %2668 = vmatprep.subr.bf16.mxu0 0
    %2669 = vmatpush1.bf16.msra.mxu0 %v2356
    %2670 = vmatprep.subr.bf16.mxu0 0
    %2671 = vmatpush1.bf16.msra.mxu0 %v2357
    %2672 = vmatprep.subr.bf16.mxu0 0
    %2673 = vmatpush1.bf16.msra.mxu0 %v2358
    %2674 = vmatprep.subr.bf16.mxu0 0
    %2675 = vmatpush1.bf16.msra.mxu0 %v2359
    %2676 = vmatprep.subr.bf16.mxu0 0
    %2677 = vmatpush1.bf16.msra.mxu0 %v2360
    %2678 = vmatprep.subr.bf16.mxu0 0
    %2679 = vmatpush1.bf16.msra.mxu0 %v2361
    %2680 = vmatprep.subr.bf16.mxu0 0
    %2681 = vmatpush1.bf16.msra.mxu0 %v2362
    %2682 = vmatprep.subr.bf16.mxu0 0
    %2683 = vmatpush1.bf16.msra.mxu0 %v2363
    %2684 = vmatprep.subr.bf16.mxu0 0
    %2685 = vmatpush1.bf16.msra.mxu0 %v2364
    %2686 = vmatprep.subr.bf16.mxu0 0
    %2687 = vmatpush1.bf16.msra.mxu0 %v2365
    %2688 = vmatprep.mubr.bf16.mxu0 %v1915
    %2689 = vmatmul.mubr.bf16.gmra.mrb[0].mxu0 %v1914
    %v2690 = vpop.f32.mrb[0].mxu0
    %v2691 = vadd.f32 %v2594, %v2690
    %v2692 = vpop.f32.mrb[0].mxu0
    %v2693 = vpop.f32.mrb[0].mxu0
    %v2694 = vadd.f32 %v2597, %v2693
    %v2695 = vpop.f32.mrb[0].mxu0
    %2696 = vmatprep.mubr.bf16.mxu0 %v1922
    %2697 = vmatmul.mubr.bf16.gmra.mrb[0].mxu0 %v1921
    %v2698 = vpop.f32.mrb[0].mxu0
    %v2699 = vadd.f32 %v2602, %v2698
    %v2700 = vpop.f32.mrb[0].mxu0
    %v2701 = vpop.f32.mrb[0].mxu0
    %v2702 = vadd.f32 %v2605, %v2701
    %v2703 = vpop.f32.mrb[0].mxu0
    %2704 = vmatprep.mubr.bf16.mxu0 %v1929
    %2705 = vmatmul.mubr.bf16.gmra.mrb[0].mxu0 %v1928
    %v2706 = vpop.f32.mrb[0].mxu0
    %v2707 = vadd.f32 %v2610, %v2706
    %v2708 = vpop.f32.mrb[0].mxu0
    %v2709 = vpop.f32.mrb[0].mxu0
    %v2710 = vadd.f32 %v2613, %v2709
    %v2711 = vpop.f32.mrb[0].mxu0
    %2712 = vmatprep.mubr.bf16.mxu0 %v1936
    %2713 = vmatmul.mubr.bf16.gmra.mrb[0].mxu0 %v1935
    %v2714 = vpop.f32.mrb[0].mxu0
    %v2715 = vadd.f32 %v2618, %v2714
    %v2716 = vpop.f32.mrb[0].mxu0
    %v2717 = vpop.f32.mrb[0].mxu0
    %v2718 = vadd.f32 %v2621, %v2717
    %v2719 = vpop.f32.mrb[0].mxu0
    %2720 = vmatprep.mubr.bf16.mxu0 %v1945
    %2721 = vmatmul.mubr.bf16.gmra.mrb[0].mxu0 %v1944
    %v2722 = vpop.f32.mrb[0].mxu0
    %v2723 = vadd.f32 %v2626, %v2722
    %v2724 = vpop.f32.mrb[0].mxu0
    %v2725 = vpop.f32.mrb[0].mxu0
    %v2726 = vadd.f32 %v2629, %v2725
    %v2727 = vpop.f32.mrb[0].mxu0
    %2728 = vmatprep.mubr.bf16.mxu0 %v1952
    %2729 = vmatmul.mubr.bf16.gmra.mrb[0].mxu0 %v1951
    %v2730 = vpop.f32.mrb[0].mxu0
    %v2731 = vadd.f32 %v2634, %v2730
    %v2732 = vpop.f32.mrb[0].mxu0
    %v2733 = vpop.f32.mrb[0].mxu0
    %v2734 = vadd.f32 %v2637, %v2733
    %v2735 = vpop.f32.mrb[0].mxu0
    %2736 = vmatprep.mubr.bf16.mxu0 %v1959
    %2737 = vmatmul.mubr.bf16.gmra.mrb[0].mxu0 %v1958
    %v2738 = vpop.f32.mrb[0].mxu0
    %v2739 = vadd.f32 %v2642, %v2738
    %v2740 = vpop.f32.mrb[0].mxu0
    %v2741 = vpop.f32.mrb[0].mxu0
    %v2742 = vadd.f32 %v2645, %v2741
    %v2743 = vpop.f32.mrb[0].mxu0
    %2744 = vmatprep.mubr.bf16.mxu0 %v1966
    %2745 = vmatmul.mubr.bf16.gmra.mrb[0].mxu0 %v1965
    %v2746 = vpop.f32.mrb[0].mxu0
    %v2747 = vadd.f32 %v2650, %v2746
    %v2748 = vpop.f32.mrb[0].mxu0
    %v2749 = vpop.f32.mrb[0].mxu0
    %v2750 = vadd.f32 %v2653, %v2749
    %v2751 = vpop.f32.mrb[0].mxu0
    %2752 = vdwg.mxu0
    %2753 = vmatprep.subr.bf16.mxu0 0
    %2754 = vmatpush1.bf16.msra.mxu0 %v2366
    %2755 = vmatprep.subr.bf16.mxu0 0
    %2756 = vmatpush1.bf16.msra.mxu0 %v2367
    %2757 = vmatprep.subr.bf16.mxu0 0
    %2758 = vmatpush1.bf16.msra.mxu0 %v2368
    %2759 = vmatprep.subr.bf16.mxu0 0
    %2760 = vmatpush1.bf16.msra.mxu0 %v2369
    %2761 = vmatprep.subr.bf16.mxu0 0
    %2762 = vmatpush1.bf16.msra.mxu0 %v2370
    %2763 = vmatprep.subr.bf16.mxu0 0
    %2764 = vmatpush1.bf16.msra.mxu0 %v2371
    %2765 = vmatprep.subr.bf16.mxu0 0
    %2766 = vmatpush1.bf16.msra.mxu0 %v2372
    %2767 = vmatprep.subr.bf16.mxu0 0
    %2768 = vmatpush1.bf16.msra.mxu0 %v2373
    %2769 = vmatprep.subr.bf16.mxu0 0
    %2770 = vmatpush1.bf16.msra.mxu0 %v2374
    %2771 = vmatprep.subr.bf16.mxu0 0
    %2772 = vmatpush1.bf16.msra.mxu0 %v2375
    %2773 = vmatprep.subr.bf16.mxu0 0
    %2774 = vmatpush1.bf16.msra.mxu0 %v2376
    %2775 = vmatprep.subr.bf16.mxu0 0
    %2776 = vmatpush1.bf16.msra.mxu0 %v2377
    %2777 = vmatprep.subr.bf16.mxu0 0
    %2778 = vmatpush1.bf16.msra.mxu0 %v2378
    %2779 = vmatprep.subr.bf16.mxu0 0
    %2780 = vmatpush1.bf16.msra.mxu0 %v2379
    %2781 = vmatprep.subr.bf16.mxu0 0
    %2782 = vmatpush1.bf16.msra.mxu0 %v2380
    %2783 = vmatprep.subr.bf16.mxu0 0
    %2784 = vmatpush1.bf16.msra.mxu0 %v2381
    %2785 = vmatprep.mubr.bf16.mxu0 %v1917
    %2786 = vmatmul.mubr.bf16.gmra.mrb[0].mxu0 %v1916
    %v2787 = vpop.f32.mrb[0].mxu0
    %v2788 = vadd.f32 %v2691, %v2787
    %v2789 = vpop.f32.mrb[0].mxu0
    %v2790 = vpop.f32.mrb[0].mxu0
    %v2791 = vadd.f32 %v2694, %v2790
    %v2792 = vpop.f32.mrb[0].mxu0
    %2793 = vmatprep.mubr.bf16.mxu0 %v1924
    %2794 = vmatmul.mubr.bf16.gmra.mrb[0].mxu0 %v1923
    %v2795 = vpop.f32.mrb[0].mxu0
    %v2796 = vadd.f32 %v2699, %v2795
    %v2797 = vpop.f32.mrb[0].mxu0
    %v2798 = vpop.f32.mrb[0].mxu0
    %v2799 = vadd.f32 %v2702, %v2798
    %v2800 = vpop.f32.mrb[0].mxu0
    %2801 = vmatprep.mubr.bf16.mxu0 %v1931
    %2802 = vmatmul.mubr.bf16.gmra.mrb[0].mxu0 %v1930
    %v2803 = vpop.f32.mrb[0].mxu0
    %v2804 = vadd.f32 %v2707, %v2803
    %v2805 = vpop.f32.mrb[0].mxu0
    %v2806 = vpop.f32.mrb[0].mxu0
    %v2807 = vadd.f32 %v2710, %v2806
    %v2808 = vpop.f32.mrb[0].mxu0
    %2809 = vmatprep.mubr.bf16.mxu0 %v1938
    %2810 = vmatmul.mubr.bf16.gmra.mrb[0].mxu0 %v1937
    %v2811 = vpop.f32.mrb[0].mxu0
    %v2812 = vadd.f32 %v2715, %v2811
    %v2813 = vpop.f32.mrb[0].mxu0
    %v2814 = vpop.f32.mrb[0].mxu0
    %v2815 = vadd.f32 %v2718, %v2814
    %v2816 = vpop.f32.mrb[0].mxu0
    %2817 = vmatprep.mubr.bf16.mxu0 %v1947
    %2818 = vmatmul.mubr.bf16.gmra.mrb[0].mxu0 %v1946
    %v2819 = vpop.f32.mrb[0].mxu0
    %v2820 = vadd.f32 %v2723, %v2819
    %v2821 = vpop.f32.mrb[0].mxu0
    %v2822 = vpop.f32.mrb[0].mxu0
    %v2823 = vadd.f32 %v2726, %v2822
    %v2824 = vpop.f32.mrb[0].mxu0
    %2825 = vmatprep.mubr.bf16.mxu0 %v1954
    %2826 = vmatmul.mubr.bf16.gmra.mrb[0].mxu0 %v1953
    %v2827 = vpop.f32.mrb[0].mxu0
    %v2828 = vadd.f32 %v2731, %v2827
    %v2829 = vpop.f32.mrb[0].mxu0
    %v2830 = vpop.f32.mrb[0].mxu0
    %v2831 = vadd.f32 %v2734, %v2830
    %v2832 = vpop.f32.mrb[0].mxu0
    %2833 = vmatprep.mubr.bf16.mxu0 %v1961
    %2834 = vmatmul.mubr.bf16.gmra.mrb[0].mxu0 %v1960
    %v2835 = vpop.f32.mrb[0].mxu0
    %v2836 = vadd.f32 %v2739, %v2835
    %v2837 = vpop.f32.mrb[0].mxu0
    %v2838 = vpop.f32.mrb[0].mxu0
    %v2839 = vadd.f32 %v2742, %v2838
    %v2840 = vpop.f32.mrb[0].mxu0
    %2841 = vmatprep.mubr.bf16.mxu0 %v1968
    %2842 = vmatmul.mubr.bf16.gmra.mrb[0].mxu0 %v1967
    %v2843 = vpop.f32.mrb[0].mxu0
    %v2844 = vadd.f32 %v2747, %v2843
    %v2845 = vpop.f32.mrb[0].mxu0
    %v2846 = vpop.f32.mrb[0].mxu0
    %v2847 = vadd.f32 %v2750, %v2846
    %v2848 = vpop.f32.mrb[0].mxu0
    %2849 = vdwg.mxu0
    %2850 = vmatprep.subr.bf16.mxu0 0
    %2851 = vmatpush1.bf16.msra.mxu0 %v2382
    %2852 = vmatprep.subr.bf16.mxu0 0
    %2853 = vmatpush1.bf16.msra.mxu0 %v2383
    %2854 = vmatprep.subr.bf16.mxu0 0
    %2855 = vmatpush1.bf16.msra.mxu0 %v2384
    %2856 = vmatprep.subr.bf16.mxu0 0
    %2857 = vmatpush1.bf16.msra.mxu0 %v2385
    %2858 = vmatprep.subr.bf16.mxu0 0
    %2859 = vmatpush1.bf16.msra.mxu0 %v2386
    %2860 = vmatprep.subr.bf16.mxu0 0
    %2861 = vmatpush1.bf16.msra.mxu0 %v2387
    %2862 = vmatprep.subr.bf16.mxu0 0
    %2863 = vmatpush1.bf16.msra.mxu0 %v2388
    %2864 = vmatprep.subr.bf16.mxu0 0
    %2865 = vmatpush1.bf16.msra.mxu0 %v2389
    %2866 = vmatprep.subr.bf16.mxu0 0
    %2867 = vmatpush1.bf16.msra.mxu0 0
    %2868 = vmatprep.subr.bf16.mxu0 0
    %2869 = vmatpush1.bf16.msra.mxu0 0
    %2870 = vmatprep.subr.bf16.mxu0 0
    %2871 = vmatpush1.bf16.msra.mxu0 0
    %2872 = vmatprep.subr.bf16.mxu0 0
    %2873 = vmatpush1.bf16.msra.mxu0 0
    %2874 = vmatprep.subr.bf16.mxu0 0
    %2875 = vmatpush1.bf16.msra.mxu0 0
    %2876 = vmatprep.subr.bf16.mxu0 0
    %2877 = vmatpush1.bf16.msra.mxu0 0
    %2878 = vmatprep.subr.bf16.mxu0 0
    %2879 = vmatpush1.bf16.msra.mxu0 0
    %2880 = vmatprep.subr.bf16.mxu0 0
    %2881 = vmatpush1.bf16.msra.mxu0 0
    %2882 = vmatprep.mubr.bf16.mxu0 0
    %2883 = vmatmul.mubr.bf16.gmra.mrb[0].mxu0 %v1918
    %v2884 = vpop.f32.mrb[0].mxu0
    %v2885 = vadd.f32 %v2788, %v2884
    %v2886 = vpop.f32.mrb[0].mxu0
    %v2887 = vpop.f32.mrb[0].mxu0
    %v2888 = vadd.f32 %v2791, %v2887
    %v2889 = vpop.f32.mrb[0].mxu0
    %2890 = vmatprep.mubr.bf16.mxu0 0
    %2891 = vmatmul.mubr.bf16.gmra.mrb[0].mxu0 %v1925
    %v2892 = vpop.f32.mrb[0].mxu0
    %v2893 = vadd.f32 %v2796, %v2892
    %v2894 = vpop.f32.mrb[0].mxu0
    %v2895 = vpop.f32.mrb[0].mxu0
    %v2896 = vadd.f32 %v2799, %v2895
    %v2897 = vpop.f32.mrb[0].mxu0
    %2898 = vmatprep.mubr.bf16.mxu0 0
    %2899 = vmatmul.mubr.bf16.gmra.mrb[0].mxu0 %v1932
    %v2900 = vpop.f32.mrb[0].mxu0
    %v2901 = vadd.f32 %v2804, %v2900
    %v2902 = vpop.f32.mrb[0].mxu0
    %v2903 = vpop.f32.mrb[0].mxu0
    %v2904 = vadd.f32 %v2807, %v2903
    %v2905 = vpop.f32.mrb[0].mxu0
    %2906 = vmatprep.mubr.bf16.mxu0 0
    %2907 = vmatmul.mubr.bf16.gmra.mrb[0].mxu0 %v1939
    %v2908 = vpop.f32.mrb[0].mxu0
    %v2909 = vadd.f32 %v2812, %v2908
    %v2910 = vpop.f32.mrb[0].mxu0
    %v2911 = vpop.f32.mrb[0].mxu0
    %v2912 = vadd.f32 %v2815, %v2911
    %v2913 = vpop.f32.mrb[0].mxu0
    %2914 = vmatprep.mubr.bf16.mxu0 0
    %2915 = vmatmul.mubr.bf16.gmra.mrb[0].mxu0 %v1948
    %v2916 = vpop.f32.mrb[0].mxu0
    %v2917 = vadd.f32 %v2820, %v2916
    %v2918 = vpop.f32.mrb[0].mxu0
    %v2919 = vpop.f32.mrb[0].mxu0
    %v2920 = vadd.f32 %v2823, %v2919
    %v2921 = vpop.f32.mrb[0].mxu0
    %2922 = vmatprep.mubr.bf16.mxu0 0
    %2923 = vmatmul.mubr.bf16.gmra.mrb[0].mxu0 %v1955
    %v2924 = vpop.f32.mrb[0].mxu0
    %v2925 = vadd.f32 %v2828, %v2924
    %v2926 = vpop.f32.mrb[0].mxu0
    %v2927 = vpop.f32.mrb[0].mxu0
    %v2928 = vadd.f32 %v2831, %v2927
    %v2929 = vpop.f32.mrb[0].mxu0
    %2930 = vmatprep.mubr.bf16.mxu0 0
    %2931 = vmatmul.mubr.bf16.gmra.mrb[0].mxu0 %v1962
    %v2932 = vpop.f32.mrb[0].mxu0
    %v2933 = vadd.f32 %v2836, %v2932
    %v2934 = vpop.f32.mrb[0].mxu0
    %v2935 = vpop.f32.mrb[0].mxu0
    %v2936 = vadd.f32 %v2839, %v2935
    %v2937 = vpop.f32.mrb[0].mxu0
    %2938 = vmatprep.mubr.bf16.mxu0 0
    %2939 = vmatmul.mubr.bf16.gmra.mrb[0].mxu0 %v1969
    %v2940 = vpop.f32.mrb[0].mxu0
    %v2941 = vadd.f32 %v2844, %v2940
    %v2942 = vpop.f32.mrb[0].mxu0
    %v2943 = vpop.f32.mrb[0].mxu0
    %v2944 = vadd.f32 %v2847, %v2943
    %v2945 = vpop.f32.mrb[0].mxu0
    %2946 = vdwg.mxu0
    %v2947 = vadd.f32 %v2885, %v2888
    %v2948 = vadd.f32 %v2947, %v2893
    %v2949 = vadd.f32 %v2948, %v2896
    %v2950 = vadd.f32 %v2949, %v2901
    %v2951 = vadd.f32 %v2950, %v2904
    %v2952 = vadd.f32 %v2951, %v2909
    %v2953 = vadd.f32 %v2952, %v2912
    %v2954 = vadd.f32 %v2953, %v2917
    %v2955 = vadd.f32 %v2954, %v2920
    %v2956 = vadd.f32 %v2955, %v2925
    %v2957 = vadd.f32 %v2956, %v2928
    %v2958 = vadd.f32 %v2957, %v2933
    %v2959 = vadd.f32 %v2958, %v2936
    %v2960 = vadd.f32 %v2959, %v2941
    %v2961 = vadd.f32 %v2960, %v2944
    %v2962 = vrot.slane %v2961, 4
    %v2963 = vadd.f32 %v2961, %v2962
    %v2964 = vrot.slane %v2963, 2
    %v2965 = vadd.f32 %v2963, %v2964
    %v2966 = vrot.slane %v2965, 1
    %v2967 = vadd.f32 %v2965, %v2966
    %v2968 = vmul.f32 %v2967, 0.0078125
    %v2969 = vmul.f32 %v2885, %v2885
    %v2970 = vmul.f32 %v2888, %v2888
    %v2971 = vmul.f32 %v2893, %v2893
    %v2972 = vmul.f32 %v2896, %v2896
    %v2973 = vmul.f32 %v2901, %v2901
    %v2974 = vmul.f32 %v2904, %v2904
    %v2975 = vmul.f32 %v2909, %v2909
    %v2976 = vmul.f32 %v2912, %v2912
    %v2977 = vmul.f32 %v2917, %v2917
    %v2978 = vmul.f32 %v2920, %v2920
    %v2979 = vmul.f32 %v2925, %v2925
    %v2980 = vmul.f32 %v2928, %v2928
    %v2981 = vmul.f32 %v2933, %v2933
    %v2982 = vmul.f32 %v2936, %v2936
    %v2983 = vmul.f32 %v2941, %v2941
    %v2984 = vmul.f32 %v2944, %v2944
    %v2985 = vadd.f32 %v2969, %v2970
    %v2986 = vadd.f32 %v2985, %v2971
    %v2987 = vadd.f32 %v2986, %v2972
    %v2988 = vadd.f32 %v2987, %v2973
    %v2989 = vadd.f32 %v2988, %v2974
    %v2990 = vadd.f32 %v2989, %v2975
    %v2991 = vadd.f32 %v2990, %v2976
    %v2992 = vadd.f32 %v2991, %v2977
    %v2993 = vadd.f32 %v2992, %v2978
    %v2994 = vadd.f32 %v2993, %v2979
    %v2995 = vadd.f32 %v2994, %v2980
    %v2996 = vadd.f32 %v2995, %v2981
    %v2997 = vadd.f32 %v2996, %v2982
    %v2998 = vadd.f32 %v2997, %v2983
    %v2999 = vadd.f32 %v2998, %v2984
    %v3000 = vrot.slane %v2999, 4
    %v3001 = vadd.f32 %v2999, %v3000
    %v3002 = vrot.slane %v3001, 2
    %v3003 = vadd.f32 %v3001, %v3002
    %v3004 = vrot.slane %v3003, 1
    %v3005 = vadd.f32 %v3003, %v3004
    %v3006 = vmul.f32 %v3005, 0.0078125
    %v3007 = vmul.f32 %v2968, %v2968
    %v3008 = vsub.f32 %v3006, %v3007
    %v3009 = vmax.f32 %v3008, 0.0
    %v3010 = vld [vmem:[%s2] sm:$0x1]
    %v3011 = vadd.f32 %v3009, 1e-05
    %v3012 = vrsqrt.pop %v3011
    %v3013 = vmul.f32 %v3010, %v3012
    %v3014 = vld [vmem:[%s3] sm:$0x1]
    %v3015 = vmul.f32 %v2968, %v3013
    %v3016 = vsub.f32 %v3014, %v3015
    %v3018 = vlaneseq
    %v3019 = vshrl.u32 %v3018, 7
    %v3020 = vsub.s32 0, %v3019
    %v3021 = vrot.slane %v3013, %v3020
    %v3023 = vmul.f32 %v2885, %v3021
    %v3024 = vmul.f32 %v2888, %v3021
    %v3025 = vmul.f32 %v2893, %v3021
    %v3026 = vmul.f32 %v2896, %v3021
    %v3027 = vmul.f32 %v2901, %v3021
    %v3028 = vmul.f32 %v2904, %v3021
    %v3029 = vmul.f32 %v2909, %v3021
    %v3030 = vmul.f32 %v2912, %v3021
    %v3031 = vmul.f32 %v2917, %v3021
    %v3032 = vmul.f32 %v2920, %v3021
    %v3033 = vmul.f32 %v2925, %v3021
    %v3034 = vmul.f32 %v2928, %v3021
    %v3035 = vmul.f32 %v2933, %v3021
    %v3036 = vmul.f32 %v2936, %v3021
    %v3037 = vmul.f32 %v2941, %v3021
    %v3038 = vmul.f32 %v2944, %v3021
    %v3040 = vlaneseq
    %v3041 = vshrl.u32 %v3040, 7
    %v3042 = vsub.s32 0, %v3041
    %v3043 = vrot.slane %v3016, %v3042
    %v3045 = vadd.f32 %v3023, %v3043
    %v3046 = vadd.f32 %v3024, %v3043
    %v3047 = vadd.f32 %v3025, %v3043
    %v3048 = vadd.f32 %v3026, %v3043
    %v3049 = vadd.f32 %v3027, %v3043
    %v3050 = vadd.f32 %v3028, %v3043
    %v3051 = vadd.f32 %v3029, %v3043
    %v3052 = vadd.f32 %v3030, %v3043
    %v3053 = vadd.f32 %v3031, %v3043
    %v3054 = vadd.f32 %v3032, %v3043
    %v3055 = vadd.f32 %v3033, %v3043
    %v3056 = vadd.f32 %v3034, %v3043
    %v3057 = vadd.f32 %v3035, %v3043
    %v3058 = vadd.f32 %v3036, %v3043
    %v3059 = vadd.f32 %v3037, %v3043
    %v3060 = vadd.f32 %v3038, %v3043
    %v3061 = vmax.f32 %v3045, 0.0
    %v3062 = vmax.f32 %v3046, 0.0
    %v3063 = vmax.f32 %v3047, 0.0
    %v3064 = vmax.f32 %v3048, 0.0
    %v3065 = vmax.f32 %v3049, 0.0
    %v3066 = vmax.f32 %v3050, 0.0
    %v3067 = vmax.f32 %v3051, 0.0
    %v3068 = vmax.f32 %v3052, 0.0
    %v3069 = vmax.f32 %v3053, 0.0
    %v3070 = vmax.f32 %v3054, 0.0
    %v3071 = vmax.f32 %v3055, 0.0
    %v3072 = vmax.f32 %v3056, 0.0
    %v3073 = vmax.f32 %v3057, 0.0
    %v3074 = vmax.f32 %v3058, 0.0
    %v3075 = vmax.f32 %v3059, 0.0
    %v3076 = vmax.f32 %v3060, 0.0
    %v3077 = vmax.f32 %v3061, %v3062
    %v3078 = vmax.f32 %v3063, %v3064
    %v3079 = vmax.f32 %v3065, %v3066
    %v3080 = vmax.f32 %v3067, %v3068
    %v3081 = vmax.f32 %v3069, %v3070
    %v3082 = vmax.f32 %v3071, %v3072
    %v3083 = vmax.f32 %v3073, %v3074
    %v3084 = vmax.f32 %v3075, %v3076
    %3085 = vst [vmem:[#allocation3] sm:$0xff] %v3077
    %3086 = vst [vmem:[#allocation3 + $0x8] sm:$0xff] %v3078
    %3087 = vst [vmem:[#allocation3 + $0x10] sm:$0xff] %v3079
    %3088 = vst [vmem:[#allocation3 + $0x18] sm:$0xff] %v3080
    %3089 = vst [vmem:[#allocation3 + $0x20] sm:$0xff] %v3081
    %3090 = vst [vmem:[#allocation3 + $0x28] sm:$0xff] %v3082
    %3091 = vst [vmem:[#allocation3 + $0x30] sm:$0xff] %v3083
    %3092 = vst [vmem:[#allocation3 + $0x38] sm:$0xff] %v3084
    %v3093 = vld [vmem:[#allocation3] ss:$2 sm:$0xf]
    %s3094 = scalar_lea.vmem [#allocation3], 8
    %v3095 = vld [vmem:[%s3094] ss:$2 sm:$0xf]
    %s3096 = scalar_lea.vmem [#allocation3], 16
    %v3097 = vld [vmem:[%s3096] ss:$2 sm:$0xf]
    %s3098 = scalar_lea.vmem [#allocation3], 24
    %v3099 = vld [vmem:[%s3098] ss:$2 sm:$0xf]
    %s3100 = scalar_lea.vmem [#allocation3], 32
    %v3101 = vld [vmem:[%s3100] ss:$2 sm:$0xf]
    %s3102 = scalar_lea.vmem [#allocation3], 40
    %v3103 = vld [vmem:[%s3102] ss:$2 sm:$0xf]
    %s3104 = scalar_lea.vmem [#allocation3], 48
    %v3105 = vld [vmem:[%s3104] ss:$2 sm:$0xf]
    %s3106 = scalar_lea.vmem [#allocation3], 56
    %v3107 = vld [vmem:[%s3106] ss:$2 sm:$0xf]
    %s3108 = scalar_lea.vmem [#allocation3], 1
    %v3109 = vld [vmem:[%s3108] ss:$2 sm:$0xf]
    %s3110 = scalar_lea.vmem [#allocation3], 9
    %v3111 = vld [vmem:[%s3110] ss:$2 sm:$0xf]
    %s3112 = scalar_lea.vmem [#allocation3], 17
    %v3113 = vld [vmem:[%s3112] ss:$2 sm:$0xf]
    %s3114 = scalar_lea.vmem [#allocation3], 25
    %v3115 = vld [vmem:[%s3114] ss:$2 sm:$0xf]
    %s3116 = scalar_lea.vmem [#allocation3], 33
    %v3117 = vld [vmem:[%s3116] ss:$2 sm:$0xf]
    %s3118 = scalar_lea.vmem [#allocation3], 41
    %v3119 = vld [vmem:[%s3118] ss:$2 sm:$0xf]
    %s3120 = scalar_lea.vmem [#allocation3], 49
    %v3121 = vld [vmem:[%s3120] ss:$2 sm:$0xf]
    %s3122 = scalar_lea.vmem [#allocation3], 57
    %v3123 = vld [vmem:[%s3122] ss:$2 sm:$0xf]
    %v3124 = vmax.f32 %v3093, %v3109
    %v3125 = vmax.f32 %v3095, %v3111
    %v3126 = vmax.f32 %v3097, %v3113
    %v3127 = vmax.f32 %v3099, %v3115
    %v3128 = vmax.f32 %v3101, %v3117
    %v3129 = vmax.f32 %v3103, %v3119
    %v3130 = vmax.f32 %v3105, %v3121
    %v3131 = vmax.f32 %v3107, %v3123
    %v3140 = vcombine.low %v3124, %v3125
    %v3141 = vcombine.low %v3126, %v3127
    %v3142 = vcombine.low %v3128, %v3129
    %v3143 = vcombine.low %v3130, %v3131
    %v3148 = vpack.c.bf16 %v3141, %v3140
    %v3149 = vpack.c.bf16 %v3143, %v3142
    %v3150 = vld [vmem:[%s4] sm:$0xf]
    %v3151 = vld [vmem:[%s4 + $0x4] sm:$0xf]
    %v3152 = vld [vmem:[%s4 + $0x8] sm:$0xf]
    %v3153 = vld [vmem:[%s4 + $0xc] sm:$0xf]
    %v3154 = vld [vmem:[%s4 + $0x10] sm:$0xf]
    %v3155 = vld [vmem:[%s4 + $0x14] sm:$0xf]
    %v3156 = vld [vmem:[%s4 + $0x18] sm:$0xf]
    %v3157 = vld [vmem:[%s4 + $0x1c] sm:$0xf]
    %v3158 = vld [vmem:[%s4 + $0x20] sm:$0xf]
    %v3159 = vld [vmem:[%s4 + $0x24] sm:$0xf]
    %v3160 = vld [vmem:[%s4 + $0x28] sm:$0xf]
    %v3161 = vld [vmem:[%s4 + $0x2c] sm:$0xf]
    %v3162 = vld [vmem:[%s4 + $0x30] sm:$0xf]
    %v3163 = vld [vmem:[%s4 + $0x34] sm:$0xf]
    %v3164 = vld [vmem:[%s4 + $0x38] sm:$0xf]
    %v3165 = vld [vmem:[%s4 + $0x3c] sm:$0xf]
    %v3182 = vunpack.c.l.b16 %v3150
    %v3183 = vunpack.c.l.b16 %v3151
    %v3184 = vunpack.c.l.b16 %v3152
    %v3185 = vunpack.c.l.b16 %v3153
    %v3186 = vunpack.c.l.b16 %v3154
    %v3187 = vunpack.c.l.b16 %v3155
    %v3188 = vunpack.c.l.b16 %v3156
    %v3189 = vunpack.c.l.b16 %v3157
    %v3190 = vunpack.c.l.b16 %v3158
    %v3191 = vunpack.c.l.b16 %v3159
    %v3192 = vunpack.c.l.b16 %v3160
    %v3193 = vunpack.c.l.b16 %v3161
    %v3194 = vunpack.c.l.b16 %v3162
    %v3195 = vunpack.c.l.b16 %v3163
    %v3196 = vunpack.c.l.b16 %v3164
    %v3197 = vunpack.c.l.b16 %v3165
    %v3198 = vpack.c.b16 %v3183, %v3182
    %v3199 = vpack.c.b16 %v3185, %v3184
    %v3200 = vpack.c.b16 %v3187, %v3186
    %v3201 = vpack.c.b16 %v3189, %v3188
    %v3202 = vpack.c.b16 %v3191, %v3190
    %v3203 = vpack.c.b16 %v3193, %v3192
    %v3204 = vpack.c.b16 %v3195, %v3194
    %v3205 = vpack.c.b16 %v3197, %v3196
    %3214 = vmatprep.subr.bf16.mxu0 0
    %3215 = vmatpush1.bf16.msra.mxu0 %v3198
    %3216 = vmatprep.subr.bf16.mxu0 0
    %3217 = vmatpush1.bf16.msra.mxu0 %v3199
    %3218 = vmatprep.subr.bf16.mxu0 0
    %3219 = vmatpush1.bf16.msra.mxu0 %v3200
    %3220 = vmatprep.subr.bf16.mxu0 0
    %3221 = vmatpush1.bf16.msra.mxu0 %v3201
    %3222 = vmatprep.subr.bf16.mxu0 0
    %3223 = vmatpush1.bf16.msra.mxu0 %v3202
    %3224 = vmatprep.subr.bf16.mxu0 0
    %3225 = vmatpush1.bf16.msra.mxu0 %v3203
    %3226 = vmatprep.subr.bf16.mxu0 0
    %3227 = vmatpush1.bf16.msra.mxu0 %v3204
    %3228 = vmatprep.subr.bf16.mxu0 0
    %3229 = vmatpush1.bf16.msra.mxu0 %v3205
    %3230 = vmatprep.subr.bf16.mxu0 0
    %3231 = vmatpush1.bf16.msra.mxu0 0
    %3232 = vmatprep.subr.bf16.mxu0 0
    %3233 = vmatpush1.bf16.msra.mxu0 0
    %3234 = vmatprep.subr.bf16.mxu0 0
    %3235 = vmatpush1.bf16.msra.mxu0 0
    %3236 = vmatprep.subr.bf16.mxu0 0
    %3237 = vmatpush1.bf16.msra.mxu0 0
    %3238 = vmatprep.subr.bf16.mxu0 0
    %3239 = vmatpush1.bf16.msra.mxu0 0
    %3240 = vmatprep.subr.bf16.mxu0 0
    %3241 = vmatpush1.bf16.msra.mxu0 0
    %3242 = vmatprep.subr.bf16.mxu0 0
    %3243 = vmatpush1.bf16.msra.mxu0 0
    %3244 = vmatprep.subr.bf16.mxu0 0
    %3245 = vmatpush1.bf16.msra.mxu0 0
    %3246 = vmatprep.mubr.bf16.mxu0 0
    %3247 = vmatmul.mubr.bf16.gmra.mrb[0].mxu0 %v3148
    %v3248 = vpop.f32.mrb[0].mxu0
    %v3249 = vadd.f32 0.0, %v3248
    %v3250 = vpop.f32.mrb[0].mxu0
    %v3251 = vpop.f32.mrb[0].mxu0
    %v3252 = vadd.f32 0.0, %v3251
    %v3253 = vpop.f32.mrb[0].mxu0
    %3254 = vmatprep.mubr.bf16.mxu0 0
    %3255 = vmatmul.mubr.bf16.gmra.mrb[0].mxu0 %v3149
    %v3256 = vpop.f32.mrb[0].mxu0
    %v3257 = vadd.f32 0.0, %v3256
    %v3258 = vpop.f32.mrb[0].mxu0
    %v3259 = vpop.f32.mrb[0].mxu0
    %v3260 = vadd.f32 0.0, %v3259
    %v3261 = vpop.f32.mrb[0].mxu0
    %3262 = vdwg.mxu0
    %v3263 = vmax.f32 %v3249, %v3252
    %v3264 = vrot.slane %v3263, 4
    %v3265 = vmax.f32 %v3263, %v3264
    %v3266 = vrot.slane %v3265, 2
    %v3267 = vmax.f32 %v3265, %v3266
    %v3268 = vrot.slane %v3267, 1
    %v3269 = vmax.f32 %v3267, %v3268
    %v3270 = vmax.f32 %v3257, %v3260
    %v3271 = vrot.slane %v3270, 4
    %v3272 = vmax.f32 %v3270, %v3271
    %v3273 = vrot.slane %v3272, 2
    %v3274 = vmax.f32 %v3272, %v3273
    %v3275 = vrot.slane %v3274, 1
    %v3276 = vmax.f32 %v3274, %v3275
    %v3277 = vld [vmem:[%s5] sm:$0x1]
    %v3279 = vlaneseq
    %v3280 = vshrl.u32 %v3279, 7
    %v3281 = vsub.s32 0, %v3280
    %v3282 = vrot.slane %v3277, %v3281
    %v3284 = vadd.f32 %v3269, %v3282
    %v3285 = vadd.f32 %v3276, %v3282
    %v3288 = vrot.slane %v3285, 7
    %vm3289 = vcmask 1041409
    %v3290 = vsel %vm3289, %v3288, %v3284
    %3292 = vst [vmem:[#allocation4] sm:$0x3] %v3290
    // Predicated region
    $region26: #{_lambda_.3} parent=1 // pred_check
      _
    $region27: #{_lambda_.3} parent=1 // pred_check_branch
      %3294 = sbr.rel (0) target = $region29
    $region28: #{_lambda_.3} parent=1 // pred_region
      %s3296 = ssub.s32 32, 32
      %3297 = vsyncadd [#allocation5], %s3296
      %s3299 = sshll.u32 [#allocation4], 4
      %s3300 = int_to_ptr.vmem [resolvable:$true] %s3299
      %3302 = dma.vmem_to_hbm [thread:$0]  %s3300, 32, %s6, [#allocation5]
    $region29: #{_lambda_.3} parent=1 // pred_fallthru
      _
    // Predicated region
    $region30: #{_lambda_.3} parent=1 // pred_check
      _
    $region31: #{_lambda_.3} parent=1 // pred_check_branch
      %3304 = sbr.rel (0) target = $region33
    $region32: #{_lambda_.3} parent=1 // pred_region
      %3305 = dma.done [#allocation5], 32
    $region33: #{_lambda_.3} parent=1 // pred_fallthru
      _
    %3306 = vsyncpa [#allocation5], 1

// kernel: _lambda_.2
$region0: #{_lambda_.2}
  #allocation0 [shape = 'u32[]', space=smem, size = 0x4, offset = 0x4, fixed_abs, tag = 'smem constant byte address 0x4 - core index']
  #allocation1 [shape = 'u32[144,128]{1,0:T(1,128)}', space=vmem, size = 0x12000, scoped, tag = 'internal scratch']
  #allocation2 [shape = 'bf16[2,18,48,128]{3,2,1,0:T(16,128)(2,1)}', space=vmem, size = 0x6c000, scoped, tag = 'scratch operand']
  #allocation3 [shape = 'f32[2,8,16,128]{3,2,1,0:T(8,128)}', space=vmem, size = 0x20000, scoped, tag = 'scratch operand']
  %s0 = inlined_call_operand.vmem [shape: bf16[2,16,16,128], index: 0, kind: input, shape index: {}]
  %s1 = inlined_call_operand.vmem [shape: bf16[1152,128], index: 1, kind: input, shape index: {}]
  %s2 = inlined_call_operand.vmem [shape: f32[1,128], index: 2, kind: input, shape index: {}]
  %s3 = inlined_call_operand.vmem [shape: f32[1,128], index: 3, kind: input, shape index: {}]
  %s4 = inlined_call_operand.vmem [shape: bf16[2,8,8,128], index: 4, kind: output, shape index: {}]
  %s5 = sld [smem:[#allocation0]]
  $region26: #{_lambda_.2} parent=0
    _
  %s7 = ssub.s32 1, %s5
  %s8 = scalar_select 0, %s7, %s5
  // Predicated region
  $region2: #{_lambda_.2} parent=0 // pred_check
    _
  $region3: #{_lambda_.2} parent=0 // pred_check_branch
    %10 = sbr.rel (0) target = $region5
  $region4: #{_lambda_.2} parent=0 // pred_region
    _
  $region5: #{_lambda_.2} parent=0 // pred_fallthru
    _
  // Predicated region
  $region6: #{_lambda_.2} parent=0 // pred_check
    _
  $region7: #{_lambda_.2} parent=0 // pred_check_branch
    %12 = sbr.rel (0) target = $region9
  $region8: #{_lambda_.2} parent=0 // pred_region
    _
  $region9: #{_lambda_.2} parent=0 // pred_fallthru
    _
  // Predicated region
  $region10: #{_lambda_.2} parent=0 // pred_check
    _
  $region11: #{_lambda_.2} parent=0 // pred_check_branch
    %14 = sbr.rel (0) target = $region13
  $region12: #{_lambda_.2} parent=0 // pred_region
    _
  $region13: #{_lambda_.2} parent=0 // pred_fallthru
    _
  // Predicated region
  $region14: #{_lambda_.2} parent=0 // pred_check
    _
  $region15: #{_lambda_.2} parent=0 // pred_check_branch
    %16 = sbr.rel (0) target = $region17
  $region16: #{_lambda_.2} parent=0 // pred_region
    _
  $region17: #{_lambda_.2} parent=0 // pred_fallthru
    _
  %18 = vst [vmem:[#allocation2] sm:$0xff] 0
  %19 = vst [vmem:[#allocation2 + $0x8] sm:$0xff] 0
  %20 = vst [vmem:[#allocation2 + $0x10] sm:$0xff] 0
  %21 = vst [vmem:[#allocation2 + $0x1b0] sm:$0xff] 0
  %22 = vst [vmem:[#allocation2 + $0x1b8] sm:$0xff] 0
  %23 = vst [vmem:[#allocation2 + $0x1c0] sm:$0xff] 0
  %s24 = scalar_lea.vmem [#allocation2], 408
  %25 = vst [vmem:[%s24] sm:$0xff] 0
  %26 = vst [vmem:[%s24 + $0x8] sm:$0xff] 0
  %27 = vst [vmem:[%s24 + $0x10] sm:$0xff] 0
  %28 = vst [vmem:[%s24 + $0x1b0] sm:$0xff] 0
  %29 = vst [vmem:[%s24 + $0x1b8] sm:$0xff] 0
  %30 = vst [vmem:[%s24 + $0x1c0] sm:$0xff] 0
  %s31 = scalar_lea.vmem [#allocation2], 24
  %32 = vst [vmem:[%s31] sm:$0xff] 0
  %33 = vst [vmem:[%s31 + $0x18] sm:$0xff] 0
  %34 = vst [vmem:[%s31 + $0x30] sm:$0xff] 0
  %35 = vst [vmem:[%s31 + $0x48] sm:$0xff] 0
  %36 = vst [vmem:[%s31 + $0x60] sm:$0xff] 0
  %37 = vst [vmem:[%s31 + $0x78] sm:$0xff] 0
  %38 = vst [vmem:[%s31 + $0x90] sm:$0xff] 0
  %39 = vst [vmem:[%s31 + $0xa8] sm:$0xff] 0
  %40 = vst [vmem:[%s31 + $0xc0] sm:$0xff] 0
  %41 = vst [vmem:[%s31 + $0xd8] sm:$0xff] 0
  %42 = vst [vmem:[%s31 + $0xf0] sm:$0xff] 0
  %43 = vst [vmem:[%s31 + $0x108] sm:$0xff] 0
  %44 = vst [vmem:[%s31 + $0x120] sm:$0xff] 0
  %45 = vst [vmem:[%s31 + $0x138] sm:$0xff] 0
  %46 = vst [vmem:[%s31 + $0x150] sm:$0xff] 0
  %47 = vst [vmem:[%s31 + $0x168] sm:$0xff] 0
  %48 = vst [vmem:[%s31 + $0x1b0] sm:$0xff] 0
  %49 = vst [vmem:[%s31 + $0x1c8] sm:$0xff] 0
  %50 = vst [vmem:[%s31 + $0x1e0] sm:$0xff] 0
  %51 = vst [vmem:[%s31 + $0x1f8] sm:$0xff] 0
  %52 = vst [vmem:[%s31 + $0x210] sm:$0xff] 0
  %53 = vst [vmem:[%s31 + $0x228] sm:$0xff] 0
  %54 = vst [vmem:[%s31 + $0x240] sm:$0xff] 0
  %55 = vst [vmem:[%s31 + $0x258] sm:$0xff] 0
  %56 = vst [vmem:[%s31 + $0x270] sm:$0xff] 0
  %57 = vst [vmem:[%s31 + $0x288] sm:$0xff] 0
  %58 = vst [vmem:[%s31 + $0x2a0] sm:$0xff] 0
  %59 = vst [vmem:[%s31 + $0x2b8] sm:$0xff] 0
  %60 = vst [vmem:[%s31 + $0x2d0] sm:$0xff] 0
  %61 = vst [vmem:[%s31 + $0x2e8] sm:$0xff] 0
  %62 = vst [vmem:[%s31 + $0x300] sm:$0xff] 0
  %63 = vst [vmem:[%s31 + $0x318] sm:$0xff] 0
  %64 = vst [vmem:[%s31 + $0x10] sm:$0xff] 0
  %65 = vst [vmem:[%s31 + $0x28] sm:$0xff] 0
  %66 = vst [vmem:[%s31 + $0x40] sm:$0xff] 0
  %67 = vst [vmem:[%s31 + $0x58] sm:$0xff] 0
  %68 = vst [vmem:[%s31 + $0x70] sm:$0xff] 0
  %69 = vst [vmem:[%s31 + $0x88] sm:$0xff] 0
  %70 = vst [vmem:[%s31 + $0xa0] sm:$0xff] 0
  %71 = vst [vmem:[%s31 + $0xb8] sm:$0xff] 0
  %72 = vst [vmem:[%s31 + $0xd0] sm:$0xff] 0
  %73 = vst [vmem:[%s31 + $0xe8] sm:$0xff] 0
  %74 = vst [vmem:[%s31 + $0x100] sm:$0xff] 0
  %75 = vst [vmem:[%s31 + $0x118] sm:$0xff] 0
  %76 = vst [vmem:[%s31 + $0x130] sm:$0xff] 0
  %77 = vst [vmem:[%s31 + $0x148] sm:$0xff] 0
  %78 = vst [vmem:[%s31 + $0x160] sm:$0xff] 0
  %79 = vst [vmem:[%s31 + $0x178] sm:$0xff] 0
  %80 = vst [vmem:[%s31 + $0x1c0] sm:$0xff] 0
  %81 = vst [vmem:[%s31 + $0x1d8] sm:$0xff] 0
  %82 = vst [vmem:[%s31 + $0x1f0] sm:$0xff] 0
  %83 = vst [vmem:[%s31 + $0x208] sm:$0xff] 0
  %84 = vst [vmem:[%s31 + $0x220] sm:$0xff] 0
  %85 = vst [vmem:[%s31 + $0x238] sm:$0xff] 0
  %86 = vst [vmem:[%s31 + $0x250] sm:$0xff] 0
  %87 = vst [vmem:[%s31 + $0x268] sm:$0xff] 0
  %88 = vst [vmem:[%s31 + $0x280] sm:$0xff] 0
  %89 = vst [vmem:[%s31 + $0x298] sm:$0xff] 0
  %90 = vst [vmem:[%s31 + $0x2b0] sm:$0xff] 0
  %91 = vst [vmem:[%s31 + $0x2c8] sm:$0xff] 0
  %92 = vst [vmem:[%s31 + $0x2e0] sm:$0xff] 0
  %93 = vst [vmem:[%s31 + $0x2f8] sm:$0xff] 0
  %94 = vst [vmem:[%s31 + $0x310] sm:$0xff] 0
  %95 = vst [vmem:[%s31 + $0x328] sm:$0xff] 0
  %v96 = vld [vmem:[%s0] sm:$0xf]
  %v97 = vld [vmem:[%s0 + $0x4] sm:$0xf]
  %v98 = vld [vmem:[%s0 + $0x8] sm:$0xf]
  %v99 = vld [vmem:[%s0 + $0xc] sm:$0xf]
  %v100 = vld [vmem:[%s0 + $0x10] sm:$0xf]
  %v101 = vld [vmem:[%s0 + $0x14] sm:$0xf]
  %v102 = vld [vmem:[%s0 + $0x18] sm:$0xf]
  %v103 = vld [vmem:[%s0 + $0x1c] sm:$0xf]
  %v104 = vld [vmem:[%s0 + $0x20] sm:$0xf]
  %v105 = vld [vmem:[%s0 + $0x24] sm:$0xf]
  %v106 = vld [vmem:[%s0 + $0x28] sm:$0xf]
  %v107 = vld [vmem:[%s0 + $0x2c] sm:$0xf]
  %v108 = vld [vmem:[%s0 + $0x30] sm:$0xf]
  %v109 = vld [vmem:[%s0 + $0x34] sm:$0xf]
  %v110 = vld [vmem:[%s0 + $0x38] sm:$0xf]
  %v111 = vld [vmem:[%s0 + $0x3c] sm:$0xf]
  %v112 = vld [vmem:[%s0 + $0x40] sm:$0xf]
  %v113 = vld [vmem:[%s0 + $0x44] sm:$0xf]
  %v114 = vld [vmem:[%s0 + $0x48] sm:$0xf]
  %v115 = vld [vmem:[%s0 + $0x4c] sm:$0xf]
  %v116 = vld [vmem:[%s0 + $0x50] sm:$0xf]
  %v117 = vld [vmem:[%s0 + $0x54] sm:$0xf]
  %v118 = vld [vmem:[%s0 + $0x58] sm:$0xf]
  %v119 = vld [vmem:[%s0 + $0x5c] sm:$0xf]
  %v120 = vld [vmem:[%s0 + $0x60] sm:$0xf]
  %v121 = vld [vmem:[%s0 + $0x64] sm:$0xf]
  %v122 = vld [vmem:[%s0 + $0x68] sm:$0xf]
  %v123 = vld [vmem:[%s0 + $0x6c] sm:$0xf]
  %v124 = vld [vmem:[%s0 + $0x70] sm:$0xf]
  %v125 = vld [vmem:[%s0 + $0x74] sm:$0xf]
  %v126 = vld [vmem:[%s0 + $0x78] sm:$0xf]
  %v127 = vld [vmem:[%s0 + $0x7c] sm:$0xf]
  %v128 = vld [vmem:[%s0 + $0x80] sm:$0xf]
  %v129 = vld [vmem:[%s0 + $0x84] sm:$0xf]
  %v130 = vld [vmem:[%s0 + $0x88] sm:$0xf]
  %v131 = vld [vmem:[%s0 + $0x8c] sm:$0xf]
  %v132 = vld [vmem:[%s0 + $0x90] sm:$0xf]
  %v133 = vld [vmem:[%s0 + $0x94] sm:$0xf]
  %v134 = vld [vmem:[%s0 + $0x98] sm:$0xf]
  %v135 = vld [vmem:[%s0 + $0x9c] sm:$0xf]
  %v136 = vld [vmem:[%s0 + $0xa0] sm:$0xf]
  %v137 = vld [vmem:[%s0 + $0xa4] sm:$0xf]
  %v138 = vld [vmem:[%s0 + $0xa8] sm:$0xf]
  %v139 = vld [vmem:[%s0 + $0xac] sm:$0xf]
  %v140 = vld [vmem:[%s0 + $0xb0] sm:$0xf]
  %v141 = vld [vmem:[%s0 + $0xb4] sm:$0xf]
  %v142 = vld [vmem:[%s0 + $0xb8] sm:$0xf]
  %v143 = vld [vmem:[%s0 + $0xbc] sm:$0xf]
  %v144 = vld [vmem:[%s0 + $0xc0] sm:$0xf]
  %v145 = vld [vmem:[%s0 + $0xc4] sm:$0xf]
  %v146 = vld [vmem:[%s0 + $0xc8] sm:$0xf]
  %v147 = vld [vmem:[%s0 + $0xcc] sm:$0xf]
  %v148 = vld [vmem:[%s0 + $0xd0] sm:$0xf]
  %v149 = vld [vmem:[%s0 + $0xd4] sm:$0xf]
  %v150 = vld [vmem:[%s0 + $0xd8] sm:$0xf]
  %v151 = vld [vmem:[%s0 + $0xdc] sm:$0xf]
  %v152 = vld [vmem:[%s0 + $0xe0] sm:$0xf]
  %v153 = vld [vmem:[%s0 + $0xe4] sm:$0xf]
  %v154 = vld [vmem:[%s0 + $0xe8] sm:$0xf]
  %v155 = vld [vmem:[%s0 + $0xec] sm:$0xf]
  %v156 = vld [vmem:[%s0 + $0xf0] sm:$0xf]
  %v157 = vld [vmem:[%s0 + $0xf4] sm:$0xf]
  %v158 = vld [vmem:[%s0 + $0xf8] sm:$0xf]
  %v159 = vld [vmem:[%s0 + $0xfc] sm:$0xf]
  %v224 = vunpack.c.l.b16 %v96
  %v225 = vunpack.c.l.b16 %v97
  %v226 = vunpack.c.l.b16 %v98
  %v227 = vunpack.c.l.b16 %v99
  %v228 = vunpack.c.l.b16 %v100
  %v229 = vunpack.c.l.b16 %v101
  %v230 = vunpack.c.l.b16 %v102
  %v231 = vunpack.c.l.b16 %v103
  %v232 = vunpack.c.l.b16 %v104
  %v233 = vunpack.c.l.b16 %v105
  %v234 = vunpack.c.l.b16 %v106
  %v235 = vunpack.c.l.b16 %v107
  %v236 = vunpack.c.l.b16 %v108
  %v237 = vunpack.c.l.b16 %v109
  %v238 = vunpack.c.l.b16 %v110
  %v239 = vunpack.c.l.b16 %v111
  %v240 = vunpack.c.l.b16 %v112
  %v241 = vunpack.c.l.b16 %v113
  %v242 = vunpack.c.l.b16 %v114
  %v243 = vunpack.c.l.b16 %v115
  %v244 = vunpack.c.l.b16 %v116
  %v245 = vunpack.c.l.b16 %v117
  %v246 = vunpack.c.l.b16 %v118
  %v247 = vunpack.c.l.b16 %v119
  %v248 = vunpack.c.l.b16 %v120
  %v249 = vunpack.c.l.b16 %v121
  %v250 = vunpack.c.l.b16 %v122
  %v251 = vunpack.c.l.b16 %v123
  %v252 = vunpack.c.l.b16 %v124
  %v253 = vunpack.c.l.b16 %v125
  %v254 = vunpack.c.l.b16 %v126
  %v255 = vunpack.c.l.b16 %v127
  %v256 = vunpack.c.l.b16 %v128
  %v257 = vunpack.c.l.b16 %v129
  %v258 = vunpack.c.l.b16 %v130
  %v259 = vunpack.c.l.b16 %v131
  %v260 = vunpack.c.l.b16 %v132
  %v261 = vunpack.c.l.b16 %v133
  %v262 = vunpack.c.l.b16 %v134
  %v263 = vunpack.c.l.b16 %v135
  %v264 = vunpack.c.l.b16 %v136
  %v265 = vunpack.c.l.b16 %v137
  %v266 = vunpack.c.l.b16 %v138
  %v267 = vunpack.c.l.b16 %v139
  %v268 = vunpack.c.l.b16 %v140
  %v269 = vunpack.c.l.b16 %v141
  %v270 = vunpack.c.l.b16 %v142
  %v271 = vunpack.c.l.b16 %v143
  %v272 = vunpack.c.l.b16 %v144
  %v273 = vunpack.c.l.b16 %v145
  %v274 = vunpack.c.l.b16 %v146
  %v275 = vunpack.c.l.b16 %v147
  %v276 = vunpack.c.l.b16 %v148
  %v277 = vunpack.c.l.b16 %v149
  %v278 = vunpack.c.l.b16 %v150
  %v279 = vunpack.c.l.b16 %v151
  %v280 = vunpack.c.l.b16 %v152
  %v281 = vunpack.c.l.b16 %v153
  %v282 = vunpack.c.l.b16 %v154
  %v283 = vunpack.c.l.b16 %v155
  %v284 = vunpack.c.l.b16 %v156
  %v285 = vunpack.c.l.b16 %v157
  %v286 = vunpack.c.l.b16 %v158
  %v287 = vunpack.c.l.b16 %v159
  %v288 = vpack.c.b16 %v225, %v224
  %v289 = vpack.c.b16 %v227, %v226
  %v290 = vpack.c.b16 %v229, %v228
  %v291 = vpack.c.b16 %v231, %v230
  %v292 = vpack.c.b16 %v233, %v232
  %v293 = vpack.c.b16 %v235, %v234
  %v294 = vpack.c.b16 %v237, %v236
  %v295 = vpack.c.b16 %v239, %v238
  %v296 = vpack.c.b16 %v241, %v240
  %v297 = vpack.c.b16 %v243, %v242
  %v298 = vpack.c.b16 %v245, %v244
  %v299 = vpack.c.b16 %v247, %v246
  %v300 = vpack.c.b16 %v249, %v248
  %v301 = vpack.c.b16 %v251, %v250
  %v302 = vpack.c.b16 %v253, %v252
  %v303 = vpack.c.b16 %v255, %v254
  %v304 = vpack.c.b16 %v257, %v256
  %v305 = vpack.c.b16 %v259, %v258
  %v306 = vpack.c.b16 %v261, %v260
  %v307 = vpack.c.b16 %v263, %v262
  %v308 = vpack.c.b16 %v265, %v264
  %v309 = vpack.c.b16 %v267, %v266
  %v310 = vpack.c.b16 %v269, %v268
  %v311 = vpack.c.b16 %v271, %v270
  %v312 = vpack.c.b16 %v273, %v272
  %v313 = vpack.c.b16 %v275, %v274
  %v314 = vpack.c.b16 %v277, %v276
  %v315 = vpack.c.b16 %v279, %v278
  %v316 = vpack.c.b16 %v281, %v280
  %v317 = vpack.c.b16 %v283, %v282
  %v318 = vpack.c.b16 %v285, %v284
  %v319 = vpack.c.b16 %v287, %v286
  %352 = vst [vmem:[%s31 + $0x8] sm:$0xff] %v288
  %353 = vst [vmem:[%s31 + $0x20] sm:$0xff] %v289
  %354 = vst [vmem:[%s31 + $0x38] sm:$0xff] %v290
  %355 = vst [vmem:[%s31 + $0x50] sm:$0xff] %v291
  %356 = vst [vmem:[%s31 + $0x68] sm:$0xff] %v292
  %357 = vst [vmem:[%s31 + $0x80] sm:$0xff] %v293
  %358 = vst [vmem:[%s31 + $0x98] sm:$0xff] %v294
  %359 = vst [vmem:[%s31 + $0xb0] sm:$0xff] %v295
  %360 = vst [vmem:[%s31 + $0xc8] sm:$0xff] %v296
  %361 = vst [vmem:[%s31 + $0xe0] sm:$0xff] %v297
  %362 = vst [vmem:[%s31 + $0xf8] sm:$0xff] %v298
  %363 = vst [vmem:[%s31 + $0x110] sm:$0xff] %v299
  %364 = vst [vmem:[%s31 + $0x128] sm:$0xff] %v300
  %365 = vst [vmem:[%s31 + $0x140] sm:$0xff] %v301
  %366 = vst [vmem:[%s31 + $0x158] sm:$0xff] %v302
  %367 = vst [vmem:[%s31 + $0x170] sm:$0xff] %v303
  %368 = vst [vmem:[%s31 + $0x1b8] sm:$0xff] %v304
  %369 = vst [vmem:[%s31 + $0x1d0] sm:$0xff] %v305
  %370 = vst [vmem:[%s31 + $0x1e8] sm:$0xff] %v306
  %371 = vst [vmem:[%s31 + $0x200] sm:$0xff] %v307
  %372 = vst [vmem:[%s31 + $0x218] sm:$0xff] %v308
  %373 = vst [vmem:[%s31 + $0x230] sm:$0xff] %v309
  %374 = vst [vmem:[%s31 + $0x248] sm:$0xff] %v310
  %375 = vst [vmem:[%s31 + $0x260] sm:$0xff] %v311
  %376 = vst [vmem:[%s31 + $0x278] sm:$0xff] %v312
  %377 = vst [vmem:[%s31 + $0x290] sm:$0xff] %v313
  %378 = vst [vmem:[%s31 + $0x2a8] sm:$0xff] %v314
  %379 = vst [vmem:[%s31 + $0x2c0] sm:$0xff] %v315
  %380 = vst [vmem:[%s31 + $0x2d8] sm:$0xff] %v316
  %381 = vst [vmem:[%s31 + $0x2f0] sm:$0xff] %v317
  %382 = vst [vmem:[%s31 + $0x308] sm:$0xff] %v318
  %383 = vst [vmem:[%s31 + $0x320] sm:$0xff] %v319
  %v384 = vld [vmem:[#allocation2] sm:$0xff]
  %v385 = vld [vmem:[#allocation2 + $0x8] sm:$0xff]
  %v386 = vld [vmem:[#allocation2 + $0x10] sm:$0xff]
  %v387 = vld [vmem:[#allocation2 + $0x18] sm:$0xff]
  %v388 = vld [vmem:[#allocation2 + $0x20] sm:$0xff]
  %v389 = vld [vmem:[#allocation2 + $0x28] sm:$0xff]
  %v390 = vld [vmem:[#allocation2 + $0x30] sm:$0xff]
  %v391 = vld [vmem:[#allocation2 + $0x38] sm:$0xff]
  %v392 = vld [vmem:[#allocation2 + $0x40] sm:$0xff]
  %v393 = vld [vmem:[#allocation2 + $0x48] sm:$0xff]
  %v394 = vld [vmem:[#allocation2 + $0x50] sm:$0xff]
  %v395 = vld [vmem:[#allocation2 + $0x58] sm:$0xff]
  %v396 = vld [vmem:[#allocation2 + $0x60] sm:$0xff]
  %v397 = vld [vmem:[#allocation2 + $0x68] sm:$0xff]
  %v398 = vld [vmem:[#allocation2 + $0x70] sm:$0xff]
  %v399 = vld [vmem:[#allocation2 + $0x78] sm:$0xff]
  %v400 = vld [vmem:[#allocation2 + $0x80] sm:$0xff]
  %v401 = vld [vmem:[#allocation2 + $0x88] sm:$0xff]
  %v402 = vld [vmem:[#allocation2 + $0x90] sm:$0xff]
  %v403 = vld [vmem:[#allocation2 + $0x98] sm:$0xff]
  %v404 = vld [vmem:[#allocation2 + $0xa0] sm:$0xff]
  %v405 = vld [vmem:[#allocation2 + $0xa8] sm:$0xff]
  %v406 = vld [vmem:[#allocation2 + $0xb0] sm:$0xff]
  %v407 = vld [vmem:[#allocation2 + $0xb8] sm:$0xff]
  %v408 = vld [vmem:[#allocation2 + $0xc0] sm:$0xff]
  %v409 = vld [vmem:[#allocation2 + $0xc8] sm:$0xff]
  %v410 = vld [vmem:[#allocation2 + $0xd0] sm:$0xff]
  %v411 = vld [vmem:[#allocation2 + $0xd8] sm:$0xff]
  %v412 = vld [vmem:[#allocation2 + $0xe0] sm:$0xff]
  %v413 = vld [vmem:[#allocation2 + $0xe8] sm:$0xff]
  %v414 = vld [vmem:[#allocation2 + $0xf0] sm:$0xff]
  %v415 = vld [vmem:[#allocation2 + $0xf8] sm:$0xff]
  %v416 = vld [vmem:[#allocation2 + $0x100] sm:$0xff]
  %v417 = vld [vmem:[#allocation2 + $0x108] sm:$0xff]
  %v418 = vld [vmem:[#allocation2 + $0x110] sm:$0xff]
  %v419 = vld [vmem:[#allocation2 + $0x118] sm:$0xff]
  %v420 = vld [vmem:[#allocation2 + $0x120] sm:$0xff]
  %v421 = vld [vmem:[#allocation2 + $0x128] sm:$0xff]
  %v422 = vld [vmem:[#allocation2 + $0x130] sm:$0xff]
  %v423 = vld [vmem:[#allocation2 + $0x138] sm:$0xff]
  %v424 = vld [vmem:[#allocation2 + $0x140] sm:$0xff]
  %v425 = vld [vmem:[#allocation2 + $0x148] sm:$0xff]
  %v426 = vld [vmem:[#allocation2 + $0x150] sm:$0xff]
  %v427 = vld [vmem:[#allocation2 + $0x158] sm:$0xff]
  %v428 = vld [vmem:[#allocation2 + $0x160] sm:$0xff]
  %v429 = vld [vmem:[#allocation2 + $0x168] sm:$0xff]
  %v430 = vld [vmem:[#allocation2 + $0x170] sm:$0xff]
  %v431 = vld [vmem:[#allocation2 + $0x178] sm:$0xff]
  %v432 = vld [vmem:[#allocation2 + $0x180] sm:$0xff]
  %v433 = vld [vmem:[#allocation2 + $0x188] sm:$0xff]
  %v434 = vld [vmem:[#allocation2 + $0x190] sm:$0xff]
  %v435 = vld [vmem:[#allocation2 + $0x198] sm:$0xff]
  %v436 = vld [vmem:[#allocation2 + $0x1a0] sm:$0xff]
  %v437 = vld [vmem:[#allocation2 + $0x1a8] sm:$0xff]
  %v438 = vld [vmem:[#allocation2 + $0x1b0] sm:$0xff]
  %v439 = vld [vmem:[#allocation2 + $0x1b8] sm:$0xff]
  %v440 = vld [vmem:[#allocation2 + $0x1c0] sm:$0xff]
  %v441 = vld [vmem:[#allocation2 + $0x1c8] sm:$0xff]
  %v442 = vld [vmem:[#allocation2 + $0x1d0] sm:$0xff]
  %v443 = vld [vmem:[#allocation2 + $0x1d8] sm:$0xff]
  %v444 = vld [vmem:[#allocation2 + $0x1e0] sm:$0xff]
  %v445 = vld [vmem:[#allocation2 + $0x1e8] sm:$0xff]
  %v446 = vld [vmem:[#allocation2 + $0x1f0] sm:$0xff]
  %v447 = vld [vmem:[#allocation2 + $0x1f8] sm:$0xff]
  %v448 = vld [vmem:[#allocation2 + $0x200] sm:$0xff]
  %v449 = vld [vmem:[#allocation2 + $0x208] sm:$0xff]
  %v450 = vld [vmem:[#allocation2 + $0x210] sm:$0xff]
  %v451 = vld [vmem:[#allocation2 + $0x218] sm:$0xff]
  %v452 = vld [vmem:[#allocation2 + $0x220] sm:$0xff]
  %v453 = vld [vmem:[#allocation2 + $0x228] sm:$0xff]
  %v454 = vld [vmem:[#allocation2 + $0x230] sm:$0xff]
  %v455 = vld [vmem:[#allocation2 + $0x238] sm:$0xff]
  %v456 = vld [vmem:[#allocation2 + $0x240] sm:$0xff]
  %v457 = vld [vmem:[#allocation2 + $0x248] sm:$0xff]
  %v458 = vld [vmem:[#allocation2 + $0x250] sm:$0xff]
  %v459 = vld [vmem:[#allocation2 + $0x258] sm:$0xff]
  %v460 = vld [vmem:[#allocation2 + $0x260] sm:$0xff]
  %v461 = vld [vmem:[#allocation2 + $0x268] sm:$0xff]
  %v462 = vld [vmem:[#allocation2 + $0x270] sm:$0xff]
  %v463 = vld [vmem:[#allocation2 + $0x278] sm:$0xff]
  %v464 = vld [vmem:[#allocation2 + $0x280] sm:$0xff]
  %v465 = vld [vmem:[#allocation2 + $0x288] sm:$0xff]
  %v466 = vld [vmem:[#allocation2 + $0x290] sm:$0xff]
  %v467 = vld [vmem:[#allocation2 + $0x298] sm:$0xff]
  %v468 = vld [vmem:[#allocation2 + $0x2a0] sm:$0xff]
  %v469 = vld [vmem:[#allocation2 + $0x2a8] sm:$0xff]
  %v470 = vld [vmem:[#allocation2 + $0x2b0] sm:$0xff]
  %v471 = vld [vmem:[#allocation2 + $0x2b8] sm:$0xff]
  %v472 = vld [vmem:[#allocation2 + $0x2c0] sm:$0xff]
  %v473 = vld [vmem:[#allocation2 + $0x2c8] sm:$0xff]
  %v474 = vld [vmem:[#allocation2 + $0x2d0] sm:$0xff]
  %v475 = vld [vmem:[#allocation2 + $0x2d8] sm:$0xff]
  %v476 = vld [vmem:[#allocation2 + $0x2e0] sm:$0xff]
  %v477 = vld [vmem:[#allocation2 + $0x2e8] sm:$0xff]
  %v478 = vld [vmem:[#allocation2 + $0x2f0] sm:$0xff]
  %v479 = vld [vmem:[#allocation2 + $0x2f8] sm:$0xff]
  %v480 = vld [vmem:[#allocation2 + $0x300] sm:$0xff]
  %v481 = vld [vmem:[#allocation2 + $0x308] sm:$0xff]
  %v482 = vld [vmem:[#allocation2 + $0x310] sm:$0xff]
  %v483 = vld [vmem:[#allocation2 + $0x318] sm:$0xff]
  %v484 = vld [vmem:[#allocation2 + $0x320] sm:$0xff]
  %v485 = vld [vmem:[#allocation2 + $0x328] sm:$0xff]
  %v486 = vld [vmem:[#allocation2 + $0x330] sm:$0xff]
  %v487 = vld [vmem:[#allocation2 + $0x338] sm:$0xff]
  %v488 = vld [vmem:[#allocation2 + $0x340] sm:$0xff]
  %v489 = vld [vmem:[#allocation2 + $0x348] sm:$0xff]
  %v490 = vld [vmem:[#allocation2 + $0x350] sm:$0xff]
  %v491 = vld [vmem:[#allocation2 + $0x358] sm:$0xff]
  %v492 = vld [vmem:[%s1] sm:$0xf]
  %v493 = vld [vmem:[%s1 + $0x4] sm:$0xf]
  %v494 = vld [vmem:[%s1 + $0x8] sm:$0xf]
  %v495 = vld [vmem:[%s1 + $0xc] sm:$0xf]
  %v496 = vld [vmem:[%s1 + $0x10] sm:$0xf]
  %v497 = vld [vmem:[%s1 + $0x14] sm:$0xf]
  %v498 = vld [vmem:[%s1 + $0x18] sm:$0xf]
  %v499 = vld [vmem:[%s1 + $0x1c] sm:$0xf]
  %v500 = vld [vmem:[%s1 + $0x20] sm:$0xf]
  %v501 = vld [vmem:[%s1 + $0x24] sm:$0xf]
  %v502 = vld [vmem:[%s1 + $0x28] sm:$0xf]
  %v503 = vld [vmem:[%s1 + $0x2c] sm:$0xf]
  %v504 = vld [vmem:[%s1 + $0x30] sm:$0xf]
  %v505 = vld [vmem:[%s1 + $0x34] sm:$0xf]
  %v506 = vld [vmem:[%s1 + $0x38] sm:$0xf]
  %v507 = vld [vmem:[%s1 + $0x3c] sm:$0xf]
  %v508 = vld [vmem:[%s1 + $0x40] sm:$0xf]
  %v509 = vld [vmem:[%s1 + $0x44] sm:$0xf]
  %v510 = vld [vmem:[%s1 + $0x48] sm:$0xf]
  %v511 = vld [vmem:[%s1 + $0x4c] sm:$0xf]
  %v512 = vld [vmem:[%s1 + $0x50] sm:$0xf]
  %v513 = vld [vmem:[%s1 + $0x54] sm:$0xf]
  %v514 = vld [vmem:[%s1 + $0x58] sm:$0xf]
  %v515 = vld [vmem:[%s1 + $0x5c] sm:$0xf]
  %v516 = vld [vmem:[%s1 + $0x60] sm:$0xf]
  %v517 = vld [vmem:[%s1 + $0x64] sm:$0xf]
  %v518 = vld [vmem:[%s1 + $0x68] sm:$0xf]
  %v519 = vld [vmem:[%s1 + $0x6c] sm:$0xf]
  %v520 = vld [vmem:[%s1 + $0x70] sm:$0xf]
  %v521 = vld [vmem:[%s1 + $0x74] sm:$0xf]
  %v522 = vld [vmem:[%s1 + $0x78] sm:$0xf]
  %v523 = vld [vmem:[%s1 + $0x7c] sm:$0xf]
  %v524 = vld [vmem:[%s1 + $0x80] sm:$0xf]
  %v525 = vld [vmem:[%s1 + $0x84] sm:$0xf]
  %v526 = vld [vmem:[%s1 + $0x88] sm:$0xf]
  %v527 = vld [vmem:[%s1 + $0x8c] sm:$0xf]
  %v528 = vld [vmem:[%s1 + $0x90] sm:$0xf]
  %v529 = vld [vmem:[%s1 + $0x94] sm:$0xf]
  %v530 = vld [vmem:[%s1 + $0x98] sm:$0xf]
  %v531 = vld [vmem:[%s1 + $0x9c] sm:$0xf]
  %v532 = vld [vmem:[%s1 + $0xa0] sm:$0xf]
  %v533 = vld [vmem:[%s1 + $0xa4] sm:$0xf]
  %v534 = vld [vmem:[%s1 + $0xa8] sm:$0xf]
  %v535 = vld [vmem:[%s1 + $0xac] sm:$0xf]
  %v536 = vld [vmem:[%s1 + $0xb0] sm:$0xf]
  %v537 = vld [vmem:[%s1 + $0xb4] sm:$0xf]
  %v538 = vld [vmem:[%s1 + $0xb8] sm:$0xf]
  %v539 = vld [vmem:[%s1 + $0xbc] sm:$0xf]
  %v540 = vld [vmem:[%s1 + $0xc0] sm:$0xf]
  %v541 = vld [vmem:[%s1 + $0xc4] sm:$0xf]
  %v542 = vld [vmem:[%s1 + $0xc8] sm:$0xf]
  %v543 = vld [vmem:[%s1 + $0xcc] sm:$0xf]
  %v544 = vld [vmem:[%s1 + $0xd0] sm:$0xf]
  %v545 = vld [vmem:[%s1 + $0xd4] sm:$0xf]
  %v546 = vld [vmem:[%s1 + $0xd8] sm:$0xf]
  %v547 = vld [vmem:[%s1 + $0xdc] sm:$0xf]
  %v548 = vld [vmem:[%s1 + $0xe0] sm:$0xf]
  %v549 = vld [vmem:[%s1 + $0xe4] sm:$0xf]
  %v550 = vld [vmem:[%s1 + $0xe8] sm:$0xf]
  %v551 = vld [vmem:[%s1 + $0xec] sm:$0xf]
  %v552 = vld [vmem:[%s1 + $0xf0] sm:$0xf]
  %v553 = vld [vmem:[%s1 + $0xf4] sm:$0xf]
  %v554 = vld [vmem:[%s1 + $0xf8] sm:$0xf]
  %v555 = vld [vmem:[%s1 + $0xfc] sm:$0xf]
  %v556 = vld [vmem:[%s1 + $0x100] sm:$0xf]
  %v557 = vld [vmem:[%s1 + $0x104] sm:$0xf]
  %v558 = vld [vmem:[%s1 + $0x108] sm:$0xf]
  %v559 = vld [vmem:[%s1 + $0x10c] sm:$0xf]
  %v560 = vld [vmem:[%s1 + $0x110] sm:$0xf]
  %v561 = vld [vmem:[%s1 + $0x114] sm:$0xf]
  %v562 = vld [vmem:[%s1 + $0x118] sm:$0xf]
  %v563 = vld [vmem:[%s1 + $0x11c] sm:$0xf]
  %v564 = vld [vmem:[%s1 + $0x120] sm:$0xf]
  %v565 = vld [vmem:[%s1 + $0x124] sm:$0xf]
  %v566 = vld [vmem:[%s1 + $0x128] sm:$0xf]
  %v567 = vld [vmem:[%s1 + $0x12c] sm:$0xf]
  %v568 = vld [vmem:[%s1 + $0x130] sm:$0xf]
  %v569 = vld [vmem:[%s1 + $0x134] sm:$0xf]
  %v570 = vld [vmem:[%s1 + $0x138] sm:$0xf]
  %v571 = vld [vmem:[%s1 + $0x13c] sm:$0xf]
  %v572 = vld [vmem:[%s1 + $0x140] sm:$0xf]
  %v573 = vld [vmem:[%s1 + $0x144] sm:$0xf]
  %v574 = vld [vmem:[%s1 + $0x148] sm:$0xf]
  %v575 = vld [vmem:[%s1 + $0x14c] sm:$0xf]
  %v576 = vld [vmem:[%s1 + $0x150] sm:$0xf]
  %v577 = vld [vmem:[%s1 + $0x154] sm:$0xf]
  %v578 = vld [vmem:[%s1 + $0x158] sm:$0xf]
  %v579 = vld [vmem:[%s1 + $0x15c] sm:$0xf]
  %v580 = vld [vmem:[%s1 + $0x160] sm:$0xf]
  %v581 = vld [vmem:[%s1 + $0x164] sm:$0xf]
  %v582 = vld [vmem:[%s1 + $0x168] sm:$0xf]
  %v583 = vld [vmem:[%s1 + $0x16c] sm:$0xf]
  %v584 = vld [vmem:[%s1 + $0x170] sm:$0xf]
  %v585 = vld [vmem:[%s1 + $0x174] sm:$0xf]
  %v586 = vld [vmem:[%s1 + $0x178] sm:$0xf]
  %v587 = vld [vmem:[%s1 + $0x17c] sm:$0xf]
  %v588 = vld [vmem:[%s1 + $0x180] sm:$0xf]
  %v589 = vld [vmem:[%s1 + $0x184] sm:$0xf]
  %v590 = vld [vmem:[%s1 + $0x188] sm:$0xf]
  %v591 = vld [vmem:[%s1 + $0x18c] sm:$0xf]
  %v592 = vld [vmem:[%s1 + $0x190] sm:$0xf]
  %v593 = vld [vmem:[%s1 + $0x194] sm:$0xf]
  %v594 = vld [vmem:[%s1 + $0x198] sm:$0xf]
  %v595 = vld [vmem:[%s1 + $0x19c] sm:$0xf]
  %v596 = vld [vmem:[%s1 + $0x1a0] sm:$0xf]
  %v597 = vld [vmem:[%s1 + $0x1a4] sm:$0xf]
  %v598 = vld [vmem:[%s1 + $0x1a8] sm:$0xf]
  %v599 = vld [vmem:[%s1 + $0x1ac] sm:$0xf]
  %v600 = vld [vmem:[%s1 + $0x1b0] sm:$0xf]
  %v601 = vld [vmem:[%s1 + $0x1b4] sm:$0xf]
  %v602 = vld [vmem:[%s1 + $0x1b8] sm:$0xf]
  %v603 = vld [vmem:[%s1 + $0x1bc] sm:$0xf]
  %v604 = vld [vmem:[%s1 + $0x1c0] sm:$0xf]
  %v605 = vld [vmem:[%s1 + $0x1c4] sm:$0xf]
  %v606 = vld [vmem:[%s1 + $0x1c8] sm:$0xf]
  %v607 = vld [vmem:[%s1 + $0x1cc] sm:$0xf]
  %v608 = vld [vmem:[%s1 + $0x1d0] sm:$0xf]
  %v609 = vld [vmem:[%s1 + $0x1d4] sm:$0xf]
  %v610 = vld [vmem:[%s1 + $0x1d8] sm:$0xf]
  %v611 = vld [vmem:[%s1 + $0x1dc] sm:$0xf]
  %v612 = vld [vmem:[%s1 + $0x1e0] sm:$0xf]
  %v613 = vld [vmem:[%s1 + $0x1e4] sm:$0xf]
  %v614 = vld [vmem:[%s1 + $0x1e8] sm:$0xf]
  %v615 = vld [vmem:[%s1 + $0x1ec] sm:$0xf]
  %v616 = vld [vmem:[%s1 + $0x1f0] sm:$0xf]
  %v617 = vld [vmem:[%s1 + $0x1f4] sm:$0xf]
  %v618 = vld [vmem:[%s1 + $0x1f8] sm:$0xf]
  %v619 = vld [vmem:[%s1 + $0x1fc] sm:$0xf]
  %v620 = vld [vmem:[%s1 + $0x200] sm:$0xf]
  %v621 = vld [vmem:[%s1 + $0x204] sm:$0xf]
  %v622 = vld [vmem:[%s1 + $0x208] sm:$0xf]
  %v623 = vld [vmem:[%s1 + $0x20c] sm:$0xf]
  %v624 = vld [vmem:[%s1 + $0x210] sm:$0xf]
  %v625 = vld [vmem:[%s1 + $0x214] sm:$0xf]
  %v626 = vld [vmem:[%s1 + $0x218] sm:$0xf]
  %v627 = vld [vmem:[%s1 + $0x21c] sm:$0xf]
  %v628 = vld [vmem:[%s1 + $0x220] sm:$0xf]
  %v629 = vld [vmem:[%s1 + $0x224] sm:$0xf]
  %v630 = vld [vmem:[%s1 + $0x228] sm:$0xf]
  %v631 = vld [vmem:[%s1 + $0x22c] sm:$0xf]
  %v632 = vld [vmem:[%s1 + $0x230] sm:$0xf]
  %v633 = vld [vmem:[%s1 + $0x234] sm:$0xf]
  %v634 = vld [vmem:[%s1 + $0x238] sm:$0xf]
  %v635 = vld [vmem:[%s1 + $0x23c] sm:$0xf]
  %v637 = vshll.u32 %v385, 16
  %v639 = vrot.slane %v637, 1
  %v640 = vshrl.u32 %v385, 16
  %v642 = vor.u32 %v640, %v639
  %v644 = vshll.u32 %v388, 16
  %v646 = vrot.slane %v644, 1
  %v647 = vshrl.u32 %v388, 16
  %v649 = vor.u32 %v647, %v646
  %v651 = vshll.u32 %v391, 16
  %v653 = vrot.slane %v651, 1
  %v654 = vshrl.u32 %v391, 16
  %v656 = vor.u32 %v654, %v653
  %v658 = vshll.u32 %v394, 16
  %v660 = vrot.slane %v658, 1
  %v661 = vshrl.u32 %v394, 16
  %v663 = vor.u32 %v661, %v660
  %v665 = vshll.u32 %v397, 16
  %v667 = vrot.slane %v665, 1
  %v668 = vshrl.u32 %v397, 16
  %v670 = vor.u32 %v668, %v667
  %v672 = vshll.u32 %v400, 16
  %v674 = vrot.slane %v672, 1
  %v675 = vshrl.u32 %v400, 16
  %v677 = vor.u32 %v675, %v674
  %v679 = vshll.u32 %v403, 16
  %v681 = vrot.slane %v679, 1
  %v682 = vshrl.u32 %v403, 16
  %v684 = vor.u32 %v682, %v681
  %v686 = vshll.u32 %v406, 16
  %v688 = vrot.slane %v686, 1
  %v689 = vshrl.u32 %v406, 16
  %v691 = vor.u32 %v689, %v688
  %v693 = vshll.u32 %v409, 16
  %v695 = vrot.slane %v693, 1
  %v696 = vshrl.u32 %v409, 16
  %v698 = vor.u32 %v696, %v695
  %v700 = vshll.u32 %v412, 16
  %v702 = vrot.slane %v700, 1
  %v703 = vshrl.u32 %v412, 16
  %v705 = vor.u32 %v703, %v702
  %v707 = vshll.u32 %v415, 16
  %v709 = vrot.slane %v707, 1
  %v710 = vshrl.u32 %v415, 16
  %v712 = vor.u32 %v710, %v709
  %v714 = vshll.u32 %v418, 16
  %v716 = vrot.slane %v714, 1
  %v717 = vshrl.u32 %v418, 16
  %v719 = vor.u32 %v717, %v716
  %v721 = vshll.u32 %v421, 16
  %v723 = vrot.slane %v721, 1
  %v724 = vshrl.u32 %v421, 16
  %v726 = vor.u32 %v724, %v723
  %v728 = vshll.u32 %v424, 16
  %v730 = vrot.slane %v728, 1
  %v731 = vshrl.u32 %v424, 16
  %v733 = vor.u32 %v731, %v730
  %v735 = vshll.u32 %v427, 16
  %v737 = vrot.slane %v735, 1
  %v738 = vshrl.u32 %v427, 16
  %v740 = vor.u32 %v738, %v737
  %v742 = vshll.u32 %v430, 16
  %v744 = vrot.slane %v742, 1
  %v745 = vshrl.u32 %v430, 16
  %v747 = vor.u32 %v745, %v744
  %v749 = vshll.u32 %v439, 16
  %v751 = vrot.slane %v749, 1
  %v752 = vshrl.u32 %v439, 16
  %v754 = vor.u32 %v752, %v751
  %v756 = vshll.u32 %v442, 16
  %v758 = vrot.slane %v756, 1
  %v759 = vshrl.u32 %v442, 16
  %v761 = vor.u32 %v759, %v758
  %v763 = vshll.u32 %v445, 16
  %v765 = vrot.slane %v763, 1
  %v766 = vshrl.u32 %v445, 16
  %v768 = vor.u32 %v766, %v765
  %v770 = vshll.u32 %v448, 16
  %v772 = vrot.slane %v770, 1
  %v773 = vshrl.u32 %v448, 16
  %v775 = vor.u32 %v773, %v772
  %v777 = vshll.u32 %v451, 16
  %v779 = vrot.slane %v777, 1
  %v780 = vshrl.u32 %v451, 16
  %v782 = vor.u32 %v780, %v779
  %v784 = vshll.u32 %v454, 16
  %v786 = vrot.slane %v784, 1
  %v787 = vshrl.u32 %v454, 16
  %v789 = vor.u32 %v787, %v786
  %v791 = vshll.u32 %v457, 16
  %v793 = vrot.slane %v791, 1
  %v794 = vshrl.u32 %v457, 16
  %v796 = vor.u32 %v794, %v793
  %v798 = vshll.u32 %v460, 16
  %v800 = vrot.slane %v798, 1
  %v801 = vshrl.u32 %v460, 16
  %v803 = vor.u32 %v801, %v800
  %v805 = vshll.u32 %v463, 16
  %v807 = vrot.slane %v805, 1
  %v808 = vshrl.u32 %v463, 16
  %v810 = vor.u32 %v808, %v807
  %v812 = vshll.u32 %v466, 16
  %v814 = vrot.slane %v812, 1
  %v815 = vshrl.u32 %v466, 16
  %v817 = vor.u32 %v815, %v814
  %v819 = vshll.u32 %v469, 16
  %v821 = vrot.slane %v819, 1
  %v822 = vshrl.u32 %v469, 16
  %v824 = vor.u32 %v822, %v821
  %v826 = vshll.u32 %v472, 16
  %v828 = vrot.slane %v826, 1
  %v829 = vshrl.u32 %v472, 16
  %v831 = vor.u32 %v829, %v828
  %v833 = vshll.u32 %v475, 16
  %v835 = vrot.slane %v833, 1
  %v836 = vshrl.u32 %v475, 16
  %v838 = vor.u32 %v836, %v835
  %v840 = vshll.u32 %v478, 16
  %v842 = vrot.slane %v840, 1
  %v843 = vshrl.u32 %v478, 16
  %v845 = vor.u32 %v843, %v842
  %v847 = vshll.u32 %v481, 16
  %v849 = vrot.slane %v847, 1
  %v850 = vshrl.u32 %v481, 16
  %v852 = vor.u32 %v850, %v849
  %v854 = vshll.u32 %v484, 16
  %v856 = vrot.slane %v854, 1
  %v857 = vshrl.u32 %v484, 16
  %v859 = vor.u32 %v857, %v856
  %vm924 = vcmask 1046528
  %v925 = vrot.slane %v385, 1
  %v926 = vrot.slane %v386, 1
  %v927 = vsel %vm924, %v925, %v926
  %v928 = vrot.slane %v388, 1
  %v929 = vrot.slane %v389, 1
  %v930 = vsel %vm924, %v928, %v929
  %v931 = vrot.slane %v391, 1
  %v932 = vrot.slane %v392, 1
  %v933 = vsel %vm924, %v931, %v932
  %v934 = vrot.slane %v394, 1
  %v935 = vrot.slane %v395, 1
  %v936 = vsel %vm924, %v934, %v935
  %v937 = vrot.slane %v397, 1
  %v938 = vrot.slane %v398, 1
  %v939 = vsel %vm924, %v937, %v938
  %v940 = vrot.slane %v400, 1
  %v941 = vrot.slane %v401, 1
  %v942 = vsel %vm924, %v940, %v941
  %v943 = vrot.slane %v403, 1
  %v944 = vrot.slane %v404, 1
  %v945 = vsel %vm924, %v943, %v944
  %v946 = vrot.slane %v406, 1
  %v947 = vrot.slane %v407, 1
  %v948 = vsel %vm924, %v946, %v947
  %v949 = vrot.slane %v409, 1
  %v950 = vrot.slane %v410, 1
  %v951 = vsel %vm924, %v949, %v950
  %v952 = vrot.slane %v412, 1
  %v953 = vrot.slane %v413, 1
  %v954 = vsel %vm924, %v952, %v953
  %v955 = vrot.slane %v415, 1
  %v956 = vrot.slane %v416, 1
  %v957 = vsel %vm924, %v955, %v956
  %v958 = vrot.slane %v418, 1
  %v959 = vrot.slane %v419, 1
  %v960 = vsel %vm924, %v958, %v959
  %v961 = vrot.slane %v421, 1
  %v962 = vrot.slane %v422, 1
  %v963 = vsel %vm924, %v961, %v962
  %v964 = vrot.slane %v424, 1
  %v965 = vrot.slane %v425, 1
  %v966 = vsel %vm924, %v964, %v965
  %v967 = vrot.slane %v427, 1
  %v968 = vrot.slane %v428, 1
  %v969 = vsel %vm924, %v967, %v968
  %v970 = vrot.slane %v430, 1
  %v971 = vrot.slane %v431, 1
  %v972 = vsel %vm924, %v970, %v971
  %v973 = vrot.slane %v439, 1
  %v974 = vrot.slane %v440, 1
  %v975 = vsel %vm924, %v973, %v974
  %v976 = vrot.slane %v442, 1
  %v977 = vrot.slane %v443, 1
  %v978 = vsel %vm924, %v976, %v977
  %v979 = vrot.slane %v445, 1
  %v980 = vrot.slane %v446, 1
  %v981 = vsel %vm924, %v979, %v980
  %v982 = vrot.slane %v448, 1
  %v983 = vrot.slane %v449, 1
  %v984 = vsel %vm924, %v982, %v983
  %v985 = vrot.slane %v451, 1
  %v986 = vrot.slane %v452, 1
  %v987 = vsel %vm924, %v985, %v986
  %v988 = vrot.slane %v454, 1
  %v989 = vrot.slane %v455, 1
  %v990 = vsel %vm924, %v988, %v989
  %v991 = vrot.slane %v457, 1
  %v992 = vrot.slane %v458, 1
  %v993 = vsel %vm924, %v991, %v992
  %v994 = vrot.slane %v460, 1
  %v995 = vrot.slane %v461, 1
  %v996 = vsel %vm924, %v994, %v995
  %v997 = vrot.slane %v463, 1
  %v998 = vrot.slane %v464, 1
  %v999 = vsel %vm924, %v997, %v998
  %v1000 = vrot.slane %v466, 1
  %v1001 = vrot.slane %v467, 1
  %v1002 = vsel %vm924, %v1000, %v1001
  %v1003 = vrot.slane %v469, 1
  %v1004 = vrot.slane %v470, 1
  %v1005 = vsel %vm924, %v1003, %v1004
  %v1006 = vrot.slane %v472, 1
  %v1007 = vrot.slane %v473, 1
  %v1008 = vsel %vm924, %v1006, %v1007
  %v1009 = vrot.slane %v475, 1
  %v1010 = vrot.slane %v476, 1
  %v1011 = vsel %vm924, %v1009, %v1010
  %v1012 = vrot.slane %v478, 1
  %v1013 = vrot.slane %v479, 1
  %v1014 = vsel %vm924, %v1012, %v1013
  %v1015 = vrot.slane %v481, 1
  %v1016 = vrot.slane %v482, 1
  %v1017 = vsel %vm924, %v1015, %v1016
  %v1018 = vrot.slane %v484, 1
  %v1019 = vrot.slane %v485, 1
  %v1020 = vsel %vm924, %v1018, %v1019
  %v1022 = vshll.u32 %v433, 16
  %v1024 = vrot.slane %v1022, 1
  %v1025 = vshrl.u32 %v433, 16
  %v1027 = vor.u32 %v1025, %v1024
  %v1029 = vshll.u32 %v487, 16
  %v1031 = vrot.slane %v1029, 1
  %v1032 = vshrl.u32 %v487, 16
  %v1034 = vor.u32 %v1032, %v1031
  %v1039 = vrot.slane %v433, 1
  %v1040 = vrot.slane %v434, 1
  %v1041 = vsel %vm924, %v1039, %v1040
  %v1042 = vrot.slane %v487, 1
  %v1043 = vrot.slane %v488, 1
  %v1044 = vsel %vm924, %v1042, %v1043
  %v1046 = vshll.u32 %v436, 16
  %v1048 = vrot.slane %v1046, 1
  %v1049 = vshrl.u32 %v436, 16
  %v1051 = vor.u32 %v1049, %v1048
  %v1053 = vshll.u32 %v490, 16
  %v1055 = vrot.slane %v1053, 1
  %v1056 = vshrl.u32 %v490, 16
  %v1058 = vor.u32 %v1056, %v1055
  %v1063 = vrot.slane %v436, 1
  %v1064 = vrot.slane %v437, 1
  %v1065 = vsel %vm924, %v1063, %v1064
  %v1066 = vrot.slane %v490, 1
  %v1067 = vrot.slane %v491, 1
  %v1068 = vsel %vm924, %v1066, %v1067
  %vm1069 = vsmask.f32 256
  %v1071 = vshrl.u32 %v384, 16
  %v1073 = vrot.slane %v1071, 7
  %v1074 = vrot.slane %v640, 7
  %v1075 = vor.u32 %v1074, %v637
  %v1076 = vsel %vm1069, %v1073, %v1075
  %v1078 = vshrl.u32 %v639, 16
  %v1080 = vrot.slane %v1078, 7
  %v1082 = vshrl.u32 %v642, 16
  %v1084 = vrot.slane %v1082, 7
  %v1085 = vshll.u32 %v642, 16
  %v1087 = vor.u32 %v1084, %v1085
  %v1088 = vsel %vm1069, %v1080, %v1087
  %v1090 = vshrl.u32 %v925, 16
  %v1092 = vrot.slane %v1090, 7
  %v1094 = vshrl.u32 %v927, 16
  %v1096 = vrot.slane %v1094, 7
  %v1097 = vshll.u32 %v927, 16
  %v1099 = vor.u32 %v1096, %v1097
  %v1100 = vsel %vm1069, %v1092, %v1099
  %v1102 = vshrl.u32 %v387, 16
  %v1104 = vrot.slane %v1102, 7
  %v1105 = vrot.slane %v647, 7
  %v1106 = vor.u32 %v1105, %v644
  %v1107 = vsel %vm1069, %v1104, %v1106
  %v1109 = vshrl.u32 %v646, 16
  %v1111 = vrot.slane %v1109, 7
  %v1113 = vshrl.u32 %v649, 16
  %v1115 = vrot.slane %v1113, 7
  %v1116 = vshll.u32 %v649, 16
  %v1118 = vor.u32 %v1115, %v1116
  %v1119 = vsel %vm1069, %v1111, %v1118
  %v1121 = vshrl.u32 %v928, 16
  %v1123 = vrot.slane %v1121, 7
  %v1125 = vshrl.u32 %v930, 16
  %v1127 = vrot.slane %v1125, 7
  %v1128 = vshll.u32 %v930, 16
  %v1130 = vor.u32 %v1127, %v1128
  %v1131 = vsel %vm1069, %v1123, %v1130
  %v1133 = vshrl.u32 %v390, 16
  %v1135 = vrot.slane %v1133, 7
  %v1136 = vrot.slane %v654, 7
  %v1137 = vor.u32 %v1136, %v651
  %v1138 = vsel %vm1069, %v1135, %v1137
  %v1140 = vshrl.u32 %v653, 16
  %v1142 = vrot.slane %v1140, 7
  %v1144 = vshrl.u32 %v656, 16
  %v1146 = vrot.slane %v1144, 7
  %v1147 = vshll.u32 %v656, 16
  %v1149 = vor.u32 %v1146, %v1147
  %v1150 = vsel %vm1069, %v1142, %v1149
  %v1152 = vshrl.u32 %v931, 16
  %v1154 = vrot.slane %v1152, 7
  %v1156 = vshrl.u32 %v933, 16
  %v1158 = vrot.slane %v1156, 7
  %v1159 = vshll.u32 %v933, 16
  %v1161 = vor.u32 %v1158, %v1159
  %v1162 = vsel %vm1069, %v1154, %v1161
  %v1164 = vshrl.u32 %v393, 16
  %v1166 = vrot.slane %v1164, 7
  %v1167 = vrot.slane %v661, 7
  %v1168 = vor.u32 %v1167, %v658
  %v1169 = vsel %vm1069, %v1166, %v1168
  %v1171 = vshrl.u32 %v660, 16
  %v1173 = vrot.slane %v1171, 7
  %v1175 = vshrl.u32 %v663, 16
  %v1177 = vrot.slane %v1175, 7
  %v1178 = vshll.u32 %v663, 16
  %v1180 = vor.u32 %v1177, %v1178
  %v1181 = vsel %vm1069, %v1173, %v1180
  %v1183 = vshrl.u32 %v934, 16
  %v1185 = vrot.slane %v1183, 7
  %v1187 = vshrl.u32 %v936, 16
  %v1189 = vrot.slane %v1187, 7
  %v1190 = vshll.u32 %v936, 16
  %v1192 = vor.u32 %v1189, %v1190
  %v1193 = vsel %vm1069, %v1185, %v1192
  %v1195 = vshrl.u32 %v396, 16
  %v1197 = vrot.slane %v1195, 7
  %v1198 = vrot.slane %v668, 7
  %v1199 = vor.u32 %v1198, %v665
  %v1200 = vsel %vm1069, %v1197, %v1199
  %v1202 = vshrl.u32 %v667, 16
  %v1204 = vrot.slane %v1202, 7
  %v1206 = vshrl.u32 %v670, 16
  %v1208 = vrot.slane %v1206, 7
  %v1209 = vshll.u32 %v670, 16
  %v1211 = vor.u32 %v1208, %v1209
  %v1212 = vsel %vm1069, %v1204, %v1211
  %v1214 = vshrl.u32 %v937, 16
  %v1216 = vrot.slane %v1214, 7
  %v1218 = vshrl.u32 %v939, 16
  %v1220 = vrot.slane %v1218, 7
  %v1221 = vshll.u32 %v939, 16
  %v1223 = vor.u32 %v1220, %v1221
  %v1224 = vsel %vm1069, %v1216, %v1223
  %v1226 = vshrl.u32 %v399, 16
  %v1228 = vrot.slane %v1226, 7
  %v1229 = vrot.slane %v675, 7
  %v1230 = vor.u32 %v1229, %v672
  %v1231 = vsel %vm1069, %v1228, %v1230
  %v1233 = vshrl.u32 %v674, 16
  %v1235 = vrot.slane %v1233, 7
  %v1237 = vshrl.u32 %v677, 16
  %v1239 = vrot.slane %v1237, 7
  %v1240 = vshll.u32 %v677, 16
  %v1242 = vor.u32 %v1239, %v1240
  %v1243 = vsel %vm1069, %v1235, %v1242
  %v1245 = vshrl.u32 %v940, 16
  %v1247 = vrot.slane %v1245, 7
  %v1249 = vshrl.u32 %v942, 16
  %v1251 = vrot.slane %v1249, 7
  %v1252 = vshll.u32 %v942, 16
  %v1254 = vor.u32 %v1251, %v1252
  %v1255 = vsel %vm1069, %v1247, %v1254
  %v1257 = vshrl.u32 %v402, 16
  %v1259 = vrot.slane %v1257, 7
  %v1260 = vrot.slane %v682, 7
  %v1261 = vor.u32 %v1260, %v679
  %v1262 = vsel %vm1069, %v1259, %v1261
  %v1264 = vshrl.u32 %v681, 16
  %v1266 = vrot.slane %v1264, 7
  %v1268 = vshrl.u32 %v684, 16
  %v1270 = vrot.slane %v1268, 7
  %v1271 = vshll.u32 %v684, 16
  %v1273 = vor.u32 %v1270, %v1271
  %v1274 = vsel %vm1069, %v1266, %v1273
  %v1276 = vshrl.u32 %v943, 16
  %v1278 = vrot.slane %v1276, 7
  %v1280 = vshrl.u32 %v945, 16
  %v1282 = vrot.slane %v1280, 7
  %v1283 = vshll.u32 %v945, 16
  %v1285 = vor.u32 %v1282, %v1283
  %v1286 = vsel %vm1069, %v1278, %v1285
  %v1288 = vshrl.u32 %v405, 16
  %v1290 = vrot.slane %v1288, 7
  %v1291 = vrot.slane %v689, 7
  %v1292 = vor.u32 %v1291, %v686
  %v1293 = vsel %vm1069, %v1290, %v1292
  %v1295 = vshrl.u32 %v688, 16
  %v1297 = vrot.slane %v1295, 7
  %v1299 = vshrl.u32 %v691, 16
  %v1301 = vrot.slane %v1299, 7
  %v1302 = vshll.u32 %v691, 16
  %v1304 = vor.u32 %v1301, %v1302
  %v1305 = vsel %vm1069, %v1297, %v1304
  %v1307 = vshrl.u32 %v946, 16
  %v1309 = vrot.slane %v1307, 7
  %v1311 = vshrl.u32 %v948, 16
  %v1313 = vrot.slane %v1311, 7
  %v1314 = vshll.u32 %v948, 16
  %v1316 = vor.u32 %v1313, %v1314
  %v1317 = vsel %vm1069, %v1309, %v1316
  %v1319 = vshrl.u32 %v408, 16
  %v1321 = vrot.slane %v1319, 7
  %v1322 = vrot.slane %v696, 7
  %v1323 = vor.u32 %v1322, %v693
  %v1324 = vsel %vm1069, %v1321, %v1323
  %v1326 = vshrl.u32 %v695, 16
  %v1328 = vrot.slane %v1326, 7
  %v1330 = vshrl.u32 %v698, 16
  %v1332 = vrot.slane %v1330, 7
  %v1333 = vshll.u32 %v698, 16
  %v1335 = vor.u32 %v1332, %v1333
  %v1336 = vsel %vm1069, %v1328, %v1335
  %v1338 = vshrl.u32 %v949, 16
  %v1340 = vrot.slane %v1338, 7
  %v1342 = vshrl.u32 %v951, 16
  %v1344 = vrot.slane %v1342, 7
  %v1345 = vshll.u32 %v951, 16
  %v1347 = vor.u32 %v1344, %v1345
  %v1348 = vsel %vm1069, %v1340, %v1347
  %v1350 = vshrl.u32 %v411, 16
  %v1352 = vrot.slane %v1350, 7
  %v1353 = vrot.slane %v703, 7
  %v1354 = vor.u32 %v1353, %v700
  %v1355 = vsel %vm1069, %v1352, %v1354
  %v1357 = vshrl.u32 %v702, 16
  %v1359 = vrot.slane %v1357, 7
  %v1361 = vshrl.u32 %v705, 16
  %v1363 = vrot.slane %v1361, 7
  %v1364 = vshll.u32 %v705, 16
  %v1366 = vor.u32 %v1363, %v1364
  %v1367 = vsel %vm1069, %v1359, %v1366
  %v1369 = vshrl.u32 %v952, 16
  %v1371 = vrot.slane %v1369, 7
  %v1373 = vshrl.u32 %v954, 16
  %v1375 = vrot.slane %v1373, 7
  %v1376 = vshll.u32 %v954, 16
  %v1378 = vor.u32 %v1375, %v1376
  %v1379 = vsel %vm1069, %v1371, %v1378
  %v1381 = vshrl.u32 %v414, 16
  %v1383 = vrot.slane %v1381, 7
  %v1384 = vrot.slane %v710, 7
  %v1385 = vor.u32 %v1384, %v707
  %v1386 = vsel %vm1069, %v1383, %v1385
  %v1388 = vshrl.u32 %v709, 16
  %v1390 = vrot.slane %v1388, 7
  %v1392 = vshrl.u32 %v712, 16
  %v1394 = vrot.slane %v1392, 7
  %v1395 = vshll.u32 %v712, 16
  %v1397 = vor.u32 %v1394, %v1395
  %v1398 = vsel %vm1069, %v1390, %v1397
  %v1400 = vshrl.u32 %v955, 16
  %v1402 = vrot.slane %v1400, 7
  %v1404 = vshrl.u32 %v957, 16
  %v1406 = vrot.slane %v1404, 7
  %v1407 = vshll.u32 %v957, 16
  %v1409 = vor.u32 %v1406, %v1407
  %v1410 = vsel %vm1069, %v1402, %v1409
  %v1412 = vshrl.u32 %v417, 16
  %v1414 = vrot.slane %v1412, 7
  %v1415 = vrot.slane %v717, 7
  %v1416 = vor.u32 %v1415, %v714
  %v1417 = vsel %vm1069, %v1414, %v1416
  %v1419 = vshrl.u32 %v716, 16
  %v1421 = vrot.slane %v1419, 7
  %v1423 = vshrl.u32 %v719, 16
  %v1425 = vrot.slane %v1423, 7
  %v1426 = vshll.u32 %v719, 16
  %v1428 = vor.u32 %v1425, %v1426
  %v1429 = vsel %vm1069, %v1421, %v1428
  %v1431 = vshrl.u32 %v958, 16
  %v1433 = vrot.slane %v1431, 7
  %v1435 = vshrl.u32 %v960, 16
  %v1437 = vrot.slane %v1435, 7
  %v1438 = vshll.u32 %v960, 16
  %v1440 = vor.u32 %v1437, %v1438
  %v1441 = vsel %vm1069, %v1433, %v1440
  %v1443 = vshrl.u32 %v420, 16
  %v1445 = vrot.slane %v1443, 7
  %v1446 = vrot.slane %v724, 7
  %v1447 = vor.u32 %v1446, %v721
  %v1448 = vsel %vm1069, %v1445, %v1447
  %v1450 = vshrl.u32 %v723, 16
  %v1452 = vrot.slane %v1450, 7
  %v1454 = vshrl.u32 %v726, 16
  %v1456 = vrot.slane %v1454, 7
  %v1457 = vshll.u32 %v726, 16
  %v1459 = vor.u32 %v1456, %v1457
  %v1460 = vsel %vm1069, %v1452, %v1459
  %v1462 = vshrl.u32 %v961, 16
  %v1464 = vrot.slane %v1462, 7
  %v1466 = vshrl.u32 %v963, 16
  %v1468 = vrot.slane %v1466, 7
  %v1469 = vshll.u32 %v963, 16
  %v1471 = vor.u32 %v1468, %v1469
  %v1472 = vsel %vm1069, %v1464, %v1471
  %v1474 = vshrl.u32 %v423, 16
  %v1476 = vrot.slane %v1474, 7
  %v1477 = vrot.slane %v731, 7
  %v1478 = vor.u32 %v1477, %v728
  %v1479 = vsel %vm1069, %v1476, %v1478
  %v1481 = vshrl.u32 %v730, 16
  %v1483 = vrot.slane %v1481, 7
  %v1485 = vshrl.u32 %v733, 16
  %v1487 = vrot.slane %v1485, 7
  %v1488 = vshll.u32 %v733, 16
  %v1490 = vor.u32 %v1487, %v1488
  %v1491 = vsel %vm1069, %v1483, %v1490
  %v1493 = vshrl.u32 %v964, 16
  %v1495 = vrot.slane %v1493, 7
  %v1497 = vshrl.u32 %v966, 16
  %v1499 = vrot.slane %v1497, 7
  %v1500 = vshll.u32 %v966, 16
  %v1502 = vor.u32 %v1499, %v1500
  %v1503 = vsel %vm1069, %v1495, %v1502
  %v1505 = vshrl.u32 %v426, 16
  %v1507 = vrot.slane %v1505, 7
  %v1508 = vrot.slane %v738, 7
  %v1509 = vor.u32 %v1508, %v735
  %v1510 = vsel %vm1069, %v1507, %v1509
  %v1512 = vshrl.u32 %v737, 16
  %v1514 = vrot.slane %v1512, 7
  %v1516 = vshrl.u32 %v740, 16
  %v1518 = vrot.slane %v1516, 7
  %v1519 = vshll.u32 %v740, 16
  %v1521 = vor.u32 %v1518, %v1519
  %v1522 = vsel %vm1069, %v1514, %v1521
  %v1524 = vshrl.u32 %v967, 16
  %v1526 = vrot.slane %v1524, 7
  %v1528 = vshrl.u32 %v969, 16
  %v1530 = vrot.slane %v1528, 7
  %v1531 = vshll.u32 %v969, 16
  %v1533 = vor.u32 %v1530, %v1531
  %v1534 = vsel %vm1069, %v1526, %v1533
  %v1536 = vshrl.u32 %v429, 16
  %v1538 = vrot.slane %v1536, 7
  %v1539 = vrot.slane %v745, 7
  %v1540 = vor.u32 %v1539, %v742
  %v1541 = vsel %vm1069, %v1538, %v1540
  %v1543 = vshrl.u32 %v744, 16
  %v1545 = vrot.slane %v1543, 7
  %v1547 = vshrl.u32 %v747, 16
  %v1549 = vrot.slane %v1547, 7
  %v1550 = vshll.u32 %v747, 16
  %v1552 = vor.u32 %v1549, %v1550
  %v1553 = vsel %vm1069, %v1545, %v1552
  %v1555 = vshrl.u32 %v970, 16
  %v1557 = vrot.slane %v1555, 7
  %v1559 = vshrl.u32 %v972, 16
  %v1561 = vrot.slane %v1559, 7
  %v1562 = vshll.u32 %v972, 16
  %v1564 = vor.u32 %v1561, %v1562
  %v1565 = vsel %vm1069, %v1557, %v1564
  %v1567 = vshrl.u32 %v432, 16
  %v1569 = vrot.slane %v1567, 7
  %v1570 = vrot.slane %v1025, 7
  %v1571 = vor.u32 %v1570, %v1022
  %v1572 = vsel %vm1069, %v1569, %v1571
  %v1574 = vshrl.u32 %v1024, 16
  %v1576 = vrot.slane %v1574, 7
  %v1578 = vshrl.u32 %v1027, 16
  %v1580 = vrot.slane %v1578, 7
  %v1581 = vshll.u32 %v1027, 16
  %v1583 = vor.u32 %v1580, %v1581
  %v1584 = vsel %vm1069, %v1576, %v1583
  %v1586 = vshrl.u32 %v1039, 16
  %v1588 = vrot.slane %v1586, 7
  %v1590 = vshrl.u32 %v1041, 16
  %v1592 = vrot.slane %v1590, 7
  %v1593 = vshll.u32 %v1041, 16
  %v1595 = vor.u32 %v1592, %v1593
  %v1596 = vsel %vm1069, %v1588, %v1595
  %v1598 = vshrl.u32 %v435, 16
  %v1600 = vrot.slane %v1598, 7
  %v1601 = vrot.slane %v1049, 7
  %v1602 = vor.u32 %v1601, %v1046
  %v1603 = vsel %vm1069, %v1600, %v1602
  %v1605 = vshrl.u32 %v1048, 16
  %v1607 = vrot.slane %v1605, 7
  %v1609 = vshrl.u32 %v1051, 16
  %v1611 = vrot.slane %v1609, 7
  %v1612 = vshll.u32 %v1051, 16
  %v1614 = vor.u32 %v1611, %v1612
  %v1615 = vsel %vm1069, %v1607, %v1614
  %v1617 = vshrl.u32 %v1063, 16
  %v1619 = vrot.slane %v1617, 7
  %v1621 = vshrl.u32 %v1065, 16
  %v1623 = vrot.slane %v1621, 7
  %v1624 = vshll.u32 %v1065, 16
  %v1626 = vor.u32 %v1623, %v1624
  %v1627 = vsel %vm1069, %v1619, %v1626
  %v1629 = vshrl.u32 %v438, 16
  %v1631 = vrot.slane %v1629, 7
  %v1632 = vrot.slane %v752, 7
  %v1633 = vor.u32 %v1632, %v749
  %v1634 = vsel %vm1069, %v1631, %v1633
  %v1636 = vshrl.u32 %v751, 16
  %v1638 = vrot.slane %v1636, 7
  %v1640 = vshrl.u32 %v754, 16
  %v1642 = vrot.slane %v1640, 7
  %v1643 = vshll.u32 %v754, 16
  %v1645 = vor.u32 %v1642, %v1643
  %v1646 = vsel %vm1069, %v1638, %v1645
  %v1648 = vshrl.u32 %v973, 16
  %v1650 = vrot.slane %v1648, 7
  %v1652 = vshrl.u32 %v975, 16
  %v1654 = vrot.slane %v1652, 7
  %v1655 = vshll.u32 %v975, 16
  %v1657 = vor.u32 %v1654, %v1655
  %v1658 = vsel %vm1069, %v1650, %v1657
  %v1660 = vshrl.u32 %v441, 16
  %v1662 = vrot.slane %v1660, 7
  %v1663 = vrot.slane %v759, 7
  %v1664 = vor.u32 %v1663, %v756
  %v1665 = vsel %vm1069, %v1662, %v1664
  %v1667 = vshrl.u32 %v758, 16
  %v1669 = vrot.slane %v1667, 7
  %v1671 = vshrl.u32 %v761, 16
  %v1673 = vrot.slane %v1671, 7
  %v1674 = vshll.u32 %v761, 16
  %v1676 = vor.u32 %v1673, %v1674
  %v1677 = vsel %vm1069, %v1669, %v1676
  %v1679 = vshrl.u32 %v976, 16
  %v1681 = vrot.slane %v1679, 7
  %v1683 = vshrl.u32 %v978, 16
  %v1685 = vrot.slane %v1683, 7
  %v1686 = vshll.u32 %v978, 16
  %v1688 = vor.u32 %v1685, %v1686
  %v1689 = vsel %vm1069, %v1681, %v1688
  %v1691 = vshrl.u32 %v444, 16
  %v1693 = vrot.slane %v1691, 7
  %v1694 = vrot.slane %v766, 7
  %v1695 = vor.u32 %v1694, %v763
  %v1696 = vsel %vm1069, %v1693, %v1695
  %v1698 = vshrl.u32 %v765, 16
  %v1700 = vrot.slane %v1698, 7
  %v1702 = vshrl.u32 %v768, 16
  %v1704 = vrot.slane %v1702, 7
  %v1705 = vshll.u32 %v768, 16
  %v1707 = vor.u32 %v1704, %v1705
  %v1708 = vsel %vm1069, %v1700, %v1707
  %v1710 = vshrl.u32 %v979, 16
  %v1712 = vrot.slane %v1710, 7
  %v1714 = vshrl.u32 %v981, 16
  %v1716 = vrot.slane %v1714, 7
  %v1717 = vshll.u32 %v981, 16
  %v1719 = vor.u32 %v1716, %v1717
  %v1720 = vsel %vm1069, %v1712, %v1719
  %v1722 = vshrl.u32 %v447, 16
  %v1724 = vrot.slane %v1722, 7
  %v1725 = vrot.slane %v773, 7
  %v1726 = vor.u32 %v1725, %v770
  %v1727 = vsel %vm1069, %v1724, %v1726
  %v1729 = vshrl.u32 %v772, 16
  %v1731 = vrot.slane %v1729, 7
  %v1733 = vshrl.u32 %v775, 16
  %v1735 = vrot.slane %v1733, 7
  %v1736 = vshll.u32 %v775, 16
  %v1738 = vor.u32 %v1735, %v1736
  %v1739 = vsel %vm1069, %v1731, %v1738
  %v1741 = vshrl.u32 %v982, 16
  %v1743 = vrot.slane %v1741, 7
  %v1745 = vshrl.u32 %v984, 16
  %v1747 = vrot.slane %v1745, 7
  %v1748 = vshll.u32 %v984, 16
  %v1750 = vor.u32 %v1747, %v1748
  %v1751 = vsel %vm1069, %v1743, %v1750
  %v1753 = vshrl.u32 %v450, 16
  %v1755 = vrot.slane %v1753, 7
  %v1756 = vrot.slane %v780, 7
  %v1757 = vor.u32 %v1756, %v777
  %v1758 = vsel %vm1069, %v1755, %v1757
  %v1760 = vshrl.u32 %v779, 16
  %v1762 = vrot.slane %v1760, 7
  %v1764 = vshrl.u32 %v782, 16
  %v1766 = vrot.slane %v1764, 7
  %v1767 = vshll.u32 %v782, 16
  %v1769 = vor.u32 %v1766, %v1767
  %v1770 = vsel %vm1069, %v1762, %v1769
  %v1772 = vshrl.u32 %v985, 16
  %v1774 = vrot.slane %v1772, 7
  %v1776 = vshrl.u32 %v987, 16
  %v1778 = vrot.slane %v1776, 7
  %v1779 = vshll.u32 %v987, 16
  %v1781 = vor.u32 %v1778, %v1779
  %v1782 = vsel %vm1069, %v1774, %v1781
  %v1784 = vshrl.u32 %v453, 16
  %v1786 = vrot.slane %v1784, 7
  %v1787 = vrot.slane %v787, 7
  %v1788 = vor.u32 %v1787, %v784
  %v1789 = vsel %vm1069, %v1786, %v1788
  %v1791 = vshrl.u32 %v786, 16
  %v1793 = vrot.slane %v1791, 7
  %v1795 = vshrl.u32 %v789, 16
  %v1797 = vrot.slane %v1795, 7
  %v1798 = vshll.u32 %v789, 16
  %v1800 = vor.u32 %v1797, %v1798
  %v1801 = vsel %vm1069, %v1793, %v1800
  %v1803 = vshrl.u32 %v988, 16
  %v1805 = vrot.slane %v1803, 7
  %v1807 = vshrl.u32 %v990, 16
  %v1809 = vrot.slane %v1807, 7
  %v1810 = vshll.u32 %v990, 16
  %v1812 = vor.u32 %v1809, %v1810
  %v1813 = vsel %vm1069, %v1805, %v1812
  %v1815 = vshrl.u32 %v456, 16
  %v1817 = vrot.slane %v1815, 7
  %v1818 = vrot.slane %v794, 7
  %v1819 = vor.u32 %v1818, %v791
  %v1820 = vsel %vm1069, %v1817, %v1819
  %v1822 = vshrl.u32 %v793, 16
  %v1824 = vrot.slane %v1822, 7
  %v1826 = vshrl.u32 %v796, 16
  %v1828 = vrot.slane %v1826, 7
  %v1829 = vshll.u32 %v796, 16
  %v1831 = vor.u32 %v1828, %v1829
  %v1832 = vsel %vm1069, %v1824, %v1831
  %v1834 = vshrl.u32 %v991, 16
  %v1836 = vrot.slane %v1834, 7
  %v1838 = vshrl.u32 %v993, 16
  %v1840 = vrot.slane %v1838, 7
  %v1841 = vshll.u32 %v993, 16
  %v1843 = vor.u32 %v1840, %v1841
  %v1844 = vsel %vm1069, %v1836, %v1843
  %v1846 = vshrl.u32 %v459, 16
  %v1848 = vrot.slane %v1846, 7
  %v1849 = vrot.slane %v801, 7
  %v1850 = vor.u32 %v1849, %v798
  %v1851 = vsel %vm1069, %v1848, %v1850
  %v1853 = vshrl.u32 %v800, 16
  %v1855 = vrot.slane %v1853, 7
  %v1857 = vshrl.u32 %v803, 16
  %v1859 = vrot.slane %v1857, 7
  %v1860 = vshll.u32 %v803, 16
  %v1862 = vor.u32 %v1859, %v1860
  %v1863 = vsel %vm1069, %v1855, %v1862
  %v1865 = vshrl.u32 %v994, 16
  %v1867 = vrot.slane %v1865, 7
  %v1869 = vshrl.u32 %v996, 16
  %v1871 = vrot.slane %v1869, 7
  %v1872 = vshll.u32 %v996, 16
  %v1874 = vor.u32 %v1871, %v1872
  %v1875 = vsel %vm1069, %v1867, %v1874
  %v1877 = vshrl.u32 %v462, 16
  %v1879 = vrot.slane %v1877, 7
  %v1880 = vrot.slane %v808, 7
  %v1881 = vor.u32 %v1880, %v805
  %v1882 = vsel %vm1069, %v1879, %v1881
  %v1884 = vshrl.u32 %v807, 16
  %v1886 = vrot.slane %v1884, 7
  %v1888 = vshrl.u32 %v810, 16
  %v1890 = vrot.slane %v1888, 7
  %v1891 = vshll.u32 %v810, 16
  %v1893 = vor.u32 %v1890, %v1891
  %v1894 = vsel %vm1069, %v1886, %v1893
  %v1896 = vshrl.u32 %v997, 16
  %v1898 = vrot.slane %v1896, 7
  %v1900 = vshrl.u32 %v999, 16
  %v1902 = vrot.slane %v1900, 7
  %v1903 = vshll.u32 %v999, 16
  %v1905 = vor.u32 %v1902, %v1903
  %v1906 = vsel %vm1069, %v1898, %v1905
  %v1908 = vshrl.u32 %v465, 16
  %v1910 = vrot.slane %v1908, 7
  %v1911 = vrot.slane %v815, 7
  %v1912 = vor.u32 %v1911, %v812
  %v1913 = vsel %vm1069, %v1910, %v1912
  %v1915 = vshrl.u32 %v814, 16
  %v1917 = vrot.slane %v1915, 7
  %v1919 = vshrl.u32 %v817, 16
  %v1921 = vrot.slane %v1919, 7
  %v1922 = vshll.u32 %v817, 16
  %v1924 = vor.u32 %v1921, %v1922
  %v1925 = vsel %vm1069, %v1917, %v1924
  %v1927 = vshrl.u32 %v1000, 16
  %v1929 = vrot.slane %v1927, 7
  %v1931 = vshrl.u32 %v1002, 16
  %v1933 = vrot.slane %v1931, 7
  %v1934 = vshll.u32 %v1002, 16
  %v1936 = vor.u32 %v1933, %v1934
  %v1937 = vsel %vm1069, %v1929, %v1936
  %v1939 = vshrl.u32 %v468, 16
  %v1941 = vrot.slane %v1939, 7
  %v1942 = vrot.slane %v822, 7
  %v1943 = vor.u32 %v1942, %v819
  %v1944 = vsel %vm1069, %v1941, %v1943
  %v1946 = vshrl.u32 %v821, 16
  %v1948 = vrot.slane %v1946, 7
  %v1950 = vshrl.u32 %v824, 16
  %v1952 = vrot.slane %v1950, 7
  %v1953 = vshll.u32 %v824, 16
  %v1955 = vor.u32 %v1952, %v1953
  %v1956 = vsel %vm1069, %v1948, %v1955
  %v1958 = vshrl.u32 %v1003, 16
  %v1960 = vrot.slane %v1958, 7
  %v1962 = vshrl.u32 %v1005, 16
  %v1964 = vrot.slane %v1962, 7
  %v1965 = vshll.u32 %v1005, 16
  %v1967 = vor.u32 %v1964, %v1965
  %v1968 = vsel %vm1069, %v1960, %v1967
  %v1970 = vshrl.u32 %v471, 16
  %v1972 = vrot.slane %v1970, 7
  %v1973 = vrot.slane %v829, 7
  %v1974 = vor.u32 %v1973, %v826
  %v1975 = vsel %vm1069, %v1972, %v1974
  %v1977 = vshrl.u32 %v828, 16
  %v1979 = vrot.slane %v1977, 7
  %v1981 = vshrl.u32 %v831, 16
  %v1983 = vrot.slane %v1981, 7
  %v1984 = vshll.u32 %v831, 16
  %v1986 = vor.u32 %v1983, %v1984
  %v1987 = vsel %vm1069, %v1979, %v1986
  %v1989 = vshrl.u32 %v1006, 16
  %v1991 = vrot.slane %v1989, 7
  %v1993 = vshrl.u32 %v1008, 16
  %v1995 = vrot.slane %v1993, 7
  %v1996 = vshll.u32 %v1008, 16
  %v1998 = vor.u32 %v1995, %v1996
  %v1999 = vsel %vm1069, %v1991, %v1998
  %v2001 = vshrl.u32 %v474, 16
  %v2003 = vrot.slane %v2001, 7
  %v2004 = vrot.slane %v836, 7
  %v2005 = vor.u32 %v2004, %v833
  %v2006 = vsel %vm1069, %v2003, %v2005
  %v2008 = vshrl.u32 %v835, 16
  %v2010 = vrot.slane %v2008, 7
  %v2012 = vshrl.u32 %v838, 16
  %v2014 = vrot.slane %v2012, 7
  %v2015 = vshll.u32 %v838, 16
  %v2017 = vor.u32 %v2014, %v2015
  %v2018 = vsel %vm1069, %v2010, %v2017
  %v2020 = vshrl.u32 %v1009, 16
  %v2022 = vrot.slane %v2020, 7
  %v2024 = vshrl.u32 %v1011, 16
  %v2026 = vrot.slane %v2024, 7
  %v2027 = vshll.u32 %v1011, 16
  %v2029 = vor.u32 %v2026, %v2027
  %v2030 = vsel %vm1069, %v2022, %v2029
  %v2032 = vshrl.u32 %v477, 16
  %v2034 = vrot.slane %v2032, 7
  %v2035 = vrot.slane %v843, 7
  %v2036 = vor.u32 %v2035, %v840
  %v2037 = vsel %vm1069, %v2034, %v2036
  %v2039 = vshrl.u32 %v842, 16
  %v2041 = vrot.slane %v2039, 7
  %v2043 = vshrl.u32 %v845, 16
  %v2045 = vrot.slane %v2043, 7
  %v2046 = vshll.u32 %v845, 16
  %v2048 = vor.u32 %v2045, %v2046
  %v2049 = vsel %vm1069, %v2041, %v2048
  %v2051 = vshrl.u32 %v1012, 16
  %v2053 = vrot.slane %v2051, 7
  %v2055 = vshrl.u32 %v1014, 16
  %v2057 = vrot.slane %v2055, 7
  %v2058 = vshll.u32 %v1014, 16
  %v2060 = vor.u32 %v2057, %v2058
  %v2061 = vsel %vm1069, %v2053, %v2060
  %v2063 = vshrl.u32 %v480, 16
  %v2065 = vrot.slane %v2063, 7
  %v2066 = vrot.slane %v850, 7
  %v2067 = vor.u32 %v2066, %v847
  %v2068 = vsel %vm1069, %v2065, %v2067
  %v2070 = vshrl.u32 %v849, 16
  %v2072 = vrot.slane %v2070, 7
  %v2074 = vshrl.u32 %v852, 16
  %v2076 = vrot.slane %v2074, 7
  %v2077 = vshll.u32 %v852, 16
  %v2079 = vor.u32 %v2076, %v2077
  %v2080 = vsel %vm1069, %v2072, %v2079
  %v2082 = vshrl.u32 %v1015, 16
  %v2084 = vrot.slane %v2082, 7
  %v2086 = vshrl.u32 %v1017, 16
  %v2088 = vrot.slane %v2086, 7
  %v2089 = vshll.u32 %v1017, 16
  %v2091 = vor.u32 %v2088, %v2089
  %v2092 = vsel %vm1069, %v2084, %v2091
  %v2094 = vshrl.u32 %v483, 16
  %v2096 = vrot.slane %v2094, 7
  %v2097 = vrot.slane %v857, 7
  %v2098 = vor.u32 %v2097, %v854
  %v2099 = vsel %vm1069, %v2096, %v2098
  %v2101 = vshrl.u32 %v856, 16
  %v2103 = vrot.slane %v2101, 7
  %v2105 = vshrl.u32 %v859, 16
  %v2107 = vrot.slane %v2105, 7
  %v2108 = vshll.u32 %v859, 16
  %v2110 = vor.u32 %v2107, %v2108
  %v2111 = vsel %vm1069, %v2103, %v2110
  %v2113 = vshrl.u32 %v1018, 16
  %v2115 = vrot.slane %v2113, 7
  %v2117 = vshrl.u32 %v1020, 16
  %v2119 = vrot.slane %v2117, 7
  %v2120 = vshll.u32 %v1020, 16
  %v2122 = vor.u32 %v2119, %v2120
  %v2123 = vsel %vm1069, %v2115, %v2122
  %v2125 = vshrl.u32 %v486, 16
  %v2127 = vrot.slane %v2125, 7
  %v2128 = vrot.slane %v1032, 7
  %v2129 = vor.u32 %v2128, %v1029
  %v2130 = vsel %vm1069, %v2127, %v2129
  %v2132 = vshrl.u32 %v1031, 16
  %v2134 = vrot.slane %v2132, 7
  %v2136 = vshrl.u32 %v1034, 16
  %v2138 = vrot.slane %v2136, 7
  %v2139 = vshll.u32 %v1034, 16
  %v2141 = vor.u32 %v2138, %v2139
  %v2142 = vsel %vm1069, %v2134, %v2141
  %v2144 = vshrl.u32 %v1042, 16
  %v2146 = vrot.slane %v2144, 7
  %v2148 = vshrl.u32 %v1044, 16
  %v2150 = vrot.slane %v2148, 7
  %v2151 = vshll.u32 %v1044, 16
  %v2153 = vor.u32 %v2150, %v2151
  %v2154 = vsel %vm1069, %v2146, %v2153
  %v2156 = vshrl.u32 %v489, 16
  %v2158 = vrot.slane %v2156, 7
  %v2159 = vrot.slane %v1056, 7
  %v2160 = vor.u32 %v2159, %v1053
  %v2161 = vsel %vm1069, %v2158, %v2160
  %v2163 = vshrl.u32 %v1055, 16
  %v2165 = vrot.slane %v2163, 7
  %v2167 = vshrl.u32 %v1058, 16
  %v2169 = vrot.slane %v2167, 7
  %v2170 = vshll.u32 %v1058, 16
  %v2172 = vor.u32 %v2169, %v2170
  %v2173 = vsel %vm1069, %v2165, %v2172
  %v2175 = vshrl.u32 %v1066, 16
  %v2177 = vrot.slane %v2175, 7
  %v2179 = vshrl.u32 %v1068, 16
  %v2181 = vrot.slane %v2179, 7
  %v2182 = vshll.u32 %v1068, 16
  %v2184 = vor.u32 %v2181, %v2182
  %v2185 = vsel %vm1069, %v2177, %v2184
  %v2438 = vunpack.c.l.b16 %v492
  %v2439 = vunpack.c.l.b16 %v493
  %v2440 = vunpack.c.l.b16 %v494
  %v2441 = vunpack.c.l.b16 %v495
  %v2442 = vunpack.c.l.b16 %v496
  %v2443 = vunpack.c.l.b16 %v497
  %v2444 = vunpack.c.l.b16 %v498
  %v2445 = vunpack.c.l.b16 %v499
  %v2446 = vunpack.c.l.b16 %v500
  %v2447 = vunpack.c.l.b16 %v501
  %v2448 = vunpack.c.l.b16 %v502
  %v2449 = vunpack.c.l.b16 %v503
  %v2450 = vunpack.c.l.b16 %v504
  %v2451 = vunpack.c.l.b16 %v505
  %v2452 = vunpack.c.l.b16 %v506
  %v2453 = vunpack.c.l.b16 %v507
  %v2454 = vunpack.c.l.b16 %v508
  %v2455 = vunpack.c.l.b16 %v509
  %v2456 = vunpack.c.l.b16 %v510
  %v2457 = vunpack.c.l.b16 %v511
  %v2458 = vunpack.c.l.b16 %v512
  %v2459 = vunpack.c.l.b16 %v513
  %v2460 = vunpack.c.l.b16 %v514
  %v2461 = vunpack.c.l.b16 %v515
  %v2462 = vunpack.c.l.b16 %v516
  %v2463 = vunpack.c.l.b16 %v517
  %v2464 = vunpack.c.l.b16 %v518
  %v2465 = vunpack.c.l.b16 %v519
  %v2466 = vunpack.c.l.b16 %v520
  %v2467 = vunpack.c.l.b16 %v521
  %v2468 = vunpack.c.l.b16 %v522
  %v2469 = vunpack.c.l.b16 %v523
  %v2470 = vunpack.c.l.b16 %v524
  %v2471 = vunpack.c.l.b16 %v525
  %v2472 = vunpack.c.l.b16 %v526
  %v2473 = vunpack.c.l.b16 %v527
  %v2474 = vunpack.c.l.b16 %v528
  %v2475 = vunpack.c.l.b16 %v529
  %v2476 = vunpack.c.l.b16 %v530
  %v2477 = vunpack.c.l.b16 %v531
  %v2478 = vunpack.c.l.b16 %v532
  %v2479 = vunpack.c.l.b16 %v533
  %v2480 = vunpack.c.l.b16 %v534
  %v2481 = vunpack.c.l.b16 %v535
  %v2482 = vunpack.c.l.b16 %v536
  %v2483 = vunpack.c.l.b16 %v537
  %v2484 = vunpack.c.l.b16 %v538
  %v2485 = vunpack.c.l.b16 %v539
  %v2486 = vunpack.c.l.b16 %v540
  %v2487 = vunpack.c.l.b16 %v541
  %v2488 = vunpack.c.l.b16 %v542
  %v2489 = vunpack.c.l.b16 %v543
  %v2490 = vunpack.c.l.b16 %v544
  %v2491 = vunpack.c.l.b16 %v545
  %v2492 = vunpack.c.l.b16 %v546
  %v2493 = vunpack.c.l.b16 %v547
  %v2494 = vunpack.c.l.b16 %v548
  %v2495 = vunpack.c.l.b16 %v549
  %v2496 = vunpack.c.l.b16 %v550
  %v2497 = vunpack.c.l.b16 %v551
  %v2498 = vunpack.c.l.b16 %v552
  %v2499 = vunpack.c.l.b16 %v553
  %v2500 = vunpack.c.l.b16 %v554
  %v2501 = vunpack.c.l.b16 %v555
  %v2502 = vunpack.c.l.b16 %v556
  %v2503 = vunpack.c.l.b16 %v557
  %v2504 = vunpack.c.l.b16 %v558
  %v2505 = vunpack.c.l.b16 %v559
  %v2506 = vunpack.c.l.b16 %v560
  %v2507 = vunpack.c.l.b16 %v561
  %v2508 = vunpack.c.l.b16 %v562
  %v2509 = vunpack.c.l.b16 %v563
  %v2510 = vunpack.c.l.b16 %v564
  %v2511 = vunpack.c.l.b16 %v565
  %v2512 = vunpack.c.l.b16 %v566
  %v2513 = vunpack.c.l.b16 %v567
  %v2514 = vunpack.c.l.b16 %v568
  %v2515 = vunpack.c.l.b16 %v569
  %v2516 = vunpack.c.l.b16 %v570
  %v2517 = vunpack.c.l.b16 %v571
  %v2518 = vunpack.c.l.b16 %v572
  %v2519 = vunpack.c.l.b16 %v573
  %v2520 = vunpack.c.l.b16 %v574
  %v2521 = vunpack.c.l.b16 %v575
  %v2522 = vunpack.c.l.b16 %v576
  %v2523 = vunpack.c.l.b16 %v577
  %v2524 = vunpack.c.l.b16 %v578
  %v2525 = vunpack.c.l.b16 %v579
  %v2526 = vunpack.c.l.b16 %v580
  %v2527 = vunpack.c.l.b16 %v581
  %v2528 = vunpack.c.l.b16 %v582
  %v2529 = vunpack.c.l.b16 %v583
  %v2530 = vunpack.c.l.b16 %v584
  %v2531 = vunpack.c.l.b16 %v585
  %v2532 = vunpack.c.l.b16 %v586
  %v2533 = vunpack.c.l.b16 %v587
  %v2534 = vunpack.c.l.b16 %v588
  %v2535 = vunpack.c.l.b16 %v589
  %v2536 = vunpack.c.l.b16 %v590
  %v2537 = vunpack.c.l.b16 %v591
  %v2538 = vunpack.c.l.b16 %v592
  %v2539 = vunpack.c.l.b16 %v593
  %v2540 = vunpack.c.l.b16 %v594
  %v2541 = vunpack.c.l.b16 %v595
  %v2542 = vunpack.c.l.b16 %v596
  %v2543 = vunpack.c.l.b16 %v597
  %v2544 = vunpack.c.l.b16 %v598
  %v2545 = vunpack.c.l.b16 %v599
  %v2546 = vunpack.c.l.b16 %v600
  %v2547 = vunpack.c.l.b16 %v601
  %v2548 = vunpack.c.l.b16 %v602
  %v2549 = vunpack.c.l.b16 %v603
  %v2550 = vunpack.c.l.b16 %v604
  %v2551 = vunpack.c.l.b16 %v605
  %v2552 = vunpack.c.l.b16 %v606
  %v2553 = vunpack.c.l.b16 %v607
  %v2554 = vunpack.c.l.b16 %v608
  %v2555 = vunpack.c.l.b16 %v609
  %v2556 = vunpack.c.l.b16 %v610
  %v2557 = vunpack.c.l.b16 %v611
  %v2558 = vunpack.c.l.b16 %v612
  %v2559 = vunpack.c.l.b16 %v613
  %v2560 = vunpack.c.l.b16 %v614
  %v2561 = vunpack.c.l.b16 %v615
  %v2562 = vunpack.c.l.b16 %v616
  %v2563 = vunpack.c.l.b16 %v617
  %v2564 = vunpack.c.l.b16 %v618
  %v2565 = vunpack.c.l.b16 %v619
  %v2566 = vunpack.c.l.b16 %v620
  %v2567 = vunpack.c.l.b16 %v621
  %v2568 = vunpack.c.l.b16 %v622
  %v2569 = vunpack.c.l.b16 %v623
  %v2570 = vunpack.c.l.b16 %v624
  %v2571 = vunpack.c.l.b16 %v625
  %v2572 = vunpack.c.l.b16 %v626
  %v2573 = vunpack.c.l.b16 %v627
  %v2574 = vunpack.c.l.b16 %v628
  %v2575 = vunpack.c.l.b16 %v629
  %v2576 = vunpack.c.l.b16 %v630
  %v2577 = vunpack.c.l.b16 %v631
  %v2578 = vunpack.c.l.b16 %v632
  %v2579 = vunpack.c.l.b16 %v633
  %v2580 = vunpack.c.l.b16 %v634
  %v2581 = vunpack.c.l.b16 %v635
  %v2582 = vpack.c.b16 %v2439, %v2438
  %v2583 = vpack.c.b16 %v2441, %v2440
  %v2584 = vpack.c.b16 %v2443, %v2442
  %v2585 = vpack.c.b16 %v2445, %v2444
  %v2586 = vpack.c.b16 %v2447, %v2446
  %v2587 = vpack.c.b16 %v2449, %v2448
  %v2588 = vpack.c.b16 %v2451, %v2450
  %v2589 = vpack.c.b16 %v2453, %v2452
  %v2590 = vpack.c.b16 %v2455, %v2454
  %v2591 = vpack.c.b16 %v2457, %v2456
  %v2592 = vpack.c.b16 %v2459, %v2458
  %v2593 = vpack.c.b16 %v2461, %v2460
  %v2594 = vpack.c.b16 %v2463, %v2462
  %v2595 = vpack.c.b16 %v2465, %v2464
  %v2596 = vpack.c.b16 %v2467, %v2466
  %v2597 = vpack.c.b16 %v2469, %v2468
  %v2598 = vpack.c.b16 %v2471, %v2470
  %v2599 = vpack.c.b16 %v2473, %v2472
  %v2600 = vpack.c.b16 %v2475, %v2474
  %v2601 = vpack.c.b16 %v2477, %v2476
  %v2602 = vpack.c.b16 %v2479, %v2478
  %v2603 = vpack.c.b16 %v2481, %v2480
  %v2604 = vpack.c.b16 %v2483, %v2482
  %v2605 = vpack.c.b16 %v2485, %v2484
  %v2606 = vpack.c.b16 %v2487, %v2486
  %v2607 = vpack.c.b16 %v2489, %v2488
  %v2608 = vpack.c.b16 %v2491, %v2490
  %v2609 = vpack.c.b16 %v2493, %v2492
  %v2610 = vpack.c.b16 %v2495, %v2494
  %v2611 = vpack.c.b16 %v2497, %v2496
  %v2612 = vpack.c.b16 %v2499, %v2498
  %v2613 = vpack.c.b16 %v2501, %v2500
  %v2614 = vpack.c.b16 %v2503, %v2502
  %v2615 = vpack.c.b16 %v2505, %v2504
  %v2616 = vpack.c.b16 %v2507, %v2506
  %v2617 = vpack.c.b16 %v2509, %v2508
  %v2618 = vpack.c.b16 %v2511, %v2510
  %v2619 = vpack.c.b16 %v2513, %v2512
  %v2620 = vpack.c.b16 %v2515, %v2514
  %v2621 = vpack.c.b16 %v2517, %v2516
  %v2622 = vpack.c.b16 %v2519, %v2518
  %v2623 = vpack.c.b16 %v2521, %v2520
  %v2624 = vpack.c.b16 %v2523, %v2522
  %v2625 = vpack.c.b16 %v2525, %v2524
  %v2626 = vpack.c.b16 %v2527, %v2526
  %v2627 = vpack.c.b16 %v2529, %v2528
  %v2628 = vpack.c.b16 %v2531, %v2530
  %v2629 = vpack.c.b16 %v2533, %v2532
  %v2630 = vpack.c.b16 %v2535, %v2534
  %v2631 = vpack.c.b16 %v2537, %v2536
  %v2632 = vpack.c.b16 %v2539, %v2538
  %v2633 = vpack.c.b16 %v2541, %v2540
  %v2634 = vpack.c.b16 %v2543, %v2542
  %v2635 = vpack.c.b16 %v2545, %v2544
  %v2636 = vpack.c.b16 %v2547, %v2546
  %v2637 = vpack.c.b16 %v2549, %v2548
  %v2638 = vpack.c.b16 %v2551, %v2550
  %v2639 = vpack.c.b16 %v2553, %v2552
  %v2640 = vpack.c.b16 %v2555, %v2554
  %v2641 = vpack.c.b16 %v2557, %v2556
  %v2642 = vpack.c.b16 %v2559, %v2558
  %v2643 = vpack.c.b16 %v2561, %v2560
  %v2644 = vpack.c.b16 %v2563, %v2562
  %v2645 = vpack.c.b16 %v2565, %v2564
  %v2646 = vpack.c.b16 %v2567, %v2566
  %v2647 = vpack.c.b16 %v2569, %v2568
  %v2648 = vpack.c.b16 %v2571, %v2570
  %v2649 = vpack.c.b16 %v2573, %v2572
  %v2650 = vpack.c.b16 %v2575, %v2574
  %v2651 = vpack.c.b16 %v2577, %v2576
  %v2652 = vpack.c.b16 %v2579, %v2578
  %v2653 = vpack.c.b16 %v2581, %v2580
  %2726 = vmatprep.subr.bf16.mxu0 0
  %2727 = vmatpush1.bf16.msra.mxu0 %v2582
  %2728 = vmatprep.subr.bf16.mxu0 0
  %2729 = vmatpush1.bf16.msra.mxu0 %v2583
  %2730 = vmatprep.subr.bf16.mxu0 0
  %2731 = vmatpush1.bf16.msra.mxu0 %v2584
  %2732 = vmatprep.subr.bf16.mxu0 0
  %2733 = vmatpush1.bf16.msra.mxu0 %v2585
  %2734 = vmatprep.subr.bf16.mxu0 0
  %2735 = vmatpush1.bf16.msra.mxu0 %v2586
  %2736 = vmatprep.subr.bf16.mxu0 0
  %2737 = vmatpush1.bf16.msra.mxu0 %v2587
  %2738 = vmatprep.subr.bf16.mxu0 0
  %2739 = vmatpush1.bf16.msra.mxu0 %v2588
  %2740 = vmatprep.subr.bf16.mxu0 0
  %2741 = vmatpush1.bf16.msra.mxu0 %v2589
  %2742 = vmatprep.subr.bf16.mxu0 0
  %2743 = vmatpush1.bf16.msra.mxu0 %v2590
  %2744 = vmatprep.subr.bf16.mxu0 0
  %2745 = vmatpush1.bf16.msra.mxu0 %v2591
  %2746 = vmatprep.subr.bf16.mxu0 0
  %2747 = vmatpush1.bf16.msra.mxu0 %v2592
  %2748 = vmatprep.subr.bf16.mxu0 0
  %2749 = vmatpush1.bf16.msra.mxu0 %v2593
  %2750 = vmatprep.subr.bf16.mxu0 0
  %2751 = vmatpush1.bf16.msra.mxu0 %v2594
  %2752 = vmatprep.subr.bf16.mxu0 0
  %2753 = vmatpush1.bf16.msra.mxu0 %v2595
  %2754 = vmatprep.subr.bf16.mxu0 0
  %2755 = vmatpush1.bf16.msra.mxu0 %v2596
  %2756 = vmatprep.subr.bf16.mxu0 0
  %2757 = vmatpush1.bf16.msra.mxu0 %v2597
  %2758 = vmatprep.mubr.bf16.mxu0 %v1088
  %2759 = vmatmul.mubr.bf16.gmra.mrb[0].mxu0 %v1076
  %v2760 = vpop.f32.mrb[0].mxu0
  %v2761 = vadd.f32 0.0, %v2760
  %v2762 = vpop.f32.mrb[0].mxu0
  %v2763 = vpop.f32.mrb[0].mxu0
  %v2764 = vadd.f32 0.0, %v2763
  %v2765 = vpop.f32.mrb[0].mxu0
  %2766 = vmatprep.mubr.bf16.mxu0 %v1119
  %2767 = vmatmul.mubr.bf16.gmra.mrb[0].mxu0 %v1107
  %v2768 = vpop.f32.mrb[0].mxu0
  %v2769 = vadd.f32 0.0, %v2768
  %v2770 = vpop.f32.mrb[0].mxu0
  %v2771 = vpop.f32.mrb[0].mxu0
  %v2772 = vadd.f32 0.0, %v2771
  %v2773 = vpop.f32.mrb[0].mxu0
  %2774 = vmatprep.mubr.bf16.mxu0 %v1150
  %2775 = vmatmul.mubr.bf16.gmra.mrb[0].mxu0 %v1138
  %v2776 = vpop.f32.mrb[0].mxu0
  %v2777 = vadd.f32 0.0, %v2776
  %v2778 = vpop.f32.mrb[0].mxu0
  %v2779 = vpop.f32.mrb[0].mxu0
  %v2780 = vadd.f32 0.0, %v2779
  %v2781 = vpop.f32.mrb[0].mxu0
  %2782 = vmatprep.mubr.bf16.mxu0 %v1181
  %2783 = vmatmul.mubr.bf16.gmra.mrb[0].mxu0 %v1169
  %v2784 = vpop.f32.mrb[0].mxu0
  %v2785 = vadd.f32 0.0, %v2784
  %v2786 = vpop.f32.mrb[0].mxu0
  %v2787 = vpop.f32.mrb[0].mxu0
  %v2788 = vadd.f32 0.0, %v2787
  %v2789 = vpop.f32.mrb[0].mxu0
  %2790 = vmatprep.mubr.bf16.mxu0 %v1212
  %2791 = vmatmul.mubr.bf16.gmra.mrb[0].mxu0 %v1200
  %v2792 = vpop.f32.mrb[0].mxu0
  %v2793 = vadd.f32 0.0, %v2792
  %v2794 = vpop.f32.mrb[0].mxu0
  %v2795 = vpop.f32.mrb[0].mxu0
  %v2796 = vadd.f32 0.0, %v2795
  %v2797 = vpop.f32.mrb[0].mxu0
  %2798 = vmatprep.mubr.bf16.mxu0 %v1243
  %2799 = vmatmul.mubr.bf16.gmra.mrb[0].mxu0 %v1231
  %v2800 = vpop.f32.mrb[0].mxu0
  %v2801 = vadd.f32 0.0, %v2800
  %v2802 = vpop.f32.mrb[0].mxu0
  %v2803 = vpop.f32.mrb[0].mxu0
  %v2804 = vadd.f32 0.0, %v2803
  %v2805 = vpop.f32.mrb[0].mxu0
  %2806 = vmatprep.mubr.bf16.mxu0 %v1274
  %2807 = vmatmul.mubr.bf16.gmra.mrb[0].mxu0 %v1262
  %v2808 = vpop.f32.mrb[0].mxu0
  %v2809 = vadd.f32 0.0, %v2808
  %v2810 = vpop.f32.mrb[0].mxu0
  %v2811 = vpop.f32.mrb[0].mxu0
  %v2812 = vadd.f32 0.0, %v2811
  %v2813 = vpop.f32.mrb[0].mxu0
  %2814 = vmatprep.mubr.bf16.mxu0 %v1305
  %2815 = vmatmul.mubr.bf16.gmra.mrb[0].mxu0 %v1293
  %v2816 = vpop.f32.mrb[0].mxu0
  %v2817 = vadd.f32 0.0, %v2816
  %v2818 = vpop.f32.mrb[0].mxu0
  %v2819 = vpop.f32.mrb[0].mxu0
  %v2820 = vadd.f32 0.0, %v2819
  %v2821 = vpop.f32.mrb[0].mxu0
  %2822 = vmatprep.mubr.bf16.mxu0 %v1336
  %2823 = vmatmul.mubr.bf16.gmra.mrb[0].mxu0 %v1324
  %v2824 = vpop.f32.mrb[0].mxu0
  %v2825 = vadd.f32 0.0, %v2824
  %v2826 = vpop.f32.mrb[0].mxu0
  %v2827 = vpop.f32.mrb[0].mxu0
  %v2828 = vadd.f32 0.0, %v2827
  %v2829 = vpop.f32.mrb[0].mxu0
  %2830 = vmatprep.mubr.bf16.mxu0 %v1367
  %2831 = vmatmul.mubr.bf16.gmra.mrb[0].mxu0 %v1355
  %v2832 = vpop.f32.mrb[0].mxu0
  %v2833 = vadd.f32 0.0, %v2832
  %v2834 = vpop.f32.mrb[0].mxu0
  %v2835 = vpop.f32.mrb[0].mxu0
  %v2836 = vadd.f32 0.0, %v2835
  %v2837 = vpop.f32.mrb[0].mxu0
  %2838 = vmatprep.mubr.bf16.mxu0 %v1398
  %2839 = vmatmul.mubr.bf16.gmra.mrb[0].mxu0 %v1386
  %v2840 = vpop.f32.mrb[0].mxu0
  %v2841 = vadd.f32 0.0, %v2840
  %v2842 = vpop.f32.mrb[0].mxu0
  %v2843 = vpop.f32.mrb[0].mxu0
  %v2844 = vadd.f32 0.0, %v2843
  %v2845 = vpop.f32.mrb[0].mxu0
  %2846 = vmatprep.mubr.bf16.mxu0 %v1429
  %2847 = vmatmul.mubr.bf16.gmra.mrb[0].mxu0 %v1417
  %v2848 = vpop.f32.mrb[0].mxu0
  %v2849 = vadd.f32 0.0, %v2848
  %v2850 = vpop.f32.mrb[0].mxu0
  %v2851 = vpop.f32.mrb[0].mxu0
  %v2852 = vadd.f32 0.0, %v2851
  %v2853 = vpop.f32.mrb[0].mxu0
  %2854 = vmatprep.mubr.bf16.mxu0 %v1460
  %2855 = vmatmul.mubr.bf16.gmra.mrb[0].mxu0 %v1448
  %v2856 = vpop.f32.mrb[0].mxu0
  %v2857 = vadd.f32 0.0, %v2856
  %v2858 = vpop.f32.mrb[0].mxu0
  %v2859 = vpop.f32.mrb[0].mxu0
  %v2860 = vadd.f32 0.0, %v2859
  %v2861 = vpop.f32.mrb[0].mxu0
  %2862 = vmatprep.mubr.bf16.mxu0 %v1491
  %2863 = vmatmul.mubr.bf16.gmra.mrb[0].mxu0 %v1479
  %v2864 = vpop.f32.mrb[0].mxu0
  %v2865 = vadd.f32 0.0, %v2864
  %v2866 = vpop.f32.mrb[0].mxu0
  %v2867 = vpop.f32.mrb[0].mxu0
  %v2868 = vadd.f32 0.0, %v2867
  %v2869 = vpop.f32.mrb[0].mxu0
  %2870 = vmatprep.mubr.bf16.mxu0 %v1522
  %2871 = vmatmul.mubr.bf16.gmra.mrb[0].mxu0 %v1510
  %v2872 = vpop.f32.mrb[0].mxu0
  %v2873 = vadd.f32 0.0, %v2872
  %v2874 = vpop.f32.mrb[0].mxu0
  %v2875 = vpop.f32.mrb[0].mxu0
  %v2876 = vadd.f32 0.0, %v2875
  %v2877 = vpop.f32.mrb[0].mxu0
  %2878 = vmatprep.mubr.bf16.mxu0 %v1553
  %2879 = vmatmul.mubr.bf16.gmra.mrb[0].mxu0 %v1541
  %v2880 = vpop.f32.mrb[0].mxu0
  %v2881 = vadd.f32 0.0, %v2880
  %v2882 = vpop.f32.mrb[0].mxu0
  %v2883 = vpop.f32.mrb[0].mxu0
  %v2884 = vadd.f32 0.0, %v2883
  %v2885 = vpop.f32.mrb[0].mxu0
  %2886 = vmatprep.mubr.bf16.mxu0 %v1646
  %2887 = vmatmul.mubr.bf16.gmra.mrb[0].mxu0 %v1634
  %v2888 = vpop.f32.mrb[0].mxu0
  %v2889 = vadd.f32 0.0, %v2888
  %v2890 = vpop.f32.mrb[0].mxu0
  %v2891 = vpop.f32.mrb[0].mxu0
  %v2892 = vadd.f32 0.0, %v2891
  %v2893 = vpop.f32.mrb[0].mxu0
  %2894 = vmatprep.mubr.bf16.mxu0 %v1677
  %2895 = vmatmul.mubr.bf16.gmra.mrb[0].mxu0 %v1665
  %v2896 = vpop.f32.mrb[0].mxu0
  %v2897 = vadd.f32 0.0, %v2896
  %v2898 = vpop.f32.mrb[0].mxu0
  %v2899 = vpop.f32.mrb[0].mxu0
  %v2900 = vadd.f32 0.0, %v2899
  %v2901 = vpop.f32.mrb[0].mxu0
  %2902 = vmatprep.mubr.bf16.mxu0 %v1708
  %2903 = vmatmul.mubr.bf16.gmra.mrb[0].mxu0 %v1696
  %v2904 = vpop.f32.mrb[0].mxu0
  %v2905 = vadd.f32 0.0, %v2904
  %v2906 = vpop.f32.mrb[0].mxu0
  %v2907 = vpop.f32.mrb[0].mxu0
  %v2908 = vadd.f32 0.0, %v2907
  %v2909 = vpop.f32.mrb[0].mxu0
  %2910 = vmatprep.mubr.bf16.mxu0 %v1739
  %2911 = vmatmul.mubr.bf16.gmra.mrb[0].mxu0 %v1727
  %v2912 = vpop.f32.mrb[0].mxu0
  %v2913 = vadd.f32 0.0, %v2912
  %v2914 = vpop.f32.mrb[0].mxu0
  %v2915 = vpop.f32.mrb[0].mxu0
  %v2916 = vadd.f32 0.0, %v2915
  %v2917 = vpop.f32.mrb[0].mxu0
  %2918 = vmatprep.mubr.bf16.mxu0 %v1770
  %2919 = vmatmul.mubr.bf16.gmra.mrb[0].mxu0 %v1758
  %v2920 = vpop.f32.mrb[0].mxu0
  %v2921 = vadd.f32 0.0, %v2920
  %v2922 = vpop.f32.mrb[0].mxu0
  %v2923 = vpop.f32.mrb[0].mxu0
  %v2924 = vadd.f32 0.0, %v2923
  %v2925 = vpop.f32.mrb[0].mxu0
  %2926 = vmatprep.mubr.bf16.mxu0 %v1801
  %2927 = vmatmul.mubr.bf16.gmra.mrb[0].mxu0 %v1789
  %v2928 = vpop.f32.mrb[0].mxu0
  %v2929 = vadd.f32 0.0, %v2928
  %v2930 = vpop.f32.mrb[0].mxu0
  %v2931 = vpop.f32.mrb[0].mxu0
  %v2932 = vadd.f32 0.0, %v2931
  %v2933 = vpop.f32.mrb[0].mxu0
  %2934 = vmatprep.mubr.bf16.mxu0 %v1832
  %2935 = vmatmul.mubr.bf16.gmra.mrb[0].mxu0 %v1820
  %v2936 = vpop.f32.mrb[0].mxu0
  %v2937 = vadd.f32 0.0, %v2936
  %v2938 = vpop.f32.mrb[0].mxu0
  %v2939 = vpop.f32.mrb[0].mxu0
  %v2940 = vadd.f32 0.0, %v2939
  %v2941 = vpop.f32.mrb[0].mxu0
  %2942 = vmatprep.mubr.bf16.mxu0 %v1863
  %2943 = vmatmul.mubr.bf16.gmra.mrb[0].mxu0 %v1851
  %v2944 = vpop.f32.mrb[0].mxu0
  %v2945 = vadd.f32 0.0, %v2944
  %v2946 = vpop.f32.mrb[0].mxu0
  %v2947 = vpop.f32.mrb[0].mxu0
  %v2948 = vadd.f32 0.0, %v2947
  %v2949 = vpop.f32.mrb[0].mxu0
  %2950 = vmatprep.mubr.bf16.mxu0 %v1894
  %2951 = vmatmul.mubr.bf16.gmra.mrb[0].mxu0 %v1882
  %v2952 = vpop.f32.mrb[0].mxu0
  %v2953 = vadd.f32 0.0, %v2952
  %v2954 = vpop.f32.mrb[0].mxu0
  %v2955 = vpop.f32.mrb[0].mxu0
  %v2956 = vadd.f32 0.0, %v2955
  %v2957 = vpop.f32.mrb[0].mxu0
  %2958 = vmatprep.mubr.bf16.mxu0 %v1925
  %2959 = vmatmul.mubr.bf16.gmra.mrb[0].mxu0 %v1913
  %v2960 = vpop.f32.mrb[0].mxu0
  %v2961 = vadd.f32 0.0, %v2960
  %v2962 = vpop.f32.mrb[0].mxu0
  %v2963 = vpop.f32.mrb[0].mxu0
  %v2964 = vadd.f32 0.0, %v2963
  %v2965 = vpop.f32.mrb[0].mxu0
  %2966 = vmatprep.mubr.bf16.mxu0 %v1956
  %2967 = vmatmul.mubr.bf16.gmra.mrb[0].mxu0 %v1944
  %v2968 = vpop.f32.mrb[0].mxu0
  %v2969 = vadd.f32 0.0, %v2968
  %v2970 = vpop.f32.mrb[0].mxu0
  %v2971 = vpop.f32.mrb[0].mxu0
  %v2972 = vadd.f32 0.0, %v2971
  %v2973 = vpop.f32.mrb[0].mxu0
  %2974 = vmatprep.mubr.bf16.mxu0 %v1987
  %2975 = vmatmul.mubr.bf16.gmra.mrb[0].mxu0 %v1975
  %v2976 = vpop.f32.mrb[0].mxu0
  %v2977 = vadd.f32 0.0, %v2976
  %v2978 = vpop.f32.mrb[0].mxu0
  %v2979 = vpop.f32.mrb[0].mxu0
  %v2980 = vadd.f32 0.0, %v2979
  %v2981 = vpop.f32.mrb[0].mxu0
  %2982 = vmatprep.mubr.bf16.mxu0 %v2018
  %2983 = vmatmul.mubr.bf16.gmra.mrb[0].mxu0 %v2006
  %v2984 = vpop.f32.mrb[0].mxu0
  %v2985 = vadd.f32 0.0, %v2984
  %v2986 = vpop.f32.mrb[0].mxu0
  %v2987 = vpop.f32.mrb[0].mxu0
  %v2988 = vadd.f32 0.0, %v2987
  %v2989 = vpop.f32.mrb[0].mxu0
  %2990 = vmatprep.mubr.bf16.mxu0 %v2049
  %2991 = vmatmul.mubr.bf16.gmra.mrb[0].mxu0 %v2037
  %v2992 = vpop.f32.mrb[0].mxu0
  %v2993 = vadd.f32 0.0, %v2992
  %v2994 = vpop.f32.mrb[0].mxu0
  %v2995 = vpop.f32.mrb[0].mxu0
  %v2996 = vadd.f32 0.0, %v2995
  %v2997 = vpop.f32.mrb[0].mxu0
  %2998 = vmatprep.mubr.bf16.mxu0 %v2080
  %2999 = vmatmul.mubr.bf16.gmra.mrb[0].mxu0 %v2068
  %v3000 = vpop.f32.mrb[0].mxu0
  %v3001 = vadd.f32 0.0, %v3000
  %v3002 = vpop.f32.mrb[0].mxu0
  %v3003 = vpop.f32.mrb[0].mxu0
  %v3004 = vadd.f32 0.0, %v3003
  %v3005 = vpop.f32.mrb[0].mxu0
  %3006 = vmatprep.mubr.bf16.mxu0 %v2111
  %3007 = vmatmul.mubr.bf16.gmra.mrb[0].mxu0 %v2099
  %v3008 = vpop.f32.mrb[0].mxu0
  %v3009 = vadd.f32 0.0, %v3008
  %v3010 = vpop.f32.mrb[0].mxu0
  %v3011 = vpop.f32.mrb[0].mxu0
  %v3012 = vadd.f32 0.0, %v3011
  %v3013 = vpop.f32.mrb[0].mxu0
  %3014 = vdwg.mxu0
  %3015 = vmatprep.subr.bf16.mxu0 0
  %3016 = vmatpush1.bf16.msra.mxu0 %v2598
  %3017 = vmatprep.subr.bf16.mxu0 0
  %3018 = vmatpush1.bf16.msra.mxu0 %v2599
  %3019 = vmatprep.subr.bf16.mxu0 0
  %3020 = vmatpush1.bf16.msra.mxu0 %v2600
  %3021 = vmatprep.subr.bf16.mxu0 0
  %3022 = vmatpush1.bf16.msra.mxu0 %v2601
  %3023 = vmatprep.subr.bf16.mxu0 0
  %3024 = vmatpush1.bf16.msra.mxu0 %v2602
  %3025 = vmatprep.subr.bf16.mxu0 0
  %3026 = vmatpush1.bf16.msra.mxu0 %v2603
  %3027 = vmatprep.subr.bf16.mxu0 0
  %3028 = vmatpush1.bf16.msra.mxu0 %v2604
  %3029 = vmatprep.subr.bf16.mxu0 0
  %3030 = vmatpush1.bf16.msra.mxu0 %v2605
  %3031 = vmatprep.subr.bf16.mxu0 0
  %3032 = vmatpush1.bf16.msra.mxu0 %v2606
  %3033 = vmatprep.subr.bf16.mxu0 0
  %3034 = vmatpush1.bf16.msra.mxu0 %v2607
  %3035 = vmatprep.subr.bf16.mxu0 0
  %3036 = vmatpush1.bf16.msra.mxu0 %v2608
  %3037 = vmatprep.subr.bf16.mxu0 0
  %3038 = vmatpush1.bf16.msra.mxu0 %v2609
  %3039 = vmatprep.subr.bf16.mxu0 0
  %3040 = vmatpush1.bf16.msra.mxu0 %v2610
  %3041 = vmatprep.subr.bf16.mxu0 0
  %3042 = vmatpush1.bf16.msra.mxu0 %v2611
  %3043 = vmatprep.subr.bf16.mxu0 0
  %3044 = vmatpush1.bf16.msra.mxu0 %v2612
  %3045 = vmatprep.subr.bf16.mxu0 0
  %3046 = vmatpush1.bf16.msra.mxu0 %v2613
  %3047 = vmatprep.mubr.bf16.mxu0 %v1107
  %3048 = vmatmul.mubr.bf16.gmra.mrb[0].mxu0 %v1100
  %v3049 = vpop.f32.mrb[0].mxu0
  %v3050 = vadd.f32 %v2761, %v3049
  %v3051 = vpop.f32.mrb[0].mxu0
  %v3052 = vpop.f32.mrb[0].mxu0
  %v3053 = vadd.f32 %v2764, %v3052
  %v3054 = vpop.f32.mrb[0].mxu0
  %3055 = vmatprep.mubr.bf16.mxu0 %v1138
  %3056 = vmatmul.mubr.bf16.gmra.mrb[0].mxu0 %v1131
  %v3057 = vpop.f32.mrb[0].mxu0
  %v3058 = vadd.f32 %v2769, %v3057
  %v3059 = vpop.f32.mrb[0].mxu0
  %v3060 = vpop.f32.mrb[0].mxu0
  %v3061 = vadd.f32 %v2772, %v3060
  %v3062 = vpop.f32.mrb[0].mxu0
  %3063 = vmatprep.mubr.bf16.mxu0 %v1169
  %3064 = vmatmul.mubr.bf16.gmra.mrb[0].mxu0 %v1162
  %v3065 = vpop.f32.mrb[0].mxu0
  %v3066 = vadd.f32 %v2777, %v3065
  %v3067 = vpop.f32.mrb[0].mxu0
  %v3068 = vpop.f32.mrb[0].mxu0
  %v3069 = vadd.f32 %v2780, %v3068
  %v3070 = vpop.f32.mrb[0].mxu0
  %3071 = vmatprep.mubr.bf16.mxu0 %v1200
  %3072 = vmatmul.mubr.bf16.gmra.mrb[0].mxu0 %v1193
  %v3073 = vpop.f32.mrb[0].mxu0
  %v3074 = vadd.f32 %v2785, %v3073
  %v3075 = vpop.f32.mrb[0].mxu0
  %v3076 = vpop.f32.mrb[0].mxu0
  %v3077 = vadd.f32 %v2788, %v3076
  %v3078 = vpop.f32.mrb[0].mxu0
  %3079 = vmatprep.mubr.bf16.mxu0 %v1231
  %3080 = vmatmul.mubr.bf16.gmra.mrb[0].mxu0 %v1224
  %v3081 = vpop.f32.mrb[0].mxu0
  %v3082 = vadd.f32 %v2793, %v3081
  %v3083 = vpop.f32.mrb[0].mxu0
  %v3084 = vpop.f32.mrb[0].mxu0
  %v3085 = vadd.f32 %v2796, %v3084
  %v3086 = vpop.f32.mrb[0].mxu0
  %3087 = vmatprep.mubr.bf16.mxu0 %v1262
  %3088 = vmatmul.mubr.bf16.gmra.mrb[0].mxu0 %v1255
  %v3089 = vpop.f32.mrb[0].mxu0
  %v3090 = vadd.f32 %v2801, %v3089
  %v3091 = vpop.f32.mrb[0].mxu0
  %v3092 = vpop.f32.mrb[0].mxu0
  %v3093 = vadd.f32 %v2804, %v3092
  %v3094 = vpop.f32.mrb[0].mxu0
  %3095 = vmatprep.mubr.bf16.mxu0 %v1293
  %3096 = vmatmul.mubr.bf16.gmra.mrb[0].mxu0 %v1286
  %v3097 = vpop.f32.mrb[0].mxu0
  %v3098 = vadd.f32 %v2809, %v3097
  %v3099 = vpop.f32.mrb[0].mxu0
  %v3100 = vpop.f32.mrb[0].mxu0
  %v3101 = vadd.f32 %v2812, %v3100
  %v3102 = vpop.f32.mrb[0].mxu0
  %3103 = vmatprep.mubr.bf16.mxu0 %v1324
  %3104 = vmatmul.mubr.bf16.gmra.mrb[0].mxu0 %v1317
  %v3105 = vpop.f32.mrb[0].mxu0
  %v3106 = vadd.f32 %v2817, %v3105
  %v3107 = vpop.f32.mrb[0].mxu0
  %v3108 = vpop.f32.mrb[0].mxu0
  %v3109 = vadd.f32 %v2820, %v3108
  %v3110 = vpop.f32.mrb[0].mxu0
  %3111 = vmatprep.mubr.bf16.mxu0 %v1355
  %3112 = vmatmul.mubr.bf16.gmra.mrb[0].mxu0 %v1348
  %v3113 = vpop.f32.mrb[0].mxu0
  %v3114 = vadd.f32 %v2825, %v3113
  %v3115 = vpop.f32.mrb[0].mxu0
  %v3116 = vpop.f32.mrb[0].mxu0
  %v3117 = vadd.f32 %v2828, %v3116
  %v3118 = vpop.f32.mrb[0].mxu0
  %3119 = vmatprep.mubr.bf16.mxu0 %v1386
  %3120 = vmatmul.mubr.bf16.gmra.mrb[0].mxu0 %v1379
  %v3121 = vpop.f32.mrb[0].mxu0
  %v3122 = vadd.f32 %v2833, %v3121
  %v3123 = vpop.f32.mrb[0].mxu0
  %v3124 = vpop.f32.mrb[0].mxu0
  %v3125 = vadd.f32 %v2836, %v3124
  %v3126 = vpop.f32.mrb[0].mxu0
  %3127 = vmatprep.mubr.bf16.mxu0 %v1417
  %3128 = vmatmul.mubr.bf16.gmra.mrb[0].mxu0 %v1410
  %v3129 = vpop.f32.mrb[0].mxu0
  %v3130 = vadd.f32 %v2841, %v3129
  %v3131 = vpop.f32.mrb[0].mxu0
  %v3132 = vpop.f32.mrb[0].mxu0
  %v3133 = vadd.f32 %v2844, %v3132
  %v3134 = vpop.f32.mrb[0].mxu0
  %3135 = vmatprep.mubr.bf16.mxu0 %v1448
  %3136 = vmatmul.mubr.bf16.gmra.mrb[0].mxu0 %v1441
  %v3137 = vpop.f32.mrb[0].mxu0
  %v3138 = vadd.f32 %v2849, %v3137
  %v3139 = vpop.f32.mrb[0].mxu0
  %v3140 = vpop.f32.mrb[0].mxu0
  %v3141 = vadd.f32 %v2852, %v3140
  %v3142 = vpop.f32.mrb[0].mxu0
  %3143 = vmatprep.mubr.bf16.mxu0 %v1479
  %3144 = vmatmul.mubr.bf16.gmra.mrb[0].mxu0 %v1472
  %v3145 = vpop.f32.mrb[0].mxu0
  %v3146 = vadd.f32 %v2857, %v3145
  %v3147 = vpop.f32.mrb[0].mxu0
  %v3148 = vpop.f32.mrb[0].mxu0
  %v3149 = vadd.f32 %v2860, %v3148
  %v3150 = vpop.f32.mrb[0].mxu0
  %3151 = vmatprep.mubr.bf16.mxu0 %v1510
  %3152 = vmatmul.mubr.bf16.gmra.mrb[0].mxu0 %v1503
  %v3153 = vpop.f32.mrb[0].mxu0
  %v3154 = vadd.f32 %v2865, %v3153
  %v3155 = vpop.f32.mrb[0].mxu0
  %v3156 = vpop.f32.mrb[0].mxu0
  %v3157 = vadd.f32 %v2868, %v3156
  %v3158 = vpop.f32.mrb[0].mxu0
  %3159 = vmatprep.mubr.bf16.mxu0 %v1541
  %3160 = vmatmul.mubr.bf16.gmra.mrb[0].mxu0 %v1534
  %v3161 = vpop.f32.mrb[0].mxu0
  %v3162 = vadd.f32 %v2873, %v3161
  %v3163 = vpop.f32.mrb[0].mxu0
  %v3164 = vpop.f32.mrb[0].mxu0
  %v3165 = vadd.f32 %v2876, %v3164
  %v3166 = vpop.f32.mrb[0].mxu0
  %3167 = vmatprep.mubr.bf16.mxu0 %v1572
  %3168 = vmatmul.mubr.bf16.gmra.mrb[0].mxu0 %v1565
  %v3169 = vpop.f32.mrb[0].mxu0
  %v3170 = vadd.f32 %v2881, %v3169
  %v3171 = vpop.f32.mrb[0].mxu0
  %v3172 = vpop.f32.mrb[0].mxu0
  %v3173 = vadd.f32 %v2884, %v3172
  %v3174 = vpop.f32.mrb[0].mxu0
  %3175 = vmatprep.mubr.bf16.mxu0 %v1665
  %3176 = vmatmul.mubr.bf16.gmra.mrb[0].mxu0 %v1658
  %v3177 = vpop.f32.mrb[0].mxu0
  %v3178 = vadd.f32 %v2889, %v3177
  %v3179 = vpop.f32.mrb[0].mxu0
  %v3180 = vpop.f32.mrb[0].mxu0
  %v3181 = vadd.f32 %v2892, %v3180
  %v3182 = vpop.f32.mrb[0].mxu0
  %3183 = vmatprep.mubr.bf16.mxu0 %v1696
  %3184 = vmatmul.mubr.bf16.gmra.mrb[0].mxu0 %v1689
  %v3185 = vpop.f32.mrb[0].mxu0
  %v3186 = vadd.f32 %v2897, %v3185
  %v3187 = vpop.f32.mrb[0].mxu0
  %v3188 = vpop.f32.mrb[0].mxu0
  %v3189 = vadd.f32 %v2900, %v3188
  %v3190 = vpop.f32.mrb[0].mxu0
  %3191 = vmatprep.mubr.bf16.mxu0 %v1727
  %3192 = vmatmul.mubr.bf16.gmra.mrb[0].mxu0 %v1720
  %v3193 = vpop.f32.mrb[0].mxu0
  %v3194 = vadd.f32 %v2905, %v3193
  %v3195 = vpop.f32.mrb[0].mxu0
  %v3196 = vpop.f32.mrb[0].mxu0
  %v3197 = vadd.f32 %v2908, %v3196
  %v3198 = vpop.f32.mrb[0].mxu0
  %3199 = vmatprep.mubr.bf16.mxu0 %v1758
  %3200 = vmatmul.mubr.bf16.gmra.mrb[0].mxu0 %v1751
  %v3201 = vpop.f32.mrb[0].mxu0
  %v3202 = vadd.f32 %v2913, %v3201
  %v3203 = vpop.f32.mrb[0].mxu0
  %v3204 = vpop.f32.mrb[0].mxu0
  %v3205 = vadd.f32 %v2916, %v3204
  %v3206 = vpop.f32.mrb[0].mxu0
  %3207 = vmatprep.mubr.bf16.mxu0 %v1789
  %3208 = vmatmul.mubr.bf16.gmra.mrb[0].mxu0 %v1782
  %v3209 = vpop.f32.mrb[0].mxu0
  %v3210 = vadd.f32 %v2921, %v3209
  %v3211 = vpop.f32.mrb[0].mxu0
  %v3212 = vpop.f32.mrb[0].mxu0
  %v3213 = vadd.f32 %v2924, %v3212
  %v3214 = vpop.f32.mrb[0].mxu0
  %3215 = vmatprep.mubr.bf16.mxu0 %v1820
  %3216 = vmatmul.mubr.bf16.gmra.mrb[0].mxu0 %v1813
  %v3217 = vpop.f32.mrb[0].mxu0
  %v3218 = vadd.f32 %v2929, %v3217
  %v3219 = vpop.f32.mrb[0].mxu0
  %v3220 = vpop.f32.mrb[0].mxu0
  %v3221 = vadd.f32 %v2932, %v3220
  %v3222 = vpop.f32.mrb[0].mxu0
  %3223 = vmatprep.mubr.bf16.mxu0 %v1851
  %3224 = vmatmul.mubr.bf16.gmra.mrb[0].mxu0 %v1844
  %v3225 = vpop.f32.mrb[0].mxu0
  %v3226 = vadd.f32 %v2937, %v3225
  %v3227 = vpop.f32.mrb[0].mxu0
  %v3228 = vpop.f32.mrb[0].mxu0
  %v3229 = vadd.f32 %v2940, %v3228
  %v3230 = vpop.f32.mrb[0].mxu0
  %3231 = vmatprep.mubr.bf16.mxu0 %v1882
  %3232 = vmatmul.mubr.bf16.gmra.mrb[0].mxu0 %v1875
  %v3233 = vpop.f32.mrb[0].mxu0
  %v3234 = vadd.f32 %v2945, %v3233
  %v3235 = vpop.f32.mrb[0].mxu0
  %v3236 = vpop.f32.mrb[0].mxu0
  %v3237 = vadd.f32 %v2948, %v3236
  %v3238 = vpop.f32.mrb[0].mxu0
  %3239 = vmatprep.mubr.bf16.mxu0 %v1913
  %3240 = vmatmul.mubr.bf16.gmra.mrb[0].mxu0 %v1906
  %v3241 = vpop.f32.mrb[0].mxu0
  %v3242 = vadd.f32 %v2953, %v3241
  %v3243 = vpop.f32.mrb[0].mxu0
  %v3244 = vpop.f32.mrb[0].mxu0
  %v3245 = vadd.f32 %v2956, %v3244
  %v3246 = vpop.f32.mrb[0].mxu0
  %3247 = vmatprep.mubr.bf16.mxu0 %v1944
  %3248 = vmatmul.mubr.bf16.gmra.mrb[0].mxu0 %v1937
  %v3249 = vpop.f32.mrb[0].mxu0
  %v3250 = vadd.f32 %v2961, %v3249
  %v3251 = vpop.f32.mrb[0].mxu0
  %v3252 = vpop.f32.mrb[0].mxu0
  %v3253 = vadd.f32 %v2964, %v3252
  %v3254 = vpop.f32.mrb[0].mxu0
  %3255 = vmatprep.mubr.bf16.mxu0 %v1975
  %3256 = vmatmul.mubr.bf16.gmra.mrb[0].mxu0 %v1968
  %v3257 = vpop.f32.mrb[0].mxu0
  %v3258 = vadd.f32 %v2969, %v3257
  %v3259 = vpop.f32.mrb[0].mxu0
  %v3260 = vpop.f32.mrb[0].mxu0
  %v3261 = vadd.f32 %v2972, %v3260
  %v3262 = vpop.f32.mrb[0].mxu0
  %3263 = vmatprep.mubr.bf16.mxu0 %v2006
  %3264 = vmatmul.mubr.bf16.gmra.mrb[0].mxu0 %v1999
  %v3265 = vpop.f32.mrb[0].mxu0
  %v3266 = vadd.f32 %v2977, %v3265
  %v3267 = vpop.f32.mrb[0].mxu0
  %v3268 = vpop.f32.mrb[0].mxu0
  %v3269 = vadd.f32 %v2980, %v3268
  %v3270 = vpop.f32.mrb[0].mxu0
  %3271 = vmatprep.mubr.bf16.mxu0 %v2037
  %3272 = vmatmul.mubr.bf16.gmra.mrb[0].mxu0 %v2030
  %v3273 = vpop.f32.mrb[0].mxu0
  %v3274 = vadd.f32 %v2985, %v3273
  %v3275 = vpop.f32.mrb[0].mxu0
  %v3276 = vpop.f32.mrb[0].mxu0
  %v3277 = vadd.f32 %v2988, %v3276
  %v3278 = vpop.f32.mrb[0].mxu0
  %3279 = vmatprep.mubr.bf16.mxu0 %v2068
  %3280 = vmatmul.mubr.bf16.gmra.mrb[0].mxu0 %v2061
  %v3281 = vpop.f32.mrb[0].mxu0
  %v3282 = vadd.f32 %v2993, %v3281
  %v3283 = vpop.f32.mrb[0].mxu0
  %v3284 = vpop.f32.mrb[0].mxu0
  %v3285 = vadd.f32 %v2996, %v3284
  %v3286 = vpop.f32.mrb[0].mxu0
  %3287 = vmatprep.mubr.bf16.mxu0 %v2099
  %3288 = vmatmul.mubr.bf16.gmra.mrb[0].mxu0 %v2092
  %v3289 = vpop.f32.mrb[0].mxu0
  %v3290 = vadd.f32 %v3001, %v3289
  %v3291 = vpop.f32.mrb[0].mxu0
  %v3292 = vpop.f32.mrb[0].mxu0
  %v3293 = vadd.f32 %v3004, %v3292
  %v3294 = vpop.f32.mrb[0].mxu0
  %3295 = vmatprep.mubr.bf16.mxu0 %v2130
  %3296 = vmatmul.mubr.bf16.gmra.mrb[0].mxu0 %v2123
  %v3297 = vpop.f32.mrb[0].mxu0
  %v3298 = vadd.f32 %v3009, %v3297
  %v3299 = vpop.f32.mrb[0].mxu0
  %v3300 = vpop.f32.mrb[0].mxu0
  %v3301 = vadd.f32 %v3012, %v3300
  %v3302 = vpop.f32.mrb[0].mxu0
  %3303 = vdwg.mxu0
  %3304 = vmatprep.subr.bf16.mxu0 0
  %3305 = vmatpush1.bf16.msra.mxu0 %v2614
  %3306 = vmatprep.subr.bf16.mxu0 0
  %3307 = vmatpush1.bf16.msra.mxu0 %v2615
  %3308 = vmatprep.subr.bf16.mxu0 0
  %3309 = vmatpush1.bf16.msra.mxu0 %v2616
  %3310 = vmatprep.subr.bf16.mxu0 0
  %3311 = vmatpush1.bf16.msra.mxu0 %v2617
  %3312 = vmatprep.subr.bf16.mxu0 0
  %3313 = vmatpush1.bf16.msra.mxu0 %v2618
  %3314 = vmatprep.subr.bf16.mxu0 0
  %3315 = vmatpush1.bf16.msra.mxu0 %v2619
  %3316 = vmatprep.subr.bf16.mxu0 0
  %3317 = vmatpush1.bf16.msra.mxu0 %v2620
  %3318 = vmatprep.subr.bf16.mxu0 0
  %3319 = vmatpush1.bf16.msra.mxu0 %v2621
  %3320 = vmatprep.subr.bf16.mxu0 0
  %3321 = vmatpush1.bf16.msra.mxu0 %v2622
  %3322 = vmatprep.subr.bf16.mxu0 0
  %3323 = vmatpush1.bf16.msra.mxu0 %v2623
  %3324 = vmatprep.subr.bf16.mxu0 0
  %3325 = vmatpush1.bf16.msra.mxu0 %v2624
  %3326 = vmatprep.subr.bf16.mxu0 0
  %3327 = vmatpush1.bf16.msra.mxu0 %v2625
  %3328 = vmatprep.subr.bf16.mxu0 0
  %3329 = vmatpush1.bf16.msra.mxu0 %v2626
  %3330 = vmatprep.subr.bf16.mxu0 0
  %3331 = vmatpush1.bf16.msra.mxu0 %v2627
  %3332 = vmatprep.subr.bf16.mxu0 0
  %3333 = vmatpush1.bf16.msra.mxu0 %v2628
  %3334 = vmatprep.subr.bf16.mxu0 0
  %3335 = vmatpush1.bf16.msra.mxu0 %v2629
  %3336 = vmatprep.mubr.bf16.mxu0 %v1131
  %3337 = vmatmul.mubr.bf16.gmra.mrb[0].mxu0 %v1119
  %v3338 = vpop.f32.mrb[0].mxu0
  %v3339 = vadd.f32 %v3050, %v3338
  %v3340 = vpop.f32.mrb[0].mxu0
  %v3341 = vpop.f32.mrb[0].mxu0
  %v3342 = vadd.f32 %v3053, %v3341
  %v3343 = vpop.f32.mrb[0].mxu0
  %3344 = vmatprep.mubr.bf16.mxu0 %v1162
  %3345 = vmatmul.mubr.bf16.gmra.mrb[0].mxu0 %v1150
  %v3346 = vpop.f32.mrb[0].mxu0
  %v3347 = vadd.f32 %v3058, %v3346
  %v3348 = vpop.f32.mrb[0].mxu0
  %v3349 = vpop.f32.mrb[0].mxu0
  %v3350 = vadd.f32 %v3061, %v3349
  %v3351 = vpop.f32.mrb[0].mxu0
  %3352 = vmatprep.mubr.bf16.mxu0 %v1193
  %3353 = vmatmul.mubr.bf16.gmra.mrb[0].mxu0 %v1181
  %v3354 = vpop.f32.mrb[0].mxu0
  %v3355 = vadd.f32 %v3066, %v3354
  %v3356 = vpop.f32.mrb[0].mxu0
  %v3357 = vpop.f32.mrb[0].mxu0
  %v3358 = vadd.f32 %v3069, %v3357
  %v3359 = vpop.f32.mrb[0].mxu0
  %3360 = vmatprep.mubr.bf16.mxu0 %v1224
  %3361 = vmatmul.mubr.bf16.gmra.mrb[0].mxu0 %v1212
  %v3362 = vpop.f32.mrb[0].mxu0
  %v3363 = vadd.f32 %v3074, %v3362
  %v3364 = vpop.f32.mrb[0].mxu0
  %v3365 = vpop.f32.mrb[0].mxu0
  %v3366 = vadd.f32 %v3077, %v3365
  %v3367 = vpop.f32.mrb[0].mxu0
  %3368 = vmatprep.mubr.bf16.mxu0 %v1255
  %3369 = vmatmul.mubr.bf16.gmra.mrb[0].mxu0 %v1243
  %v3370 = vpop.f32.mrb[0].mxu0
  %v3371 = vadd.f32 %v3082, %v3370
  %v3372 = vpop.f32.mrb[0].mxu0
  %v3373 = vpop.f32.mrb[0].mxu0
  %v3374 = vadd.f32 %v3085, %v3373
  %v3375 = vpop.f32.mrb[0].mxu0
  %3376 = vmatprep.mubr.bf16.mxu0 %v1286
  %3377 = vmatmul.mubr.bf16.gmra.mrb[0].mxu0 %v1274
  %v3378 = vpop.f32.mrb[0].mxu0
  %v3379 = vadd.f32 %v3090, %v3378
  %v3380 = vpop.f32.mrb[0].mxu0
  %v3381 = vpop.f32.mrb[0].mxu0
  %v3382 = vadd.f32 %v3093, %v3381
  %v3383 = vpop.f32.mrb[0].mxu0
  %3384 = vmatprep.mubr.bf16.mxu0 %v1317
  %3385 = vmatmul.mubr.bf16.gmra.mrb[0].mxu0 %v1305
  %v3386 = vpop.f32.mrb[0].mxu0
  %v3387 = vadd.f32 %v3098, %v3386
  %v3388 = vpop.f32.mrb[0].mxu0
  %v3389 = vpop.f32.mrb[0].mxu0
  %v3390 = vadd.f32 %v3101, %v3389
  %v3391 = vpop.f32.mrb[0].mxu0
  %3392 = vmatprep.mubr.bf16.mxu0 %v1348
  %3393 = vmatmul.mubr.bf16.gmra.mrb[0].mxu0 %v1336
  %v3394 = vpop.f32.mrb[0].mxu0
  %v3395 = vadd.f32 %v3106, %v3394
  %v3396 = vpop.f32.mrb[0].mxu0
  %v3397 = vpop.f32.mrb[0].mxu0
  %v3398 = vadd.f32 %v3109, %v3397
  %v3399 = vpop.f32.mrb[0].mxu0
  %3400 = vmatprep.mubr.bf16.mxu0 %v1379
  %3401 = vmatmul.mubr.bf16.gmra.mrb[0].mxu0 %v1367
  %v3402 = vpop.f32.mrb[0].mxu0
  %v3403 = vadd.f32 %v3114, %v3402
  %v3404 = vpop.f32.mrb[0].mxu0
  %v3405 = vpop.f32.mrb[0].mxu0
  %v3406 = vadd.f32 %v3117, %v3405
  %v3407 = vpop.f32.mrb[0].mxu0
  %3408 = vmatprep.mubr.bf16.mxu0 %v1410
  %3409 = vmatmul.mubr.bf16.gmra.mrb[0].mxu0 %v1398
  %v3410 = vpop.f32.mrb[0].mxu0
  %v3411 = vadd.f32 %v3122, %v3410
  %v3412 = vpop.f32.mrb[0].mxu0
  %v3413 = vpop.f32.mrb[0].mxu0
  %v3414 = vadd.f32 %v3125, %v3413
  %v3415 = vpop.f32.mrb[0].mxu0
  %3416 = vmatprep.mubr.bf16.mxu0 %v1441
  %3417 = vmatmul.mubr.bf16.gmra.mrb[0].mxu0 %v1429
  %v3418 = vpop.f32.mrb[0].mxu0
  %v3419 = vadd.f32 %v3130, %v3418
  %v3420 = vpop.f32.mrb[0].mxu0
  %v3421 = vpop.f32.mrb[0].mxu0
  %v3422 = vadd.f32 %v3133, %v3421
  %v3423 = vpop.f32.mrb[0].mxu0
  %3424 = vmatprep.mubr.bf16.mxu0 %v1472
  %3425 = vmatmul.mubr.bf16.gmra.mrb[0].mxu0 %v1460
  %v3426 = vpop.f32.mrb[0].mxu0
  %v3427 = vadd.f32 %v3138, %v3426
  %v3428 = vpop.f32.mrb[0].mxu0
  %v3429 = vpop.f32.mrb[0].mxu0
  %v3430 = vadd.f32 %v3141, %v3429
  %v3431 = vpop.f32.mrb[0].mxu0
  %3432 = vmatprep.mubr.bf16.mxu0 %v1503
  %3433 = vmatmul.mubr.bf16.gmra.mrb[0].mxu0 %v1491
  %v3434 = vpop.f32.mrb[0].mxu0
  %v3435 = vadd.f32 %v3146, %v3434
  %v3436 = vpop.f32.mrb[0].mxu0
  %v3437 = vpop.f32.mrb[0].mxu0
  %v3438 = vadd.f32 %v3149, %v3437
  %v3439 = vpop.f32.mrb[0].mxu0
  %3440 = vmatprep.mubr.bf16.mxu0 %v1534
  %3441 = vmatmul.mubr.bf16.gmra.mrb[0].mxu0 %v1522
  %v3442 = vpop.f32.mrb[0].mxu0
  %v3443 = vadd.f32 %v3154, %v3442
  %v3444 = vpop.f32.mrb[0].mxu0
  %v3445 = vpop.f32.mrb[0].mxu0
  %v3446 = vadd.f32 %v3157, %v3445
  %v3447 = vpop.f32.mrb[0].mxu0
  %3448 = vmatprep.mubr.bf16.mxu0 %v1565
  %3449 = vmatmul.mubr.bf16.gmra.mrb[0].mxu0 %v1553
  %v3450 = vpop.f32.mrb[0].mxu0
  %v3451 = vadd.f32 %v3162, %v3450
  %v3452 = vpop.f32.mrb[0].mxu0
  %v3453 = vpop.f32.mrb[0].mxu0
  %v3454 = vadd.f32 %v3165, %v3453
  %v3455 = vpop.f32.mrb[0].mxu0
  %3456 = vmatprep.mubr.bf16.mxu0 %v1596
  %3457 = vmatmul.mubr.bf16.gmra.mrb[0].mxu0 %v1584
  %v3458 = vpop.f32.mrb[0].mxu0
  %v3459 = vadd.f32 %v3170, %v3458
  %v3460 = vpop.f32.mrb[0].mxu0
  %v3461 = vpop.f32.mrb[0].mxu0
  %v3462 = vadd.f32 %v3173, %v3461
  %v3463 = vpop.f32.mrb[0].mxu0
  %3464 = vmatprep.mubr.bf16.mxu0 %v1689
  %3465 = vmatmul.mubr.bf16.gmra.mrb[0].mxu0 %v1677
  %v3466 = vpop.f32.mrb[0].mxu0
  %v3467 = vadd.f32 %v3178, %v3466
  %v3468 = vpop.f32.mrb[0].mxu0
  %v3469 = vpop.f32.mrb[0].mxu0
  %v3470 = vadd.f32 %v3181, %v3469
  %v3471 = vpop.f32.mrb[0].mxu0
  %3472 = vmatprep.mubr.bf16.mxu0 %v1720
  %3473 = vmatmul.mubr.bf16.gmra.mrb[0].mxu0 %v1708
  %v3474 = vpop.f32.mrb[0].mxu0
  %v3475 = vadd.f32 %v3186, %v3474
  %v3476 = vpop.f32.mrb[0].mxu0
  %v3477 = vpop.f32.mrb[0].mxu0
  %v3478 = vadd.f32 %v3189, %v3477
  %v3479 = vpop.f32.mrb[0].mxu0
  %3480 = vmatprep.mubr.bf16.mxu0 %v1751
  %3481 = vmatmul.mubr.bf16.gmra.mrb[0].mxu0 %v1739
  %v3482 = vpop.f32.mrb[0].mxu0
  %v3483 = vadd.f32 %v3194, %v3482
  %v3484 = vpop.f32.mrb[0].mxu0
  %v3485 = vpop.f32.mrb[0].mxu0
  %v3486 = vadd.f32 %v3197, %v3485
  %v3487 = vpop.f32.mrb[0].mxu0
  %3488 = vmatprep.mubr.bf16.mxu0 %v1782
  %3489 = vmatmul.mubr.bf16.gmra.mrb[0].mxu0 %v1770
  %v3490 = vpop.f32.mrb[0].mxu0
  %v3491 = vadd.f32 %v3202, %v3490
  %v3492 = vpop.f32.mrb[0].mxu0
  %v3493 = vpop.f32.mrb[0].mxu0
  %v3494 = vadd.f32 %v3205, %v3493
  %v3495 = vpop.f32.mrb[0].mxu0
  %3496 = vmatprep.mubr.bf16.mxu0 %v1813
  %3497 = vmatmul.mubr.bf16.gmra.mrb[0].mxu0 %v1801
  %v3498 = vpop.f32.mrb[0].mxu0
  %v3499 = vadd.f32 %v3210, %v3498
  %v3500 = vpop.f32.mrb[0].mxu0
  %v3501 = vpop.f32.mrb[0].mxu0
  %v3502 = vadd.f32 %v3213, %v3501
  %v3503 = vpop.f32.mrb[0].mxu0
  %3504 = vmatprep.mubr.bf16.mxu0 %v1844
  %3505 = vmatmul.mubr.bf16.gmra.mrb[0].mxu0 %v1832
  %v3506 = vpop.f32.mrb[0].mxu0
  %v3507 = vadd.f32 %v3218, %v3506
  %v3508 = vpop.f32.mrb[0].mxu0
  %v3509 = vpop.f32.mrb[0].mxu0
  %v3510 = vadd.f32 %v3221, %v3509
  %v3511 = vpop.f32.mrb[0].mxu0
  %3512 = vmatprep.mubr.bf16.mxu0 %v1875
  %3513 = vmatmul.mubr.bf16.gmra.mrb[0].mxu0 %v1863
  %v3514 = vpop.f32.mrb[0].mxu0
  %v3515 = vadd.f32 %v3226, %v3514
  %v3516 = vpop.f32.mrb[0].mxu0
  %v3517 = vpop.f32.mrb[0].mxu0
  %v3518 = vadd.f32 %v3229, %v3517
  %v3519 = vpop.f32.mrb[0].mxu0
  %3520 = vmatprep.mubr.bf16.mxu0 %v1906
  %3521 = vmatmul.mubr.bf16.gmra.mrb[0].mxu0 %v1894
  %v3522 = vpop.f32.mrb[0].mxu0
  %v3523 = vadd.f32 %v3234, %v3522
  %v3524 = vpop.f32.mrb[0].mxu0
  %v3525 = vpop.f32.mrb[0].mxu0
  %v3526 = vadd.f32 %v3237, %v3525
  %v3527 = vpop.f32.mrb[0].mxu0
  %3528 = vmatprep.mubr.bf16.mxu0 %v1937
  %3529 = vmatmul.mubr.bf16.gmra.mrb[0].mxu0 %v1925
  %v3530 = vpop.f32.mrb[0].mxu0
  %v3531 = vadd.f32 %v3242, %v3530
  %v3532 = vpop.f32.mrb[0].mxu0
  %v3533 = vpop.f32.mrb[0].mxu0
  %v3534 = vadd.f32 %v3245, %v3533
  %v3535 = vpop.f32.mrb[0].mxu0
  %3536 = vmatprep.mubr.bf16.mxu0 %v1968
  %3537 = vmatmul.mubr.bf16.gmra.mrb[0].mxu0 %v1956
  %v3538 = vpop.f32.mrb[0].mxu0
  %v3539 = vadd.f32 %v3250, %v3538
  %v3540 = vpop.f32.mrb[0].mxu0
  %v3541 = vpop.f32.mrb[0].mxu0
  %v3542 = vadd.f32 %v3253, %v3541
  %v3543 = vpop.f32.mrb[0].mxu0
  %3544 = vmatprep.mubr.bf16.mxu0 %v1999
  %3545 = vmatmul.mubr.bf16.gmra.mrb[0].mxu0 %v1987
  %v3546 = vpop.f32.mrb[0].mxu0
  %v3547 = vadd.f32 %v3258, %v3546
  %v3548 = vpop.f32.mrb[0].mxu0
  %v3549 = vpop.f32.mrb[0].mxu0
  %v3550 = vadd.f32 %v3261, %v3549
  %v3551 = vpop.f32.mrb[0].mxu0
  %3552 = vmatprep.mubr.bf16.mxu0 %v2030
  %3553 = vmatmul.mubr.bf16.gmra.mrb[0].mxu0 %v2018
  %v3554 = vpop.f32.mrb[0].mxu0
  %v3555 = vadd.f32 %v3266, %v3554
  %v3556 = vpop.f32.mrb[0].mxu0
  %v3557 = vpop.f32.mrb[0].mxu0
  %v3558 = vadd.f32 %v3269, %v3557
  %v3559 = vpop.f32.mrb[0].mxu0
  %3560 = vmatprep.mubr.bf16.mxu0 %v2061
  %3561 = vmatmul.mubr.bf16.gmra.mrb[0].mxu0 %v2049
  %v3562 = vpop.f32.mrb[0].mxu0
  %v3563 = vadd.f32 %v3274, %v3562
  %v3564 = vpop.f32.mrb[0].mxu0
  %v3565 = vpop.f32.mrb[0].mxu0
  %v3566 = vadd.f32 %v3277, %v3565
  %v3567 = vpop.f32.mrb[0].mxu0
  %3568 = vmatprep.mubr.bf16.mxu0 %v2092
  %3569 = vmatmul.mubr.bf16.gmra.mrb[0].mxu0 %v2080
  %v3570 = vpop.f32.mrb[0].mxu0
  %v3571 = vadd.f32 %v3282, %v3570
  %v3572 = vpop.f32.mrb[0].mxu0
  %v3573 = vpop.f32.mrb[0].mxu0
  %v3574 = vadd.f32 %v3285, %v3573
  %v3575 = vpop.f32.mrb[0].mxu0
  %3576 = vmatprep.mubr.bf16.mxu0 %v2123
  %3577 = vmatmul.mubr.bf16.gmra.mrb[0].mxu0 %v2111
  %v3578 = vpop.f32.mrb[0].mxu0
  %v3579 = vadd.f32 %v3290, %v3578
  %v3580 = vpop.f32.mrb[0].mxu0
  %v3581 = vpop.f32.mrb[0].mxu0
  %v3582 = vadd.f32 %v3293, %v3581
  %v3583 = vpop.f32.mrb[0].mxu0
  %3584 = vmatprep.mubr.bf16.mxu0 %v2154
  %3585 = vmatmul.mubr.bf16.gmra.mrb[0].mxu0 %v2142
  %v3586 = vpop.f32.mrb[0].mxu0
  %v3587 = vadd.f32 %v3298, %v3586
  %v3588 = vpop.f32.mrb[0].mxu0
  %v3589 = vpop.f32.mrb[0].mxu0
  %v3590 = vadd.f32 %v3301, %v3589
  %v3591 = vpop.f32.mrb[0].mxu0
  %3592 = vdwg.mxu0
  %3593 = vmatprep.subr.bf16.mxu0 0
  %3594 = vmatpush1.bf16.msra.mxu0 %v2630
  %3595 = vmatprep.subr.bf16.mxu0 0
  %3596 = vmatpush1.bf16.msra.mxu0 %v2631
  %3597 = vmatprep.subr.bf16.mxu0 0
  %3598 = vmatpush1.bf16.msra.mxu0 %v2632
  %3599 = vmatprep.subr.bf16.mxu0 0
  %3600 = vmatpush1.bf16.msra.mxu0 %v2633
  %3601 = vmatprep.subr.bf16.mxu0 0
  %3602 = vmatpush1.bf16.msra.mxu0 %v2634
  %3603 = vmatprep.subr.bf16.mxu0 0
  %3604 = vmatpush1.bf16.msra.mxu0 %v2635
  %3605 = vmatprep.subr.bf16.mxu0 0
  %3606 = vmatpush1.bf16.msra.mxu0 %v2636
  %3607 = vmatprep.subr.bf16.mxu0 0
  %3608 = vmatpush1.bf16.msra.mxu0 %v2637
  %3609 = vmatprep.subr.bf16.mxu0 0
  %3610 = vmatpush1.bf16.msra.mxu0 %v2638
  %3611 = vmatprep.subr.bf16.mxu0 0
  %3612 = vmatpush1.bf16.msra.mxu0 %v2639
  %3613 = vmatprep.subr.bf16.mxu0 0
  %3614 = vmatpush1.bf16.msra.mxu0 %v2640
  %3615 = vmatprep.subr.bf16.mxu0 0
  %3616 = vmatpush1.bf16.msra.mxu0 %v2641
  %3617 = vmatprep.subr.bf16.mxu0 0
  %3618 = vmatpush1.bf16.msra.mxu0 %v2642
  %3619 = vmatprep.subr.bf16.mxu0 0
  %3620 = vmatpush1.bf16.msra.mxu0 %v2643
  %3621 = vmatprep.subr.bf16.mxu0 0
  %3622 = vmatpush1.bf16.msra.mxu0 %v2644
  %3623 = vmatprep.subr.bf16.mxu0 0
  %3624 = vmatpush1.bf16.msra.mxu0 %v2645
  %3625 = vmatprep.mubr.bf16.mxu0 %v1150
  %3626 = vmatmul.mubr.bf16.gmra.mrb[0].mxu0 %v1138
  %v3627 = vpop.f32.mrb[0].mxu0
  %v3628 = vadd.f32 %v3339, %v3627
  %v3629 = vpop.f32.mrb[0].mxu0
  %v3630 = vpop.f32.mrb[0].mxu0
  %v3631 = vadd.f32 %v3342, %v3630
  %v3632 = vpop.f32.mrb[0].mxu0
  %3633 = vmatprep.mubr.bf16.mxu0 %v1181
  %3634 = vmatmul.mubr.bf16.gmra.mrb[0].mxu0 %v1169
  %v3635 = vpop.f32.mrb[0].mxu0
  %v3636 = vadd.f32 %v3347, %v3635
  %v3637 = vpop.f32.mrb[0].mxu0
  %v3638 = vpop.f32.mrb[0].mxu0
  %v3639 = vadd.f32 %v3350, %v3638
  %v3640 = vpop.f32.mrb[0].mxu0
  %3641 = vmatprep.mubr.bf16.mxu0 %v1212
  %3642 = vmatmul.mubr.bf16.gmra.mrb[0].mxu0 %v1200
  %v3643 = vpop.f32.mrb[0].mxu0
  %v3644 = vadd.f32 %v3355, %v3643
  %v3645 = vpop.f32.mrb[0].mxu0
  %v3646 = vpop.f32.mrb[0].mxu0
  %v3647 = vadd.f32 %v3358, %v3646
  %v3648 = vpop.f32.mrb[0].mxu0
  %3649 = vmatprep.mubr.bf16.mxu0 %v1243
  %3650 = vmatmul.mubr.bf16.gmra.mrb[0].mxu0 %v1231
  %v3651 = vpop.f32.mrb[0].mxu0
  %v3652 = vadd.f32 %v3363, %v3651
  %v3653 = vpop.f32.mrb[0].mxu0
  %v3654 = vpop.f32.mrb[0].mxu0
  %v3655 = vadd.f32 %v3366, %v3654
  %v3656 = vpop.f32.mrb[0].mxu0
  %3657 = vmatprep.mubr.bf16.mxu0 %v1274
  %3658 = vmatmul.mubr.bf16.gmra.mrb[0].mxu0 %v1262
  %v3659 = vpop.f32.mrb[0].mxu0
  %v3660 = vadd.f32 %v3371, %v3659
  %v3661 = vpop.f32.mrb[0].mxu0
  %v3662 = vpop.f32.mrb[0].mxu0
  %v3663 = vadd.f32 %v3374, %v3662
  %v3664 = vpop.f32.mrb[0].mxu0
  %3665 = vmatprep.mubr.bf16.mxu0 %v1305
  %3666 = vmatmul.mubr.bf16.gmra.mrb[0].mxu0 %v1293
  %v3667 = vpop.f32.mrb[0].mxu0
  %v3668 = vadd.f32 %v3379, %v3667
  %v3669 = vpop.f32.mrb[0].mxu0
  %v3670 = vpop.f32.mrb[0].mxu0
  %v3671 = vadd.f32 %v3382, %v3670
  %v3672 = vpop.f32.mrb[0].mxu0
  %3673 = vmatprep.mubr.bf16.mxu0 %v1336
  %3674 = vmatmul.mubr.bf16.gmra.mrb[0].mxu0 %v1324
  %v3675 = vpop.f32.mrb[0].mxu0
  %v3676 = vadd.f32 %v3387, %v3675
  %v3677 = vpop.f32.mrb[0].mxu0
  %v3678 = vpop.f32.mrb[0].mxu0
  %v3679 = vadd.f32 %v3390, %v3678
  %v3680 = vpop.f32.mrb[0].mxu0
  %3681 = vmatprep.mubr.bf16.mxu0 %v1367
  %3682 = vmatmul.mubr.bf16.gmra.mrb[0].mxu0 %v1355
  %v3683 = vpop.f32.mrb[0].mxu0
  %v3684 = vadd.f32 %v3395, %v3683
  %v3685 = vpop.f32.mrb[0].mxu0
  %v3686 = vpop.f32.mrb[0].mxu0
  %v3687 = vadd.f32 %v3398, %v3686
  %v3688 = vpop.f32.mrb[0].mxu0
  %3689 = vmatprep.mubr.bf16.mxu0 %v1398
  %3690 = vmatmul.mubr.bf16.gmra.mrb[0].mxu0 %v1386
  %v3691 = vpop.f32.mrb[0].mxu0
  %v3692 = vadd.f32 %v3403, %v3691
  %v3693 = vpop.f32.mrb[0].mxu0
  %v3694 = vpop.f32.mrb[0].mxu0
  %v3695 = vadd.f32 %v3406, %v3694
  %v3696 = vpop.f32.mrb[0].mxu0
  %3697 = vmatprep.mubr.bf16.mxu0 %v1429
  %3698 = vmatmul.mubr.bf16.gmra.mrb[0].mxu0 %v1417
  %v3699 = vpop.f32.mrb[0].mxu0
  %v3700 = vadd.f32 %v3411, %v3699
  %v3701 = vpop.f32.mrb[0].mxu0
  %v3702 = vpop.f32.mrb[0].mxu0
  %v3703 = vadd.f32 %v3414, %v3702
  %v3704 = vpop.f32.mrb[0].mxu0
  %3705 = vmatprep.mubr.bf16.mxu0 %v1460
  %3706 = vmatmul.mubr.bf16.gmra.mrb[0].mxu0 %v1448
  %v3707 = vpop.f32.mrb[0].mxu0
  %v3708 = vadd.f32 %v3419, %v3707
  %v3709 = vpop.f32.mrb[0].mxu0
  %v3710 = vpop.f32.mrb[0].mxu0
  %v3711 = vadd.f32 %v3422, %v3710
  %v3712 = vpop.f32.mrb[0].mxu0
  %3713 = vmatprep.mubr.bf16.mxu0 %v1491
  %3714 = vmatmul.mubr.bf16.gmra.mrb[0].mxu0 %v1479
  %v3715 = vpop.f32.mrb[0].mxu0
  %v3716 = vadd.f32 %v3427, %v3715
  %v3717 = vpop.f32.mrb[0].mxu0
  %v3718 = vpop.f32.mrb[0].mxu0
  %v3719 = vadd.f32 %v3430, %v3718
  %v3720 = vpop.f32.mrb[0].mxu0
  %3721 = vmatprep.mubr.bf16.mxu0 %v1522
  %3722 = vmatmul.mubr.bf16.gmra.mrb[0].mxu0 %v1510
  %v3723 = vpop.f32.mrb[0].mxu0
  %v3724 = vadd.f32 %v3435, %v3723
  %v3725 = vpop.f32.mrb[0].mxu0
  %v3726 = vpop.f32.mrb[0].mxu0
  %v3727 = vadd.f32 %v3438, %v3726
  %v3728 = vpop.f32.mrb[0].mxu0
  %3729 = vmatprep.mubr.bf16.mxu0 %v1553
  %3730 = vmatmul.mubr.bf16.gmra.mrb[0].mxu0 %v1541
  %v3731 = vpop.f32.mrb[0].mxu0
  %v3732 = vadd.f32 %v3443, %v3731
  %v3733 = vpop.f32.mrb[0].mxu0
  %v3734 = vpop.f32.mrb[0].mxu0
  %v3735 = vadd.f32 %v3446, %v3734
  %v3736 = vpop.f32.mrb[0].mxu0
  %3737 = vmatprep.mubr.bf16.mxu0 %v1584
  %3738 = vmatmul.mubr.bf16.gmra.mrb[0].mxu0 %v1572
  %v3739 = vpop.f32.mrb[0].mxu0
  %v3740 = vadd.f32 %v3451, %v3739
  %v3741 = vpop.f32.mrb[0].mxu0
  %v3742 = vpop.f32.mrb[0].mxu0
  %v3743 = vadd.f32 %v3454, %v3742
  %v3744 = vpop.f32.mrb[0].mxu0
  %3745 = vmatprep.mubr.bf16.mxu0 %v1615
  %3746 = vmatmul.mubr.bf16.gmra.mrb[0].mxu0 %v1603
  %v3747 = vpop.f32.mrb[0].mxu0
  %v3748 = vadd.f32 %v3459, %v3747
  %v3749 = vpop.f32.mrb[0].mxu0
  %v3750 = vpop.f32.mrb[0].mxu0
  %v3751 = vadd.f32 %v3462, %v3750
  %v3752 = vpop.f32.mrb[0].mxu0
  %3753 = vmatprep.mubr.bf16.mxu0 %v1708
  %3754 = vmatmul.mubr.bf16.gmra.mrb[0].mxu0 %v1696
  %v3755 = vpop.f32.mrb[0].mxu0
  %v3756 = vadd.f32 %v3467, %v3755
  %v3757 = vpop.f32.mrb[0].mxu0
  %v3758 = vpop.f32.mrb[0].mxu0
  %v3759 = vadd.f32 %v3470, %v3758
  %v3760 = vpop.f32.mrb[0].mxu0
  %3761 = vmatprep.mubr.bf16.mxu0 %v1739
  %3762 = vmatmul.mubr.bf16.gmra.mrb[0].mxu0 %v1727
  %v3763 = vpop.f32.mrb[0].mxu0
  %v3764 = vadd.f32 %v3475, %v3763
  %v3765 = vpop.f32.mrb[0].mxu0
  %v3766 = vpop.f32.mrb[0].mxu0
  %v3767 = vadd.f32 %v3478, %v3766
  %v3768 = vpop.f32.mrb[0].mxu0
  %3769 = vmatprep.mubr.bf16.mxu0 %v1770
  %3770 = vmatmul.mubr.bf16.gmra.mrb[0].mxu0 %v1758
  %v3771 = vpop.f32.mrb[0].mxu0
  %v3772 = vadd.f32 %v3483, %v3771
  %v3773 = vpop.f32.mrb[0].mxu0
  %v3774 = vpop.f32.mrb[0].mxu0
  %v3775 = vadd.f32 %v3486, %v3774
  %v3776 = vpop.f32.mrb[0].mxu0
  %3777 = vmatprep.mubr.bf16.mxu0 %v1801
  %3778 = vmatmul.mubr.bf16.gmra.mrb[0].mxu0 %v1789
  %v3779 = vpop.f32.mrb[0].mxu0
  %v3780 = vadd.f32 %v3491, %v3779
  %v3781 = vpop.f32.mrb[0].mxu0
  %v3782 = vpop.f32.mrb[0].mxu0
  %v3783 = vadd.f32 %v3494, %v3782
  %v3784 = vpop.f32.mrb[0].mxu0
  %3785 = vmatprep.mubr.bf16.mxu0 %v1832
  %3786 = vmatmul.mubr.bf16.gmra.mrb[0].mxu0 %v1820
  %v3787 = vpop.f32.mrb[0].mxu0
  %v3788 = vadd.f32 %v3499, %v3787
  %v3789 = vpop.f32.mrb[0].mxu0
  %v3790 = vpop.f32.mrb[0].mxu0
  %v3791 = vadd.f32 %v3502, %v3790
  %v3792 = vpop.f32.mrb[0].mxu0
  %3793 = vmatprep.mubr.bf16.mxu0 %v1863
  %3794 = vmatmul.mubr.bf16.gmra.mrb[0].mxu0 %v1851
  %v3795 = vpop.f32.mrb[0].mxu0
  %v3796 = vadd.f32 %v3507, %v3795
  %v3797 = vpop.f32.mrb[0].mxu0
  %v3798 = vpop.f32.mrb[0].mxu0
  %v3799 = vadd.f32 %v3510, %v3798
  %v3800 = vpop.f32.mrb[0].mxu0
  %3801 = vmatprep.mubr.bf16.mxu0 %v1894
  %3802 = vmatmul.mubr.bf16.gmra.mrb[0].mxu0 %v1882
  %v3803 = vpop.f32.mrb[0].mxu0
  %v3804 = vadd.f32 %v3515, %v3803
  %v3805 = vpop.f32.mrb[0].mxu0
  %v3806 = vpop.f32.mrb[0].mxu0
  %v3807 = vadd.f32 %v3518, %v3806
  %v3808 = vpop.f32.mrb[0].mxu0
  %3809 = vmatprep.mubr.bf16.mxu0 %v1925
  %3810 = vmatmul.mubr.bf16.gmra.mrb[0].mxu0 %v1913
  %v3811 = vpop.f32.mrb[0].mxu0
  %v3812 = vadd.f32 %v3523, %v3811
  %v3813 = vpop.f32.mrb[0].mxu0
  %v3814 = vpop.f32.mrb[0].mxu0
  %v3815 = vadd.f32 %v3526, %v3814
  %v3816 = vpop.f32.mrb[0].mxu0
  %3817 = vmatprep.mubr.bf16.mxu0 %v1956
  %3818 = vmatmul.mubr.bf16.gmra.mrb[0].mxu0 %v1944
  %v3819 = vpop.f32.mrb[0].mxu0
  %v3820 = vadd.f32 %v3531, %v3819
  %v3821 = vpop.f32.mrb[0].mxu0
  %v3822 = vpop.f32.mrb[0].mxu0
  %v3823 = vadd.f32 %v3534, %v3822
  %v3824 = vpop.f32.mrb[0].mxu0
  %3825 = vmatprep.mubr.bf16.mxu0 %v1987
  %3826 = vmatmul.mubr.bf16.gmra.mrb[0].mxu0 %v1975
  %v3827 = vpop.f32.mrb[0].mxu0
  %v3828 = vadd.f32 %v3539, %v3827
  %v3829 = vpop.f32.mrb[0].mxu0
  %v3830 = vpop.f32.mrb[0].mxu0
  %v3831 = vadd.f32 %v3542, %v3830
  %v3832 = vpop.f32.mrb[0].mxu0
  %3833 = vmatprep.mubr.bf16.mxu0 %v2018
  %3834 = vmatmul.mubr.bf16.gmra.mrb[0].mxu0 %v2006
  %v3835 = vpop.f32.mrb[0].mxu0
  %v3836 = vadd.f32 %v3547, %v3835
  %v3837 = vpop.f32.mrb[0].mxu0
  %v3838 = vpop.f32.mrb[0].mxu0
  %v3839 = vadd.f32 %v3550, %v3838
  %v3840 = vpop.f32.mrb[0].mxu0
  %3841 = vmatprep.mubr.bf16.mxu0 %v2049
  %3842 = vmatmul.mubr.bf16.gmra.mrb[0].mxu0 %v2037
  %v3843 = vpop.f32.mrb[0].mxu0
  %v3844 = vadd.f32 %v3555, %v3843
  %v3845 = vpop.f32.mrb[0].mxu0
  %v3846 = vpop.f32.mrb[0].mxu0
  %v3847 = vadd.f32 %v3558, %v3846
  %v3848 = vpop.f32.mrb[0].mxu0
  %3849 = vmatprep.mubr.bf16.mxu0 %v2080
  %3850 = vmatmul.mubr.bf16.gmra.mrb[0].mxu0 %v2068
  %v3851 = vpop.f32.mrb[0].mxu0
  %v3852 = vadd.f32 %v3563, %v3851
  %v3853 = vpop.f32.mrb[0].mxu0
  %v3854 = vpop.f32.mrb[0].mxu0
  %v3855 = vadd.f32 %v3566, %v3854
  %v3856 = vpop.f32.mrb[0].mxu0
  %3857 = vmatprep.mubr.bf16.mxu0 %v2111
  %3858 = vmatmul.mubr.bf16.gmra.mrb[0].mxu0 %v2099
  %v3859 = vpop.f32.mrb[0].mxu0
  %v3860 = vadd.f32 %v3571, %v3859
  %v3861 = vpop.f32.mrb[0].mxu0
  %v3862 = vpop.f32.mrb[0].mxu0
  %v3863 = vadd.f32 %v3574, %v3862
  %v3864 = vpop.f32.mrb[0].mxu0
  %3865 = vmatprep.mubr.bf16.mxu0 %v2142
  %3866 = vmatmul.mubr.bf16.gmra.mrb[0].mxu0 %v2130
  %v3867 = vpop.f32.mrb[0].mxu0
  %v3868 = vadd.f32 %v3579, %v3867
  %v3869 = vpop.f32.mrb[0].mxu0
  %v3870 = vpop.f32.mrb[0].mxu0
  %v3871 = vadd.f32 %v3582, %v3870
  %v3872 = vpop.f32.mrb[0].mxu0
  %3873 = vmatprep.mubr.bf16.mxu0 %v2173
  %3874 = vmatmul.mubr.bf16.gmra.mrb[0].mxu0 %v2161
  %v3875 = vpop.f32.mrb[0].mxu0
  %v3876 = vadd.f32 %v3587, %v3875
  %v3877 = vpop.f32.mrb[0].mxu0
  %v3878 = vpop.f32.mrb[0].mxu0
  %v3879 = vadd.f32 %v3590, %v3878
  %v3880 = vpop.f32.mrb[0].mxu0
  %3881 = vdwg.mxu0
  %3882 = vmatprep.subr.bf16.mxu0 0
  %3883 = vmatpush1.bf16.msra.mxu0 %v2646
  %3884 = vmatprep.subr.bf16.mxu0 0
  %3885 = vmatpush1.bf16.msra.mxu0 %v2647
  %3886 = vmatprep.subr.bf16.mxu0 0
  %3887 = vmatpush1.bf16.msra.mxu0 %v2648
  %3888 = vmatprep.subr.bf16.mxu0 0
  %3889 = vmatpush1.bf16.msra.mxu0 %v2649
  %3890 = vmatprep.subr.bf16.mxu0 0
  %3891 = vmatpush1.bf16.msra.mxu0 %v2650
  %3892 = vmatprep.subr.bf16.mxu0 0
  %3893 = vmatpush1.bf16.msra.mxu0 %v2651
  %3894 = vmatprep.subr.bf16.mxu0 0
  %3895 = vmatpush1.bf16.msra.mxu0 %v2652
  %3896 = vmatprep.subr.bf16.mxu0 0
  %3897 = vmatpush1.bf16.msra.mxu0 %v2653
  %3898 = vmatprep.subr.bf16.mxu0 0
  %3899 = vmatpush1.bf16.msra.mxu0 0
  %3900 = vmatprep.subr.bf16.mxu0 0
  %3901 = vmatpush1.bf16.msra.mxu0 0
  %3902 = vmatprep.subr.bf16.mxu0 0
  %3903 = vmatpush1.bf16.msra.mxu0 0
  %3904 = vmatprep.subr.bf16.mxu0 0
  %3905 = vmatpush1.bf16.msra.mxu0 0
  %3906 = vmatprep.subr.bf16.mxu0 0
  %3907 = vmatpush1.bf16.msra.mxu0 0
  %3908 = vmatprep.subr.bf16.mxu0 0
  %3909 = vmatpush1.bf16.msra.mxu0 0
  %3910 = vmatprep.subr.bf16.mxu0 0
  %3911 = vmatpush1.bf16.msra.mxu0 0
  %3912 = vmatprep.subr.bf16.mxu0 0
  %3913 = vmatpush1.bf16.msra.mxu0 0
  %3914 = vmatprep.mubr.bf16.mxu0 0
  %3915 = vmatmul.mubr.bf16.gmra.mrb[0].mxu0 %v1162
  %v3916 = vpop.f32.mrb[0].mxu0
  %v3917 = vadd.f32 %v3628, %v3916
  %v3918 = vpop.f32.mrb[0].mxu0
  %v3919 = vpop.f32.mrb[0].mxu0
  %v3920 = vadd.f32 %v3631, %v3919
  %v3921 = vpop.f32.mrb[0].mxu0
  %3922 = vmatprep.mubr.bf16.mxu0 0
  %3923 = vmatmul.mubr.bf16.gmra.mrb[0].mxu0 %v1193
  %v3924 = vpop.f32.mrb[0].mxu0
  %v3925 = vadd.f32 %v3636, %v3924
  %v3926 = vpop.f32.mrb[0].mxu0
  %v3927 = vpop.f32.mrb[0].mxu0
  %v3928 = vadd.f32 %v3639, %v3927
  %v3929 = vpop.f32.mrb[0].mxu0
  %3930 = vmatprep.mubr.bf16.mxu0 0
  %3931 = vmatmul.mubr.bf16.gmra.mrb[0].mxu0 %v1224
  %v3932 = vpop.f32.mrb[0].mxu0
  %v3933 = vadd.f32 %v3644, %v3932
  %v3934 = vpop.f32.mrb[0].mxu0
  %v3935 = vpop.f32.mrb[0].mxu0
  %v3936 = vadd.f32 %v3647, %v3935
  %v3937 = vpop.f32.mrb[0].mxu0
  %3938 = vmatprep.mubr.bf16.mxu0 0
  %3939 = vmatmul.mubr.bf16.gmra.mrb[0].mxu0 %v1255
  %v3940 = vpop.f32.mrb[0].mxu0
  %v3941 = vadd.f32 %v3652, %v3940
  %v3942 = vpop.f32.mrb[0].mxu0
  %v3943 = vpop.f32.mrb[0].mxu0
  %v3944 = vadd.f32 %v3655, %v3943
  %v3945 = vpop.f32.mrb[0].mxu0
  %3946 = vmatprep.mubr.bf16.mxu0 0
  %3947 = vmatmul.mubr.bf16.gmra.mrb[0].mxu0 %v1286
  %v3948 = vpop.f32.mrb[0].mxu0
  %v3949 = vadd.f32 %v3660, %v3948
  %v3950 = vpop.f32.mrb[0].mxu0
  %v3951 = vpop.f32.mrb[0].mxu0
  %v3952 = vadd.f32 %v3663, %v3951
  %v3953 = vpop.f32.mrb[0].mxu0
  %3954 = vmatprep.mubr.bf16.mxu0 0
  %3955 = vmatmul.mubr.bf16.gmra.mrb[0].mxu0 %v1317
  %v3956 = vpop.f32.mrb[0].mxu0
  %v3957 = vadd.f32 %v3668, %v3956
  %v3958 = vpop.f32.mrb[0].mxu0
  %v3959 = vpop.f32.mrb[0].mxu0
  %v3960 = vadd.f32 %v3671, %v3959
  %v3961 = vpop.f32.mrb[0].mxu0
  %3962 = vmatprep.mubr.bf16.mxu0 0
  %3963 = vmatmul.mubr.bf16.gmra.mrb[0].mxu0 %v1348
  %v3964 = vpop.f32.mrb[0].mxu0
  %v3965 = vadd.f32 %v3676, %v3964
  %v3966 = vpop.f32.mrb[0].mxu0
  %v3967 = vpop.f32.mrb[0].mxu0
  %v3968 = vadd.f32 %v3679, %v3967
  %v3969 = vpop.f32.mrb[0].mxu0
  %3970 = vmatprep.mubr.bf16.mxu0 0
  %3971 = vmatmul.mubr.bf16.gmra.mrb[0].mxu0 %v1379
  %v3972 = vpop.f32.mrb[0].mxu0
  %v3973 = vadd.f32 %v3684, %v3972
  %v3974 = vpop.f32.mrb[0].mxu0
  %v3975 = vpop.f32.mrb[0].mxu0
  %v3976 = vadd.f32 %v3687, %v3975
  %v3977 = vpop.f32.mrb[0].mxu0
  %3978 = vmatprep.mubr.bf16.mxu0 0
  %3979 = vmatmul.mubr.bf16.gmra.mrb[0].mxu0 %v1410
  %v3980 = vpop.f32.mrb[0].mxu0
  %v3981 = vadd.f32 %v3692, %v3980
  %v3982 = vpop.f32.mrb[0].mxu0
  %v3983 = vpop.f32.mrb[0].mxu0
  %v3984 = vadd.f32 %v3695, %v3983
  %v3985 = vpop.f32.mrb[0].mxu0
  %3986 = vmatprep.mubr.bf16.mxu0 0
  %3987 = vmatmul.mubr.bf16.gmra.mrb[0].mxu0 %v1441
  %v3988 = vpop.f32.mrb[0].mxu0
  %v3989 = vadd.f32 %v3700, %v3988
  %v3990 = vpop.f32.mrb[0].mxu0
  %v3991 = vpop.f32.mrb[0].mxu0
  %v3992 = vadd.f32 %v3703, %v3991
  %v3993 = vpop.f32.mrb[0].mxu0
  %3994 = vmatprep.mubr.bf16.mxu0 0
  %3995 = vmatmul.mubr.bf16.gmra.mrb[0].mxu0 %v1472
  %v3996 = vpop.f32.mrb[0].mxu0
  %v3997 = vadd.f32 %v3708, %v3996
  %v3998 = vpop.f32.mrb[0].mxu0
  %v3999 = vpop.f32.mrb[0].mxu0
  %v4000 = vadd.f32 %v3711, %v3999
  %v4001 = vpop.f32.mrb[0].mxu0
  %4002 = vmatprep.mubr.bf16.mxu0 0
  %4003 = vmatmul.mubr.bf16.gmra.mrb[0].mxu0 %v1503
  %v4004 = vpop.f32.mrb[0].mxu0
  %v4005 = vadd.f32 %v3716, %v4004
  %v4006 = vpop.f32.mrb[0].mxu0
  %v4007 = vpop.f32.mrb[0].mxu0
  %v4008 = vadd.f32 %v3719, %v4007
  %v4009 = vpop.f32.mrb[0].mxu0
  %4010 = vmatprep.mubr.bf16.mxu0 0
  %4011 = vmatmul.mubr.bf16.gmra.mrb[0].mxu0 %v1534
  %v4012 = vpop.f32.mrb[0].mxu0
  %v4013 = vadd.f32 %v3724, %v4012
  %v4014 = vpop.f32.mrb[0].mxu0
  %v4015 = vpop.f32.mrb[0].mxu0
  %v4016 = vadd.f32 %v3727, %v4015
  %v4017 = vpop.f32.mrb[0].mxu0
  %4018 = vmatprep.mubr.bf16.mxu0 0
  %4019 = vmatmul.mubr.bf16.gmra.mrb[0].mxu0 %v1565
  %v4020 = vpop.f32.mrb[0].mxu0
  %v4021 = vadd.f32 %v3732, %v4020
  %v4022 = vpop.f32.mrb[0].mxu0
  %v4023 = vpop.f32.mrb[0].mxu0
  %v4024 = vadd.f32 %v3735, %v4023
  %v4025 = vpop.f32.mrb[0].mxu0
  %4026 = vmatprep.mubr.bf16.mxu0 0
  %4027 = vmatmul.mubr.bf16.gmra.mrb[0].mxu0 %v1596
  %v4028 = vpop.f32.mrb[0].mxu0
  %v4029 = vadd.f32 %v3740, %v4028
  %v4030 = vpop.f32.mrb[0].mxu0
  %v4031 = vpop.f32.mrb[0].mxu0
  %v4032 = vadd.f32 %v3743, %v4031
  %v4033 = vpop.f32.mrb[0].mxu0
  %4034 = vmatprep.mubr.bf16.mxu0 0
  %4035 = vmatmul.mubr.bf16.gmra.mrb[0].mxu0 %v1627
  %v4036 = vpop.f32.mrb[0].mxu0
  %v4037 = vadd.f32 %v3748, %v4036
  %v4038 = vpop.f32.mrb[0].mxu0
  %v4039 = vpop.f32.mrb[0].mxu0
  %v4040 = vadd.f32 %v3751, %v4039
  %v4041 = vpop.f32.mrb[0].mxu0
  %4042 = vmatprep.mubr.bf16.mxu0 0
  %4043 = vmatmul.mubr.bf16.gmra.mrb[0].mxu0 %v1720
  %v4044 = vpop.f32.mrb[0].mxu0
  %v4045 = vadd.f32 %v3756, %v4044
  %v4046 = vpop.f32.mrb[0].mxu0
  %v4047 = vpop.f32.mrb[0].mxu0
  %v4048 = vadd.f32 %v3759, %v4047
  %v4049 = vpop.f32.mrb[0].mxu0
  %4050 = vmatprep.mubr.bf16.mxu0 0
  %4051 = vmatmul.mubr.bf16.gmra.mrb[0].mxu0 %v1751
  %v4052 = vpop.f32.mrb[0].mxu0
  %v4053 = vadd.f32 %v3764, %v4052
  %v4054 = vpop.f32.mrb[0].mxu0
  %v4055 = vpop.f32.mrb[0].mxu0
  %v4056 = vadd.f32 %v3767, %v4055
  %v4057 = vpop.f32.mrb[0].mxu0
  %4058 = vmatprep.mubr.bf16.mxu0 0
  %4059 = vmatmul.mubr.bf16.gmra.mrb[0].mxu0 %v1782
  %v4060 = vpop.f32.mrb[0].mxu0
  %v4061 = vadd.f32 %v3772, %v4060
  %v4062 = vpop.f32.mrb[0].mxu0
  %v4063 = vpop.f32.mrb[0].mxu0
  %v4064 = vadd.f32 %v3775, %v4063
  %v4065 = vpop.f32.mrb[0].mxu0
  %4066 = vmatprep.mubr.bf16.mxu0 0
  %4067 = vmatmul.mubr.bf16.gmra.mrb[0].mxu0 %v1813
  %v4068 = vpop.f32.mrb[0].mxu0
  %v4069 = vadd.f32 %v3780, %v4068
  %v4070 = vpop.f32.mrb[0].mxu0
  %v4071 = vpop.f32.mrb[0].mxu0
  %v4072 = vadd.f32 %v3783, %v4071
  %v4073 = vpop.f32.mrb[0].mxu0
  %4074 = vmatprep.mubr.bf16.mxu0 0
  %4075 = vmatmul.mubr.bf16.gmra.mrb[0].mxu0 %v1844
  %v4076 = vpop.f32.mrb[0].mxu0
  %v4077 = vadd.f32 %v3788, %v4076
  %v4078 = vpop.f32.mrb[0].mxu0
  %v4079 = vpop.f32.mrb[0].mxu0
  %v4080 = vadd.f32 %v3791, %v4079
  %v4081 = vpop.f32.mrb[0].mxu0
  %4082 = vmatprep.mubr.bf16.mxu0 0
  %4083 = vmatmul.mubr.bf16.gmra.mrb[0].mxu0 %v1875
  %v4084 = vpop.f32.mrb[0].mxu0
  %v4085 = vadd.f32 %v3796, %v4084
  %v4086 = vpop.f32.mrb[0].mxu0
  %v4087 = vpop.f32.mrb[0].mxu0
  %v4088 = vadd.f32 %v3799, %v4087
  %v4089 = vpop.f32.mrb[0].mxu0
  %4090 = vmatprep.mubr.bf16.mxu0 0
  %4091 = vmatmul.mubr.bf16.gmra.mrb[0].mxu0 %v1906
  %v4092 = vpop.f32.mrb[0].mxu0
  %v4093 = vadd.f32 %v3804, %v4092
  %v4094 = vpop.f32.mrb[0].mxu0
  %v4095 = vpop.f32.mrb[0].mxu0
  %v4096 = vadd.f32 %v3807, %v4095
  %v4097 = vpop.f32.mrb[0].mxu0
  %4098 = vmatprep.mubr.bf16.mxu0 0
  %4099 = vmatmul.mubr.bf16.gmra.mrb[0].mxu0 %v1937
  %v4100 = vpop.f32.mrb[0].mxu0
  %v4101 = vadd.f32 %v3812, %v4100
  %v4102 = vpop.f32.mrb[0].mxu0
  %v4103 = vpop.f32.mrb[0].mxu0
  %v4104 = vadd.f32 %v3815, %v4103
  %v4105 = vpop.f32.mrb[0].mxu0
  %4106 = vmatprep.mubr.bf16.mxu0 0
  %4107 = vmatmul.mubr.bf16.gmra.mrb[0].mxu0 %v1968
  %v4108 = vpop.f32.mrb[0].mxu0
  %v4109 = vadd.f32 %v3820, %v4108
  %v4110 = vpop.f32.mrb[0].mxu0
  %v4111 = vpop.f32.mrb[0].mxu0
  %v4112 = vadd.f32 %v3823, %v4111
  %v4113 = vpop.f32.mrb[0].mxu0
  %4114 = vmatprep.mubr.bf16.mxu0 0
  %4115 = vmatmul.mubr.bf16.gmra.mrb[0].mxu0 %v1999
  %v4116 = vpop.f32.mrb[0].mxu0
  %v4117 = vadd.f32 %v3828, %v4116
  %v4118 = vpop.f32.mrb[0].mxu0
  %v4119 = vpop.f32.mrb[0].mxu0
  %v4120 = vadd.f32 %v3831, %v4119
  %v4121 = vpop.f32.mrb[0].mxu0
  %4122 = vmatprep.mubr.bf16.mxu0 0
  %4123 = vmatmul.mubr.bf16.gmra.mrb[0].mxu0 %v2030
  %v4124 = vpop.f32.mrb[0].mxu0
  %v4125 = vadd.f32 %v3836, %v4124
  %v4126 = vpop.f32.mrb[0].mxu0
  %v4127 = vpop.f32.mrb[0].mxu0
  %v4128 = vadd.f32 %v3839, %v4127
  %v4129 = vpop.f32.mrb[0].mxu0
  %4130 = vmatprep.mubr.bf16.mxu0 0
  %4131 = vmatmul.mubr.bf16.gmra.mrb[0].mxu0 %v2061
  %v4132 = vpop.f32.mrb[0].mxu0
  %v4133 = vadd.f32 %v3844, %v4132
  %v4134 = vpop.f32.mrb[0].mxu0
  %v4135 = vpop.f32.mrb[0].mxu0
  %v4136 = vadd.f32 %v3847, %v4135
  %v4137 = vpop.f32.mrb[0].mxu0
  %4138 = vmatprep.mubr.bf16.mxu0 0
  %4139 = vmatmul.mubr.bf16.gmra.mrb[0].mxu0 %v2092
  %v4140 = vpop.f32.mrb[0].mxu0
  %v4141 = vadd.f32 %v3852, %v4140
  %v4142 = vpop.f32.mrb[0].mxu0
  %v4143 = vpop.f32.mrb[0].mxu0
  %v4144 = vadd.f32 %v3855, %v4143
  %v4145 = vpop.f32.mrb[0].mxu0
  %4146 = vmatprep.mubr.bf16.mxu0 0
  %4147 = vmatmul.mubr.bf16.gmra.mrb[0].mxu0 %v2123
  %v4148 = vpop.f32.mrb[0].mxu0
  %v4149 = vadd.f32 %v3860, %v4148
  %v4150 = vpop.f32.mrb[0].mxu0
  %v4151 = vpop.f32.mrb[0].mxu0
  %v4152 = vadd.f32 %v3863, %v4151
  %v4153 = vpop.f32.mrb[0].mxu0
  %4154 = vmatprep.mubr.bf16.mxu0 0
  %4155 = vmatmul.mubr.bf16.gmra.mrb[0].mxu0 %v2154
  %v4156 = vpop.f32.mrb[0].mxu0
  %v4157 = vadd.f32 %v3868, %v4156
  %v4158 = vpop.f32.mrb[0].mxu0
  %v4159 = vpop.f32.mrb[0].mxu0
  %v4160 = vadd.f32 %v3871, %v4159
  %v4161 = vpop.f32.mrb[0].mxu0
  %4162 = vmatprep.mubr.bf16.mxu0 0
  %4163 = vmatmul.mubr.bf16.gmra.mrb[0].mxu0 %v2185
  %v4164 = vpop.f32.mrb[0].mxu0
  %v4165 = vadd.f32 %v3876, %v4164
  %v4166 = vpop.f32.mrb[0].mxu0
  %v4167 = vpop.f32.mrb[0].mxu0
  %v4168 = vadd.f32 %v3879, %v4167
  %v4169 = vpop.f32.mrb[0].mxu0
  %4170 = vdwg.mxu0
  %v4171 = vadd.f32 %v3917, %v3920
  %v4172 = vadd.f32 %v4171, %v3925
  %v4173 = vadd.f32 %v4172, %v3928
  %v4174 = vadd.f32 %v4173, %v3933
  %v4175 = vadd.f32 %v4174, %v3936
  %v4176 = vadd.f32 %v4175, %v3941
  %v4177 = vadd.f32 %v4176, %v3944
  %v4178 = vadd.f32 %v4177, %v3949
  %v4179 = vadd.f32 %v4178, %v3952
  %v4180 = vadd.f32 %v4179, %v3957
  %v4181 = vadd.f32 %v4180, %v3960
  %v4182 = vadd.f32 %v4181, %v3965
  %v4183 = vadd.f32 %v4182, %v3968
  %v4184 = vadd.f32 %v4183, %v3973
  %v4185 = vadd.f32 %v4184, %v3976
  %v4186 = vadd.f32 %v4185, %v3981
  %v4187 = vadd.f32 %v4186, %v3984
  %v4188 = vadd.f32 %v4187, %v3989
  %v4189 = vadd.f32 %v4188, %v3992
  %v4190 = vadd.f32 %v4189, %v3997
  %v4191 = vadd.f32 %v4190, %v4000
  %v4192 = vadd.f32 %v4191, %v4005
  %v4193 = vadd.f32 %v4192, %v4008
  %v4194 = vadd.f32 %v4193, %v4013
  %v4195 = vadd.f32 %v4194, %v4016
  %v4196 = vadd.f32 %v4195, %v4021
  %v4197 = vadd.f32 %v4196, %v4024
  %v4198 = vadd.f32 %v4197, %v4029
  %v4199 = vadd.f32 %v4198, %v4032
  %v4200 = vadd.f32 %v4199, %v4037
  %v4201 = vadd.f32 %v4200, %v4040
  %v4202 = vadd.f32 %v4201, %v4045
  %v4203 = vadd.f32 %v4202, %v4048
  %v4204 = vadd.f32 %v4203, %v4053
  %v4205 = vadd.f32 %v4204, %v4056
  %v4206 = vadd.f32 %v4205, %v4061
  %v4207 = vadd.f32 %v4206, %v4064
  %v4208 = vadd.f32 %v4207, %v4069
  %v4209 = vadd.f32 %v4208, %v4072
  %v4210 = vadd.f32 %v4209, %v4077
  %v4211 = vadd.f32 %v4210, %v4080
  %v4212 = vadd.f32 %v4211, %v4085
  %v4213 = vadd.f32 %v4212, %v4088
  %v4214 = vadd.f32 %v4213, %v4093
  %v4215 = vadd.f32 %v4214, %v4096
  %v4216 = vadd.f32 %v4215, %v4101
  %v4217 = vadd.f32 %v4216, %v4104
  %v4218 = vadd.f32 %v4217, %v4109
  %v4219 = vadd.f32 %v4218, %v4112
  %v4220 = vadd.f32 %v4219, %v4117
  %v4221 = vadd.f32 %v4220, %v4120
  %v4222 = vadd.f32 %v4221, %v4125
  %v4223 = vadd.f32 %v4222, %v4128
  %v4224 = vadd.f32 %v4223, %v4133
  %v4225 = vadd.f32 %v4224, %v4136
  %v4226 = vadd.f32 %v4225, %v4141
  %v4227 = vadd.f32 %v4226, %v4144
  %v4228 = vadd.f32 %v4227, %v4149
  %v4229 = vadd.f32 %v4228, %v4152
  %v4230 = vadd.f32 %v4229, %v4157
  %v4231 = vadd.f32 %v4230, %v4160
  %v4232 = vadd.f32 %v4231, %v4165
  %v4233 = vadd.f32 %v4232, %v4168
  %v4234 = vrot.slane %v4233, 4
  %v4235 = vadd.f32 %v4233, %v4234
  %v4236 = vrot.slane %v4235, 2
  %v4237 = vadd.f32 %v4235, %v4236
  %v4238 = vrot.slane %v4237, 1
  %v4239 = vadd.f32 %v4237, %v4238
  %v4240 = vmul.f32 %v4239, 0.001953125
  %v4241 = vmul.f32 %v3917, %v3917
  %v4242 = vmul.f32 %v3920, %v3920
  %v4243 = vmul.f32 %v3925, %v3925
  %v4244 = vmul.f32 %v3928, %v3928
  %v4245 = vmul.f32 %v3933, %v3933
  %v4246 = vmul.f32 %v3936, %v3936
  %v4247 = vmul.f32 %v3941, %v3941
  %v4248 = vmul.f32 %v3944, %v3944
  %v4249 = vmul.f32 %v3949, %v3949
  %v4250 = vmul.f32 %v3952, %v3952
  %v4251 = vmul.f32 %v3957, %v3957
  %v4252 = vmul.f32 %v3960, %v3960
  %v4253 = vmul.f32 %v3965, %v3965
  %v4254 = vmul.f32 %v3968, %v3968
  %v4255 = vmul.f32 %v3973, %v3973
  %v4256 = vmul.f32 %v3976, %v3976
  %v4257 = vmul.f32 %v3981, %v3981
  %v4258 = vmul.f32 %v3984, %v3984
  %v4259 = vmul.f32 %v3989, %v3989
  %v4260 = vmul.f32 %v3992, %v3992
  %v4261 = vmul.f32 %v3997, %v3997
  %v4262 = vmul.f32 %v4000, %v4000
  %v4263 = vmul.f32 %v4005, %v4005
  %v4264 = vmul.f32 %v4008, %v4008
  %v4265 = vmul.f32 %v4013, %v4013
  %v4266 = vmul.f32 %v4016, %v4016
  %v4267 = vmul.f32 %v4021, %v4021
  %v4268 = vmul.f32 %v4024, %v4024
  %v4269 = vmul.f32 %v4029, %v4029
  %v4270 = vmul.f32 %v4032, %v4032
  %v4271 = vmul.f32 %v4037, %v4037
  %v4272 = vmul.f32 %v4040, %v4040
  %v4273 = vmul.f32 %v4045, %v4045
  %v4274 = vmul.f32 %v4048, %v4048
  %v4275 = vmul.f32 %v4053, %v4053
  %v4276 = vmul.f32 %v4056, %v4056
  %v4277 = vmul.f32 %v4061, %v4061
  %v4278 = vmul.f32 %v4064, %v4064
  %v4279 = vmul.f32 %v4069, %v4069
  %v4280 = vmul.f32 %v4072, %v4072
  %v4281 = vmul.f32 %v4077, %v4077
  %v4282 = vmul.f32 %v4080, %v4080
  %v4283 = vmul.f32 %v4085, %v4085
  %v4284 = vmul.f32 %v4088, %v4088
  %v4285 = vmul.f32 %v4093, %v4093
  %v4286 = vmul.f32 %v4096, %v4096
  %v4287 = vmul.f32 %v4101, %v4101
  %v4288 = vmul.f32 %v4104, %v4104
  %v4289 = vmul.f32 %v4109, %v4109
  %v4290 = vmul.f32 %v4112, %v4112
  %v4291 = vmul.f32 %v4117, %v4117
  %v4292 = vmul.f32 %v4120, %v4120
  %v4293 = vmul.f32 %v4125, %v4125
  %v4294 = vmul.f32 %v4128, %v4128
  %v4295 = vmul.f32 %v4133, %v4133
  %v4296 = vmul.f32 %v4136, %v4136
  %v4297 = vmul.f32 %v4141, %v4141
  %v4298 = vmul.f32 %v4144, %v4144
  %v4299 = vmul.f32 %v4149, %v4149
  %v4300 = vmul.f32 %v4152, %v4152
  %v4301 = vmul.f32 %v4157, %v4157
  %v4302 = vmul.f32 %v4160, %v4160
  %v4303 = vmul.f32 %v4165, %v4165
  %v4304 = vmul.f32 %v4168, %v4168
  %v4305 = vadd.f32 %v4241, %v4242
  %v4306 = vadd.f32 %v4305, %v4243
  %v4307 = vadd.f32 %v4306, %v4244
  %v4308 = vadd.f32 %v4307, %v4245
  %v4309 = vadd.f32 %v4308, %v4246
  %v4310 = vadd.f32 %v4309, %v4247
  %v4311 = vadd.f32 %v4310, %v4248
  %v4312 = vadd.f32 %v4311, %v4249
  %v4313 = vadd.f32 %v4312, %v4250
  %v4314 = vadd.f32 %v4313, %v4251
  %v4315 = vadd.f32 %v4314, %v4252
  %v4316 = vadd.f32 %v4315, %v4253
  %v4317 = vadd.f32 %v4316, %v4254
  %v4318 = vadd.f32 %v4317, %v4255
  %v4319 = vadd.f32 %v4318, %v4256
  %v4320 = vadd.f32 %v4319, %v4257
  %v4321 = vadd.f32 %v4320, %v4258
  %v4322 = vadd.f32 %v4321, %v4259
  %v4323 = vadd.f32 %v4322, %v4260
  %v4324 = vadd.f32 %v4323, %v4261
  %v4325 = vadd.f32 %v4324, %v4262
  %v4326 = vadd.f32 %v4325, %v4263
  %v4327 = vadd.f32 %v4326, %v4264
  %v4328 = vadd.f32 %v4327, %v4265
  %v4329 = vadd.f32 %v4328, %v4266
  %v4330 = vadd.f32 %v4329, %v4267
  %v4331 = vadd.f32 %v4330, %v4268
  %v4332 = vadd.f32 %v4331, %v4269
  %v4333 = vadd.f32 %v4332, %v4270
  %v4334 = vadd.f32 %v4333, %v4271
  %v4335 = vadd.f32 %v4334, %v4272
  %v4336 = vadd.f32 %v4335, %v4273
  %v4337 = vadd.f32 %v4336, %v4274
  %v4338 = vadd.f32 %v4337, %v4275
  %v4339 = vadd.f32 %v4338, %v4276
  %v4340 = vadd.f32 %v4339, %v4277
  %v4341 = vadd.f32 %v4340, %v4278
  %v4342 = vadd.f32 %v4341, %v4279
  %v4343 = vadd.f32 %v4342, %v4280
  %v4344 = vadd.f32 %v4343, %v4281
  %v4345 = vadd.f32 %v4344, %v4282
  %v4346 = vadd.f32 %v4345, %v4283
  %v4347 = vadd.f32 %v4346, %v4284
  %v4348 = vadd.f32 %v4347, %v4285
  %v4349 = vadd.f32 %v4348, %v4286
  %v4350 = vadd.f32 %v4349, %v4287
  %v4351 = vadd.f32 %v4350, %v4288
  %v4352 = vadd.f32 %v4351, %v4289
  %v4353 = vadd.f32 %v4352, %v4290
  %v4354 = vadd.f32 %v4353, %v4291
  %v4355 = vadd.f32 %v4354, %v4292
  %v4356 = vadd.f32 %v4355, %v4293
  %v4357 = vadd.f32 %v4356, %v4294
  %v4358 = vadd.f32 %v4357, %v4295
  %v4359 = vadd.f32 %v4358, %v4296
  %v4360 = vadd.f32 %v4359, %v4297
  %v4361 = vadd.f32 %v4360, %v4298
  %v4362 = vadd.f32 %v4361, %v4299
  %v4363 = vadd.f32 %v4362, %v4300
  %v4364 = vadd.f32 %v4363, %v4301
  %v4365 = vadd.f32 %v4364, %v4302
  %v4366 = vadd.f32 %v4365, %v4303
  %v4367 = vadd.f32 %v4366, %v4304
  %v4368 = vrot.slane %v4367, 4
  %v4369 = vadd.f32 %v4367, %v4368
  %v4370 = vrot.slane %v4369, 2
  %v4371 = vadd.f32 %v4369, %v4370
  %v4372 = vrot.slane %v4371, 1
  %v4373 = vadd.f32 %v4371, %v4372
  %v4374 = vmul.f32 %v4373, 0.001953125
  %v4375 = vmul.f32 %v4240, %v4240
  %v4376 = vsub.f32 %v4374, %v4375
  %v4377 = vmax.f32 %v4376, 0.0
  %v4378 = vld [vmem:[%s2] sm:$0x1]
  %v4379 = vadd.f32 %v4377, 1e-05
  %v4380 = vrsqrt.pop %v4379
  %v4381 = vmul.f32 %v4378, %v4380
  %v4382 = vld [vmem:[%s3] sm:$0x1]
  %v4383 = vmul.f32 %v4240, %v4381
  %v4384 = vsub.f32 %v4382, %v4383
  %v4386 = vlaneseq
  %v4387 = vshrl.u32 %v4386, 7
  %v4388 = vsub.s32 0, %v4387
  %v4389 = vrot.slane %v4381, %v4388
  %v4391 = vmul.f32 %v3917, %v4389
  %v4392 = vmul.f32 %v3920, %v4389
  %v4393 = vmul.f32 %v3925, %v4389
  %v4394 = vmul.f32 %v3928, %v4389
  %v4395 = vmul.f32 %v3933, %v4389
  %v4396 = vmul.f32 %v3936, %v4389
  %v4397 = vmul.f32 %v3941, %v4389
  %v4398 = vmul.f32 %v3944, %v4389
  %v4399 = vmul.f32 %v3949, %v4389
  %v4400 = vmul.f32 %v3952, %v4389
  %v4401 = vmul.f32 %v3957, %v4389
  %v4402 = vmul.f32 %v3960, %v4389
  %v4403 = vmul.f32 %v3965, %v4389
  %v4404 = vmul.f32 %v3968, %v4389
  %v4405 = vmul.f32 %v3973, %v4389
  %v4406 = vmul.f32 %v3976, %v4389
  %v4407 = vmul.f32 %v3981, %v4389
  %v4408 = vmul.f32 %v3984, %v4389
  %v4409 = vmul.f32 %v3989, %v4389
  %v4410 = vmul.f32 %v3992, %v4389
  %v4411 = vmul.f32 %v3997, %v4389
  %v4412 = vmul.f32 %v4000, %v4389
  %v4413 = vmul.f32 %v4005, %v4389
  %v4414 = vmul.f32 %v4008, %v4389
  %v4415 = vmul.f32 %v4013, %v4389
  %v4416 = vmul.f32 %v4016, %v4389
  %v4417 = vmul.f32 %v4021, %v4389
  %v4418 = vmul.f32 %v4024, %v4389
  %v4419 = vmul.f32 %v4029, %v4389
  %v4420 = vmul.f32 %v4032, %v4389
  %v4421 = vmul.f32 %v4037, %v4389
  %v4422 = vmul.f32 %v4040, %v4389
  %v4423 = vmul.f32 %v4045, %v4389
  %v4424 = vmul.f32 %v4048, %v4389
  %v4425 = vmul.f32 %v4053, %v4389
  %v4426 = vmul.f32 %v4056, %v4389
  %v4427 = vmul.f32 %v4061, %v4389
  %v4428 = vmul.f32 %v4064, %v4389
  %v4429 = vmul.f32 %v4069, %v4389
  %v4430 = vmul.f32 %v4072, %v4389
  %v4431 = vmul.f32 %v4077, %v4389
  %v4432 = vmul.f32 %v4080, %v4389
  %v4433 = vmul.f32 %v4085, %v4389
  %v4434 = vmul.f32 %v4088, %v4389
  %v4435 = vmul.f32 %v4093, %v4389
  %v4436 = vmul.f32 %v4096, %v4389
  %v4437 = vmul.f32 %v4101, %v4389
  %v4438 = vmul.f32 %v4104, %v4389
  %v4439 = vmul.f32 %v4109, %v4389
  %v4440 = vmul.f32 %v4112, %v4389
  %v4441 = vmul.f32 %v4117, %v4389
  %v4442 = vmul.f32 %v4120, %v4389
  %v4443 = vmul.f32 %v4125, %v4389
  %v4444 = vmul.f32 %v4128, %v4389
  %v4445 = vmul.f32 %v4133, %v4389
  %v4446 = vmul.f32 %v4136, %v4389
  %v4447 = vmul.f32 %v4141, %v4389
  %v4448 = vmul.f32 %v4144, %v4389
  %v4449 = vmul.f32 %v4149, %v4389
  %v4450 = vmul.f32 %v4152, %v4389
  %v4451 = vmul.f32 %v4157, %v4389
  %v4452 = vmul.f32 %v4160, %v4389
  %v4453 = vmul.f32 %v4165, %v4389
  %v4454 = vmul.f32 %v4168, %v4389
  %v4456 = vlaneseq
  %v4457 = vshrl.u32 %v4456, 7
  %v4458 = vsub.s32 0, %v4457
  %v4459 = vrot.slane %v4384, %v4458
  %v4461 = vadd.f32 %v4391, %v4459
  %v4462 = vadd.f32 %v4392, %v4459
  %v4463 = vadd.f32 %v4393, %v4459
  %v4464 = vadd.f32 %v4394, %v4459
  %v4465 = vadd.f32 %v4395, %v4459
  %v4466 = vadd.f32 %v4396, %v4459
  %v4467 = vadd.f32 %v4397, %v4459
  %v4468 = vadd.f32 %v4398, %v4459
  %v4469 = vadd.f32 %v4399, %v4459
  %v4470 = vadd.f32 %v4400, %v4459
  %v4471 = vadd.f32 %v4401, %v4459
  %v4472 = vadd.f32 %v4402, %v4459
  %v4473 = vadd.f32 %v4403, %v4459
  %v4474 = vadd.f32 %v4404, %v4459
  %v4475 = vadd.f32 %v4405, %v4459
  %v4476 = vadd.f32 %v4406, %v4459
  %v4477 = vadd.f32 %v4407, %v4459
  %v4478 = vadd.f32 %v4408, %v4459
  %v4479 = vadd.f32 %v4409, %v4459
  %v4480 = vadd.f32 %v4410, %v4459
  %v4481 = vadd.f32 %v4411, %v4459
  %v4482 = vadd.f32 %v4412, %v4459
  %v4483 = vadd.f32 %v4413, %v4459
  %v4484 = vadd.f32 %v4414, %v4459
  %v4485 = vadd.f32 %v4415, %v4459
  %v4486 = vadd.f32 %v4416, %v4459
  %v4487 = vadd.f32 %v4417, %v4459
  %v4488 = vadd.f32 %v4418, %v4459
  %v4489 = vadd.f32 %v4419, %v4459
  %v4490 = vadd.f32 %v4420, %v4459
  %v4491 = vadd.f32 %v4421, %v4459
  %v4492 = vadd.f32 %v4422, %v4459
  %v4493 = vadd.f32 %v4423, %v4459
  %v4494 = vadd.f32 %v4424, %v4459
  %v4495 = vadd.f32 %v4425, %v4459
  %v4496 = vadd.f32 %v4426, %v4459
  %v4497 = vadd.f32 %v4427, %v4459
  %v4498 = vadd.f32 %v4428, %v4459
  %v4499 = vadd.f32 %v4429, %v4459
  %v4500 = vadd.f32 %v4430, %v4459
  %v4501 = vadd.f32 %v4431, %v4459
  %v4502 = vadd.f32 %v4432, %v4459
  %v4503 = vadd.f32 %v4433, %v4459
  %v4504 = vadd.f32 %v4434, %v4459
  %v4505 = vadd.f32 %v4435, %v4459
  %v4506 = vadd.f32 %v4436, %v4459
  %v4507 = vadd.f32 %v4437, %v4459
  %v4508 = vadd.f32 %v4438, %v4459
  %v4509 = vadd.f32 %v4439, %v4459
  %v4510 = vadd.f32 %v4440, %v4459
  %v4511 = vadd.f32 %v4441, %v4459
  %v4512 = vadd.f32 %v4442, %v4459
  %v4513 = vadd.f32 %v4443, %v4459
  %v4514 = vadd.f32 %v4444, %v4459
  %v4515 = vadd.f32 %v4445, %v4459
  %v4516 = vadd.f32 %v4446, %v4459
  %v4517 = vadd.f32 %v4447, %v4459
  %v4518 = vadd.f32 %v4448, %v4459
  %v4519 = vadd.f32 %v4449, %v4459
  %v4520 = vadd.f32 %v4450, %v4459
  %v4521 = vadd.f32 %v4451, %v4459
  %v4522 = vadd.f32 %v4452, %v4459
  %v4523 = vadd.f32 %v4453, %v4459
  %v4524 = vadd.f32 %v4454, %v4459
  %v4525 = vmax.f32 %v4461, 0.0
  %v4526 = vmax.f32 %v4462, 0.0
  %v4527 = vmax.f32 %v4463, 0.0
  %v4528 = vmax.f32 %v4464, 0.0
  %v4529 = vmax.f32 %v4465, 0.0
  %v4530 = vmax.f32 %v4466, 0.0
  %v4531 = vmax.f32 %v4467, 0.0
  %v4532 = vmax.f32 %v4468, 0.0
  %v4533 = vmax.f32 %v4469, 0.0
  %v4534 = vmax.f32 %v4470, 0.0
  %v4535 = vmax.f32 %v4471, 0.0
  %v4536 = vmax.f32 %v4472, 0.0
  %v4537 = vmax.f32 %v4473, 0.0
  %v4538 = vmax.f32 %v4474, 0.0
  %v4539 = vmax.f32 %v4475, 0.0
  %v4540 = vmax.f32 %v4476, 0.0
  %v4541 = vmax.f32 %v4477, 0.0
  %v4542 = vmax.f32 %v4478, 0.0
  %v4543 = vmax.f32 %v4479, 0.0
  %v4544 = vmax.f32 %v4480, 0.0
  %v4545 = vmax.f32 %v4481, 0.0
  %v4546 = vmax.f32 %v4482, 0.0
  %v4547 = vmax.f32 %v4483, 0.0
  %v4548 = vmax.f32 %v4484, 0.0
  %v4549 = vmax.f32 %v4485, 0.0
  %v4550 = vmax.f32 %v4486, 0.0
  %v4551 = vmax.f32 %v4487, 0.0
  %v4552 = vmax.f32 %v4488, 0.0
  %v4553 = vmax.f32 %v4489, 0.0
  %v4554 = vmax.f32 %v4490, 0.0
  %v4555 = vmax.f32 %v4491, 0.0
  %v4556 = vmax.f32 %v4492, 0.0
  %v4557 = vmax.f32 %v4493, 0.0
  %v4558 = vmax.f32 %v4494, 0.0
  %v4559 = vmax.f32 %v4495, 0.0
  %v4560 = vmax.f32 %v4496, 0.0
  %v4561 = vmax.f32 %v4497, 0.0
  %v4562 = vmax.f32 %v4498, 0.0
  %v4563 = vmax.f32 %v4499, 0.0
  %v4564 = vmax.f32 %v4500, 0.0
  %v4565 = vmax.f32 %v4501, 0.0
  %v4566 = vmax.f32 %v4502, 0.0
  %v4567 = vmax.f32 %v4503, 0.0
  %v4568 = vmax.f32 %v4504, 0.0
  %v4569 = vmax.f32 %v4505, 0.0
  %v4570 = vmax.f32 %v4506, 0.0
  %v4571 = vmax.f32 %v4507, 0.0
  %v4572 = vmax.f32 %v4508, 0.0
  %v4573 = vmax.f32 %v4509, 0.0
  %v4574 = vmax.f32 %v4510, 0.0
  %v4575 = vmax.f32 %v4511, 0.0
  %v4576 = vmax.f32 %v4512, 0.0
  %v4577 = vmax.f32 %v4513, 0.0
  %v4578 = vmax.f32 %v4514, 0.0
  %v4579 = vmax.f32 %v4515, 0.0
  %v4580 = vmax.f32 %v4516, 0.0
  %v4581 = vmax.f32 %v4517, 0.0
  %v4582 = vmax.f32 %v4518, 0.0
  %v4583 = vmax.f32 %v4519, 0.0
  %v4584 = vmax.f32 %v4520, 0.0
  %v4585 = vmax.f32 %v4521, 0.0
  %v4586 = vmax.f32 %v4522, 0.0
  %v4587 = vmax.f32 %v4523, 0.0
  %v4588 = vmax.f32 %v4524, 0.0
  %v4589 = vmax.f32 %v4525, %v4527
  %v4590 = vmax.f32 %v4526, %v4528
  %v4591 = vmax.f32 %v4529, %v4531
  %v4592 = vmax.f32 %v4530, %v4532
  %v4593 = vmax.f32 %v4533, %v4535
  %v4594 = vmax.f32 %v4534, %v4536
  %v4595 = vmax.f32 %v4537, %v4539
  %v4596 = vmax.f32 %v4538, %v4540
  %v4597 = vmax.f32 %v4541, %v4543
  %v4598 = vmax.f32 %v4542, %v4544
  %v4599 = vmax.f32 %v4545, %v4547
  %v4600 = vmax.f32 %v4546, %v4548
  %v4601 = vmax.f32 %v4549, %v4551
  %v4602 = vmax.f32 %v4550, %v4552
  %v4603 = vmax.f32 %v4553, %v4555
  %v4604 = vmax.f32 %v4554, %v4556
  %v4605 = vmax.f32 %v4557, %v4559
  %v4606 = vmax.f32 %v4558, %v4560
  %v4607 = vmax.f32 %v4561, %v4563
  %v4608 = vmax.f32 %v4562, %v4564
  %v4609 = vmax.f32 %v4565, %v4567
  %v4610 = vmax.f32 %v4566, %v4568
  %v4611 = vmax.f32 %v4569, %v4571
  %v4612 = vmax.f32 %v4570, %v4572
  %v4613 = vmax.f32 %v4573, %v4575
  %v4614 = vmax.f32 %v4574, %v4576
  %v4615 = vmax.f32 %v4577, %v4579
  %v4616 = vmax.f32 %v4578, %v4580
  %v4617 = vmax.f32 %v4581, %v4583
  %v4618 = vmax.f32 %v4582, %v4584
  %v4619 = vmax.f32 %v4585, %v4587
  %v4620 = vmax.f32 %v4586, %v4588
  %4621 = vst [vmem:[#allocation3] sm:$0xff] %v4589
  %4622 = vst [vmem:[#allocation3 + $0x8] sm:$0xff] %v4590
  %4623 = vst [vmem:[#allocation3 + $0x10] sm:$0xff] %v4591
  %4624 = vst [vmem:[#allocation3 + $0x18] sm:$0xff] %v4592
  %4625 = vst [vmem:[#allocation3 + $0x20] sm:$0xff] %v4593
  %4626 = vst [vmem:[#allocation3 + $0x28] sm:$0xff] %v4594
  %4627 = vst [vmem:[#allocation3 + $0x30] sm:$0xff] %v4595
  %4628 = vst [vmem:[#allocation3 + $0x38] sm:$0xff] %v4596
  %4629 = vst [vmem:[#allocation3 + $0x40] sm:$0xff] %v4597
  %4630 = vst [vmem:[#allocation3 + $0x48] sm:$0xff] %v4598
  %4631 = vst [vmem:[#allocation3 + $0x50] sm:$0xff] %v4599
  %4632 = vst [vmem:[#allocation3 + $0x58] sm:$0xff] %v4600
  %4633 = vst [vmem:[#allocation3 + $0x60] sm:$0xff] %v4601
  %4634 = vst [vmem:[#allocation3 + $0x68] sm:$0xff] %v4602
  %4635 = vst [vmem:[#allocation3 + $0x70] sm:$0xff] %v4603
  %4636 = vst [vmem:[#allocation3 + $0x78] sm:$0xff] %v4604
  %4637 = vst [vmem:[#allocation3 + $0x80] sm:$0xff] %v4605
  %4638 = vst [vmem:[#allocation3 + $0x88] sm:$0xff] %v4606
  %4639 = vst [vmem:[#allocation3 + $0x90] sm:$0xff] %v4607
  %4640 = vst [vmem:[#allocation3 + $0x98] sm:$0xff] %v4608
  %4641 = vst [vmem:[#allocation3 + $0xa0] sm:$0xff] %v4609
  %4642 = vst [vmem:[#allocation3 + $0xa8] sm:$0xff] %v4610
  %4643 = vst [vmem:[#allocation3 + $0xb0] sm:$0xff] %v4611
  %4644 = vst [vmem:[#allocation3 + $0xb8] sm:$0xff] %v4612
  %4645 = vst [vmem:[#allocation3 + $0xc0] sm:$0xff] %v4613
  %4646 = vst [vmem:[#allocation3 + $0xc8] sm:$0xff] %v4614
  %4647 = vst [vmem:[#allocation3 + $0xd0] sm:$0xff] %v4615
  %4648 = vst [vmem:[#allocation3 + $0xd8] sm:$0xff] %v4616
  %4649 = vst [vmem:[#allocation3 + $0xe0] sm:$0xff] %v4617
  %4650 = vst [vmem:[#allocation3 + $0xe8] sm:$0xff] %v4618
  %4651 = vst [vmem:[#allocation3 + $0xf0] sm:$0xff] %v4619
  %4652 = vst [vmem:[#allocation3 + $0xf8] sm:$0xff] %v4620
  %v4653 = vld [vmem:[#allocation3] ss:$2 sm:$0xff]
  %s4654 = scalar_lea.vmem [#allocation3], 16
  %v4655 = vld [vmem:[%s4654] ss:$2 sm:$0xff]
  %s4656 = scalar_lea.vmem [#allocation3], 32
  %v4657 = vld [vmem:[%s4656] ss:$2 sm:$0xff]
  %s4658 = scalar_lea.vmem [#allocation3], 48
  %v4659 = vld [vmem:[%s4658] ss:$2 sm:$0xff]
  %s4660 = scalar_lea.vmem [#allocation3], 64
  %v4661 = vld [vmem:[%s4660] ss:$2 sm:$0xff]
  %s4662 = scalar_lea.vmem [#allocation3], 80
  %v4663 = vld [vmem:[%s4662] ss:$2 sm:$0xff]
  %s4664 = scalar_lea.vmem [#allocation3], 96
  %v4665 = vld [vmem:[%s4664] ss:$2 sm:$0xff]
  %s4666 = scalar_lea.vmem [#allocation3], 112
  %v4667 = vld [vmem:[%s4666] ss:$2 sm:$0xff]
  %s4668 = scalar_lea.vmem [#allocation3], 128
  %v4669 = vld [vmem:[%s4668] ss:$2 sm:$0xff]
  %s4670 = scalar_lea.vmem [#allocation3], 144
  %v4671 = vld [vmem:[%s4670] ss:$2 sm:$0xff]
  %s4672 = scalar_lea.vmem [#allocation3], 160
  %v4673 = vld [vmem:[%s4672] ss:$2 sm:$0xff]
  %s4674 = scalar_lea.vmem [#allocation3], 176
  %v4675 = vld [vmem:[%s4674] ss:$2 sm:$0xff]
  %s4676 = scalar_lea.vmem [#allocation3], 192
  %v4677 = vld [vmem:[%s4676] ss:$2 sm:$0xff]
  %s4678 = scalar_lea.vmem [#allocation3], 208
  %v4679 = vld [vmem:[%s4678] ss:$2 sm:$0xff]
  %s4680 = scalar_lea.vmem [#allocation3], 224
  %v4681 = vld [vmem:[%s4680] ss:$2 sm:$0xff]
  %s4682 = scalar_lea.vmem [#allocation3], 240
  %v4683 = vld [vmem:[%s4682] ss:$2 sm:$0xff]
  %s4684 = scalar_lea.vmem [#allocation3], 1
  %v4685 = vld [vmem:[%s4684] ss:$2 sm:$0xff]
  %s4686 = scalar_lea.vmem [#allocation3], 17
  %v4687 = vld [vmem:[%s4686] ss:$2 sm:$0xff]
  %s4688 = scalar_lea.vmem [#allocation3], 33
  %v4689 = vld [vmem:[%s4688] ss:$2 sm:$0xff]
  %s4690 = scalar_lea.vmem [#allocation3], 49
  %v4691 = vld [vmem:[%s4690] ss:$2 sm:$0xff]
  %s4692 = scalar_lea.vmem [#allocation3], 65
  %v4693 = vld [vmem:[%s4692] ss:$2 sm:$0xff]
  %s4694 = scalar_lea.vmem [#allocation3], 81
  %v4695 = vld [vmem:[%s4694] ss:$2 sm:$0xff]
  %s4696 = scalar_lea.vmem [#allocation3], 97
  %v4697 = vld [vmem:[%s4696] ss:$2 sm:$0xff]
  %s4698 = scalar_lea.vmem [#allocation3], 113
  %v4699 = vld [vmem:[%s4698] ss:$2 sm:$0xff]
  %s4700 = scalar_lea.vmem [#allocation3], 129
  %v4701 = vld [vmem:[%s4700] ss:$2 sm:$0xff]
  %s4702 = scalar_lea.vmem [#allocation3], 145
  %v4703 = vld [vmem:[%s4702] ss:$2 sm:$0xff]
  %s4704 = scalar_lea.vmem [#allocation3], 161
  %v4705 = vld [vmem:[%s4704] ss:$2 sm:$0xff]
  %s4706 = scalar_lea.vmem [#allocation3], 177
  %v4707 = vld [vmem:[%s4706] ss:$2 sm:$0xff]
  %s4708 = scalar_lea.vmem [#allocation3], 193
  %v4709 = vld [vmem:[%s4708] ss:$2 sm:$0xff]
  %s4710 = scalar_lea.vmem [#allocation3], 209
  %v4711 = vld [vmem:[%s4710] ss:$2 sm:$0xff]
  %s4712 = scalar_lea.vmem [#allocation3], 225
  %v4713 = vld [vmem:[%s4712] ss:$2 sm:$0xff]
  %s4714 = scalar_lea.vmem [#allocation3], 241
  %v4715 = vld [vmem:[%s4714] ss:$2 sm:$0xff]
  %v4716 = vmax.f32 %v4653, %v4685
  %v4717 = vmax.f32 %v4655, %v4687
  %v4718 = vmax.f32 %v4657, %v4689
  %v4719 = vmax.f32 %v4659, %v4691
  %v4720 = vmax.f32 %v4661, %v4693
  %v4721 = vmax.f32 %v4663, %v4695
  %v4722 = vmax.f32 %v4665, %v4697
  %v4723 = vmax.f32 %v4667, %v4699
  %v4724 = vmax.f32 %v4669, %v4701
  %v4725 = vmax.f32 %v4671, %v4703
  %v4726 = vmax.f32 %v4673, %v4705
  %v4727 = vmax.f32 %v4675, %v4707
  %v4728 = vmax.f32 %v4677, %v4709
  %v4729 = vmax.f32 %v4679, %v4711
  %v4730 = vmax.f32 %v4681, %v4713
  %v4731 = vmax.f32 %v4683, %v4715
  %v4732 = vpack.c.bf16 %v4716, %v4716
  %v4733 = vpack.c.bf16 %v4717, %v4717
  %v4734 = vpack.c.bf16 %v4718, %v4718
  %v4735 = vpack.c.bf16 %v4719, %v4719
  %v4736 = vpack.c.bf16 %v4720, %v4720
  %v4737 = vpack.c.bf16 %v4721, %v4721
  %v4738 = vpack.c.bf16 %v4722, %v4722
  %v4739 = vpack.c.bf16 %v4723, %v4723
  %v4740 = vpack.c.bf16 %v4724, %v4724
  %v4741 = vpack.c.bf16 %v4725, %v4725
  %v4742 = vpack.c.bf16 %v4726, %v4726
  %v4743 = vpack.c.bf16 %v4727, %v4727
  %v4744 = vpack.c.bf16 %v4728, %v4728
  %v4745 = vpack.c.bf16 %v4729, %v4729
  %v4746 = vpack.c.bf16 %v4730, %v4730
  %v4747 = vpack.c.bf16 %v4731, %v4731
  %4748 = vst [vmem:[%s4] sm:$0xf] %v4732
  %4749 = vst [vmem:[%s4 + $0x4] sm:$0xf] %v4733
  %4750 = vst [vmem:[%s4 + $0x8] sm:$0xf] %v4734
  %4751 = vst [vmem:[%s4 + $0xc] sm:$0xf] %v4735
  %4752 = vst [vmem:[%s4 + $0x10] sm:$0xf] %v4736
  %4753 = vst [vmem:[%s4 + $0x14] sm:$0xf] %v4737
  %4754 = vst [vmem:[%s4 + $0x18] sm:$0xf] %v4738
  %4755 = vst [vmem:[%s4 + $0x1c] sm:$0xf] %v4739
  %4756 = vst [vmem:[%s4 + $0x20] sm:$0xf] %v4740
  %4757 = vst [vmem:[%s4 + $0x24] sm:$0xf] %v4741
  %4758 = vst [vmem:[%s4 + $0x28] sm:$0xf] %v4742
  %4759 = vst [vmem:[%s4 + $0x2c] sm:$0xf] %v4743
  %4760 = vst [vmem:[%s4 + $0x30] sm:$0xf] %v4744
  %4761 = vst [vmem:[%s4 + $0x34] sm:$0xf] %v4745
  %4762 = vst [vmem:[%s4 + $0x38] sm:$0xf] %v4746
  %4763 = vst [vmem:[%s4 + $0x3c] sm:$0xf] %v4747
  // Predicated region
  $region18: #{_lambda_.2} parent=0 // pred_check
    _
  $region19: #{_lambda_.2} parent=0 // pred_check_branch
    %4765 = sbr.rel (0) target = $region21
  $region20: #{_lambda_.2} parent=0 // pred_region
    _
  $region21: #{_lambda_.2} parent=0 // pred_fallthru
    _
  // Predicated region
  $region22: #{_lambda_.2} parent=0 // pred_check
    _
  $region23: #{_lambda_.2} parent=0 // pred_check_branch
    %4767 = sbr.rel (0) target = $region25
  $region24: #{_lambda_.2} parent=0 // pred_region
    _
  $region25: #{_lambda_.2} parent=0 // pred_fallthru
    _

</llo_original>
